<compile_context>
chip_gen: v7x
topology: tpu7x:2x2x1
jax: 0.10.0
libtpu: 0.0.40
codegen_flags: <defaults>
</compile_context>

<pallas_src>
import functools

import jax
import jax.numpy as jnp
from jax import lax
from jax.experimental import pallas as pl
from jax.experimental.pallas import tpu as pltpu

BN_EPS = 1e-5
LANE = 128


def _pad_to_lanes(c):
    return ((c + LANE - 1) // LANE) * LANE


def _pad2d(x, rows, cols):
    return jnp.pad(x, ((0, rows - x.shape[0]), (0, cols - x.shape[1])))


def _pick_batch_tile(n, max_bt=8):
    divs = [d for d in range(1, min(n, max_bt) + 1) if n % d == 0]
    multi = [d for d in divs if n // d >= 2]       # keep >=2 grid steps if possible
    return max(multi) if multi else max(divs)


# ---------------------------------------------------------------------------
# Fused kernel: conv3x3(MXU im2col)+BN+ReLU6+maxpool -> 7x(dw3x3+BN+ReLU6+pw1x1)
#               -> global-avg-pool -> linear head, for one batch tile.
# ---------------------------------------------------------------------------
def _studentnet_kernel(*refs, nblk, strides, pooled_hw):
    patches_ref, w0_ref, s0_ref = refs[0], refs[1], refs[2]
    blk_refs = [refs[3 + 4 * b: 3 + 4 * (b + 1)] for b in range(nblk)]
    fcw_ref = refs[3 + 4 * nblk]
    fcb_ref = refs[4 + 4 * nblk]
    o_ref = refs[5 + 4 * nblk]
    scr_refs = refs[6 + 4 * nblk:]

    bt, hw, k0 = patches_ref.shape
    c0p = w0_ref.shape[1]
    hh, ww = pooled_hw[0] * 2, pooled_hw[1] * 2

    # ---- block0: 3x3 conv as one MXU matmul over im2col patches -------------
    conv = jnp.dot(patches_ref[...].reshape(bt * hw, k0), w0_ref[...],
                   preferred_element_type=jnp.float32)
    conv = jnp.clip(conv + s0_ref[...], 0.0, 6.0)          # folded BN + ReLU6
    # 2x2 max-pool at value level (clip and max commute; clip applied above).
    r = conv.reshape(bt, hh // 2, 2, ww // 2, 2, c0p)
    act = jnp.maximum(jnp.maximum(r[:, :, 0, :, 0, :], r[:, :, 0, :, 1, :]),
                      jnp.maximum(r[:, :, 1, :, 0, :], r[:, :, 1, :, 1, :]))
    h, w = pooled_hw                                        # (bt, h, w, c0p)

    # ---- blocks 1..7: depthwise 3x3 + folded BN + ReLU6 + pointwise 1x1 -----
    for b in range(nblk):
        dw_ref, sh_ref, pw_ref, pb_ref = blk_refs[b]
        scr = scr_refs[b]
        stride = strides[b]
        cinp = dw_ref.shape[1]
        coutp = pw_ref.shape[1]
        ho = (h + 1) // 2 if stride == 2 else h
        wo = (w + 1) // 2 if stride == 2 else w

        # zero-padded halo buffer in VMEM (replaces the host-side jnp.pad).
        scr[...] = jnp.zeros(scr.shape, scr.dtype)
        scr[:, pl.ds(1, h), pl.ds(1, w), :] = act

        dw9 = dw_ref[...]                                   # (9, cinp)
        acc = jnp.zeros((bt, ho, wo, cinp), jnp.float32)
        for t in range(9):                                  # 9-tap loop stays unrolled
            dy, dx = t // 3, t % 3
            if stride == 1:
                tap = scr[:, pl.ds(dy, ho), pl.ds(dx, wo), :]
            else:       # stride 2: slice-only strided ref read (no int indexers)
                tap = scr[:, pl.ds(dy, ho, 2), pl.ds(dx, wo, 2), :]
            acc = acc + tap * dw9[t].reshape(1, 1, 1, cinp)
        acc = jnp.clip(acc + sh_ref[...].reshape(1, 1, 1, cinp), 0.0, 6.0)

        # pointwise 1x1 as one lane-dense MXU matmul (bf16 operands, f32 acc).
        lhs = acc.reshape(bt * ho * wo, cinp).astype(jnp.bfloat16)
        y = jnp.dot(lhs, pw_ref[...],
                    preferred_element_type=jnp.float32) + pb_ref[...]
        act = y.reshape(bt, ho, wo, coutp)
        h, w = ho, wo

    # ---- AdaptiveAvgPool2d((1,1)) + Linear head ------------------------------
    feat = jnp.mean(act.reshape(bt, h * w, act.shape[-1]), axis=1)   # (bt, Cpad)
    logits = jnp.dot(feat, fcw_ref[...],
                     preferred_element_type=jnp.float32) + fcb_ref[...]
    o_ref[...] = logits.reshape(1, bt, logits.shape[-1])


# ---------------------------------------------------------------------------
# Parameters (deterministic init; shapes follow StudentNet.__init__)
# ---------------------------------------------------------------------------
def init_params(key, base=16, width_mult=1, num_classes=11):
    multiplier = [3, 4, 8, 8, 16, 16, 16, 16, 16]
    bw = [base * m for m in multiplier]
    for i in range(3, 7):
        bw[i] = int(bw[i] * width_mult)

    keys = iter(jax.random.split(key, 128))

    def nrm(shape, s=0.1):
        return jax.random.normal(next(keys), shape, jnp.float32) * s

    def bn_init(c):
        return dict(gamma=1.0 + nrm((c,), 0.05), beta=nrm((c,), 0.05),
                    mean=nrm((c,), 0.05), var=1.0 + jnp.abs(nrm((c,), 0.1)))

    params = {"block0": dict(conv_w=nrm((bw[0], 3, 3, 3)),   # [Cout, Cin, kh, kw]
                             conv_b=nrm((bw[0],)),
                             bn=bn_init(bw[0]))}
    strides = [2, 2, 2, 1, 1, 1, 1]
    blocks = []
    for i in range(1, 8):
        c_in, c_out = bw[i - 1], bw[i]
        blocks.append(dict(
            dw_w=nrm((c_in, 1, 3, 3)),                       # depthwise [C, 1, 3, 3]
            dw_b=nrm((c_in,)),
            bn=bn_init(c_in),
            pw_w=nrm((c_out, c_in, 1, 1)),                   # pointwise [Cout, Cin, 1, 1]
            pw_b=nrm((c_out,)),
            stride=strides[i - 1]))
    params["blocks"] = blocks
    params["fc_w"] = nrm((num_classes, bw[7]))
    params["fc_b"] = nrm((num_classes,))
    return params, bw


def _fold_bn(bn, conv_b):
    # TODO(synk): BatchNorm2d training-mode batch statistics are not modeled;
    # eval-mode running stats (+ conv bias) are folded into an affine scale/shift.
    scale = bn["gamma"] / jnp.sqrt(bn["var"] + BN_EPS)
    shift = bn["beta"] + scale * (conv_b - bn["mean"])
    return scale, shift


# ---------------------------------------------------------------------------
# Forward pass (single Pallas kernel)
# ---------------------------------------------------------------------------
def forward(params, x_nchw, *, max_batch_tile=8):
    x = jnp.transpose(x_nchw, (0, 2, 3, 1)).astype(jnp.float32)    # NCHW -> NHWC
    n, hh, ww, cin0 = x.shape
    assert hh % 2 == 0 and ww % 2 == 0, "MaxPool2d(2,2) path assumes even H/W"

    # ---- fold BN + zero-pad every channel dim to a multiple of 128 lanes ----
    p0 = params["block0"]
    c0 = p0["conv_w"].shape[0]
    c0p = _pad_to_lanes(c0)
    k0 = 9 * cin0
    k0p = ((k0 + 7) // 8) * 8
    scale0, shift0 = _fold_bn(p0["bn"], p0["conv_b"])
    w0 = jnp.transpose(p0["conv_w"], (2, 3, 1, 0)).reshape(k0, c0) * scale0[None, :]
    w0 = _pad2d(w0, k0p, c0p)                                # (k0p, c0p) f32
    s0 = _pad2d(shift0.reshape(1, c0), 1, c0p)

    blk_arrays, strides, cinps = [], [], []
    for blk in params["blocks"]:
        cin = blk["dw_w"].shape[0]
        cout = blk["pw_w"].shape[0]
        cinp, coutp = _pad_to_lanes(cin), _pad_to_lanes(cout)
        scale, shift = _fold_bn(blk["bn"], blk["dw_b"])
        dw9 = jnp.transpose(blk["dw_w"][:, 0], (1, 2, 0)).reshape(9, cin) * scale[None, :]
        blk_arrays.append((
            _pad2d(dw9, 9, cinp),                                        # (9, cinp)
            _pad2d(shift.reshape(1, cin), 1, cinp),                      # (1, cinp)
            _pad2d(blk["pw_w"][:, :, 0, 0].T, cinp, coutp).astype(jnp.bfloat16),
            _pad2d(blk["pw_b"].reshape(1, cout), 1, coutp),              # (1, coutp)
        ))
        strides.append(int(blk["stride"]))
        cinps.append(cinp)

    nclass = params["fc_w"].shape[0]
    c7p = _pad_to_lanes(params["fc_w"].shape[1])
    ncp = _pad_to_lanes(nclass)
    fcw = _pad2d(params["fc_w"].T, c7p, ncp)
    fcb = _pad2d(params["fc_b"].reshape(1, nclass), 1, ncp)

    # ---- host-side im2col for block0 (one entry-point op; no per-block pads) --
    xp = jnp.pad(x, ((0, 0), (1, 1), (1, 1), (0, 0)))
    taps = [xp[:, dy:dy + hh, dx:dx + ww, :] for dy in range(3) for dx in range(3)]
    patches = jnp.concatenate(taps, axis=-1).reshape(n, hh * ww, k0)
    patches = jnp.pad(patches, ((0, 0), (0, 0), (0, k0p - k0)))

    # ---- grid / specs: batch-tiled so the MXU matmuls see M = bt*H*W rows ----
    bt = _pick_batch_tile(n, max_batch_tile)
    grid = (n // bt,)
    pooled_hw = (hh // 2, ww // 2)

    in_arrays = [patches, w0, s0]
    in_specs = [
        pl.BlockSpec((bt, hh * ww, k0p), lambda i: (i, 0, 0)),
        pl.BlockSpec(w0.shape, lambda i: (0, 0)),
        pl.BlockSpec(s0.shape, lambda i: (0, 0)),
    ]
    scratch_shapes = []
    h, w = pooled_hw
    for arrays, stride, cinp in zip(blk_arrays, strides, cinps):
        in_arrays += list(arrays)
        in_specs += [pl.BlockSpec(a.shape, lambda i: (0, 0)) for a in arrays]
        scratch_shapes.append(pltpu.VMEM((bt, h + 2, w + 2, cinp), jnp.float32))
        if stride == 2:
            h, w = (h + 1) // 2, (w + 1) // 2
    in_arrays += [fcw, fcb]
    in_specs += [pl.BlockSpec(fcw.shape, lambda i: (0, 0)),
                 pl.BlockSpec(fcb.shape, lambda i: (0, 0))]

    kernel = functools.partial(_studentnet_kernel, nblk=len(blk_arrays),
                               strides=tuple(strides), pooled_hw=pooled_hw)
    out = pl.pallas_call(
        kernel,
        out_shape=jax.ShapeDtypeStruct((n // bt, bt, ncp), jnp.float32),
        grid=grid,
        in_specs=in_specs,
        out_specs=pl.BlockSpec((1, bt, ncp), lambda i: (i, 0, 0)),
        scratch_shapes=scratch_shapes,
        compiler_params=pltpu.CompilerParams(dimension_semantics=("parallel",)),
    )(*in_arrays)
    return out.reshape(n, ncp)[:, :nclass]


# ---------------------------------------------------------------------------
# Pure-JAX reference (for correctness check)
# ---------------------------------------------------------------------------
def _bn_ref(y, bn):
    return (y - bn["mean"]) * bn["gamma"] / jnp.sqrt(bn["var"] + BN_EPS) + bn["beta"]


def ref_forward(params, x_nchw):
    x = jnp.transpose(x_nchw, (0, 2, 3, 1)).astype(jnp.float32)
    p0 = params["block0"]
    y = lax.conv_general_dilated(
        x, jnp.transpose(p0["conv_w"], (2, 3, 1, 0)),
        window_strides=(1, 1), padding=((1, 1), (1, 1)),
        dimension_numbers=("NHWC", "HWIO", "NHWC"))
    y = jnp.clip(_bn_ref(y + p0["conv_b"], p0["bn"]), 0.0, 6.0)
    n, h, w, c = y.shape
    y = y.reshape(n, h // 2, 2, w // 2, 2, c).max(axis=(2, 4))
    for blk in params["blocks"]:
        y2 = lax.conv_general_dilated(
            y, jnp.transpose(blk["dw_w"], (2, 3, 1, 0)),
            window_strides=(blk["stride"],) * 2, padding=((1, 1), (1, 1)),
            dimension_numbers=("NHWC", "HWIO", "NHWC"),
            feature_group_count=y.shape[-1])
        y2 = jnp.clip(_bn_ref(y2 + blk["dw_b"], blk["bn"]), 0.0, 6.0)
        y = jnp.einsum("nhwc,oc->nhwo", y2, blk["pw_w"][:, :, 0, 0]) + blk["pw_b"]
    feat = y.mean(axis=(1, 2))
    return feat @ params["fc_w"].T + params["fc_b"]


# ---------------------------------------------------------------------------
if __name__ == "__main__":
    key = jax.random.PRNGKey(0)
    pkey, xkey = jax.random.split(key)
    # small structure-preserving config: base=4 -> channels 12, 16, 32, 32, 64...
    params, bw = init_params(pkey, base=4, width_mult=1)
    x = jax.random.normal(xkey, (2, 3, 32, 32), jnp.float32)      # NCHW like PyTorch

    logits = jax.block_until_ready(forward(params, x))
    ref = jax.block_until_ready(ref_forward(params, x))

    assert logits.shape == (2, 11), logits.shape
    err = float(jnp.max(jnp.abs(logits - ref)))
    ref_scale = float(jnp.max(jnp.abs(ref)))
    # tolerance accounts for bf16 operands (f32 accumulation) in the 7 chained
    # pointwise matmuls.
    assert err < 7.5e-2 * (1.0 + ref_scale), (
        f"mismatch vs reference: err={err} scale={ref_scale}")
    print("KERNEL_OK")
</pallas_src>

<mosaic_0001>
module attributes {stable_mosaic.version = 11 : i64} {
  func.func @_studentnet_kernel(%arg0: i32, %arg1: memref<1x1024x32xf32, #tpu.memory_space<vmem>>, %arg2: memref<32x128xf32, #tpu.memory_space<vmem>>, %arg3: memref<1x128xf32, #tpu.memory_space<vmem>>, %arg4: memref<9x128xf32, #tpu.memory_space<vmem>>, %arg5: memref<1x128xf32, #tpu.memory_space<vmem>>, %arg6: memref<128x128xbf16, #tpu.memory_space<vmem>>, %arg7: memref<1x128xf32, #tpu.memory_space<vmem>>, %arg8: memref<9x128xf32, #tpu.memory_space<vmem>>, %arg9: memref<1x128xf32, #tpu.memory_space<vmem>>, %arg10: memref<128x128xbf16, #tpu.memory_space<vmem>>, %arg11: memref<1x128xf32, #tpu.memory_space<vmem>>, %arg12: memref<9x128xf32, #tpu.memory_space<vmem>>, %arg13: memref<1x128xf32, #tpu.memory_space<vmem>>, %arg14: memref<128x128xbf16, #tpu.memory_space<vmem>>, %arg15: memref<1x128xf32, #tpu.memory_space<vmem>>, %arg16: memref<9x128xf32, #tpu.memory_space<vmem>>, %arg17: memref<1x128xf32, #tpu.memory_space<vmem>>, %arg18: memref<128x128xbf16, #tpu.memory_space<vmem>>, %arg19: memref<1x128xf32, #tpu.memory_space<vmem>>, %arg20: memref<9x128xf32, #tpu.memory_space<vmem>>, %arg21: memref<1x128xf32, #tpu.memory_space<vmem>>, %arg22: memref<128x128xbf16, #tpu.memory_space<vmem>>, %arg23: memref<1x128xf32, #tpu.memory_space<vmem>>, %arg24: memref<9x128xf32, #tpu.memory_space<vmem>>, %arg25: memref<1x128xf32, #tpu.memory_space<vmem>>, %arg26: memref<128x128xbf16, #tpu.memory_space<vmem>>, %arg27: memref<1x128xf32, #tpu.memory_space<vmem>>, %arg28: memref<9x128xf32, #tpu.memory_space<vmem>>, %arg29: memref<1x128xf32, #tpu.memory_space<vmem>>, %arg30: memref<128x128xbf16, #tpu.memory_space<vmem>>, %arg31: memref<1x128xf32, #tpu.memory_space<vmem>>, %arg32: memref<128x128xf32, #tpu.memory_space<vmem>>, %arg33: memref<1x128xf32, #tpu.memory_space<vmem>>, %arg34: memref<1x1x128xf32, #tpu.memory_space<vmem>>, %arg35: memref<1x18x18x128xf32, #tpu.memory_space<vmem>>, %arg36: memref<1x10x10x128xf32, #tpu.memory_space<vmem>>, %arg37: memref<1x6x6x128xf32, #tpu.memory_space<vmem>>, %arg38: memref<1x4x4x128xf32, #tpu.memory_space<vmem>>, %arg39: memref<1x4x4x128xf32, #tpu.memory_space<vmem>>, %arg40: memref<1x4x4x128xf32, #tpu.memory_space<vmem>>, %arg41: memref<1x4x4x128xf32, #tpu.memory_space<vmem>>) attributes {dimension_semantics = [#tpu.dimension_semantics<parallel>], iteration_bounds = array<i64: 2>, scalar_prefetch = 0 : i64, scratch_operands = 7 : i64, tpu.core_type = #tpu.core_type<tc>, window_params = [{transform_indices = @transform_0, window_bounds = array<i64: 1, 1024, 32>}, {pipeline_mode = #tpu.pipeline_mode<synchronous>, transform_indices = @transform_1, window_bounds = array<i64: 32, 128>}, {pipeline_mode = #tpu.pipeline_mode<synchronous>, transform_indices = @transform_2, window_bounds = array<i64: 1, 128>}, {pipeline_mode = #tpu.pipeline_mode<synchronous>, transform_indices = @transform_3, window_bounds = array<i64: 9, 128>}, {pipeline_mode = #tpu.pipeline_mode<synchronous>, transform_indices = @transform_4, window_bounds = array<i64: 1, 128>}, {pipeline_mode = #tpu.pipeline_mode<synchronous>, transform_indices = @transform_5, window_bounds = array<i64: 128, 128>}, {pipeline_mode = #tpu.pipeline_mode<synchronous>, transform_indices = @transform_6, window_bounds = array<i64: 1, 128>}, {pipeline_mode = #tpu.pipeline_mode<synchronous>, transform_indices = @transform_7, window_bounds = array<i64: 9, 128>}, {pipeline_mode = #tpu.pipeline_mode<synchronous>, transform_indices = @transform_8, window_bounds = array<i64: 1, 128>}, {pipeline_mode = #tpu.pipeline_mode<synchronous>, transform_indices = @transform_9, window_bounds = array<i64: 128, 128>}, {pipeline_mode = #tpu.pipeline_mode<synchronous>, transform_indices = @transform_10, window_bounds = array<i64: 1, 128>}, {pipeline_mode = #tpu.pipeline_mode<synchronous>, transform_indices = @transform_11, window_bounds = array<i64: 9, 128>}, {pipeline_mode = #tpu.pipeline_mode<synchronous>, transform_indices = @transform_12, window_bounds = array<i64: 1, 128>}, {pipeline_mode = #tpu.pipeline_mode<synchronous>, transform_indices = @transform_13, window_bounds = array<i64: 128, 128>}, {pipeline_mode = #tpu.pipeline_mode<synchronous>, transform_indices = @transform_14, window_bounds = array<i64: 1, 128>}, {pipeline_mode = #tpu.pipeline_mode<synchronous>, transform_indices = @transform_15, window_bounds = array<i64: 9, 128>}, {pipeline_mode = #tpu.pipeline_mode<synchronous>, transform_indices = @transform_16, window_bounds = array<i64: 1, 128>}, {pipeline_mode = #tpu.pipeline_mode<synchronous>, transform_indices = @transform_17, window_bounds = array<i64: 128, 128>}, {pipeline_mode = #tpu.pipeline_mode<synchronous>, transform_indices = @transform_18, window_bounds = array<i64: 1, 128>}, {pipeline_mode = #tpu.pipeline_mode<synchronous>, transform_indices = @transform_19, window_bounds = array<i64: 9, 128>}, {pipeline_mode = #tpu.pipeline_mode<synchronous>, transform_indices = @transform_20, window_bounds = array<i64: 1, 128>}, {pipeline_mode = #tpu.pipeline_mode<synchronous>, transform_indices = @transform_21, window_bounds = array<i64: 128, 128>}, {pipeline_mode = #tpu.pipeline_mode<synchronous>, transform_indices = @transform_22, window_bounds = array<i64: 1, 128>}, {pipeline_mode = #tpu.pipeline_mode<synchronous>, transform_indices = @transform_23, window_bounds = array<i64: 9, 128>}, {pipeline_mode = #tpu.pipeline_mode<synchronous>, transform_indices = @transform_24, window_bounds = array<i64: 1, 128>}, {pipeline_mode = #tpu.pipeline_mode<synchronous>, transform_indices = @transform_25, window_bounds = array<i64: 128, 128>}, {pipeline_mode = #tpu.pipeline_mode<synchronous>, transform_indices = @transform_26, window_bounds = array<i64: 1, 128>}, {pipeline_mode = #tpu.pipeline_mode<synchronous>, transform_indices = @transform_27, window_bounds = array<i64: 9, 128>}, {pipeline_mode = #tpu.pipeline_mode<synchronous>, transform_indices = @transform_28, window_bounds = array<i64: 1, 128>}, {pipeline_mode = #tpu.pipeline_mode<synchronous>, transform_indices = @transform_29, window_bounds = array<i64: 128, 128>}, {pipeline_mode = #tpu.pipeline_mode<synchronous>, transform_indices = @transform_30, window_bounds = array<i64: 1, 128>}, {pipeline_mode = #tpu.pipeline_mode<synchronous>, transform_indices = @transform_31, window_bounds = array<i64: 128, 128>}, {pipeline_mode = #tpu.pipeline_mode<synchronous>, transform_indices = @transform_32, window_bounds = array<i64: 1, 128>}, {transform_indices = @transform_33, window_bounds = array<i64: 1, 1, 128>}]} {
    %c0 = arith.constant 0 : index
    %c0_0 = arith.constant 0 : index
    %c0_1 = arith.constant 0 : index
    %0 = vector.load %arg1[%c0, %c0_0, %c0_1] : memref<1x1024x32xf32, #tpu.memory_space<vmem>>, vector<1x1024x32xf32>
    %1 = vector.shape_cast %0 : vector<1x1024x32xf32> to vector<1024x32xf32>
    %c0_2 = arith.constant 0 : index
    %c0_3 = arith.constant 0 : index
    %2 = vector.load %arg2[%c0_2, %c0_3] : memref<32x128xf32, #tpu.memory_space<vmem>>, vector<32x128xf32>
    %cst = arith.constant dense<0.000000e+00> : vector<1024x128xf32>
    %3 = tpu.matmul %1, %2, %cst {dimension_numbers = #tpu.dot_dimension_numbers<[1], [0], [0], [1], [0, 0, 1, 1], [], []>} : vector<1024x32xf32>, vector<32x128xf32>, vector<1024x128xf32> -> vector<1024x128xf32>
    %c0_4 = arith.constant 0 : index
    %c0_5 = arith.constant 0 : index
    %4 = vector.load %arg3[%c0_4, %c0_5] : memref<1x128xf32, #tpu.memory_space<vmem>>, vector<1x128xf32>
    %5 = vector.broadcast %4 : vector<1x128xf32> to vector<1024x128xf32>
    %6 = arith.addf %3, %5 : vector<1024x128xf32>
    %cst_6 = arith.constant 0.000000e+00 : f32
    %cst_7 = arith.constant 6.000000e+00 : f32
    %7 = vector.broadcast %cst_6 : f32 to vector<1024x128xf32>
    %8 = arith.maximumf %7, %6 : vector<1024x128xf32>
    %9 = vector.broadcast %cst_7 : f32 to vector<1024x128xf32>
    %10 = arith.minimumf %9, %8 : vector<1024x128xf32>
    %11 = vector.shape_cast %10 : vector<1024x128xf32> to vector<1x16x2x16x2x128xf32>
    %12 = vector.extract_strided_slice %11 {offsets = [0, 0, 0, 0, 0, 0], sizes = [1, 16, 1, 16, 1, 128], strides = [1, 1, 1, 1, 1, 1]} : vector<1x16x2x16x2x128xf32> to vector<1x16x1x16x1x128xf32>
    %13 = vector.shape_cast %12 : vector<1x16x1x16x1x128xf32> to vector<1x16x16x128xf32>
    %14 = vector.extract_strided_slice %11 {offsets = [0, 0, 0, 0, 1, 0], sizes = [1, 16, 1, 16, 1, 128], strides = [1, 1, 1, 1, 1, 1]} : vector<1x16x2x16x2x128xf32> to vector<1x16x1x16x1x128xf32>
    %15 = vector.shape_cast %14 : vector<1x16x1x16x1x128xf32> to vector<1x16x16x128xf32>
    %16 = arith.maximumf %13, %15 : vector<1x16x16x128xf32>
    %17 = vector.extract_strided_slice %11 {offsets = [0, 0, 1, 0, 0, 0], sizes = [1, 16, 1, 16, 1, 128], strides = [1, 1, 1, 1, 1, 1]} : vector<1x16x2x16x2x128xf32> to vector<1x16x1x16x1x128xf32>
    %18 = vector.shape_cast %17 : vector<1x16x1x16x1x128xf32> to vector<1x16x16x128xf32>
    %19 = vector.extract_strided_slice %11 {offsets = [0, 0, 1, 0, 1, 0], sizes = [1, 16, 1, 16, 1, 128], strides = [1, 1, 1, 1, 1, 1]} : vector<1x16x2x16x2x128xf32> to vector<1x16x1x16x1x128xf32>
    %20 = vector.shape_cast %19 : vector<1x16x1x16x1x128xf32> to vector<1x16x16x128xf32>
    %21 = arith.maximumf %18, %20 : vector<1x16x16x128xf32>
    %22 = arith.maximumf %16, %21 : vector<1x16x16x128xf32>
    %cst_8 = arith.constant 0.000000e+00 : f32
    %23 = vector.broadcast %cst_8 : f32 to vector<1x18x18x128xf32>
    %c0_9 = arith.constant 0 : index
    %c0_10 = arith.constant 0 : index
    %c0_11 = arith.constant 0 : index
    %c0_12 = arith.constant 0 : index
    %24 = vector.load %arg35[%c0_9, %c0_10, %c0_11, %c0_12] : memref<1x18x18x128xf32, #tpu.memory_space<vmem>>, vector<1x18x18x128xf32>
    tpu.vector_store %arg35[%c0_9, %c0_10, %c0_11, %c0_12], %23 {strides = array<i32>} : memref<1x18x18x128xf32, #tpu.memory_space<vmem>>, vector<1x18x18x128xf32>,
    %c0_13 = arith.constant 0 : index
    %c1 = arith.constant 1 : index
    %c1_14 = arith.constant 1 : index
    %c0_15 = arith.constant 0 : index
    %25 = vector.load %arg35[%c0_13, %c1, %c1_14, %c0_15] : memref<1x18x18x128xf32, #tpu.memory_space<vmem>>, vector<1x16x16x128xf32>
    tpu.vector_store %arg35[%c0_13, %c1, %c1_14, %c0_15], %22 {strides = array<i32>} : memref<1x18x18x128xf32, #tpu.memory_space<vmem>>, vector<1x16x16x128xf32>,
    %c0_16 = arith.constant 0 : index
    %c0_17 = arith.constant 0 : index
    %26 = vector.load %arg4[%c0_16, %c0_17] : memref<9x128xf32, #tpu.memory_space<vmem>>, vector<9x128xf32>
    %cst_18 = arith.constant 0.000000e+00 : f32
    %27 = vector.broadcast %cst_18 : f32 to vector<1x8x8x128xf32>
    %c0_19 = arith.constant 0 : index
    %c0_20 = arith.constant 0 : index
    %c0_21 = arith.constant 0 : index
    %c0_22 = arith.constant 0 : index
    %28 = tpu.strided_load %arg35[%c0_19, %c0_20, %c0_21, %c0_22] {strides = array<i32: 1, 2, 2, 1>} : memref<1x18x18x128xf32, #tpu.memory_space<vmem>>, vector<1x8x8x128xf32>
    %29 = vector.extract_strided_slice %26 {offsets = [0, 0], sizes = [1, 128], strides = [1, 1]} : vector<9x128xf32> to vector<1x128xf32>
    %30 = vector.shape_cast %29 : vector<1x128xf32> to vector<128xf32>
    %31 = vector.shape_cast %30 : vector<128xf32> to vector<1x1x1x128xf32>
    %32 = vector.broadcast %31 : vector<1x1x1x128xf32> to vector<1x8x8x128xf32>
    %33 = arith.mulf %28, %32 : vector<1x8x8x128xf32>
    %34 = arith.addf %27, %33 : vector<1x8x8x128xf32>
    %c0_23 = arith.constant 0 : index
    %c0_24 = arith.constant 0 : index
    %c1_25 = arith.constant 1 : index
    %c0_26 = arith.constant 0 : index
    %35 = tpu.strided_load %arg35[%c0_23, %c0_24, %c1_25, %c0_26] {strides = array<i32: 1, 2, 2, 1>} : memref<1x18x18x128xf32, #tpu.memory_space<vmem>>, vector<1x8x8x128xf32>
    %36 = vector.extract_strided_slice %26 {offsets = [1, 0], sizes = [1, 128], strides = [1, 1]} : vector<9x128xf32> to vector<1x128xf32>
    %37 = vector.shape_cast %36 : vector<1x128xf32> to vector<128xf32>
    %38 = vector.shape_cast %37 : vector<128xf32> to vector<1x1x1x128xf32>
    %39 = vector.broadcast %38 : vector<1x1x1x128xf32> to vector<1x8x8x128xf32>
    %40 = arith.mulf %35, %39 : vector<1x8x8x128xf32>
    %41 = arith.addf %34, %40 : vector<1x8x8x128xf32>
    %c0_27 = arith.constant 0 : index
    %c0_28 = arith.constant 0 : index
    %c2 = arith.constant 2 : index
    %c0_29 = arith.constant 0 : index
    %42 = tpu.strided_load %arg35[%c0_27, %c0_28, %c2, %c0_29] {strides = array<i32: 1, 2, 2, 1>} : memref<1x18x18x128xf32, #tpu.memory_space<vmem>>, vector<1x8x8x128xf32>
    %43 = vector.extract_strided_slice %26 {offsets = [2, 0], sizes = [1, 128], strides = [1, 1]} : vector<9x128xf32> to vector<1x128xf32>
    %44 = vector.shape_cast %43 : vector<1x128xf32> to vector<128xf32>
    %45 = vector.shape_cast %44 : vector<128xf32> to vector<1x1x1x128xf32>
    %46 = vector.broadcast %45 : vector<1x1x1x128xf32> to vector<1x8x8x128xf32>
    %47 = arith.mulf %42, %46 : vector<1x8x8x128xf32>
    %48 = arith.addf %41, %47 : vector<1x8x8x128xf32>
    %c0_30 = arith.constant 0 : index
    %c1_31 = arith.constant 1 : index
    %c0_32 = arith.constant 0 : index
    %c0_33 = arith.constant 0 : index
    %49 = tpu.strided_load %arg35[%c0_30, %c1_31, %c0_32, %c0_33] {strides = array<i32: 1, 2, 2, 1>} : memref<1x18x18x128xf32, #tpu.memory_space<vmem>>, vector<1x8x8x128xf32>
    %50 = vector.extract_strided_slice %26 {offsets = [3, 0], sizes = [1, 128], strides = [1, 1]} : vector<9x128xf32> to vector<1x128xf32>
    %51 = vector.shape_cast %50 : vector<1x128xf32> to vector<128xf32>
    %52 = vector.shape_cast %51 : vector<128xf32> to vector<1x1x1x128xf32>
    %53 = vector.broadcast %52 : vector<1x1x1x128xf32> to vector<1x8x8x128xf32>
    %54 = arith.mulf %49, %53 : vector<1x8x8x128xf32>
    %55 = arith.addf %48, %54 : vector<1x8x8x128xf32>
    %c0_34 = arith.constant 0 : index
    %c1_35 = arith.constant 1 : index
    %c1_36 = arith.constant 1 : index
    %c0_37 = arith.constant 0 : index
    %56 = tpu.strided_load %arg35[%c0_34, %c1_35, %c1_36, %c0_37] {strides = array<i32: 1, 2, 2, 1>} : memref<1x18x18x128xf32, #tpu.memory_space<vmem>>, vector<1x8x8x128xf32>
    %57 = vector.extract_strided_slice %26 {offsets = [4, 0], sizes = [1, 128], strides = [1, 1]} : vector<9x128xf32> to vector<1x128xf32>
    %58 = vector.shape_cast %57 : vector<1x128xf32> to vector<128xf32>
    %59 = vector.shape_cast %58 : vector<128xf32> to vector<1x1x1x128xf32>
    %60 = vector.broadcast %59 : vector<1x1x1x128xf32> to vector<1x8x8x128xf32>
    %61 = arith.mulf %56, %60 : vector<1x8x8x128xf32>
    %62 = arith.addf %55, %61 : vector<1x8x8x128xf32>
    %c0_38 = arith.constant 0 : index
    %c1_39 = arith.constant 1 : index
    %c2_40 = arith.constant 2 : index
    %c0_41 = arith.constant 0 : index
    %63 = tpu.strided_load %arg35[%c0_38, %c1_39, %c2_40, %c0_41] {strides = array<i32: 1, 2, 2, 1>} : memref<1x18x18x128xf32, #tpu.memory_space<vmem>>, vector<1x8x8x128xf32>
    %64 = vector.extract_strided_slice %26 {offsets = [5, 0], sizes = [1, 128], strides = [1, 1]} : vector<9x128xf32> to vector<1x128xf32>
    %65 = vector.shape_cast %64 : vector<1x128xf32> to vector<128xf32>
    %66 = vector.shape_cast %65 : vector<128xf32> to vector<1x1x1x128xf32>
    %67 = vector.broadcast %66 : vector<1x1x1x128xf32> to vector<1x8x8x128xf32>
    %68 = arith.mulf %63, %67 : vector<1x8x8x128xf32>
    %69 = arith.addf %62, %68 : vector<1x8x8x128xf32>
    %c0_42 = arith.constant 0 : index
    %c2_43 = arith.constant 2 : index
    %c0_44 = arith.constant 0 : index
    %c0_45 = arith.constant 0 : index
    %70 = tpu.strided_load %arg35[%c0_42, %c2_43, %c0_44, %c0_45] {strides = array<i32: 1, 2, 2, 1>} : memref<1x18x18x128xf32, #tpu.memory_space<vmem>>, vector<1x8x8x128xf32>
    %71 = vector.extract_strided_slice %26 {offsets = [6, 0], sizes = [1, 128], strides = [1, 1]} : vector<9x128xf32> to vector<1x128xf32>
    %72 = vector.shape_cast %71 : vector<1x128xf32> to vector<128xf32>
    %73 = vector.shape_cast %72 : vector<128xf32> to vector<1x1x1x128xf32>
    %74 = vector.broadcast %73 : vector<1x1x1x128xf32> to vector<1x8x8x128xf32>
    %75 = arith.mulf %70, %74 : vector<1x8x8x128xf32>
    %76 = arith.addf %69, %75 : vector<1x8x8x128xf32>
    %c0_46 = arith.constant 0 : index
    %c2_47 = arith.constant 2 : index
    %c1_48 = arith.constant 1 : index
    %c0_49 = arith.constant 0 : index
    %77 = tpu.strided_load %arg35[%c0_46, %c2_47, %c1_48, %c0_49] {strides = array<i32: 1, 2, 2, 1>} : memref<1x18x18x128xf32, #tpu.memory_space<vmem>>, vector<1x8x8x128xf32>
    %78 = vector.extract_strided_slice %26 {offsets = [7, 0], sizes = [1, 128], strides = [1, 1]} : vector<9x128xf32> to vector<1x128xf32>
    %79 = vector.shape_cast %78 : vector<1x128xf32> to vector<128xf32>
    %80 = vector.shape_cast %79 : vector<128xf32> to vector<1x1x1x128xf32>
    %81 = vector.broadcast %80 : vector<1x1x1x128xf32> to vector<1x8x8x128xf32>
    %82 = arith.mulf %77, %81 : vector<1x8x8x128xf32>
    %83 = arith.addf %76, %82 : vector<1x8x8x128xf32>
    %c0_50 = arith.constant 0 : index
    %c2_51 = arith.constant 2 : index
    %c2_52 = arith.constant 2 : index
    %c0_53 = arith.constant 0 : index
    %84 = tpu.strided_load %arg35[%c0_50, %c2_51, %c2_52, %c0_53] {strides = array<i32: 1, 2, 2, 1>} : memref<1x18x18x128xf32, #tpu.memory_space<vmem>>, vector<1x8x8x128xf32>
    %85 = vector.extract_strided_slice %26 {offsets = [8, 0], sizes = [1, 128], strides = [1, 1]} : vector<9x128xf32> to vector<1x128xf32>
    %86 = vector.shape_cast %85 : vector<1x128xf32> to vector<128xf32>
    %87 = vector.shape_cast %86 : vector<128xf32> to vector<1x1x1x128xf32>
    %88 = vector.broadcast %87 : vector<1x1x1x128xf32> to vector<1x8x8x128xf32>
    %89 = arith.mulf %84, %88 : vector<1x8x8x128xf32>
    %90 = arith.addf %83, %89 : vector<1x8x8x128xf32>
    %c0_54 = arith.constant 0 : index
    %c0_55 = arith.constant 0 : index
    %91 = vector.load %arg5[%c0_54, %c0_55] : memref<1x128xf32, #tpu.memory_space<vmem>>, vector<1x128xf32>
    %92 = vector.shape_cast %91 : vector<1x128xf32> to vector<1x1x1x128xf32>
    %93 = vector.broadcast %92 : vector<1x1x1x128xf32> to vector<1x8x8x128xf32>
    %94 = arith.addf %90, %93 : vector<1x8x8x128xf32>
    %cst_56 = arith.constant 0.000000e+00 : f32
    %cst_57 = arith.constant 6.000000e+00 : f32
    %95 = vector.broadcast %cst_56 : f32 to vector<1x8x8x128xf32>
    %96 = arith.maximumf %95, %94 : vector<1x8x8x128xf32>
    %97 = vector.broadcast %cst_57 : f32 to vector<1x8x8x128xf32>
    %98 = arith.minimumf %97, %96 : vector<1x8x8x128xf32>
    %99 = vector.shape_cast %98 : vector<1x8x8x128xf32> to vector<64x128xf32>
    %100 = arith.truncf %99 : vector<64x128xf32> to vector<64x128xbf16>
    %c0_58 = arith.constant 0 : index
    %c0_59 = arith.constant 0 : index
    %101 = vector.load %arg6[%c0_58, %c0_59] : memref<128x128xbf16, #tpu.memory_space<vmem>>, vector<128x128xbf16>
    %cst_60 = arith.constant dense<0.000000e+00> : vector<64x128xf32>
    %102 = tpu.matmul %100, %101, %cst_60 {dimension_numbers = #tpu.dot_dimension_numbers<[1], [0], [0], [1], [0, 0, 1, 1], [], []>} : vector<64x128xbf16>, vector<128x128xbf16>, vector<64x128xf32> -> vector<64x128xf32>
    %c0_61 = arith.constant 0 : index
    %c0_62 = arith.constant 0 : index
    %103 = vector.load %arg7[%c0_61, %c0_62] : memref<1x128xf32, #tpu.memory_space<vmem>>, vector<1x128xf32>
    %104 = vector.broadcast %103 : vector<1x128xf32> to vector<64x128xf32>
    %105 = arith.addf %102, %104 : vector<64x128xf32>
    %106 = vector.shape_cast %105 : vector<64x128xf32> to vector<1x8x8x128xf32>
    %cst_63 = arith.constant 0.000000e+00 : f32
    %107 = vector.broadcast %cst_63 : f32 to vector<1x10x10x128xf32>
    %c0_64 = arith.constant 0 : index
    %c0_65 = arith.constant 0 : index
    %c0_66 = arith.constant 0 : index
    %c0_67 = arith.constant 0 : index
    %108 = vector.load %arg36[%c0_64, %c0_65, %c0_66, %c0_67] : memref<1x10x10x128xf32, #tpu.memory_space<vmem>>, vector<1x10x10x128xf32>
    tpu.vector_store %arg36[%c0_64, %c0_65, %c0_66, %c0_67], %107 {strides = array<i32>} : memref<1x10x10x128xf32, #tpu.memory_space<vmem>>, vector<1x10x10x128xf32>,
    %c0_68 = arith.constant 0 : index
    %c1_69 = arith.constant 1 : index
    %c1_70 = arith.constant 1 : index
    %c0_71 = arith.constant 0 : index
    %109 = vector.load %arg36[%c0_68, %c1_69, %c1_70, %c0_71] : memref<1x10x10x128xf32, #tpu.memory_space<vmem>>, vector<1x8x8x128xf32>
    tpu.vector_store %arg36[%c0_68, %c1_69, %c1_70, %c0_71], %106 {strides = array<i32>} : memref<1x10x10x128xf32, #tpu.memory_space<vmem>>, vector<1x8x8x128xf32>,
    %c0_72 = arith.constant 0 : index
    %c0_73 = arith.constant 0 : index
    %110 = vector.load %arg8[%c0_72, %c0_73] : memref<9x128xf32, #tpu.memory_space<vmem>>, vector<9x128xf32>
    %cst_74 = arith.constant 0.000000e+00 : f32
    %111 = vector.broadcast %cst_74 : f32 to vector<1x4x4x128xf32>
    %c0_75 = arith.constant 0 : index
    %c0_76 = arith.constant 0 : index
    %c0_77 = arith.constant 0 : index
    %c0_78 = arith.constant 0 : index
    %112 = tpu.strided_load %arg36[%c0_75, %c0_76, %c0_77, %c0_78] {strides = array<i32: 1, 2, 2, 1>} : memref<1x10x10x128xf32, #tpu.memory_space<vmem>>, vector<1x4x4x128xf32>
    %113 = vector.extract_strided_slice %110 {offsets = [0, 0], sizes = [1, 128], strides = [1, 1]} : vector<9x128xf32> to vector<1x128xf32>
    %114 = vector.shape_cast %113 : vector<1x128xf32> to vector<128xf32>
    %115 = vector.shape_cast %114 : vector<128xf32> to vector<1x1x1x128xf32>
    %116 = vector.broadcast %115 : vector<1x1x1x128xf32> to vector<1x4x4x128xf32>
    %117 = arith.mulf %112, %116 : vector<1x4x4x128xf32>
    %118 = arith.addf %111, %117 : vector<1x4x4x128xf32>
    %c0_79 = arith.constant 0 : index
    %c0_80 = arith.constant 0 : index
    %c1_81 = arith.constant 1 : index
    %c0_82 = arith.constant 0 : index
    %119 = tpu.strided_load %arg36[%c0_79, %c0_80, %c1_81, %c0_82] {strides = array<i32: 1, 2, 2, 1>} : memref<1x10x10x128xf32, #tpu.memory_space<vmem>>, vector<1x4x4x128xf32>
    %120 = vector.extract_strided_slice %110 {offsets = [1, 0], sizes = [1, 128], strides = [1, 1]} : vector<9x128xf32> to vector<1x128xf32>
    %121 = vector.shape_cast %120 : vector<1x128xf32> to vector<128xf32>
    %122 = vector.shape_cast %121 : vector<128xf32> to vector<1x1x1x128xf32>
    %123 = vector.broadcast %122 : vector<1x1x1x128xf32> to vector<1x4x4x128xf32>
    %124 = arith.mulf %119, %123 : vector<1x4x4x128xf32>
    %125 = arith.addf %118, %124 : vector<1x4x4x128xf32>
    %c0_83 = arith.constant 0 : index
    %c0_84 = arith.constant 0 : index
    %c2_85 = arith.constant 2 : index
    %c0_86 = arith.constant 0 : index
    %126 = tpu.strided_load %arg36[%c0_83, %c0_84, %c2_85, %c0_86] {strides = array<i32: 1, 2, 2, 1>} : memref<1x10x10x128xf32, #tpu.memory_space<vmem>>, vector<1x4x4x128xf32>
    %127 = vector.extract_strided_slice %110 {offsets = [2, 0], sizes = [1, 128], strides = [1, 1]} : vector<9x128xf32> to vector<1x128xf32>
    %128 = vector.shape_cast %127 : vector<1x128xf32> to vector<128xf32>
    %129 = vector.shape_cast %128 : vector<128xf32> to vector<1x1x1x128xf32>
    %130 = vector.broadcast %129 : vector<1x1x1x128xf32> to vector<1x4x4x128xf32>
    %131 = arith.mulf %126, %130 : vector<1x4x4x128xf32>
    %132 = arith.addf %125, %131 : vector<1x4x4x128xf32>
    %c0_87 = arith.constant 0 : index
    %c1_88 = arith.constant 1 : index
    %c0_89 = arith.constant 0 : index
    %c0_90 = arith.constant 0 : index
    %133 = tpu.strided_load %arg36[%c0_87, %c1_88, %c0_89, %c0_90] {strides = array<i32: 1, 2, 2, 1>} : memref<1x10x10x128xf32, #tpu.memory_space<vmem>>, vector<1x4x4x128xf32>
    %134 = vector.extract_strided_slice %110 {offsets = [3, 0], sizes = [1, 128], strides = [1, 1]} : vector<9x128xf32> to vector<1x128xf32>
    %135 = vector.shape_cast %134 : vector<1x128xf32> to vector<128xf32>
    %136 = vector.shape_cast %135 : vector<128xf32> to vector<1x1x1x128xf32>
    %137 = vector.broadcast %136 : vector<1x1x1x128xf32> to vector<1x4x4x128xf32>
    %138 = arith.mulf %133, %137 : vector<1x4x4x128xf32>
    %139 = arith.addf %132, %138 : vector<1x4x4x128xf32>
    %c0_91 = arith.constant 0 : index
    %c1_92 = arith.constant 1 : index
    %c1_93 = arith.constant 1 : index
    %c0_94 = arith.constant 0 : index
    %140 = tpu.strided_load %arg36[%c0_91, %c1_92, %c1_93, %c0_94] {strides = array<i32: 1, 2, 2, 1>} : memref<1x10x10x128xf32, #tpu.memory_space<vmem>>, vector<1x4x4x128xf32>
    %141 = vector.extract_strided_slice %110 {offsets = [4, 0], sizes = [1, 128], strides = [1, 1]} : vector<9x128xf32> to vector<1x128xf32>
    %142 = vector.shape_cast %141 : vector<1x128xf32> to vector<128xf32>
    %143 = vector.shape_cast %142 : vector<128xf32> to vector<1x1x1x128xf32>
    %144 = vector.broadcast %143 : vector<1x1x1x128xf32> to vector<1x4x4x128xf32>
    %145 = arith.mulf %140, %144 : vector<1x4x4x128xf32>
    %146 = arith.addf %139, %145 : vector<1x4x4x128xf32>
    %c0_95 = arith.constant 0 : index
    %c1_96 = arith.constant 1 : index
    %c2_97 = arith.constant 2 : index
    %c0_98 = arith.constant 0 : index
    %147 = tpu.strided_load %arg36[%c0_95, %c1_96, %c2_97, %c0_98] {strides = array<i32: 1, 2, 2, 1>} : memref<1x10x10x128xf32, #tpu.memory_space<vmem>>, vector<1x4x4x128xf32>
    %148 = vector.extract_strided_slice %110 {offsets = [5, 0], sizes = [1, 128], strides = [1, 1]} : vector<9x128xf32> to vector<1x128xf32>
    %149 = vector.shape_cast %148 : vector<1x128xf32> to vector<128xf32>
    %150 = vector.shape_cast %149 : vector<128xf32> to vector<1x1x1x128xf32>
    %151 = vector.broadcast %150 : vector<1x1x1x128xf32> to vector<1x4x4x128xf32>
    %152 = arith.mulf %147, %151 : vector<1x4x4x128xf32>
    %153 = arith.addf %146, %152 : vector<1x4x4x128xf32>
    %c0_99 = arith.constant 0 : index
    %c2_100 = arith.constant 2 : index
    %c0_101 = arith.constant 0 : index
    %c0_102 = arith.constant 0 : index
    %154 = tpu.strided_load %arg36[%c0_99, %c2_100, %c0_101, %c0_102] {strides = array<i32: 1, 2, 2, 1>} : memref<1x10x10x128xf32, #tpu.memory_space<vmem>>, vector<1x4x4x128xf32>
    %155 = vector.extract_strided_slice %110 {offsets = [6, 0], sizes = [1, 128], strides = [1, 1]} : vector<9x128xf32> to vector<1x128xf32>
    %156 = vector.shape_cast %155 : vector<1x128xf32> to vector<128xf32>
    %157 = vector.shape_cast %156 : vector<128xf32> to vector<1x1x1x128xf32>
    %158 = vector.broadcast %157 : vector<1x1x1x128xf32> to vector<1x4x4x128xf32>
    %159 = arith.mulf %154, %158 : vector<1x4x4x128xf32>
    %160 = arith.addf %153, %159 : vector<1x4x4x128xf32>
    %c0_103 = arith.constant 0 : index
    %c2_104 = arith.constant 2 : index
    %c1_105 = arith.constant 1 : index
    %c0_106 = arith.constant 0 : index
    %161 = tpu.strided_load %arg36[%c0_103, %c2_104, %c1_105, %c0_106] {strides = array<i32: 1, 2, 2, 1>} : memref<1x10x10x128xf32, #tpu.memory_space<vmem>>, vector<1x4x4x128xf32>
    %162 = vector.extract_strided_slice %110 {offsets = [7, 0], sizes = [1, 128], strides = [1, 1]} : vector<9x128xf32> to vector<1x128xf32>
    %163 = vector.shape_cast %162 : vector<1x128xf32> to vector<128xf32>
    %164 = vector.shape_cast %163 : vector<128xf32> to vector<1x1x1x128xf32>
    %165 = vector.broadcast %164 : vector<1x1x1x128xf32> to vector<1x4x4x128xf32>
    %166 = arith.mulf %161, %165 : vector<1x4x4x128xf32>
    %167 = arith.addf %160, %166 : vector<1x4x4x128xf32>
    %c0_107 = arith.constant 0 : index
    %c2_108 = arith.constant 2 : index
    %c2_109 = arith.constant 2 : index
    %c0_110 = arith.constant 0 : index
    %168 = tpu.strided_load %arg36[%c0_107, %c2_108, %c2_109, %c0_110] {strides = array<i32: 1, 2, 2, 1>} : memref<1x10x10x128xf32, #tpu.memory_space<vmem>>, vector<1x4x4x128xf32>
    %169 = vector.extract_strided_slice %110 {offsets = [8, 0], sizes = [1, 128], strides = [1, 1]} : vector<9x128xf32> to vector<1x128xf32>
    %170 = vector.shape_cast %169 : vector<1x128xf32> to vector<128xf32>
    %171 = vector.shape_cast %170 : vector<128xf32> to vector<1x1x1x128xf32>
    %172 = vector.broadcast %171 : vector<1x1x1x128xf32> to vector<1x4x4x128xf32>
    %173 = arith.mulf %168, %172 : vector<1x4x4x128xf32>
    %174 = arith.addf %167, %173 : vector<1x4x4x128xf32>
    %c0_111 = arith.constant 0 : index
    %c0_112 = arith.constant 0 : index
    %175 = vector.load %arg9[%c0_111, %c0_112] : memref<1x128xf32, #tpu.memory_space<vmem>>, vector<1x128xf32>
    %176 = vector.shape_cast %175 : vector<1x128xf32> to vector<1x1x1x128xf32>
    %177 = vector.broadcast %176 : vector<1x1x1x128xf32> to vector<1x4x4x128xf32>
    %178 = arith.addf %174, %177 : vector<1x4x4x128xf32>
    %cst_113 = arith.constant 0.000000e+00 : f32
    %cst_114 = arith.constant 6.000000e+00 : f32
    %179 = vector.broadcast %cst_113 : f32 to vector<1x4x4x128xf32>
    %180 = arith.maximumf %179, %178 : vector<1x4x4x128xf32>
    %181 = vector.broadcast %cst_114 : f32 to vector<1x4x4x128xf32>
    %182 = arith.minimumf %181, %180 : vector<1x4x4x128xf32>
    %183 = vector.shape_cast %182 : vector<1x4x4x128xf32> to vector<16x128xf32>
    %184 = arith.truncf %183 : vector<16x128xf32> to vector<16x128xbf16>
    %c0_115 = arith.constant 0 : index
    %c0_116 = arith.constant 0 : index
    %185 = vector.load %arg10[%c0_115, %c0_116] : memref<128x128xbf16, #tpu.memory_space<vmem>>, vector<128x128xbf16>
    %cst_117 = arith.constant dense<0.000000e+00> : vector<16x128xf32>
    %186 = tpu.matmul %184, %185, %cst_117 {dimension_numbers = #tpu.dot_dimension_numbers<[1], [0], [0], [1], [0, 0, 1, 1], [], []>} : vector<16x128xbf16>, vector<128x128xbf16>, vector<16x128xf32> -> vector<16x128xf32>
    %c0_118 = arith.constant 0 : index
    %c0_119 = arith.constant 0 : index
    %187 = vector.load %arg11[%c0_118, %c0_119] : memref<1x128xf32, #tpu.memory_space<vmem>>, vector<1x128xf32>
    %188 = vector.broadcast %187 : vector<1x128xf32> to vector<16x128xf32>
    %189 = arith.addf %186, %188 : vector<16x128xf32>
    %190 = vector.shape_cast %189 : vector<16x128xf32> to vector<1x4x4x128xf32>
    %cst_120 = arith.constant 0.000000e+00 : f32
    %191 = vector.broadcast %cst_120 : f32 to vector<1x6x6x128xf32>
    %c0_121 = arith.constant 0 : index
    %c0_122 = arith.constant 0 : index
    %c0_123 = arith.constant 0 : index
    %c0_124 = arith.constant 0 : index
    %192 = vector.load %arg37[%c0_121, %c0_122, %c0_123, %c0_124] : memref<1x6x6x128xf32, #tpu.memory_space<vmem>>, vector<1x6x6x128xf32>
    tpu.vector_store %arg37[%c0_121, %c0_122, %c0_123, %c0_124], %191 {strides = array<i32>} : memref<1x6x6x128xf32, #tpu.memory_space<vmem>>, vector<1x6x6x128xf32>,
    %c0_125 = arith.constant 0 : index
    %c1_126 = arith.constant 1 : index
    %c1_127 = arith.constant 1 : index
    %c0_128 = arith.constant 0 : index
    %193 = vector.load %arg37[%c0_125, %c1_126, %c1_127, %c0_128] : memref<1x6x6x128xf32, #tpu.memory_space<vmem>>, vector<1x4x4x128xf32>
    tpu.vector_store %arg37[%c0_125, %c1_126, %c1_127, %c0_128], %190 {strides = array<i32>} : memref<1x6x6x128xf32, #tpu.memory_space<vmem>>, vector<1x4x4x128xf32>,
    %c0_129 = arith.constant 0 : index
    %c0_130 = arith.constant 0 : index
    %194 = vector.load %arg12[%c0_129, %c0_130] : memref<9x128xf32, #tpu.memory_space<vmem>>, vector<9x128xf32>
    %cst_131 = arith.constant 0.000000e+00 : f32
    %195 = vector.broadcast %cst_131 : f32 to vector<1x2x2x128xf32>
    %c0_132 = arith.constant 0 : index
    %c0_133 = arith.constant 0 : index
    %c0_134 = arith.constant 0 : index
    %c0_135 = arith.constant 0 : index
    %196 = tpu.strided_load %arg37[%c0_132, %c0_133, %c0_134, %c0_135] {strides = array<i32: 1, 2, 2, 1>} : memref<1x6x6x128xf32, #tpu.memory_space<vmem>>, vector<1x2x2x128xf32>
    %197 = vector.extract_strided_slice %194 {offsets = [0, 0], sizes = [1, 128], strides = [1, 1]} : vector<9x128xf32> to vector<1x128xf32>
    %198 = vector.shape_cast %197 : vector<1x128xf32> to vector<128xf32>
    %199 = vector.shape_cast %198 : vector<128xf32> to vector<1x1x1x128xf32>
    %200 = vector.broadcast %199 : vector<1x1x1x128xf32> to vector<1x2x2x128xf32>
    %201 = arith.mulf %196, %200 : vector<1x2x2x128xf32>
    %202 = arith.addf %195, %201 : vector<1x2x2x128xf32>
    %c0_136 = arith.constant 0 : index
    %c0_137 = arith.constant 0 : index
    %c1_138 = arith.constant 1 : index
    %c0_139 = arith.constant 0 : index
    %203 = tpu.strided_load %arg37[%c0_136, %c0_137, %c1_138, %c0_139] {strides = array<i32: 1, 2, 2, 1>} : memref<1x6x6x128xf32, #tpu.memory_space<vmem>>, vector<1x2x2x128xf32>
    %204 = vector.extract_strided_slice %194 {offsets = [1, 0], sizes = [1, 128], strides = [1, 1]} : vector<9x128xf32> to vector<1x128xf32>
    %205 = vector.shape_cast %204 : vector<1x128xf32> to vector<128xf32>
    %206 = vector.shape_cast %205 : vector<128xf32> to vector<1x1x1x128xf32>
    %207 = vector.broadcast %206 : vector<1x1x1x128xf32> to vector<1x2x2x128xf32>
    %208 = arith.mulf %203, %207 : vector<1x2x2x128xf32>
    %209 = arith.addf %202, %208 : vector<1x2x2x128xf32>
    %c0_140 = arith.constant 0 : index
    %c0_141 = arith.constant 0 : index
    %c2_142 = arith.constant 2 : index
    %c0_143 = arith.constant 0 : index
    %210 = tpu.strided_load %arg37[%c0_140, %c0_141, %c2_142, %c0_143] {strides = array<i32: 1, 2, 2, 1>} : memref<1x6x6x128xf32, #tpu.memory_space<vmem>>, vector<1x2x2x128xf32>
    %211 = vector.extract_strided_slice %194 {offsets = [2, 0], sizes = [1, 128], strides = [1, 1]} : vector<9x128xf32> to vector<1x128xf32>
    %212 = vector.shape_cast %211 : vector<1x128xf32> to vector<128xf32>
    %213 = vector.shape_cast %212 : vector<128xf32> to vector<1x1x1x128xf32>
    %214 = vector.broadcast %213 : vector<1x1x1x128xf32> to vector<1x2x2x128xf32>
    %215 = arith.mulf %210, %214 : vector<1x2x2x128xf32>
    %216 = arith.addf %209, %215 : vector<1x2x2x128xf32>
    %c0_144 = arith.constant 0 : index
    %c1_145 = arith.constant 1 : index
    %c0_146 = arith.constant 0 : index
    %c0_147 = arith.constant 0 : index
    %217 = tpu.strided_load %arg37[%c0_144, %c1_145, %c0_146, %c0_147] {strides = array<i32: 1, 2, 2, 1>} : memref<1x6x6x128xf32, #tpu.memory_space<vmem>>, vector<1x2x2x128xf32>
    %218 = vector.extract_strided_slice %194 {offsets = [3, 0], sizes = [1, 128], strides = [1, 1]} : vector<9x128xf32> to vector<1x128xf32>
    %219 = vector.shape_cast %218 : vector<1x128xf32> to vector<128xf32>
    %220 = vector.shape_cast %219 : vector<128xf32> to vector<1x1x1x128xf32>
    %221 = vector.broadcast %220 : vector<1x1x1x128xf32> to vector<1x2x2x128xf32>
    %222 = arith.mulf %217, %221 : vector<1x2x2x128xf32>
    %223 = arith.addf %216, %222 : vector<1x2x2x128xf32>
    %c0_148 = arith.constant 0 : index
    %c1_149 = arith.constant 1 : index
    %c1_150 = arith.constant 1 : index
    %c0_151 = arith.constant 0 : index
    %224 = tpu.strided_load %arg37[%c0_148, %c1_149, %c1_150, %c0_151] {strides = array<i32: 1, 2, 2, 1>} : memref<1x6x6x128xf32, #tpu.memory_space<vmem>>, vector<1x2x2x128xf32>
    %225 = vector.extract_strided_slice %194 {offsets = [4, 0], sizes = [1, 128], strides = [1, 1]} : vector<9x128xf32> to vector<1x128xf32>
    %226 = vector.shape_cast %225 : vector<1x128xf32> to vector<128xf32>
    %227 = vector.shape_cast %226 : vector<128xf32> to vector<1x1x1x128xf32>
    %228 = vector.broadcast %227 : vector<1x1x1x128xf32> to vector<1x2x2x128xf32>
    %229 = arith.mulf %224, %228 : vector<1x2x2x128xf32>
    %230 = arith.addf %223, %229 : vector<1x2x2x128xf32>
    %c0_152 = arith.constant 0 : index
    %c1_153 = arith.constant 1 : index
    %c2_154 = arith.constant 2 : index
    %c0_155 = arith.constant 0 : index
    %231 = tpu.strided_load %arg37[%c0_152, %c1_153, %c2_154, %c0_155] {strides = array<i32: 1, 2, 2, 1>} : memref<1x6x6x128xf32, #tpu.memory_space<vmem>>, vector<1x2x2x128xf32>
    %232 = vector.extract_strided_slice %194 {offsets = [5, 0], sizes = [1, 128], strides = [1, 1]} : vector<9x128xf32> to vector<1x128xf32>
    %233 = vector.shape_cast %232 : vector<1x128xf32> to vector<128xf32>
    %234 = vector.shape_cast %233 : vector<128xf32> to vector<1x1x1x128xf32>
    %235 = vector.broadcast %234 : vector<1x1x1x128xf32> to vector<1x2x2x128xf32>
    %236 = arith.mulf %231, %235 : vector<1x2x2x128xf32>
    %237 = arith.addf %230, %236 : vector<1x2x2x128xf32>
    %c0_156 = arith.constant 0 : index
    %c2_157 = arith.constant 2 : index
    %c0_158 = arith.constant 0 : index
    %c0_159 = arith.constant 0 : index
    %238 = tpu.strided_load %arg37[%c0_156, %c2_157, %c0_158, %c0_159] {strides = array<i32: 1, 2, 2, 1>} : memref<1x6x6x128xf32, #tpu.memory_space<vmem>>, vector<1x2x2x128xf32>
    %239 = vector.extract_strided_slice %194 {offsets = [6, 0], sizes = [1, 128], strides = [1, 1]} : vector<9x128xf32> to vector<1x128xf32>
    %240 = vector.shape_cast %239 : vector<1x128xf32> to vector<128xf32>
    %241 = vector.shape_cast %240 : vector<128xf32> to vector<1x1x1x128xf32>
    %242 = vector.broadcast %241 : vector<1x1x1x128xf32> to vector<1x2x2x128xf32>
    %243 = arith.mulf %238, %242 : vector<1x2x2x128xf32>
    %244 = arith.addf %237, %243 : vector<1x2x2x128xf32>
    %c0_160 = arith.constant 0 : index
    %c2_161 = arith.constant 2 : index
    %c1_162 = arith.constant 1 : index
    %c0_163 = arith.constant 0 : index
    %245 = tpu.strided_load %arg37[%c0_160, %c2_161, %c1_162, %c0_163] {strides = array<i32: 1, 2, 2, 1>} : memref<1x6x6x128xf32, #tpu.memory_space<vmem>>, vector<1x2x2x128xf32>
    %246 = vector.extract_strided_slice %194 {offsets = [7, 0], sizes = [1, 128], strides = [1, 1]} : vector<9x128xf32> to vector<1x128xf32>
    %247 = vector.shape_cast %246 : vector<1x128xf32> to vector<128xf32>
    %248 = vector.shape_cast %247 : vector<128xf32> to vector<1x1x1x128xf32>
    %249 = vector.broadcast %248 : vector<1x1x1x128xf32> to vector<1x2x2x128xf32>
    %250 = arith.mulf %245, %249 : vector<1x2x2x128xf32>
    %251 = arith.addf %244, %250 : vector<1x2x2x128xf32>
    %c0_164 = arith.constant 0 : index
    %c2_165 = arith.constant 2 : index
    %c2_166 = arith.constant 2 : index
    %c0_167 = arith.constant 0 : index
    %252 = tpu.strided_load %arg37[%c0_164, %c2_165, %c2_166, %c0_167] {strides = array<i32: 1, 2, 2, 1>} : memref<1x6x6x128xf32, #tpu.memory_space<vmem>>, vector<1x2x2x128xf32>
    %253 = vector.extract_strided_slice %194 {offsets = [8, 0], sizes = [1, 128], strides = [1, 1]} : vector<9x128xf32> to vector<1x128xf32>
    %254 = vector.shape_cast %253 : vector<1x128xf32> to vector<128xf32>
    %255 = vector.shape_cast %254 : vector<128xf32> to vector<1x1x1x128xf32>
    %256 = vector.broadcast %255 : vector<1x1x1x128xf32> to vector<1x2x2x128xf32>
    %257 = arith.mulf %252, %256 : vector<1x2x2x128xf32>
    %258 = arith.addf %251, %257 : vector<1x2x2x128xf32>
    %c0_168 = arith.constant 0 : index
    %c0_169 = arith.constant 0 : index
    %259 = vector.load %arg13[%c0_168, %c0_169] : memref<1x128xf32, #tpu.memory_space<vmem>>, vector<1x128xf32>
    %260 = vector.shape_cast %259 : vector<1x128xf32> to vector<1x1x1x128xf32>
    %261 = vector.broadcast %260 : vector<1x1x1x128xf32> to vector<1x2x2x128xf32>
    %262 = arith.addf %258, %261 : vector<1x2x2x128xf32>
    %cst_170 = arith.constant 0.000000e+00 : f32
    %cst_171 = arith.constant 6.000000e+00 : f32
    %263 = vector.broadcast %cst_170 : f32 to vector<1x2x2x128xf32>
    %264 = arith.maximumf %263, %262 : vector<1x2x2x128xf32>
    %265 = vector.broadcast %cst_171 : f32 to vector<1x2x2x128xf32>
    %266 = arith.minimumf %265, %264 : vector<1x2x2x128xf32>
    %267 = vector.shape_cast %266 : vector<1x2x2x128xf32> to vector<4x128xf32>
    %268 = arith.truncf %267 : vector<4x128xf32> to vector<4x128xbf16>
    %c0_172 = arith.constant 0 : index
    %c0_173 = arith.constant 0 : index
    %269 = vector.load %arg14[%c0_172, %c0_173] : memref<128x128xbf16, #tpu.memory_space<vmem>>, vector<128x128xbf16>
    %cst_174 = arith.constant dense<0.000000e+00> : vector<4x128xf32>
    %270 = tpu.matmul %268, %269, %cst_174 {dimension_numbers = #tpu.dot_dimension_numbers<[1], [0], [0], [1], [0, 0, 1, 1], [], []>} : vector<4x128xbf16>, vector<128x128xbf16>, vector<4x128xf32> -> vector<4x128xf32>
    %c0_175 = arith.constant 0 : index
    %c0_176 = arith.constant 0 : index
    %271 = vector.load %arg15[%c0_175, %c0_176] : memref<1x128xf32, #tpu.memory_space<vmem>>, vector<1x128xf32>
    %272 = vector.broadcast %271 : vector<1x128xf32> to vector<4x128xf32>
    %273 = arith.addf %270, %272 : vector<4x128xf32>
    %274 = vector.shape_cast %273 : vector<4x128xf32> to vector<1x2x2x128xf32>
    %cst_177 = arith.constant 0.000000e+00 : f32
    %275 = vector.broadcast %cst_177 : f32 to vector<1x4x4x128xf32>
    %c0_178 = arith.constant 0 : index
    %c0_179 = arith.constant 0 : index
    %c0_180 = arith.constant 0 : index
    %c0_181 = arith.constant 0 : index
    %276 = vector.load %arg38[%c0_178, %c0_179, %c0_180, %c0_181] : memref<1x4x4x128xf32, #tpu.memory_space<vmem>>, vector<1x4x4x128xf32>
    tpu.vector_store %arg38[%c0_178, %c0_179, %c0_180, %c0_181], %275 {strides = array<i32>} : memref<1x4x4x128xf32, #tpu.memory_space<vmem>>, vector<1x4x4x128xf32>,
    %c0_182 = arith.constant 0 : index
    %c1_183 = arith.constant 1 : index
    %c1_184 = arith.constant 1 : index
    %c0_185 = arith.constant 0 : index
    %277 = vector.load %arg38[%c0_182, %c1_183, %c1_184, %c0_185] : memref<1x4x4x128xf32, #tpu.memory_space<vmem>>, vector<1x2x2x128xf32>
    tpu.vector_store %arg38[%c0_182, %c1_183, %c1_184, %c0_185], %274 {strides = array<i32>} : memref<1x4x4x128xf32, #tpu.memory_space<vmem>>, vector<1x2x2x128xf32>,
    %c0_186 = arith.constant 0 : index
    %c0_187 = arith.constant 0 : index
    %278 = vector.load %arg16[%c0_186, %c0_187] : memref<9x128xf32, #tpu.memory_space<vmem>>, vector<9x128xf32>
    %cst_188 = arith.constant 0.000000e+00 : f32
    %279 = vector.broadcast %cst_188 : f32 to vector<1x2x2x128xf32>
    %c0_189 = arith.constant 0 : index
    %c0_190 = arith.constant 0 : index
    %c0_191 = arith.constant 0 : index
    %c0_192 = arith.constant 0 : index
    %280 = vector.load %arg38[%c0_189, %c0_190, %c0_191, %c0_192] : memref<1x4x4x128xf32, #tpu.memory_space<vmem>>, vector<1x2x2x128xf32>
    %281 = vector.extract_strided_slice %278 {offsets = [0, 0], sizes = [1, 128], strides = [1, 1]} : vector<9x128xf32> to vector<1x128xf32>
    %282 = vector.shape_cast %281 : vector<1x128xf32> to vector<128xf32>
    %283 = vector.shape_cast %282 : vector<128xf32> to vector<1x1x1x128xf32>
    %284 = vector.broadcast %283 : vector<1x1x1x128xf32> to vector<1x2x2x128xf32>
    %285 = arith.mulf %280, %284 : vector<1x2x2x128xf32>
    %286 = arith.addf %279, %285 : vector<1x2x2x128xf32>
    %c0_193 = arith.constant 0 : index
    %c0_194 = arith.constant 0 : index
    %c1_195 = arith.constant 1 : index
    %c0_196 = arith.constant 0 : index
    %287 = vector.load %arg38[%c0_193, %c0_194, %c1_195, %c0_196] : memref<1x4x4x128xf32, #tpu.memory_space<vmem>>, vector<1x2x2x128xf32>
    %288 = vector.extract_strided_slice %278 {offsets = [1, 0], sizes = [1, 128], strides = [1, 1]} : vector<9x128xf32> to vector<1x128xf32>
    %289 = vector.shape_cast %288 : vector<1x128xf32> to vector<128xf32>
    %290 = vector.shape_cast %289 : vector<128xf32> to vector<1x1x1x128xf32>
    %291 = vector.broadcast %290 : vector<1x1x1x128xf32> to vector<1x2x2x128xf32>
    %292 = arith.mulf %287, %291 : vector<1x2x2x128xf32>
    %293 = arith.addf %286, %292 : vector<1x2x2x128xf32>
    %c0_197 = arith.constant 0 : index
    %c0_198 = arith.constant 0 : index
    %c2_199 = arith.constant 2 : index
    %c0_200 = arith.constant 0 : index
    %294 = vector.load %arg38[%c0_197, %c0_198, %c2_199, %c0_200] : memref<1x4x4x128xf32, #tpu.memory_space<vmem>>, vector<1x2x2x128xf32>
    %295 = vector.extract_strided_slice %278 {offsets = [2, 0], sizes = [1, 128], strides = [1, 1]} : vector<9x128xf32> to vector<1x128xf32>
    %296 = vector.shape_cast %295 : vector<1x128xf32> to vector<128xf32>
    %297 = vector.shape_cast %296 : vector<128xf32> to vector<1x1x1x128xf32>
    %298 = vector.broadcast %297 : vector<1x1x1x128xf32> to vector<1x2x2x128xf32>
    %299 = arith.mulf %294, %298 : vector<1x2x2x128xf32>
    %300 = arith.addf %293, %299 : vector<1x2x2x128xf32>
    %c0_201 = arith.constant 0 : index
    %c1_202 = arith.constant 1 : index
    %c0_203 = arith.constant 0 : index
    %c0_204 = arith.constant 0 : index
    %301 = vector.load %arg38[%c0_201, %c1_202, %c0_203, %c0_204] : memref<1x4x4x128xf32, #tpu.memory_space<vmem>>, vector<1x2x2x128xf32>
    %302 = vector.extract_strided_slice %278 {offsets = [3, 0], sizes = [1, 128], strides = [1, 1]} : vector<9x128xf32> to vector<1x128xf32>
    %303 = vector.shape_cast %302 : vector<1x128xf32> to vector<128xf32>
    %304 = vector.shape_cast %303 : vector<128xf32> to vector<1x1x1x128xf32>
    %305 = vector.broadcast %304 : vector<1x1x1x128xf32> to vector<1x2x2x128xf32>
    %306 = arith.mulf %301, %305 : vector<1x2x2x128xf32>
    %307 = arith.addf %300, %306 : vector<1x2x2x128xf32>
    %c0_205 = arith.constant 0 : index
    %c1_206 = arith.constant 1 : index
    %c1_207 = arith.constant 1 : index
    %c0_208 = arith.constant 0 : index
    %308 = vector.load %arg38[%c0_205, %c1_206, %c1_207, %c0_208] : memref<1x4x4x128xf32, #tpu.memory_space<vmem>>, vector<1x2x2x128xf32>
    %309 = vector.extract_strided_slice %278 {offsets = [4, 0], sizes = [1, 128], strides = [1, 1]} : vector<9x128xf32> to vector<1x128xf32>
    %310 = vector.shape_cast %309 : vector<1x128xf32> to vector<128xf32>
    %311 = vector.shape_cast %310 : vector<128xf32> to vector<1x1x1x128xf32>
    %312 = vector.broadcast %311 : vector<1x1x1x128xf32> to vector<1x2x2x128xf32>
    %313 = arith.mulf %308, %312 : vector<1x2x2x128xf32>
    %314 = arith.addf %307, %313 : vector<1x2x2x128xf32>
    %c0_209 = arith.constant 0 : index
    %c1_210 = arith.constant 1 : index
    %c2_211 = arith.constant 2 : index
    %c0_212 = arith.constant 0 : index
    %315 = vector.load %arg38[%c0_209, %c1_210, %c2_211, %c0_212] : memref<1x4x4x128xf32, #tpu.memory_space<vmem>>, vector<1x2x2x128xf32>
    %316 = vector.extract_strided_slice %278 {offsets = [5, 0], sizes = [1, 128], strides = [1, 1]} : vector<9x128xf32> to vector<1x128xf32>
    %317 = vector.shape_cast %316 : vector<1x128xf32> to vector<128xf32>
    %318 = vector.shape_cast %317 : vector<128xf32> to vector<1x1x1x128xf32>
    %319 = vector.broadcast %318 : vector<1x1x1x128xf32> to vector<1x2x2x128xf32>
    %320 = arith.mulf %315, %319 : vector<1x2x2x128xf32>
    %321 = arith.addf %314, %320 : vector<1x2x2x128xf32>
    %c0_213 = arith.constant 0 : index
    %c2_214 = arith.constant 2 : index
    %c0_215 = arith.constant 0 : index
    %c0_216 = arith.constant 0 : index
    %322 = vector.load %arg38[%c0_213, %c2_214, %c0_215, %c0_216] : memref<1x4x4x128xf32, #tpu.memory_space<vmem>>, vector<1x2x2x128xf32>
    %323 = vector.extract_strided_slice %278 {offsets = [6, 0], sizes = [1, 128], strides = [1, 1]} : vector<9x128xf32> to vector<1x128xf32>
    %324 = vector.shape_cast %323 : vector<1x128xf32> to vector<128xf32>
    %325 = vector.shape_cast %324 : vector<128xf32> to vector<1x1x1x128xf32>
    %326 = vector.broadcast %325 : vector<1x1x1x128xf32> to vector<1x2x2x128xf32>
    %327 = arith.mulf %322, %326 : vector<1x2x2x128xf32>
    %328 = arith.addf %321, %327 : vector<1x2x2x128xf32>
    %c0_217 = arith.constant 0 : index
    %c2_218 = arith.constant 2 : index
    %c1_219 = arith.constant 1 : index
    %c0_220 = arith.constant 0 : index
    %329 = vector.load %arg38[%c0_217, %c2_218, %c1_219, %c0_220] : memref<1x4x4x128xf32, #tpu.memory_space<vmem>>, vector<1x2x2x128xf32>
    %330 = vector.extract_strided_slice %278 {offsets = [7, 0], sizes = [1, 128], strides = [1, 1]} : vector<9x128xf32> to vector<1x128xf32>
    %331 = vector.shape_cast %330 : vector<1x128xf32> to vector<128xf32>
    %332 = vector.shape_cast %331 : vector<128xf32> to vector<1x1x1x128xf32>
    %333 = vector.broadcast %332 : vector<1x1x1x128xf32> to vector<1x2x2x128xf32>
    %334 = arith.mulf %329, %333 : vector<1x2x2x128xf32>
    %335 = arith.addf %328, %334 : vector<1x2x2x128xf32>
    %c0_221 = arith.constant 0 : index
    %c2_222 = arith.constant 2 : index
    %c2_223 = arith.constant 2 : index
    %c0_224 = arith.constant 0 : index
    %336 = vector.load %arg38[%c0_221, %c2_222, %c2_223, %c0_224] : memref<1x4x4x128xf32, #tpu.memory_space<vmem>>, vector<1x2x2x128xf32>
    %337 = vector.extract_strided_slice %278 {offsets = [8, 0], sizes = [1, 128], strides = [1, 1]} : vector<9x128xf32> to vector<1x128xf32>
    %338 = vector.shape_cast %337 : vector<1x128xf32> to vector<128xf32>
    %339 = vector.shape_cast %338 : vector<128xf32> to vector<1x1x1x128xf32>
    %340 = vector.broadcast %339 : vector<1x1x1x128xf32> to vector<1x2x2x128xf32>
    %341 = arith.mulf %336, %340 : vector<1x2x2x128xf32>
    %342 = arith.addf %335, %341 : vector<1x2x2x128xf32>
    %c0_225 = arith.constant 0 : index
    %c0_226 = arith.constant 0 : index
    %343 = vector.load %arg17[%c0_225, %c0_226] : memref<1x128xf32, #tpu.memory_space<vmem>>, vector<1x128xf32>
    %344 = vector.shape_cast %343 : vector<1x128xf32> to vector<1x1x1x128xf32>
    %345 = vector.broadcast %344 : vector<1x1x1x128xf32> to vector<1x2x2x128xf32>
    %346 = arith.addf %342, %345 : vector<1x2x2x128xf32>
    %cst_227 = arith.constant 0.000000e+00 : f32
    %cst_228 = arith.constant 6.000000e+00 : f32
    %347 = vector.broadcast %cst_227 : f32 to vector<1x2x2x128xf32>
    %348 = arith.maximumf %347, %346 : vector<1x2x2x128xf32>
    %349 = vector.broadcast %cst_228 : f32 to vector<1x2x2x128xf32>
    %350 = arith.minimumf %349, %348 : vector<1x2x2x128xf32>
    %351 = vector.shape_cast %350 : vector<1x2x2x128xf32> to vector<4x128xf32>
    %352 = arith.truncf %351 : vector<4x128xf32> to vector<4x128xbf16>
    %c0_229 = arith.constant 0 : index
    %c0_230 = arith.constant 0 : index
    %353 = vector.load %arg18[%c0_229, %c0_230] : memref<128x128xbf16, #tpu.memory_space<vmem>>, vector<128x128xbf16>
    %cst_231 = arith.constant dense<0.000000e+00> : vector<4x128xf32>
    %354 = tpu.matmul %352, %353, %cst_231 {dimension_numbers = #tpu.dot_dimension_numbers<[1], [0], [0], [1], [0, 0, 1, 1], [], []>} : vector<4x128xbf16>, vector<128x128xbf16>, vector<4x128xf32> -> vector<4x128xf32>
    %c0_232 = arith.constant 0 : index
    %c0_233 = arith.constant 0 : index
    %355 = vector.load %arg19[%c0_232, %c0_233] : memref<1x128xf32, #tpu.memory_space<vmem>>, vector<1x128xf32>
    %356 = vector.broadcast %355 : vector<1x128xf32> to vector<4x128xf32>
    %357 = arith.addf %354, %356 : vector<4x128xf32>
    %358 = vector.shape_cast %357 : vector<4x128xf32> to vector<1x2x2x128xf32>
    %cst_234 = arith.constant 0.000000e+00 : f32
    %359 = vector.broadcast %cst_234 : f32 to vector<1x4x4x128xf32>
    %c0_235 = arith.constant 0 : index
    %c0_236 = arith.constant 0 : index
    %c0_237 = arith.constant 0 : index
    %c0_238 = arith.constant 0 : index
    %360 = vector.load %arg39[%c0_235, %c0_236, %c0_237, %c0_238] : memref<1x4x4x128xf32, #tpu.memory_space<vmem>>, vector<1x4x4x128xf32>
    tpu.vector_store %arg39[%c0_235, %c0_236, %c0_237, %c0_238], %359 {strides = array<i32>} : memref<1x4x4x128xf32, #tpu.memory_space<vmem>>, vector<1x4x4x128xf32>,
    %c0_239 = arith.constant 0 : index
    %c1_240 = arith.constant 1 : index
    %c1_241 = arith.constant 1 : index
    %c0_242 = arith.constant 0 : index
    %361 = vector.load %arg39[%c0_239, %c1_240, %c1_241, %c0_242] : memref<1x4x4x128xf32, #tpu.memory_space<vmem>>, vector<1x2x2x128xf32>
    tpu.vector_store %arg39[%c0_239, %c1_240, %c1_241, %c0_242], %358 {strides = array<i32>} : memref<1x4x4x128xf32, #tpu.memory_space<vmem>>, vector<1x2x2x128xf32>,
    %c0_243 = arith.constant 0 : index
    %c0_244 = arith.constant 0 : index
    %362 = vector.load %arg20[%c0_243, %c0_244] : memref<9x128xf32, #tpu.memory_space<vmem>>, vector<9x128xf32>
    %cst_245 = arith.constant 0.000000e+00 : f32
    %363 = vector.broadcast %cst_245 : f32 to vector<1x2x2x128xf32>
    %c0_246 = arith.constant 0 : index
    %c0_247 = arith.constant 0 : index
    %c0_248 = arith.constant 0 : index
    %c0_249 = arith.constant 0 : index
    %364 = vector.load %arg39[%c0_246, %c0_247, %c0_248, %c0_249] : memref<1x4x4x128xf32, #tpu.memory_space<vmem>>, vector<1x2x2x128xf32>
    %365 = vector.extract_strided_slice %362 {offsets = [0, 0], sizes = [1, 128], strides = [1, 1]} : vector<9x128xf32> to vector<1x128xf32>
    %366 = vector.shape_cast %365 : vector<1x128xf32> to vector<128xf32>
    %367 = vector.shape_cast %366 : vector<128xf32> to vector<1x1x1x128xf32>
    %368 = vector.broadcast %367 : vector<1x1x1x128xf32> to vector<1x2x2x128xf32>
    %369 = arith.mulf %364, %368 : vector<1x2x2x128xf32>
    %370 = arith.addf %363, %369 : vector<1x2x2x128xf32>
    %c0_250 = arith.constant 0 : index
    %c0_251 = arith.constant 0 : index
    %c1_252 = arith.constant 1 : index
    %c0_253 = arith.constant 0 : index
    %371 = vector.load %arg39[%c0_250, %c0_251, %c1_252, %c0_253] : memref<1x4x4x128xf32, #tpu.memory_space<vmem>>, vector<1x2x2x128xf32>
    %372 = vector.extract_strided_slice %362 {offsets = [1, 0], sizes = [1, 128], strides = [1, 1]} : vector<9x128xf32> to vector<1x128xf32>
    %373 = vector.shape_cast %372 : vector<1x128xf32> to vector<128xf32>
    %374 = vector.shape_cast %373 : vector<128xf32> to vector<1x1x1x128xf32>
    %375 = vector.broadcast %374 : vector<1x1x1x128xf32> to vector<1x2x2x128xf32>
    %376 = arith.mulf %371, %375 : vector<1x2x2x128xf32>
    %377 = arith.addf %370, %376 : vector<1x2x2x128xf32>
    %c0_254 = arith.constant 0 : index
    %c0_255 = arith.constant 0 : index
    %c2_256 = arith.constant 2 : index
    %c0_257 = arith.constant 0 : index
    %378 = vector.load %arg39[%c0_254, %c0_255, %c2_256, %c0_257] : memref<1x4x4x128xf32, #tpu.memory_space<vmem>>, vector<1x2x2x128xf32>
    %379 = vector.extract_strided_slice %362 {offsets = [2, 0], sizes = [1, 128], strides = [1, 1]} : vector<9x128xf32> to vector<1x128xf32>
    %380 = vector.shape_cast %379 : vector<1x128xf32> to vector<128xf32>
    %381 = vector.shape_cast %380 : vector<128xf32> to vector<1x1x1x128xf32>
    %382 = vector.broadcast %381 : vector<1x1x1x128xf32> to vector<1x2x2x128xf32>
    %383 = arith.mulf %378, %382 : vector<1x2x2x128xf32>
    %384 = arith.addf %377, %383 : vector<1x2x2x128xf32>
    %c0_258 = arith.constant 0 : index
    %c1_259 = arith.constant 1 : index
    %c0_260 = arith.constant 0 : index
    %c0_261 = arith.constant 0 : index
    %385 = vector.load %arg39[%c0_258, %c1_259, %c0_260, %c0_261] : memref<1x4x4x128xf32, #tpu.memory_space<vmem>>, vector<1x2x2x128xf32>
    %386 = vector.extract_strided_slice %362 {offsets = [3, 0], sizes = [1, 128], strides = [1, 1]} : vector<9x128xf32> to vector<1x128xf32>
    %387 = vector.shape_cast %386 : vector<1x128xf32> to vector<128xf32>
    %388 = vector.shape_cast %387 : vector<128xf32> to vector<1x1x1x128xf32>
    %389 = vector.broadcast %388 : vector<1x1x1x128xf32> to vector<1x2x2x128xf32>
    %390 = arith.mulf %385, %389 : vector<1x2x2x128xf32>
    %391 = arith.addf %384, %390 : vector<1x2x2x128xf32>
    %c0_262 = arith.constant 0 : index
    %c1_263 = arith.constant 1 : index
    %c1_264 = arith.constant 1 : index
    %c0_265 = arith.constant 0 : index
    %392 = vector.load %arg39[%c0_262, %c1_263, %c1_264, %c0_265] : memref<1x4x4x128xf32, #tpu.memory_space<vmem>>, vector<1x2x2x128xf32>
    %393 = vector.extract_strided_slice %362 {offsets = [4, 0], sizes = [1, 128], strides = [1, 1]} : vector<9x128xf32> to vector<1x128xf32>
    %394 = vector.shape_cast %393 : vector<1x128xf32> to vector<128xf32>
    %395 = vector.shape_cast %394 : vector<128xf32> to vector<1x1x1x128xf32>
    %396 = vector.broadcast %395 : vector<1x1x1x128xf32> to vector<1x2x2x128xf32>
    %397 = arith.mulf %392, %396 : vector<1x2x2x128xf32>
    %398 = arith.addf %391, %397 : vector<1x2x2x128xf32>
    %c0_266 = arith.constant 0 : index
    %c1_267 = arith.constant 1 : index
    %c2_268 = arith.constant 2 : index
    %c0_269 = arith.constant 0 : index
    %399 = vector.load %arg39[%c0_266, %c1_267, %c2_268, %c0_269] : memref<1x4x4x128xf32, #tpu.memory_space<vmem>>, vector<1x2x2x128xf32>
    %400 = vector.extract_strided_slice %362 {offsets = [5, 0], sizes = [1, 128], strides = [1, 1]} : vector<9x128xf32> to vector<1x128xf32>
    %401 = vector.shape_cast %400 : vector<1x128xf32> to vector<128xf32>
    %402 = vector.shape_cast %401 : vector<128xf32> to vector<1x1x1x128xf32>
    %403 = vector.broadcast %402 : vector<1x1x1x128xf32> to vector<1x2x2x128xf32>
    %404 = arith.mulf %399, %403 : vector<1x2x2x128xf32>
    %405 = arith.addf %398, %404 : vector<1x2x2x128xf32>
    %c0_270 = arith.constant 0 : index
    %c2_271 = arith.constant 2 : index
    %c0_272 = arith.constant 0 : index
    %c0_273 = arith.constant 0 : index
    %406 = vector.load %arg39[%c0_270, %c2_271, %c0_272, %c0_273] : memref<1x4x4x128xf32, #tpu.memory_space<vmem>>, vector<1x2x2x128xf32>
    %407 = vector.extract_strided_slice %362 {offsets = [6, 0], sizes = [1, 128], strides = [1, 1]} : vector<9x128xf32> to vector<1x128xf32>
    %408 = vector.shape_cast %407 : vector<1x128xf32> to vector<128xf32>
    %409 = vector.shape_cast %408 : vector<128xf32> to vector<1x1x1x128xf32>
    %410 = vector.broadcast %409 : vector<1x1x1x128xf32> to vector<1x2x2x128xf32>
    %411 = arith.mulf %406, %410 : vector<1x2x2x128xf32>
    %412 = arith.addf %405, %411 : vector<1x2x2x128xf32>
    %c0_274 = arith.constant 0 : index
    %c2_275 = arith.constant 2 : index
    %c1_276 = arith.constant 1 : index
    %c0_277 = arith.constant 0 : index
    %413 = vector.load %arg39[%c0_274, %c2_275, %c1_276, %c0_277] : memref<1x4x4x128xf32, #tpu.memory_space<vmem>>, vector<1x2x2x128xf32>
    %414 = vector.extract_strided_slice %362 {offsets = [7, 0], sizes = [1, 128], strides = [1, 1]} : vector<9x128xf32> to vector<1x128xf32>
    %415 = vector.shape_cast %414 : vector<1x128xf32> to vector<128xf32>
    %416 = vector.shape_cast %415 : vector<128xf32> to vector<1x1x1x128xf32>
    %417 = vector.broadcast %416 : vector<1x1x1x128xf32> to vector<1x2x2x128xf32>
    %418 = arith.mulf %413, %417 : vector<1x2x2x128xf32>
    %419 = arith.addf %412, %418 : vector<1x2x2x128xf32>
    %c0_278 = arith.constant 0 : index
    %c2_279 = arith.constant 2 : index
    %c2_280 = arith.constant 2 : index
    %c0_281 = arith.constant 0 : index
    %420 = vector.load %arg39[%c0_278, %c2_279, %c2_280, %c0_281] : memref<1x4x4x128xf32, #tpu.memory_space<vmem>>, vector<1x2x2x128xf32>
    %421 = vector.extract_strided_slice %362 {offsets = [8, 0], sizes = [1, 128], strides = [1, 1]} : vector<9x128xf32> to vector<1x128xf32>
    %422 = vector.shape_cast %421 : vector<1x128xf32> to vector<128xf32>
    %423 = vector.shape_cast %422 : vector<128xf32> to vector<1x1x1x128xf32>
    %424 = vector.broadcast %423 : vector<1x1x1x128xf32> to vector<1x2x2x128xf32>
    %425 = arith.mulf %420, %424 : vector<1x2x2x128xf32>
    %426 = arith.addf %419, %425 : vector<1x2x2x128xf32>
    %c0_282 = arith.constant 0 : index
    %c0_283 = arith.constant 0 : index
    %427 = vector.load %arg21[%c0_282, %c0_283] : memref<1x128xf32, #tpu.memory_space<vmem>>, vector<1x128xf32>
    %428 = vector.shape_cast %427 : vector<1x128xf32> to vector<1x1x1x128xf32>
    %429 = vector.broadcast %428 : vector<1x1x1x128xf32> to vector<1x2x2x128xf32>
    %430 = arith.addf %426, %429 : vector<1x2x2x128xf32>
    %cst_284 = arith.constant 0.000000e+00 : f32
    %cst_285 = arith.constant 6.000000e+00 : f32
    %431 = vector.broadcast %cst_284 : f32 to vector<1x2x2x128xf32>
    %432 = arith.maximumf %431, %430 : vector<1x2x2x128xf32>
    %433 = vector.broadcast %cst_285 : f32 to vector<1x2x2x128xf32>
    %434 = arith.minimumf %433, %432 : vector<1x2x2x128xf32>
    %435 = vector.shape_cast %434 : vector<1x2x2x128xf32> to vector<4x128xf32>
    %436 = arith.truncf %435 : vector<4x128xf32> to vector<4x128xbf16>
    %c0_286 = arith.constant 0 : index
    %c0_287 = arith.constant 0 : index
    %437 = vector.load %arg22[%c0_286, %c0_287] : memref<128x128xbf16, #tpu.memory_space<vmem>>, vector<128x128xbf16>
    %cst_288 = arith.constant dense<0.000000e+00> : vector<4x128xf32>
    %438 = tpu.matmul %436, %437, %cst_288 {dimension_numbers = #tpu.dot_dimension_numbers<[1], [0], [0], [1], [0, 0, 1, 1], [], []>} : vector<4x128xbf16>, vector<128x128xbf16>, vector<4x128xf32> -> vector<4x128xf32>
    %c0_289 = arith.constant 0 : index
    %c0_290 = arith.constant 0 : index
    %439 = vector.load %arg23[%c0_289, %c0_290] : memref<1x128xf32, #tpu.memory_space<vmem>>, vector<1x128xf32>
    %440 = vector.broadcast %439 : vector<1x128xf32> to vector<4x128xf32>
    %441 = arith.addf %438, %440 : vector<4x128xf32>
    %442 = vector.shape_cast %441 : vector<4x128xf32> to vector<1x2x2x128xf32>
    %cst_291 = arith.constant 0.000000e+00 : f32
    %443 = vector.broadcast %cst_291 : f32 to vector<1x4x4x128xf32>
    %c0_292 = arith.constant 0 : index
    %c0_293 = arith.constant 0 : index
    %c0_294 = arith.constant 0 : index
    %c0_295 = arith.constant 0 : index
    %444 = vector.load %arg40[%c0_292, %c0_293, %c0_294, %c0_295] : memref<1x4x4x128xf32, #tpu.memory_space<vmem>>, vector<1x4x4x128xf32>
    tpu.vector_store %arg40[%c0_292, %c0_293, %c0_294, %c0_295], %443 {strides = array<i32>} : memref<1x4x4x128xf32, #tpu.memory_space<vmem>>, vector<1x4x4x128xf32>,
    %c0_296 = arith.constant 0 : index
    %c1_297 = arith.constant 1 : index
    %c1_298 = arith.constant 1 : index
    %c0_299 = arith.constant 0 : index
    %445 = vector.load %arg40[%c0_296, %c1_297, %c1_298, %c0_299] : memref<1x4x4x128xf32, #tpu.memory_space<vmem>>, vector<1x2x2x128xf32>
    tpu.vector_store %arg40[%c0_296, %c1_297, %c1_298, %c0_299], %442 {strides = array<i32>} : memref<1x4x4x128xf32, #tpu.memory_space<vmem>>, vector<1x2x2x128xf32>,
    %c0_300 = arith.constant 0 : index
    %c0_301 = arith.constant 0 : index
    %446 = vector.load %arg24[%c0_300, %c0_301] : memref<9x128xf32, #tpu.memory_space<vmem>>, vector<9x128xf32>
    %cst_302 = arith.constant 0.000000e+00 : f32
    %447 = vector.broadcast %cst_302 : f32 to vector<1x2x2x128xf32>
    %c0_303 = arith.constant 0 : index
    %c0_304 = arith.constant 0 : index
    %c0_305 = arith.constant 0 : index
    %c0_306 = arith.constant 0 : index
    %448 = vector.load %arg40[%c0_303, %c0_304, %c0_305, %c0_306] : memref<1x4x4x128xf32, #tpu.memory_space<vmem>>, vector<1x2x2x128xf32>
    %449 = vector.extract_strided_slice %446 {offsets = [0, 0], sizes = [1, 128], strides = [1, 1]} : vector<9x128xf32> to vector<1x128xf32>
    %450 = vector.shape_cast %449 : vector<1x128xf32> to vector<128xf32>
    %451 = vector.shape_cast %450 : vector<128xf32> to vector<1x1x1x128xf32>
    %452 = vector.broadcast %451 : vector<1x1x1x128xf32> to vector<1x2x2x128xf32>
    %453 = arith.mulf %448, %452 : vector<1x2x2x128xf32>
    %454 = arith.addf %447, %453 : vector<1x2x2x128xf32>
    %c0_307 = arith.constant 0 : index
    %c0_308 = arith.constant 0 : index
    %c1_309 = arith.constant 1 : index
    %c0_310 = arith.constant 0 : index
    %455 = vector.load %arg40[%c0_307, %c0_308, %c1_309, %c0_310] : memref<1x4x4x128xf32, #tpu.memory_space<vmem>>, vector<1x2x2x128xf32>
    %456 = vector.extract_strided_slice %446 {offsets = [1, 0], sizes = [1, 128], strides = [1, 1]} : vector<9x128xf32> to vector<1x128xf32>
    %457 = vector.shape_cast %456 : vector<1x128xf32> to vector<128xf32>
    %458 = vector.shape_cast %457 : vector<128xf32> to vector<1x1x1x128xf32>
    %459 = vector.broadcast %458 : vector<1x1x1x128xf32> to vector<1x2x2x128xf32>
    %460 = arith.mulf %455, %459 : vector<1x2x2x128xf32>
    %461 = arith.addf %454, %460 : vector<1x2x2x128xf32>
    %c0_311 = arith.constant 0 : index
    %c0_312 = arith.constant 0 : index
    %c2_313 = arith.constant 2 : index
    %c0_314 = arith.constant 0 : index
    %462 = vector.load %arg40[%c0_311, %c0_312, %c2_313, %c0_314] : memref<1x4x4x128xf32, #tpu.memory_space<vmem>>, vector<1x2x2x128xf32>
    %463 = vector.extract_strided_slice %446 {offsets = [2, 0], sizes = [1, 128], strides = [1, 1]} : vector<9x128xf32> to vector<1x128xf32>
    %464 = vector.shape_cast %463 : vector<1x128xf32> to vector<128xf32>
    %465 = vector.shape_cast %464 : vector<128xf32> to vector<1x1x1x128xf32>
    %466 = vector.broadcast %465 : vector<1x1x1x128xf32> to vector<1x2x2x128xf32>
    %467 = arith.mulf %462, %466 : vector<1x2x2x128xf32>
    %468 = arith.addf %461, %467 : vector<1x2x2x128xf32>
    %c0_315 = arith.constant 0 : index
    %c1_316 = arith.constant 1 : index
    %c0_317 = arith.constant 0 : index
    %c0_318 = arith.constant 0 : index
    %469 = vector.load %arg40[%c0_315, %c1_316, %c0_317, %c0_318] : memref<1x4x4x128xf32, #tpu.memory_space<vmem>>, vector<1x2x2x128xf32>
    %470 = vector.extract_strided_slice %446 {offsets = [3, 0], sizes = [1, 128], strides = [1, 1]} : vector<9x128xf32> to vector<1x128xf32>
    %471 = vector.shape_cast %470 : vector<1x128xf32> to vector<128xf32>
    %472 = vector.shape_cast %471 : vector<128xf32> to vector<1x1x1x128xf32>
    %473 = vector.broadcast %472 : vector<1x1x1x128xf32> to vector<1x2x2x128xf32>
    %474 = arith.mulf %469, %473 : vector<1x2x2x128xf32>
    %475 = arith.addf %468, %474 : vector<1x2x2x128xf32>
    %c0_319 = arith.constant 0 : index
    %c1_320 = arith.constant 1 : index
    %c1_321 = arith.constant 1 : index
    %c0_322 = arith.constant 0 : index
    %476 = vector.load %arg40[%c0_319, %c1_320, %c1_321, %c0_322] : memref<1x4x4x128xf32, #tpu.memory_space<vmem>>, vector<1x2x2x128xf32>
    %477 = vector.extract_strided_slice %446 {offsets = [4, 0], sizes = [1, 128], strides = [1, 1]} : vector<9x128xf32> to vector<1x128xf32>
    %478 = vector.shape_cast %477 : vector<1x128xf32> to vector<128xf32>
    %479 = vector.shape_cast %478 : vector<128xf32> to vector<1x1x1x128xf32>
    %480 = vector.broadcast %479 : vector<1x1x1x128xf32> to vector<1x2x2x128xf32>
    %481 = arith.mulf %476, %480 : vector<1x2x2x128xf32>
    %482 = arith.addf %475, %481 : vector<1x2x2x128xf32>
    %c0_323 = arith.constant 0 : index
    %c1_324 = arith.constant 1 : index
    %c2_325 = arith.constant 2 : index
    %c0_326 = arith.constant 0 : index
    %483 = vector.load %arg40[%c0_323, %c1_324, %c2_325, %c0_326] : memref<1x4x4x128xf32, #tpu.memory_space<vmem>>, vector<1x2x2x128xf32>
    %484 = vector.extract_strided_slice %446 {offsets = [5, 0], sizes = [1, 128], strides = [1, 1]} : vector<9x128xf32> to vector<1x128xf32>
    %485 = vector.shape_cast %484 : vector<1x128xf32> to vector<128xf32>
    %486 = vector.shape_cast %485 : vector<128xf32> to vector<1x1x1x128xf32>
    %487 = vector.broadcast %486 : vector<1x1x1x128xf32> to vector<1x2x2x128xf32>
    %488 = arith.mulf %483, %487 : vector<1x2x2x128xf32>
    %489 = arith.addf %482, %488 : vector<1x2x2x128xf32>
    %c0_327 = arith.constant 0 : index
    %c2_328 = arith.constant 2 : index
    %c0_329 = arith.constant 0 : index
    %c0_330 = arith.constant 0 : index
    %490 = vector.load %arg40[%c0_327, %c2_328, %c0_329, %c0_330] : memref<1x4x4x128xf32, #tpu.memory_space<vmem>>, vector<1x2x2x128xf32>
    %491 = vector.extract_strided_slice %446 {offsets = [6, 0], sizes = [1, 128], strides = [1, 1]} : vector<9x128xf32> to vector<1x128xf32>
    %492 = vector.shape_cast %491 : vector<1x128xf32> to vector<128xf32>
    %493 = vector.shape_cast %492 : vector<128xf32> to vector<1x1x1x128xf32>
    %494 = vector.broadcast %493 : vector<1x1x1x128xf32> to vector<1x2x2x128xf32>
    %495 = arith.mulf %490, %494 : vector<1x2x2x128xf32>
    %496 = arith.addf %489, %495 : vector<1x2x2x128xf32>
    %c0_331 = arith.constant 0 : index
    %c2_332 = arith.constant 2 : index
    %c1_333 = arith.constant 1 : index
    %c0_334 = arith.constant 0 : index
    %497 = vector.load %arg40[%c0_331, %c2_332, %c1_333, %c0_334] : memref<1x4x4x128xf32, #tpu.memory_space<vmem>>, vector<1x2x2x128xf32>
    %498 = vector.extract_strided_slice %446 {offsets = [7, 0], sizes = [1, 128], strides = [1, 1]} : vector<9x128xf32> to vector<1x128xf32>
    %499 = vector.shape_cast %498 : vector<1x128xf32> to vector<128xf32>
    %500 = vector.shape_cast %499 : vector<128xf32> to vector<1x1x1x128xf32>
    %501 = vector.broadcast %500 : vector<1x1x1x128xf32> to vector<1x2x2x128xf32>
    %502 = arith.mulf %497, %501 : vector<1x2x2x128xf32>
    %503 = arith.addf %496, %502 : vector<1x2x2x128xf32>
    %c0_335 = arith.constant 0 : index
    %c2_336 = arith.constant 2 : index
    %c2_337 = arith.constant 2 : index
    %c0_338 = arith.constant 0 : index
    %504 = vector.load %arg40[%c0_335, %c2_336, %c2_337, %c0_338] : memref<1x4x4x128xf32, #tpu.memory_space<vmem>>, vector<1x2x2x128xf32>
    %505 = vector.extract_strided_slice %446 {offsets = [8, 0], sizes = [1, 128], strides = [1, 1]} : vector<9x128xf32> to vector<1x128xf32>
    %506 = vector.shape_cast %505 : vector<1x128xf32> to vector<128xf32>
    %507 = vector.shape_cast %506 : vector<128xf32> to vector<1x1x1x128xf32>
    %508 = vector.broadcast %507 : vector<1x1x1x128xf32> to vector<1x2x2x128xf32>
    %509 = arith.mulf %504, %508 : vector<1x2x2x128xf32>
    %510 = arith.addf %503, %509 : vector<1x2x2x128xf32>
    %c0_339 = arith.constant 0 : index
    %c0_340 = arith.constant 0 : index
    %511 = vector.load %arg25[%c0_339, %c0_340] : memref<1x128xf32, #tpu.memory_space<vmem>>, vector<1x128xf32>
    %512 = vector.shape_cast %511 : vector<1x128xf32> to vector<1x1x1x128xf32>
    %513 = vector.broadcast %512 : vector<1x1x1x128xf32> to vector<1x2x2x128xf32>
    %514 = arith.addf %510, %513 : vector<1x2x2x128xf32>
    %cst_341 = arith.constant 0.000000e+00 : f32
    %cst_342 = arith.constant 6.000000e+00 : f32
    %515 = vector.broadcast %cst_341 : f32 to vector<1x2x2x128xf32>
    %516 = arith.maximumf %515, %514 : vector<1x2x2x128xf32>
    %517 = vector.broadcast %cst_342 : f32 to vector<1x2x2x128xf32>
    %518 = arith.minimumf %517, %516 : vector<1x2x2x128xf32>
    %519 = vector.shape_cast %518 : vector<1x2x2x128xf32> to vector<4x128xf32>
    %520 = arith.truncf %519 : vector<4x128xf32> to vector<4x128xbf16>
    %c0_343 = arith.constant 0 : index
    %c0_344 = arith.constant 0 : index
    %521 = vector.load %arg26[%c0_343, %c0_344] : memref<128x128xbf16, #tpu.memory_space<vmem>>, vector<128x128xbf16>
    %cst_345 = arith.constant dense<0.000000e+00> : vector<4x128xf32>
    %522 = tpu.matmul %520, %521, %cst_345 {dimension_numbers = #tpu.dot_dimension_numbers<[1], [0], [0], [1], [0, 0, 1, 1], [], []>} : vector<4x128xbf16>, vector<128x128xbf16>, vector<4x128xf32> -> vector<4x128xf32>
    %c0_346 = arith.constant 0 : index
    %c0_347 = arith.constant 0 : index
    %523 = vector.load %arg27[%c0_346, %c0_347] : memref<1x128xf32, #tpu.memory_space<vmem>>, vector<1x128xf32>
    %524 = vector.broadcast %523 : vector<1x128xf32> to vector<4x128xf32>
    %525 = arith.addf %522, %524 : vector<4x128xf32>
    %526 = vector.shape_cast %525 : vector<4x128xf32> to vector<1x2x2x128xf32>
    %cst_348 = arith.constant 0.000000e+00 : f32
    %527 = vector.broadcast %cst_348 : f32 to vector<1x4x4x128xf32>
    %c0_349 = arith.constant 0 : index
    %c0_350 = arith.constant 0 : index
    %c0_351 = arith.constant 0 : index
    %c0_352 = arith.constant 0 : index
    %528 = vector.load %arg41[%c0_349, %c0_350, %c0_351, %c0_352] : memref<1x4x4x128xf32, #tpu.memory_space<vmem>>, vector<1x4x4x128xf32>
    tpu.vector_store %arg41[%c0_349, %c0_350, %c0_351, %c0_352], %527 {strides = array<i32>} : memref<1x4x4x128xf32, #tpu.memory_space<vmem>>, vector<1x4x4x128xf32>,
    %c0_353 = arith.constant 0 : index
    %c1_354 = arith.constant 1 : index
    %c1_355 = arith.constant 1 : index
    %c0_356 = arith.constant 0 : index
    %529 = vector.load %arg41[%c0_353, %c1_354, %c1_355, %c0_356] : memref<1x4x4x128xf32, #tpu.memory_space<vmem>>, vector<1x2x2x128xf32>
    tpu.vector_store %arg41[%c0_353, %c1_354, %c1_355, %c0_356], %526 {strides = array<i32>} : memref<1x4x4x128xf32, #tpu.memory_space<vmem>>, vector<1x2x2x128xf32>,
    %c0_357 = arith.constant 0 : index
    %c0_358 = arith.constant 0 : index
    %530 = vector.load %arg28[%c0_357, %c0_358] : memref<9x128xf32, #tpu.memory_space<vmem>>, vector<9x128xf32>
    %cst_359 = arith.constant 0.000000e+00 : f32
    %531 = vector.broadcast %cst_359 : f32 to vector<1x2x2x128xf32>
    %c0_360 = arith.constant 0 : index
    %c0_361 = arith.constant 0 : index
    %c0_362 = arith.constant 0 : index
    %c0_363 = arith.constant 0 : index
    %532 = vector.load %arg41[%c0_360, %c0_361, %c0_362, %c0_363] : memref<1x4x4x128xf32, #tpu.memory_space<vmem>>, vector<1x2x2x128xf32>
    %533 = vector.extract_strided_slice %530 {offsets = [0, 0], sizes = [1, 128], strides = [1, 1]} : vector<9x128xf32> to vector<1x128xf32>
    %534 = vector.shape_cast %533 : vector<1x128xf32> to vector<128xf32>
    %535 = vector.shape_cast %534 : vector<128xf32> to vector<1x1x1x128xf32>
    %536 = vector.broadcast %535 : vector<1x1x1x128xf32> to vector<1x2x2x128xf32>
    %537 = arith.mulf %532, %536 : vector<1x2x2x128xf32>
    %538 = arith.addf %531, %537 : vector<1x2x2x128xf32>
    %c0_364 = arith.constant 0 : index
    %c0_365 = arith.constant 0 : index
    %c1_366 = arith.constant 1 : index
    %c0_367 = arith.constant 0 : index
    %539 = vector.load %arg41[%c0_364, %c0_365, %c1_366, %c0_367] : memref<1x4x4x128xf32, #tpu.memory_space<vmem>>, vector<1x2x2x128xf32>
    %540 = vector.extract_strided_slice %530 {offsets = [1, 0], sizes = [1, 128], strides = [1, 1]} : vector<9x128xf32> to vector<1x128xf32>
    %541 = vector.shape_cast %540 : vector<1x128xf32> to vector<128xf32>
    %542 = vector.shape_cast %541 : vector<128xf32> to vector<1x1x1x128xf32>
    %543 = vector.broadcast %542 : vector<1x1x1x128xf32> to vector<1x2x2x128xf32>
    %544 = arith.mulf %539, %543 : vector<1x2x2x128xf32>
    %545 = arith.addf %538, %544 : vector<1x2x2x128xf32>
    %c0_368 = arith.constant 0 : index
    %c0_369 = arith.constant 0 : index
    %c2_370 = arith.constant 2 : index
    %c0_371 = arith.constant 0 : index
    %546 = vector.load %arg41[%c0_368, %c0_369, %c2_370, %c0_371] : memref<1x4x4x128xf32, #tpu.memory_space<vmem>>, vector<1x2x2x128xf32>
    %547 = vector.extract_strided_slice %530 {offsets = [2, 0], sizes = [1, 128], strides = [1, 1]} : vector<9x128xf32> to vector<1x128xf32>
    %548 = vector.shape_cast %547 : vector<1x128xf32> to vector<128xf32>
    %549 = vector.shape_cast %548 : vector<128xf32> to vector<1x1x1x128xf32>
    %550 = vector.broadcast %549 : vector<1x1x1x128xf32> to vector<1x2x2x128xf32>
    %551 = arith.mulf %546, %550 : vector<1x2x2x128xf32>
    %552 = arith.addf %545, %551 : vector<1x2x2x128xf32>
    %c0_372 = arith.constant 0 : index
    %c1_373 = arith.constant 1 : index
    %c0_374 = arith.constant 0 : index
    %c0_375 = arith.constant 0 : index
    %553 = vector.load %arg41[%c0_372, %c1_373, %c0_374, %c0_375] : memref<1x4x4x128xf32, #tpu.memory_space<vmem>>, vector<1x2x2x128xf32>
    %554 = vector.extract_strided_slice %530 {offsets = [3, 0], sizes = [1, 128], strides = [1, 1]} : vector<9x128xf32> to vector<1x128xf32>
    %555 = vector.shape_cast %554 : vector<1x128xf32> to vector<128xf32>
    %556 = vector.shape_cast %555 : vector<128xf32> to vector<1x1x1x128xf32>
    %557 = vector.broadcast %556 : vector<1x1x1x128xf32> to vector<1x2x2x128xf32>
    %558 = arith.mulf %553, %557 : vector<1x2x2x128xf32>
    %559 = arith.addf %552, %558 : vector<1x2x2x128xf32>
    %c0_376 = arith.constant 0 : index
    %c1_377 = arith.constant 1 : index
    %c1_378 = arith.constant 1 : index
    %c0_379 = arith.constant 0 : index
    %560 = vector.load %arg41[%c0_376, %c1_377, %c1_378, %c0_379] : memref<1x4x4x128xf32, #tpu.memory_space<vmem>>, vector<1x2x2x128xf32>
    %561 = vector.extract_strided_slice %530 {offsets = [4, 0], sizes = [1, 128], strides = [1, 1]} : vector<9x128xf32> to vector<1x128xf32>
    %562 = vector.shape_cast %561 : vector<1x128xf32> to vector<128xf32>
    %563 = vector.shape_cast %562 : vector<128xf32> to vector<1x1x1x128xf32>
    %564 = vector.broadcast %563 : vector<1x1x1x128xf32> to vector<1x2x2x128xf32>
    %565 = arith.mulf %560, %564 : vector<1x2x2x128xf32>
    %566 = arith.addf %559, %565 : vector<1x2x2x128xf32>
    %c0_380 = arith.constant 0 : index
    %c1_381 = arith.constant 1 : index
    %c2_382 = arith.constant 2 : index
    %c0_383 = arith.constant 0 : index
    %567 = vector.load %arg41[%c0_380, %c1_381, %c2_382, %c0_383] : memref<1x4x4x128xf32, #tpu.memory_space<vmem>>, vector<1x2x2x128xf32>
    %568 = vector.extract_strided_slice %530 {offsets = [5, 0], sizes = [1, 128], strides = [1, 1]} : vector<9x128xf32> to vector<1x128xf32>
    %569 = vector.shape_cast %568 : vector<1x128xf32> to vector<128xf32>
    %570 = vector.shape_cast %569 : vector<128xf32> to vector<1x1x1x128xf32>
    %571 = vector.broadcast %570 : vector<1x1x1x128xf32> to vector<1x2x2x128xf32>
    %572 = arith.mulf %567, %571 : vector<1x2x2x128xf32>
    %573 = arith.addf %566, %572 : vector<1x2x2x128xf32>
    %c0_384 = arith.constant 0 : index
    %c2_385 = arith.constant 2 : index
    %c0_386 = arith.constant 0 : index
    %c0_387 = arith.constant 0 : index
    %574 = vector.load %arg41[%c0_384, %c2_385, %c0_386, %c0_387] : memref<1x4x4x128xf32, #tpu.memory_space<vmem>>, vector<1x2x2x128xf32>
    %575 = vector.extract_strided_slice %530 {offsets = [6, 0], sizes = [1, 128], strides = [1, 1]} : vector<9x128xf32> to vector<1x128xf32>
    %576 = vector.shape_cast %575 : vector<1x128xf32> to vector<128xf32>
    %577 = vector.shape_cast %576 : vector<128xf32> to vector<1x1x1x128xf32>
    %578 = vector.broadcast %577 : vector<1x1x1x128xf32> to vector<1x2x2x128xf32>
    %579 = arith.mulf %574, %578 : vector<1x2x2x128xf32>
    %580 = arith.addf %573, %579 : vector<1x2x2x128xf32>
    %c0_388 = arith.constant 0 : index
    %c2_389 = arith.constant 2 : index
    %c1_390 = arith.constant 1 : index
    %c0_391 = arith.constant 0 : index
    %581 = vector.load %arg41[%c0_388, %c2_389, %c1_390, %c0_391] : memref<1x4x4x128xf32, #tpu.memory_space<vmem>>, vector<1x2x2x128xf32>
    %582 = vector.extract_strided_slice %530 {offsets = [7, 0], sizes = [1, 128], strides = [1, 1]} : vector<9x128xf32> to vector<1x128xf32>
    %583 = vector.shape_cast %582 : vector<1x128xf32> to vector<128xf32>
    %584 = vector.shape_cast %583 : vector<128xf32> to vector<1x1x1x128xf32>
    %585 = vector.broadcast %584 : vector<1x1x1x128xf32> to vector<1x2x2x128xf32>
    %586 = arith.mulf %581, %585 : vector<1x2x2x128xf32>
    %587 = arith.addf %580, %586 : vector<1x2x2x128xf32>
    %c0_392 = arith.constant 0 : index
    %c2_393 = arith.constant 2 : index
    %c2_394 = arith.constant 2 : index
    %c0_395 = arith.constant 0 : index
    %588 = vector.load %arg41[%c0_392, %c2_393, %c2_394, %c0_395] : memref<1x4x4x128xf32, #tpu.memory_space<vmem>>, vector<1x2x2x128xf32>
    %589 = vector.extract_strided_slice %530 {offsets = [8, 0], sizes = [1, 128], strides = [1, 1]} : vector<9x128xf32> to vector<1x128xf32>
    %590 = vector.shape_cast %589 : vector<1x128xf32> to vector<128xf32>
    %591 = vector.shape_cast %590 : vector<128xf32> to vector<1x1x1x128xf32>
    %592 = vector.broadcast %591 : vector<1x1x1x128xf32> to vector<1x2x2x128xf32>
    %593 = arith.mulf %588, %592 : vector<1x2x2x128xf32>
    %594 = arith.addf %587, %593 : vector<1x2x2x128xf32>
    %c0_396 = arith.constant 0 : index
    %c0_397 = arith.constant 0 : index
    %595 = vector.load %arg29[%c0_396, %c0_397] : memref<1x128xf32, #tpu.memory_space<vmem>>, vector<1x128xf32>
    %596 = vector.shape_cast %595 : vector<1x128xf32> to vector<1x1x1x128xf32>
    %597 = vector.broadcast %596 : vector<1x1x1x128xf32> to vector<1x2x2x128xf32>
    %598 = arith.addf %594, %597 : vector<1x2x2x128xf32>
    %cst_398 = arith.constant 0.000000e+00 : f32
    %cst_399 = arith.constant 6.000000e+00 : f32
    %599 = vector.broadcast %cst_398 : f32 to vector<1x2x2x128xf32>
    %600 = arith.maximumf %599, %598 : vector<1x2x2x128xf32>
    %601 = vector.broadcast %cst_399 : f32 to vector<1x2x2x128xf32>
    %602 = arith.minimumf %601, %600 : vector<1x2x2x128xf32>
    %603 = vector.shape_cast %602 : vector<1x2x2x128xf32> to vector<4x128xf32>
    %604 = arith.truncf %603 : vector<4x128xf32> to vector<4x128xbf16>
    %c0_400 = arith.constant 0 : index
    %c0_401 = arith.constant 0 : index
    %605 = vector.load %arg30[%c0_400, %c0_401] : memref<128x128xbf16, #tpu.memory_space<vmem>>, vector<128x128xbf16>
    %cst_402 = arith.constant dense<0.000000e+00> : vector<4x128xf32>
    %606 = tpu.matmul %604, %605, %cst_402 {dimension_numbers = #tpu.dot_dimension_numbers<[1], [0], [0], [1], [0, 0, 1, 1], [], []>} : vector<4x128xbf16>, vector<128x128xbf16>, vector<4x128xf32> -> vector<4x128xf32>
    %c0_403 = arith.constant 0 : index
    %c0_404 = arith.constant 0 : index
    %607 = vector.load %arg31[%c0_403, %c0_404] : memref<1x128xf32, #tpu.memory_space<vmem>>, vector<1x128xf32>
    %608 = vector.broadcast %607 : vector<1x128xf32> to vector<4x128xf32>
    %609 = arith.addf %606, %608 : vector<4x128xf32>
    %610 = vector.shape_cast %609 : vector<4x128xf32> to vector<1x2x2x128xf32>
    %611 = vector.shape_cast %610 : vector<1x2x2x128xf32> to vector<1x4x128xf32>
    %cst_405 = arith.constant dense<0.000000e+00> : vector<1x128xf32>
    %612 = vector.multi_reduction <add>, %611, %cst_405 [1] : vector<1x4x128xf32> to vector<1x128xf32>
    %cst_406 = arith.constant 4.000000e+00 : f32
    %613 = vector.broadcast %cst_406 : f32 to vector<1x128xf32>
    %614 = arith.divf %612, %613 : vector<1x128xf32>
    %c0_407 = arith.constant 0 : index
    %c0_408 = arith.constant 0 : index
    %615 = vector.load %arg32[%c0_407, %c0_408] : memref<128x128xf32, #tpu.memory_space<vmem>>, vector<128x128xf32>
    %cst_409 = arith.constant dense<0.000000e+00> : vector<1x128xf32>
    %616 = tpu.matmul %614, %615, %cst_409 {dimension_numbers = #tpu.dot_dimension_numbers<[1], [0], [0], [1], [0, 0, 1, 1], [], []>} : vector<1x128xf32>, vector<128x128xf32>, vector<1x128xf32> -> vector<1x128xf32>
    %c0_410 = arith.constant 0 : index
    %c0_411 = arith.constant 0 : index
    %617 = vector.load %arg33[%c0_410, %c0_411] : memref<1x128xf32, #tpu.memory_space<vmem>>, vector<1x128xf32>
    %618 = arith.addf %616, %617 : vector<1x128xf32>
    %619 = vector.shape_cast %618 : vector<1x128xf32> to vector<1x1x128xf32>
    %c0_412 = arith.constant 0 : index
    %c0_413 = arith.constant 0 : index
    %c0_414 = arith.constant 0 : index
    %620 = vector.load %arg34[%c0_412, %c0_413, %c0_414] : memref<1x1x128xf32, #tpu.memory_space<vmem>>, vector<1x1x128xf32>
    tpu.vector_store %arg34[%c0_412, %c0_413, %c0_414], %619 {strides = array<i32>} : memref<1x1x128xf32, #tpu.memory_space<vmem>>, vector<1x1x128xf32>,
    return
  }
  func.func @transform_0(%arg0: i32) -> (i32, i32, i32) {
    %c0_i32 = arith.constant 0 : i32
    %c0_i32_0 = arith.constant 0 : i32
    %c0_i32_1 = arith.constant 0 : i32
    return %arg0, %c0_i32, %c0_i32_0 : i32, i32, i32
  }
  func.func @transform_1(%arg0: i32) -> (i32, i32) {
    %c0_i32 = arith.constant 0 : i32
    %c0_i32_0 = arith.constant 0 : i32
    %c0_i32_1 = arith.constant 0 : i32
    return %c0_i32, %c0_i32_0 : i32, i32
  }
  func.func @transform_2(%arg0: i32) -> (i32, i32) {
    %c0_i32 = arith.constant 0 : i32
    %c0_i32_0 = arith.constant 0 : i32
    %c0_i32_1 = arith.constant 0 : i32
    return %c0_i32, %c0_i32_0 : i32, i32
  }
  func.func @transform_3(%arg0: i32) -> (i32, i32) {
    %c0_i32 = arith.constant 0 : i32
    %c0_i32_0 = arith.constant 0 : i32
    %c0_i32_1 = arith.constant 0 : i32
    return %c0_i32, %c0_i32_0 : i32, i32
  }
  func.func @transform_4(%arg0: i32) -> (i32, i32) {
    %c0_i32 = arith.constant 0 : i32
    %c0_i32_0 = arith.constant 0 : i32
    %c0_i32_1 = arith.constant 0 : i32
    return %c0_i32, %c0_i32_0 : i32, i32
  }
  func.func @transform_5(%arg0: i32) -> (i32, i32) {
    %c0_i32 = arith.constant 0 : i32
    %c0_i32_0 = arith.constant 0 : i32
    %c0_i32_1 = arith.constant 0 : i32
    return %c0_i32, %c0_i32_0 : i32, i32
  }
  func.func @transform_6(%arg0: i32) -> (i32, i32) {
    %c0_i32 = arith.constant 0 : i32
    %c0_i32_0 = arith.constant 0 : i32
    %c0_i32_1 = arith.constant 0 : i32
    return %c0_i32, %c0_i32_0 : i32, i32
  }
  func.func @transform_7(%arg0: i32) -> (i32, i32) {
    %c0_i32 = arith.constant 0 : i32
    %c0_i32_0 = arith.constant 0 : i32
    %c0_i32_1 = arith.constant 0 : i32
    return %c0_i32, %c0_i32_0 : i32, i32
  }
  func.func @transform_8(%arg0: i32) -> (i32, i32) {
    %c0_i32 = arith.constant 0 : i32
    %c0_i32_0 = arith.constant 0 : i32
    %c0_i32_1 = arith.constant 0 : i32
    return %c0_i32, %c0_i32_0 : i32, i32
  }
  func.func @transform_9(%arg0: i32) -> (i32, i32) {
    %c0_i32 = arith.constant 0 : i32
    %c0_i32_0 = arith.constant 0 : i32
    %c0_i32_1 = arith.constant 0 : i32
    return %c0_i32, %c0_i32_0 : i32, i32
  }
  func.func @transform_10(%arg0: i32) -> (i32, i32) {
    %c0_i32 = arith.constant 0 : i32
    %c0_i32_0 = arith.constant 0 : i32
    %c0_i32_1 = arith.constant 0 : i32
    return %c0_i32, %c0_i32_0 : i32, i32
  }
  func.func @transform_11(%arg0: i32) -> (i32, i32) {
    %c0_i32 = arith.constant 0 : i32
    %c0_i32_0 = arith.constant 0 : i32
    %c0_i32_1 = arith.constant 0 : i32
    return %c0_i32, %c0_i32_0 : i32, i32
  }
  func.func @transform_12(%arg0: i32) -> (i32, i32) {
    %c0_i32 = arith.constant 0 : i32
    %c0_i32_0 = arith.constant 0 : i32
    %c0_i32_1 = arith.constant 0 : i32
    return %c0_i32, %c0_i32_0 : i32, i32
  }
  func.func @transform_13(%arg0: i32) -> (i32, i32) {
    %c0_i32 = arith.constant 0 : i32
    %c0_i32_0 = arith.constant 0 : i32
    %c0_i32_1 = arith.constant 0 : i32
    return %c0_i32, %c0_i32_0 : i32, i32
  }
  func.func @transform_14(%arg0: i32) -> (i32, i32) {
    %c0_i32 = arith.constant 0 : i32
    %c0_i32_0 = arith.constant 0 : i32
    %c0_i32_1 = arith.constant 0 : i32
    return %c0_i32, %c0_i32_0 : i32, i32
  }
  func.func @transform_15(%arg0: i32) -> (i32, i32) {
    %c0_i32 = arith.constant 0 : i32
    %c0_i32_0 = arith.constant 0 : i32
    %c0_i32_1 = arith.constant 0 : i32
    return %c0_i32, %c0_i32_0 : i32, i32
  }
  func.func @transform_16(%arg0: i32) -> (i32, i32) {
    %c0_i32 = arith.constant 0 : i32
    %c0_i32_0 = arith.constant 0 : i32
    %c0_i32_1 = arith.constant 0 : i32
    return %c0_i32, %c0_i32_0 : i32, i32
  }
  func.func @transform_17(%arg0: i32) -> (i32, i32) {
    %c0_i32 = arith.constant 0 : i32
    %c0_i32_0 = arith.constant 0 : i32
    %c0_i32_1 = arith.constant 0 : i32
    return %c0_i32, %c0_i32_0 : i32, i32
  }
  func.func @transform_18(%arg0: i32) -> (i32, i32) {
    %c0_i32 = arith.constant 0 : i32
    %c0_i32_0 = arith.constant 0 : i32
    %c0_i32_1 = arith.constant 0 : i32
    return %c0_i32, %c0_i32_0 : i32, i32
  }
  func.func @transform_19(%arg0: i32) -> (i32, i32) {
    %c0_i32 = arith.constant 0 : i32
    %c0_i32_0 = arith.constant 0 : i32
    %c0_i32_1 = arith.constant 0 : i32
    return %c0_i32, %c0_i32_0 : i32, i32
  }
  func.func @transform_20(%arg0: i32) -> (i32, i32) {
    %c0_i32 = arith.constant 0 : i32
    %c0_i32_0 = arith.constant 0 : i32
    %c0_i32_1 = arith.constant 0 : i32
    return %c0_i32, %c0_i32_0 : i32, i32
  }
  func.func @transform_21(%arg0: i32) -> (i32, i32) {
    %c0_i32 = arith.constant 0 : i32
    %c0_i32_0 = arith.constant 0 : i32
    %c0_i32_1 = arith.constant 0 : i32
    return %c0_i32, %c0_i32_0 : i32, i32
  }
  func.func @transform_22(%arg0: i32) -> (i32, i32) {
    %c0_i32 = arith.constant 0 : i32
    %c0_i32_0 = arith.constant 0 : i32
    %c0_i32_1 = arith.constant 0 : i32
    return %c0_i32, %c0_i32_0 : i32, i32
  }
  func.func @transform_23(%arg0: i32) -> (i32, i32) {
    %c0_i32 = arith.constant 0 : i32
    %c0_i32_0 = arith.constant 0 : i32
    %c0_i32_1 = arith.constant 0 : i32
    return %c0_i32, %c0_i32_0 : i32, i32
  }
  func.func @transform_24(%arg0: i32) -> (i32, i32) {
    %c0_i32 = arith.constant 0 : i32
    %c0_i32_0 = arith.constant 0 : i32
    %c0_i32_1 = arith.constant 0 : i32
    return %c0_i32, %c0_i32_0 : i32, i32
  }
  func.func @transform_25(%arg0: i32) -> (i32, i32) {
    %c0_i32 = arith.constant 0 : i32
    %c0_i32_0 = arith.constant 0 : i32
    %c0_i32_1 = arith.constant 0 : i32
    return %c0_i32, %c0_i32_0 : i32, i32
  }
  func.func @transform_26(%arg0: i32) -> (i32, i32) {
    %c0_i32 = arith.constant 0 : i32
    %c0_i32_0 = arith.constant 0 : i32
    %c0_i32_1 = arith.constant 0 : i32
    return %c0_i32, %c0_i32_0 : i32, i32
  }
  func.func @transform_27(%arg0: i32) -> (i32, i32) {
    %c0_i32 = arith.constant 0 : i32
    %c0_i32_0 = arith.constant 0 : i32
    %c0_i32_1 = arith.constant 0 : i32
    return %c0_i32, %c0_i32_0 : i32, i32
  }
  func.func @transform_28(%arg0: i32) -> (i32, i32) {
    %c0_i32 = arith.constant 0 : i32
    %c0_i32_0 = arith.constant 0 : i32
    %c0_i32_1 = arith.constant 0 : i32
    return %c0_i32, %c0_i32_0 : i32, i32
  }
  func.func @transform_29(%arg0: i32) -> (i32, i32) {
    %c0_i32 = arith.constant 0 : i32
    %c0_i32_0 = arith.constant 0 : i32
    %c0_i32_1 = arith.constant 0 : i32
    return %c0_i32, %c0_i32_0 : i32, i32
  }
  func.func @transform_30(%arg0: i32) -> (i32, i32) {
    %c0_i32 = arith.constant 0 : i32
    %c0_i32_0 = arith.constant 0 : i32
    %c0_i32_1 = arith.constant 0 : i32
    return %c0_i32, %c0_i32_0 : i32, i32
  }
  func.func @transform_31(%arg0: i32) -> (i32, i32) {
    %c0_i32 = arith.constant 0 : i32
    %c0_i32_0 = arith.constant 0 : i32
    %c0_i32_1 = arith.constant 0 : i32
    return %c0_i32, %c0_i32_0 : i32, i32
  }
  func.func @transform_32(%arg0: i32) -> (i32, i32) {
    %c0_i32 = arith.constant 0 : i32
    %c0_i32_0 = arith.constant 0 : i32
    %c0_i32_1 = arith.constant 0 : i32
    return %c0_i32, %c0_i32_0 : i32, i32
  }
  func.func @transform_33(%arg0: i32) -> (i32, i32, i32) {
    %c0_i32 = arith.constant 0 : i32
    %c0_i32_0 = arith.constant 0 : i32
    %c0_i32_1 = arith.constant 0 : i32
    return %arg0, %c0_i32, %c0_i32_0 : i32, i32, i32
  }
}

</mosaic_0001>

<llo_original>
// kernel: tpu_custom_call.1
$region0: #{tpu_custom_call.1}
  #allocation0 [shape = 'u32[]', space=smem, size = 0x4, offset = 0x4, fixed_abs, tag = 'smem constant byte address 0x4 - core index']
  #allocation1 [shape = 'u32[144,128]{1,0:T(1,128)}', space=vmem, size = 0x12000, scoped, tag = 'internal scratch']
  #allocation2 [shape = 'f32[1,18,18,128]{3,2,1,0:T(8,128)}', space=vmem, size = 0x36000, scoped, tag = 'scratch operand']
  #allocation3 [shape = 'f32[1,10,10,128]{3,2,1,0:T(8,128)}', space=vmem, size = 0x14000, scoped, tag = 'scratch operand']
  #allocation4 [shape = 'f32[1,6,6,128]{3,2,1,0:T(8,128)}', space=vmem, size = 0x6000, scoped, tag = 'scratch operand']
  #allocation5 [shape = 'f32[1,4,4,128]{3,2,1,0:T(4,128)}', space=vmem, size = 0x2000, scoped, tag = 'scratch operand']
  #allocation6 [shape = 'f32[1,4,4,128]{3,2,1,0:T(4,128)}', space=vmem, size = 0x2000, scoped, tag = 'scratch operand']
  #allocation7 [shape = 'f32[1,4,4,128]{3,2,1,0:T(4,128)}', space=vmem, size = 0x2000, scoped, tag = 'scratch operand']
  #allocation8 [shape = 'f32[1,4,4,128]{3,2,1,0:T(4,128)}', space=vmem, size = 0x2000, scoped, tag = 'scratch operand']
  %s0 = inlined_call_operand.smem [shape: u32[34], index: -1, kind: input, shape index: {}]
  %s1 = sld [smem:[%s0]]
  %s2 = scalar_lea.smem %s0, 1
  %s3 = sld [smem:[%s2]]
  %s4 = scalar_lea.smem %s0, 2
  %s5 = sld [smem:[%s4]]
  %s6 = scalar_lea.smem %s0, 3
  %s7 = sld [smem:[%s6]]
  %s8 = scalar_lea.smem %s0, 4
  %s9 = sld [smem:[%s8]]
  %s10 = scalar_lea.smem %s0, 5
  %s11 = sld [smem:[%s10]]
  %s12 = scalar_lea.smem %s0, 6
  %s13 = sld [smem:[%s12]]
  %s14 = scalar_lea.smem %s0, 7
  %s15 = sld [smem:[%s14]]
  %s16 = scalar_lea.smem %s0, 8
  %s17 = sld [smem:[%s16]]
  %s18 = scalar_lea.smem %s0, 9
  %s19 = sld [smem:[%s18]]
  %s20 = scalar_lea.smem %s0, 10
  %s21 = sld [smem:[%s20]]
  %s22 = scalar_lea.smem %s0, 11
  %s23 = sld [smem:[%s22]]
  %s24 = scalar_lea.smem %s0, 12
  %s25 = sld [smem:[%s24]]
  %s26 = scalar_lea.smem %s0, 13
  %s27 = sld [smem:[%s26]]
  %s28 = scalar_lea.smem %s0, 14
  %s29 = sld [smem:[%s28]]
  %s30 = scalar_lea.smem %s0, 15
  %s31 = sld [smem:[%s30]]
  %s32 = scalar_lea.smem %s0, 16
  %s33 = sld [smem:[%s32]]
  %s34 = scalar_lea.smem %s0, 17
  %s35 = sld [smem:[%s34]]
  %s36 = scalar_lea.smem %s0, 18
  %s37 = sld [smem:[%s36]]
  %s38 = scalar_lea.smem %s0, 19
  %s39 = sld [smem:[%s38]]
  %s40 = scalar_lea.smem %s0, 20
  %s41 = sld [smem:[%s40]]
  %s42 = scalar_lea.smem %s0, 21
  %s43 = sld [smem:[%s42]]
  %s44 = scalar_lea.smem %s0, 22
  %s45 = sld [smem:[%s44]]
  %s46 = scalar_lea.smem %s0, 23
  %s47 = sld [smem:[%s46]]
  %s48 = scalar_lea.smem %s0, 24
  %s49 = sld [smem:[%s48]]
  %s50 = scalar_lea.smem %s0, 25
  %s51 = sld [smem:[%s50]]
  %s52 = scalar_lea.smem %s0, 26
  %s53 = sld [smem:[%s52]]
  %s54 = scalar_lea.smem %s0, 27
  %s55 = sld [smem:[%s54]]
  %s56 = scalar_lea.smem %s0, 28
  %s57 = sld [smem:[%s56]]
  %s58 = scalar_lea.smem %s0, 29
  %s59 = sld [smem:[%s58]]
  %s60 = scalar_lea.smem %s0, 30
  %s61 = sld [smem:[%s60]]
  %s62 = scalar_lea.smem %s0, 31
  %s63 = sld [smem:[%s62]]
  %s64 = scalar_lea.smem %s0, 32
  %s65 = sld [smem:[%s64]]
  %s66 = scalar_lea.smem %s0, 33
  %s67 = sld [smem:[%s66]]
  %s68 = sld [smem:[#allocation0]]
  $region165: #{tpu_custom_call.1} parent=0
    _
  %s70 = ssub.s32 1, %s68
  %s71 = scalar_select 0, %s70, %s68
  $region1: #{tpu_custom_call.1} parent=0
    #allocation9 [shape = 'u8[1024]{0}', space=vmem, size = 0x400, scoped, tag = 'output window, operand 0']
    #allocation10 [shape = 's32[2]{0}', space=sflag, size = 0x8, scoped, tag = 'scoped memory for tpu_custom_call.1']
    %72 = vsyncpa [#allocation10], 0
    %s73 = scalar_lea.sflag [#allocation10], 1
    %74 = vsyncpa %s73, 0
    loop: start=0, step=1, limit=4
    $region2: #{tpu_custom_call.1} parent=1 // loop_pre_header
      _
    $region3: #{tpu_custom_call.1} parent=1 // loop_header
      %s76 = sphi 0, %s80
      %p77 = scmp.ge.s32.totalorder %s76, 4
      %s86 = sphi 0, %s88
      %s89 = sphi 0, %s86
      %s90 = sphi 0, %s89
      %s106 = sphi 0, %s90
      %s110 = sphi 0, %s110
      %s112 = sphi 0, %s110
      %s113 = sphi 0, %s112
      %s127 = sphi 0, %s113
      %s131 = sphi 0, %s131
      %s133 = sphi 0, %s131
      %s134 = sphi 0, %s133
      %s148 = sphi 0, %s134
      %s152 = sphi 0, %s152
      %s154 = sphi 0, %s152
      %s155 = sphi 0, %s154
      %s169 = sphi 0, %s155
      %s173 = sphi 0, %s173
      %s175 = sphi 0, %s173
      %s176 = sphi 0, %s175
      %s190 = sphi 0, %s176
      %s194 = sphi 0, %s194
      %s196 = sphi 0, %s194
      %s197 = sphi 0, %s196
      %s211 = sphi 0, %s197
      %s215 = sphi 0, %s215
      %s217 = sphi 0, %s215
      %s218 = sphi 0, %s217
      %s232 = sphi 0, %s218
      %s236 = sphi 0, %s236
      %s238 = sphi 0, %s236
      %s239 = sphi 0, %s238
      %s253 = sphi 0, %s239
      %s257 = sphi 0, %s257
      %s259 = sphi 0, %s257
      %s260 = sphi 0, %s259
      %s274 = sphi 0, %s260
      %s278 = sphi 0, %s278
      %s280 = sphi 0, %s278
      %s281 = sphi 0, %s280
      %s295 = sphi 0, %s281
      %s299 = sphi 0, %s299
      %s301 = sphi 0, %s299
      %s302 = sphi 0, %s301
      %s316 = sphi 0, %s302
      %s320 = sphi 0, %s320
      %s322 = sphi 0, %s320
      %s323 = sphi 0, %s322
      %s337 = sphi 0, %s323
      %s341 = sphi 0, %s341
      %s343 = sphi 0, %s341
      %s344 = sphi 0, %s343
      %s358 = sphi 0, %s344
      %s362 = sphi 0, %s362
      %s364 = sphi 0, %s362
      %s365 = sphi 0, %s364
      %s379 = sphi 0, %s365
      %s383 = sphi 0, %s383
      %s385 = sphi 0, %s383
      %s386 = sphi 0, %s385
      %s400 = sphi 0, %s386
      %s404 = sphi 0, %s404
      %s406 = sphi 0, %s404
      %s407 = sphi 0, %s406
      %s421 = sphi 0, %s407
      %s425 = sphi 0, %s425
      %s427 = sphi 0, %s425
      %s428 = sphi 0, %s427
      %s442 = sphi 0, %s428
      %s446 = sphi 0, %s446
      %s448 = sphi 0, %s446
      %s449 = sphi 0, %s448
      %s463 = sphi 0, %s449
      %s467 = sphi 0, %s467
      %s469 = sphi 0, %s467
      %s470 = sphi 0, %s469
      %s484 = sphi 0, %s470
      %s488 = sphi 0, %s488
      %s490 = sphi 0, %s488
      %s491 = sphi 0, %s490
      %s505 = sphi 0, %s491
      %s509 = sphi 0, %s509
      %s511 = sphi 0, %s509
      %s512 = sphi 0, %s511
      %s526 = sphi 0, %s512
      %s530 = sphi 0, %s530
      %s532 = sphi 0, %s530
      %s533 = sphi 0, %s532
      %s547 = sphi 0, %s533
      %s551 = sphi 0, %s551
      %s553 = sphi 0, %s551
      %s554 = sphi 0, %s553
      %s568 = sphi 0, %s554
      %s572 = sphi 0, %s572
      %s574 = sphi 0, %s572
      %s575 = sphi 0, %s574
      %s589 = sphi 0, %s575
      %s593 = sphi 0, %s593
      %s595 = sphi 0, %s593
      %s596 = sphi 0, %s595
      %s610 = sphi 0, %s596
      %s614 = sphi 0, %s614
      %s616 = sphi 0, %s614
      %s617 = sphi 0, %s616
      %s631 = sphi 0, %s617
      %s635 = sphi 0, %s635
      %s637 = sphi 0, %s635
      %s638 = sphi 0, %s637
      %s652 = sphi 0, %s638
      %s656 = sphi 0, %s656
      %s658 = sphi 0, %s656
      %s659 = sphi 0, %s658
      %s673 = sphi 0, %s659
      %s677 = sphi 0, %s677
      %s679 = sphi 0, %s677
      %s680 = sphi 0, %s679
      %s694 = sphi 0, %s680
      %s698 = sphi 0, %s698
      %s700 = sphi 0, %s698
      %s701 = sphi 0, %s700
      %s715 = sphi 0, %s701
      %s719 = sphi 0, %s719
      %s721 = sphi 0, %s719
      %s722 = sphi 0, %s721
      %s736 = sphi 0, %s722
      %s740 = sphi 0, %s740
      %s742 = sphi 0, %s740
      %s743 = sphi 0, %s742
      %s757 = sphi 0, %s743
      %s761 = sphi 0, %s761
      %s763 = sphi 0, %s761
      %s764 = sphi 0, %s763
      %s778 = sphi 0, %s764
      %s784 = sphi 0, %s786
      %s787 = sphi 0, %s784
      %s788 = sphi 0, %s787
      %s804 = sphi 0, %s788
    $region4: #{tpu_custom_call.1} parent=1 // loop_header_branch
      %79 = sbr.rel (%p77) target = $region8
    $region5: #{tpu_custom_call.1} parent=1 // loop_body
      %s81 = ssub.s32 %s76, 1
      %s82 = ssub.s32 %s76, 2
      %s83 = sadd.s32 %s76, 1
      %s84 = ssub.s32 %s76, %s83
      %p85 = scmp.eq.s32.totalorder %s84, 0
      %s87 = sadd.s32 %s86, 1
      %s88 = scalar_select %p85, %s86, %s87
      %p91 = pneg %p85
      %p92 = scmp.eq.s32.totalorder %s76, 1
      %p93 = por %p91, %p92
      %p94 = scmp.ne.s32.totalorder %s86, %s89
      %p95 = scmp.eq.s32.totalorder %s76, 0
      %p96 = por %p94, %p95
      %p97 = scmp.ne.s32.totalorder %s86, %s89
      %p98 = scmp.eq.s32.totalorder %s81, 1
      %p99 = por %p97, %p98
      %p100 = scmp.ne.s32.totalorder %s89, %s90
      %p101 = scmp.eq.s32.totalorder %s81, 0
      %p102 = por %p100, %p101
      %p103 = scmp.ne.s32.totalorder %s89, %s90
      %p104 = scmp.eq.s32.totalorder %s82, 1
      %p105 = por %p103, %p104
      %p107 = scmp.ne.s32.totalorder %s90, %s106
      %p108 = scmp.eq.s32.totalorder %s82, 0
      %p109 = por %p107, %p108
      %s111 = sadd.s32 %s110, 1
      %p114 = scmp.eq.s32.totalorder %s76, 1
      %p115 = scmp.ne.s32.totalorder %s110, %s112
      %p116 = scmp.eq.s32.totalorder %s76, 0
      %p117 = por %p115, %p116
      %p118 = scmp.ne.s32.totalorder %s110, %s112
      %p119 = scmp.eq.s32.totalorder %s81, 1
      %p120 = por %p118, %p119
      %p121 = scmp.ne.s32.totalorder %s112, %s113
      %p122 = scmp.eq.s32.totalorder %s81, 0
      %p123 = por %p121, %p122
      %p124 = scmp.ne.s32.totalorder %s112, %s113
      %p125 = scmp.eq.s32.totalorder %s82, 1
      %p126 = por %p124, %p125
      %p128 = scmp.ne.s32.totalorder %s113, %s127
      %p129 = scmp.eq.s32.totalorder %s82, 0
      %p130 = por %p128, %p129
      %s132 = sadd.s32 %s131, 1
      %p135 = scmp.eq.s32.totalorder %s76, 1
      %p136 = scmp.ne.s32.totalorder %s131, %s133
      %p137 = scmp.eq.s32.totalorder %s76, 0
      %p138 = por %p136, %p137
      %p139 = scmp.ne.s32.totalorder %s131, %s133
      %p140 = scmp.eq.s32.totalorder %s81, 1
      %p141 = por %p139, %p140
      %p142 = scmp.ne.s32.totalorder %s133, %s134
      %p143 = scmp.eq.s32.totalorder %s81, 0
      %p144 = por %p142, %p143
      %p145 = scmp.ne.s32.totalorder %s133, %s134
      %p146 = scmp.eq.s32.totalorder %s82, 1
      %p147 = por %p145, %p146
      %p149 = scmp.ne.s32.totalorder %s134, %s148
      %p150 = scmp.eq.s32.totalorder %s82, 0
      %p151 = por %p149, %p150
      %s153 = sadd.s32 %s152, 1
      %p156 = scmp.eq.s32.totalorder %s76, 1
      %p157 = scmp.ne.s32.totalorder %s152, %s154
      %p158 = scmp.eq.s32.totalorder %s76, 0
      %p159 = por %p157, %p158
      %p160 = scmp.ne.s32.totalorder %s152, %s154
      %p161 = scmp.eq.s32.totalorder %s81, 1
      %p162 = por %p160, %p161
      %p163 = scmp.ne.s32.totalorder %s154, %s155
      %p164 = scmp.eq.s32.totalorder %s81, 0
      %p165 = por %p163, %p164
      %p166 = scmp.ne.s32.totalorder %s154, %s155
      %p167 = scmp.eq.s32.totalorder %s82, 1
      %p168 = por %p166, %p167
      %p170 = scmp.ne.s32.totalorder %s155, %s169
      %p171 = scmp.eq.s32.totalorder %s82, 0
      %p172 = por %p170, %p171
      %s174 = sadd.s32 %s173, 1
      %p177 = scmp.eq.s32.totalorder %s76, 1
      %p178 = scmp.ne.s32.totalorder %s173, %s175
      %p179 = scmp.eq.s32.totalorder %s76, 0
      %p180 = por %p178, %p179
      %p181 = scmp.ne.s32.totalorder %s173, %s175
      %p182 = scmp.eq.s32.totalorder %s81, 1
      %p183 = por %p181, %p182
      %p184 = scmp.ne.s32.totalorder %s175, %s176
      %p185 = scmp.eq.s32.totalorder %s81, 0
      %p186 = por %p184, %p185
      %p187 = scmp.ne.s32.totalorder %s175, %s176
      %p188 = scmp.eq.s32.totalorder %s82, 1
      %p189 = por %p187, %p188
      %p191 = scmp.ne.s32.totalorder %s176, %s190
      %p192 = scmp.eq.s32.totalorder %s82, 0
      %p193 = por %p191, %p192
      %s195 = sadd.s32 %s194, 1
      %p198 = scmp.eq.s32.totalorder %s76, 1
      %p199 = scmp.ne.s32.totalorder %s194, %s196
      %p200 = scmp.eq.s32.totalorder %s76, 0
      %p201 = por %p199, %p200
      %p202 = scmp.ne.s32.totalorder %s194, %s196
      %p203 = scmp.eq.s32.totalorder %s81, 1
      %p204 = por %p202, %p203
      %p205 = scmp.ne.s32.totalorder %s196, %s197
      %p206 = scmp.eq.s32.totalorder %s81, 0
      %p207 = por %p205, %p206
      %p208 = scmp.ne.s32.totalorder %s196, %s197
      %p209 = scmp.eq.s32.totalorder %s82, 1
      %p210 = por %p208, %p209
      %p212 = scmp.ne.s32.totalorder %s197, %s211
      %p213 = scmp.eq.s32.totalorder %s82, 0
      %p214 = por %p212, %p213
      %s216 = sadd.s32 %s215, 1
      %p219 = scmp.eq.s32.totalorder %s76, 1
      %p220 = scmp.ne.s32.totalorder %s215, %s217
      %p221 = scmp.eq.s32.totalorder %s76, 0
      %p222 = por %p220, %p221
      %p223 = scmp.ne.s32.totalorder %s215, %s217
      %p224 = scmp.eq.s32.totalorder %s81, 1
      %p225 = por %p223, %p224
      %p226 = scmp.ne.s32.totalorder %s217, %s218
      %p227 = scmp.eq.s32.totalorder %s81, 0
      %p228 = por %p226, %p227
      %p229 = scmp.ne.s32.totalorder %s217, %s218
      %p230 = scmp.eq.s32.totalorder %s82, 1
      %p231 = por %p229, %p230
      %p233 = scmp.ne.s32.totalorder %s218, %s232
      %p234 = scmp.eq.s32.totalorder %s82, 0
      %p235 = por %p233, %p234
      %s237 = sadd.s32 %s236, 1
      %p240 = scmp.eq.s32.totalorder %s76, 1
      %p241 = scmp.ne.s32.totalorder %s236, %s238
      %p242 = scmp.eq.s32.totalorder %s76, 0
      %p243 = por %p241, %p242
      %p244 = scmp.ne.s32.totalorder %s236, %s238
      %p245 = scmp.eq.s32.totalorder %s81, 1
      %p246 = por %p244, %p245
      %p247 = scmp.ne.s32.totalorder %s238, %s239
      %p248 = scmp.eq.s32.totalorder %s81, 0
      %p249 = por %p247, %p248
      %p250 = scmp.ne.s32.totalorder %s238, %s239
      %p251 = scmp.eq.s32.totalorder %s82, 1
      %p252 = por %p250, %p251
      %p254 = scmp.ne.s32.totalorder %s239, %s253
      %p255 = scmp.eq.s32.totalorder %s82, 0
      %p256 = por %p254, %p255
      %s258 = sadd.s32 %s257, 1
      %p261 = scmp.eq.s32.totalorder %s76, 1
      %p262 = scmp.ne.s32.totalorder %s257, %s259
      %p263 = scmp.eq.s32.totalorder %s76, 0
      %p264 = por %p262, %p263
      %p265 = scmp.ne.s32.totalorder %s257, %s259
      %p266 = scmp.eq.s32.totalorder %s81, 1
      %p267 = por %p265, %p266
      %p268 = scmp.ne.s32.totalorder %s259, %s260
      %p269 = scmp.eq.s32.totalorder %s81, 0
      %p270 = por %p268, %p269
      %p271 = scmp.ne.s32.totalorder %s259, %s260
      %p272 = scmp.eq.s32.totalorder %s82, 1
      %p273 = por %p271, %p272
      %p275 = scmp.ne.s32.totalorder %s260, %s274
      %p276 = scmp.eq.s32.totalorder %s82, 0
      %p277 = por %p275, %p276
      %s279 = sadd.s32 %s278, 1
      %p282 = scmp.eq.s32.totalorder %s76, 1
      %p283 = scmp.ne.s32.totalorder %s278, %s280
      %p284 = scmp.eq.s32.totalorder %s76, 0
      %p285 = por %p283, %p284
      %p286 = scmp.ne.s32.totalorder %s278, %s280
      %p287 = scmp.eq.s32.totalorder %s81, 1
      %p288 = por %p286, %p287
      %p289 = scmp.ne.s32.totalorder %s280, %s281
      %p290 = scmp.eq.s32.totalorder %s81, 0
      %p291 = por %p289, %p290
      %p292 = scmp.ne.s32.totalorder %s280, %s281
      %p293 = scmp.eq.s32.totalorder %s82, 1
      %p294 = por %p292, %p293
      %p296 = scmp.ne.s32.totalorder %s281, %s295
      %p297 = scmp.eq.s32.totalorder %s82, 0
      %p298 = por %p296, %p297
      %s300 = sadd.s32 %s299, 1
      %p303 = scmp.eq.s32.totalorder %s76, 1
      %p304 = scmp.ne.s32.totalorder %s299, %s301
      %p305 = scmp.eq.s32.totalorder %s76, 0
      %p306 = por %p304, %p305
      %p307 = scmp.ne.s32.totalorder %s299, %s301
      %p308 = scmp.eq.s32.totalorder %s81, 1
      %p309 = por %p307, %p308
      %p310 = scmp.ne.s32.totalorder %s301, %s302
      %p311 = scmp.eq.s32.totalorder %s81, 0
      %p312 = por %p310, %p311
      %p313 = scmp.ne.s32.totalorder %s301, %s302
      %p314 = scmp.eq.s32.totalorder %s82, 1
      %p315 = por %p313, %p314
      %p317 = scmp.ne.s32.totalorder %s302, %s316
      %p318 = scmp.eq.s32.totalorder %s82, 0
      %p319 = por %p317, %p318
      %s321 = sadd.s32 %s320, 1
      %p324 = scmp.eq.s32.totalorder %s76, 1
      %p325 = scmp.ne.s32.totalorder %s320, %s322
      %p326 = scmp.eq.s32.totalorder %s76, 0
      %p327 = por %p325, %p326
      %p328 = scmp.ne.s32.totalorder %s320, %s322
      %p329 = scmp.eq.s32.totalorder %s81, 1
      %p330 = por %p328, %p329
      %p331 = scmp.ne.s32.totalorder %s322, %s323
      %p332 = scmp.eq.s32.totalorder %s81, 0
      %p333 = por %p331, %p332
      %p334 = scmp.ne.s32.totalorder %s322, %s323
      %p335 = scmp.eq.s32.totalorder %s82, 1
      %p336 = por %p334, %p335
      %p338 = scmp.ne.s32.totalorder %s323, %s337
      %p339 = scmp.eq.s32.totalorder %s82, 0
      %p340 = por %p338, %p339
      %s342 = sadd.s32 %s341, 1
      %p345 = scmp.eq.s32.totalorder %s76, 1
      %p346 = scmp.ne.s32.totalorder %s341, %s343
      %p347 = scmp.eq.s32.totalorder %s76, 0
      %p348 = por %p346, %p347
      %p349 = scmp.ne.s32.totalorder %s341, %s343
      %p350 = scmp.eq.s32.totalorder %s81, 1
      %p351 = por %p349, %p350
      %p352 = scmp.ne.s32.totalorder %s343, %s344
      %p353 = scmp.eq.s32.totalorder %s81, 0
      %p354 = por %p352, %p353
      %p355 = scmp.ne.s32.totalorder %s343, %s344
      %p356 = scmp.eq.s32.totalorder %s82, 1
      %p357 = por %p355, %p356
      %p359 = scmp.ne.s32.totalorder %s344, %s358
      %p360 = scmp.eq.s32.totalorder %s82, 0
      %p361 = por %p359, %p360
      %s363 = sadd.s32 %s362, 1
      %p366 = scmp.eq.s32.totalorder %s76, 1
      %p367 = scmp.ne.s32.totalorder %s362, %s364
      %p368 = scmp.eq.s32.totalorder %s76, 0
      %p369 = por %p367, %p368
      %p370 = scmp.ne.s32.totalorder %s362, %s364
      %p371 = scmp.eq.s32.totalorder %s81, 1
      %p372 = por %p370, %p371
      %p373 = scmp.ne.s32.totalorder %s364, %s365
      %p374 = scmp.eq.s32.totalorder %s81, 0
      %p375 = por %p373, %p374
      %p376 = scmp.ne.s32.totalorder %s364, %s365
      %p377 = scmp.eq.s32.totalorder %s82, 1
      %p378 = por %p376, %p377
      %p380 = scmp.ne.s32.totalorder %s365, %s379
      %p381 = scmp.eq.s32.totalorder %s82, 0
      %p382 = por %p380, %p381
      %s384 = sadd.s32 %s383, 1
      %p387 = scmp.eq.s32.totalorder %s76, 1
      %p388 = scmp.ne.s32.totalorder %s383, %s385
      %p389 = scmp.eq.s32.totalorder %s76, 0
      %p390 = por %p388, %p389
      %p391 = scmp.ne.s32.totalorder %s383, %s385
      %p392 = scmp.eq.s32.totalorder %s81, 1
      %p393 = por %p391, %p392
      %p394 = scmp.ne.s32.totalorder %s385, %s386
      %p395 = scmp.eq.s32.totalorder %s81, 0
      %p396 = por %p394, %p395
      %p397 = scmp.ne.s32.totalorder %s385, %s386
      %p398 = scmp.eq.s32.totalorder %s82, 1
      %p399 = por %p397, %p398
      %p401 = scmp.ne.s32.totalorder %s386, %s400
      %p402 = scmp.eq.s32.totalorder %s82, 0
      %p403 = por %p401, %p402
      %s405 = sadd.s32 %s404, 1
      %p408 = scmp.eq.s32.totalorder %s76, 1
      %p409 = scmp.ne.s32.totalorder %s404, %s406
      %p410 = scmp.eq.s32.totalorder %s76, 0
      %p411 = por %p409, %p410
      %p412 = scmp.ne.s32.totalorder %s404, %s406
      %p413 = scmp.eq.s32.totalorder %s81, 1
      %p414 = por %p412, %p413
      %p415 = scmp.ne.s32.totalorder %s406, %s407
      %p416 = scmp.eq.s32.totalorder %s81, 0
      %p417 = por %p415, %p416
      %p418 = scmp.ne.s32.totalorder %s406, %s407
      %p419 = scmp.eq.s32.totalorder %s82, 1
      %p420 = por %p418, %p419
      %p422 = scmp.ne.s32.totalorder %s407, %s421
      %p423 = scmp.eq.s32.totalorder %s82, 0
      %p424 = por %p422, %p423
      %s426 = sadd.s32 %s425, 1
      %p429 = scmp.eq.s32.totalorder %s76, 1
      %p430 = scmp.ne.s32.totalorder %s425, %s427
      %p431 = scmp.eq.s32.totalorder %s76, 0
      %p432 = por %p430, %p431
      %p433 = scmp.ne.s32.totalorder %s425, %s427
      %p434 = scmp.eq.s32.totalorder %s81, 1
      %p435 = por %p433, %p434
      %p436 = scmp.ne.s32.totalorder %s427, %s428
      %p437 = scmp.eq.s32.totalorder %s81, 0
      %p438 = por %p436, %p437
      %p439 = scmp.ne.s32.totalorder %s427, %s428
      %p440 = scmp.eq.s32.totalorder %s82, 1
      %p441 = por %p439, %p440
      %p443 = scmp.ne.s32.totalorder %s428, %s442
      %p444 = scmp.eq.s32.totalorder %s82, 0
      %p445 = por %p443, %p444
      %s447 = sadd.s32 %s446, 1
      %p450 = scmp.eq.s32.totalorder %s76, 1
      %p451 = scmp.ne.s32.totalorder %s446, %s448
      %p452 = scmp.eq.s32.totalorder %s76, 0
      %p453 = por %p451, %p452
      %p454 = scmp.ne.s32.totalorder %s446, %s448
      %p455 = scmp.eq.s32.totalorder %s81, 1
      %p456 = por %p454, %p455
      %p457 = scmp.ne.s32.totalorder %s448, %s449
      %p458 = scmp.eq.s32.totalorder %s81, 0
      %p459 = por %p457, %p458
      %p460 = scmp.ne.s32.totalorder %s448, %s449
      %p461 = scmp.eq.s32.totalorder %s82, 1
      %p462 = por %p460, %p461
      %p464 = scmp.ne.s32.totalorder %s449, %s463
      %p465 = scmp.eq.s32.totalorder %s82, 0
      %p466 = por %p464, %p465
      %s468 = sadd.s32 %s467, 1
      %p471 = scmp.eq.s32.totalorder %s76, 1
      %p472 = scmp.ne.s32.totalorder %s467, %s469
      %p473 = scmp.eq.s32.totalorder %s76, 0
      %p474 = por %p472, %p473
      %p475 = scmp.ne.s32.totalorder %s467, %s469
      %p476 = scmp.eq.s32.totalorder %s81, 1
      %p477 = por %p475, %p476
      %p478 = scmp.ne.s32.totalorder %s469, %s470
      %p479 = scmp.eq.s32.totalorder %s81, 0
      %p480 = por %p478, %p479
      %p481 = scmp.ne.s32.totalorder %s469, %s470
      %p482 = scmp.eq.s32.totalorder %s82, 1
      %p483 = por %p481, %p482
      %p485 = scmp.ne.s32.totalorder %s470, %s484
      %p486 = scmp.eq.s32.totalorder %s82, 0
      %p487 = por %p485, %p486
      %s489 = sadd.s32 %s488, 1
      %p492 = scmp.eq.s32.totalorder %s76, 1
      %p493 = scmp.ne.s32.totalorder %s488, %s490
      %p494 = scmp.eq.s32.totalorder %s76, 0
      %p495 = por %p493, %p494
      %p496 = scmp.ne.s32.totalorder %s488, %s490
      %p497 = scmp.eq.s32.totalorder %s81, 1
      %p498 = por %p496, %p497
      %p499 = scmp.ne.s32.totalorder %s490, %s491
      %p500 = scmp.eq.s32.totalorder %s81, 0
      %p501 = por %p499, %p500
      %p502 = scmp.ne.s32.totalorder %s490, %s491
      %p503 = scmp.eq.s32.totalorder %s82, 1
      %p504 = por %p502, %p503
      %p506 = scmp.ne.s32.totalorder %s491, %s505
      %p507 = scmp.eq.s32.totalorder %s82, 0
      %p508 = por %p506, %p507
      %s510 = sadd.s32 %s509, 1
      %p513 = scmp.eq.s32.totalorder %s76, 1
      %p514 = scmp.ne.s32.totalorder %s509, %s511
      %p515 = scmp.eq.s32.totalorder %s76, 0
      %p516 = por %p514, %p515
      %p517 = scmp.ne.s32.totalorder %s509, %s511
      %p518 = scmp.eq.s32.totalorder %s81, 1
      %p519 = por %p517, %p518
      %p520 = scmp.ne.s32.totalorder %s511, %s512
      %p521 = scmp.eq.s32.totalorder %s81, 0
      %p522 = por %p520, %p521
      %p523 = scmp.ne.s32.totalorder %s511, %s512
      %p524 = scmp.eq.s32.totalorder %s82, 1
      %p525 = por %p523, %p524
      %p527 = scmp.ne.s32.totalorder %s512, %s526
      %p528 = scmp.eq.s32.totalorder %s82, 0
      %p529 = por %p527, %p528
      %s531 = sadd.s32 %s530, 1
      %p534 = scmp.eq.s32.totalorder %s76, 1
      %p535 = scmp.ne.s32.totalorder %s530, %s532
      %p536 = scmp.eq.s32.totalorder %s76, 0
      %p537 = por %p535, %p536
      %p538 = scmp.ne.s32.totalorder %s530, %s532
      %p539 = scmp.eq.s32.totalorder %s81, 1
      %p540 = por %p538, %p539
      %p541 = scmp.ne.s32.totalorder %s532, %s533
      %p542 = scmp.eq.s32.totalorder %s81, 0
      %p543 = por %p541, %p542
      %p544 = scmp.ne.s32.totalorder %s532, %s533
      %p545 = scmp.eq.s32.totalorder %s82, 1
      %p546 = por %p544, %p545
      %p548 = scmp.ne.s32.totalorder %s533, %s547
      %p549 = scmp.eq.s32.totalorder %s82, 0
      %p550 = por %p548, %p549
      %s552 = sadd.s32 %s551, 1
      %p555 = scmp.eq.s32.totalorder %s76, 1
      %p556 = scmp.ne.s32.totalorder %s551, %s553
      %p557 = scmp.eq.s32.totalorder %s76, 0
      %p558 = por %p556, %p557
      %p559 = scmp.ne.s32.totalorder %s551, %s553
      %p560 = scmp.eq.s32.totalorder %s81, 1
      %p561 = por %p559, %p560
      %p562 = scmp.ne.s32.totalorder %s553, %s554
      %p563 = scmp.eq.s32.totalorder %s81, 0
      %p564 = por %p562, %p563
      %p565 = scmp.ne.s32.totalorder %s553, %s554
      %p566 = scmp.eq.s32.totalorder %s82, 1
      %p567 = por %p565, %p566
      %p569 = scmp.ne.s32.totalorder %s554, %s568
      %p570 = scmp.eq.s32.totalorder %s82, 0
      %p571 = por %p569, %p570
      %s573 = sadd.s32 %s572, 1
      %p576 = scmp.eq.s32.totalorder %s76, 1
      %p577 = scmp.ne.s32.totalorder %s572, %s574
      %p578 = scmp.eq.s32.totalorder %s76, 0
      %p579 = por %p577, %p578
      %p580 = scmp.ne.s32.totalorder %s572, %s574
      %p581 = scmp.eq.s32.totalorder %s81, 1
      %p582 = por %p580, %p581
      %p583 = scmp.ne.s32.totalorder %s574, %s575
      %p584 = scmp.eq.s32.totalorder %s81, 0
      %p585 = por %p583, %p584
      %p586 = scmp.ne.s32.totalorder %s574, %s575
      %p587 = scmp.eq.s32.totalorder %s82, 1
      %p588 = por %p586, %p587
      %p590 = scmp.ne.s32.totalorder %s575, %s589
      %p591 = scmp.eq.s32.totalorder %s82, 0
      %p592 = por %p590, %p591
      %s594 = sadd.s32 %s593, 1
      %p597 = scmp.eq.s32.totalorder %s76, 1
      %p598 = scmp.ne.s32.totalorder %s593, %s595
      %p599 = scmp.eq.s32.totalorder %s76, 0
      %p600 = por %p598, %p599
      %p601 = scmp.ne.s32.totalorder %s593, %s595
      %p602 = scmp.eq.s32.totalorder %s81, 1
      %p603 = por %p601, %p602
      %p604 = scmp.ne.s32.totalorder %s595, %s596
      %p605 = scmp.eq.s32.totalorder %s81, 0
      %p606 = por %p604, %p605
      %p607 = scmp.ne.s32.totalorder %s595, %s596
      %p608 = scmp.eq.s32.totalorder %s82, 1
      %p609 = por %p607, %p608
      %p611 = scmp.ne.s32.totalorder %s596, %s610
      %p612 = scmp.eq.s32.totalorder %s82, 0
      %p613 = por %p611, %p612
      %s615 = sadd.s32 %s614, 1
      %p618 = scmp.eq.s32.totalorder %s76, 1
      %p619 = scmp.ne.s32.totalorder %s614, %s616
      %p620 = scmp.eq.s32.totalorder %s76, 0
      %p621 = por %p619, %p620
      %p622 = scmp.ne.s32.totalorder %s614, %s616
      %p623 = scmp.eq.s32.totalorder %s81, 1
      %p624 = por %p622, %p623
      %p625 = scmp.ne.s32.totalorder %s616, %s617
      %p626 = scmp.eq.s32.totalorder %s81, 0
      %p627 = por %p625, %p626
      %p628 = scmp.ne.s32.totalorder %s616, %s617
      %p629 = scmp.eq.s32.totalorder %s82, 1
      %p630 = por %p628, %p629
      %p632 = scmp.ne.s32.totalorder %s617, %s631
      %p633 = scmp.eq.s32.totalorder %s82, 0
      %p634 = por %p632, %p633
      %s636 = sadd.s32 %s635, 1
      %p639 = scmp.eq.s32.totalorder %s76, 1
      %p640 = scmp.ne.s32.totalorder %s635, %s637
      %p641 = scmp.eq.s32.totalorder %s76, 0
      %p642 = por %p640, %p641
      %p643 = scmp.ne.s32.totalorder %s635, %s637
      %p644 = scmp.eq.s32.totalorder %s81, 1
      %p645 = por %p643, %p644
      %p646 = scmp.ne.s32.totalorder %s637, %s638
      %p647 = scmp.eq.s32.totalorder %s81, 0
      %p648 = por %p646, %p647
      %p649 = scmp.ne.s32.totalorder %s637, %s638
      %p650 = scmp.eq.s32.totalorder %s82, 1
      %p651 = por %p649, %p650
      %p653 = scmp.ne.s32.totalorder %s638, %s652
      %p654 = scmp.eq.s32.totalorder %s82, 0
      %p655 = por %p653, %p654
      %s657 = sadd.s32 %s656, 1
      %p660 = scmp.eq.s32.totalorder %s76, 1
      %p661 = scmp.ne.s32.totalorder %s656, %s658
      %p662 = scmp.eq.s32.totalorder %s76, 0
      %p663 = por %p661, %p662
      %p664 = scmp.ne.s32.totalorder %s656, %s658
      %p665 = scmp.eq.s32.totalorder %s81, 1
      %p666 = por %p664, %p665
      %p667 = scmp.ne.s32.totalorder %s658, %s659
      %p668 = scmp.eq.s32.totalorder %s81, 0
      %p669 = por %p667, %p668
      %p670 = scmp.ne.s32.totalorder %s658, %s659
      %p671 = scmp.eq.s32.totalorder %s82, 1
      %p672 = por %p670, %p671
      %p674 = scmp.ne.s32.totalorder %s659, %s673
      %p675 = scmp.eq.s32.totalorder %s82, 0
      %p676 = por %p674, %p675
      %s678 = sadd.s32 %s677, 1
      %p681 = scmp.eq.s32.totalorder %s76, 1
      %p682 = scmp.ne.s32.totalorder %s677, %s679
      %p683 = scmp.eq.s32.totalorder %s76, 0
      %p684 = por %p682, %p683
      %p685 = scmp.ne.s32.totalorder %s677, %s679
      %p686 = scmp.eq.s32.totalorder %s81, 1
      %p687 = por %p685, %p686
      %p688 = scmp.ne.s32.totalorder %s679, %s680
      %p689 = scmp.eq.s32.totalorder %s81, 0
      %p690 = por %p688, %p689
      %p691 = scmp.ne.s32.totalorder %s679, %s680
      %p692 = scmp.eq.s32.totalorder %s82, 1
      %p693 = por %p691, %p692
      %p695 = scmp.ne.s32.totalorder %s680, %s694
      %p696 = scmp.eq.s32.totalorder %s82, 0
      %p697 = por %p695, %p696
      %s699 = sadd.s32 %s698, 1
      %p702 = scmp.eq.s32.totalorder %s76, 1
      %p703 = scmp.ne.s32.totalorder %s698, %s700
      %p704 = scmp.eq.s32.totalorder %s76, 0
      %p705 = por %p703, %p704
      %p706 = scmp.ne.s32.totalorder %s698, %s700
      %p707 = scmp.eq.s32.totalorder %s81, 1
      %p708 = por %p706, %p707
      %p709 = scmp.ne.s32.totalorder %s700, %s701
      %p710 = scmp.eq.s32.totalorder %s81, 0
      %p711 = por %p709, %p710
      %p712 = scmp.ne.s32.totalorder %s700, %s701
      %p713 = scmp.eq.s32.totalorder %s82, 1
      %p714 = por %p712, %p713
      %p716 = scmp.ne.s32.totalorder %s701, %s715
      %p717 = scmp.eq.s32.totalorder %s82, 0
      %p718 = por %p716, %p717
      %s720 = sadd.s32 %s719, 1
      %p723 = scmp.eq.s32.totalorder %s76, 1
      %p724 = scmp.ne.s32.totalorder %s719, %s721
      %p725 = scmp.eq.s32.totalorder %s76, 0
      %p726 = por %p724, %p725
      %p727 = scmp.ne.s32.totalorder %s719, %s721
      %p728 = scmp.eq.s32.totalorder %s81, 1
      %p729 = por %p727, %p728
      %p730 = scmp.ne.s32.totalorder %s721, %s722
      %p731 = scmp.eq.s32.totalorder %s81, 0
      %p732 = por %p730, %p731
      %p733 = scmp.ne.s32.totalorder %s721, %s722
      %p734 = scmp.eq.s32.totalorder %s82, 1
      %p735 = por %p733, %p734
      %p737 = scmp.ne.s32.totalorder %s722, %s736
      %p738 = scmp.eq.s32.totalorder %s82, 0
      %p739 = por %p737, %p738
      %s741 = sadd.s32 %s740, 1
      %p744 = scmp.eq.s32.totalorder %s76, 1
      %p745 = scmp.ne.s32.totalorder %s740, %s742
      %p746 = scmp.eq.s32.totalorder %s76, 0
      %p747 = por %p745, %p746
      %p748 = scmp.ne.s32.totalorder %s740, %s742
      %p749 = scmp.eq.s32.totalorder %s81, 1
      %p750 = por %p748, %p749
      %p751 = scmp.ne.s32.totalorder %s742, %s743
      %p752 = scmp.eq.s32.totalorder %s81, 0
      %p753 = por %p751, %p752
      %p754 = scmp.ne.s32.totalorder %s742, %s743
      %p755 = scmp.eq.s32.totalorder %s82, 1
      %p756 = por %p754, %p755
      %p758 = scmp.ne.s32.totalorder %s743, %s757
      %p759 = scmp.eq.s32.totalorder %s82, 0
      %p760 = por %p758, %p759
      %s762 = sadd.s32 %s761, 1
      %p765 = scmp.eq.s32.totalorder %s76, 1
      %p766 = scmp.ne.s32.totalorder %s761, %s763
      %p767 = scmp.eq.s32.totalorder %s76, 0
      %p768 = por %p766, %p767
      %p769 = scmp.ne.s32.totalorder %s761, %s763
      %p770 = scmp.eq.s32.totalorder %s81, 1
      %p771 = por %p769, %p770
      %p772 = scmp.ne.s32.totalorder %s763, %s764
      %p773 = scmp.eq.s32.totalorder %s81, 0
      %p774 = por %p772, %p773
      %p775 = scmp.ne.s32.totalorder %s763, %s764
      %p776 = scmp.eq.s32.totalorder %s82, 1
      %p777 = por %p775, %p776
      %p779 = scmp.ne.s32.totalorder %s764, %s778
      %p780 = scmp.eq.s32.totalorder %s82, 0
      %p781 = por %p779, %p780
      %s782 = ssub.s32 %s76, %s83
      %p783 = scmp.eq.s32.totalorder %s782, 0
      %s785 = sadd.s32 %s784, 1
      %s786 = scalar_select %p783, %s784, %s785
      %p789 = pneg %p783
      %p790 = scmp.eq.s32.totalorder %s76, 1
      %p791 = por %p789, %p790
      %p792 = scmp.ne.s32.totalorder %s784, %s787
      %p793 = scmp.eq.s32.totalorder %s76, 0
      %p794 = por %p792, %p793
      %p795 = scmp.ne.s32.totalorder %s784, %s787
      %p796 = scmp.eq.s32.totalorder %s81, 1
      %p797 = por %p795, %p796
      %p798 = scmp.ne.s32.totalorder %s787, %s788
      %p799 = scmp.eq.s32.totalorder %s81, 0
      %p800 = por %p798, %p799
      %p801 = scmp.ne.s32.totalorder %s787, %s788
      %p802 = scmp.eq.s32.totalorder %s82, 1
      %p803 = por %p801, %p802
      %p805 = scmp.ne.s32.totalorder %s788, %s804
      %p806 = scmp.eq.s32.totalorder %s82, 0
      %p807 = por %p805, %p806
      %p808 = scmp.le.s32.totalorder 1, %s76
      %p809 = scmp.lt.s32.totalorder %s76, 3
      %p810 = pnand %p808, %p809
      %p811 = pneg %p810
      // Predicated region
      $region9: #{tpu_custom_call.1} parent=5 // pred_check
        _
      $region10: #{tpu_custom_call.1} parent=5 // pred_check_branch
        %813 = sbr.rel (%p810) target = $region12
      $region11: #{tpu_custom_call.1} parent=5 // pred_region
        %s814 = ssub.s32 %s76, 1
        // Predicated region
        $region13: #{tpu_custom_call.1} parent=11 // pred_check
          %p815 = pneg %p123
        $region14: #{tpu_custom_call.1} parent=11 // pred_check_branch
          %817 = sbr.rel (%p815) target = $region16
        $region15: #{tpu_custom_call.1} parent=11 // pred_region
          _
        $region16: #{tpu_custom_call.1} parent=11 // pred_fallthru
          _
        // Predicated region
        $region17: #{tpu_custom_call.1} parent=11 // pred_check
          %p818 = pneg %p144
        $region18: #{tpu_custom_call.1} parent=11 // pred_check_branch
          %820 = sbr.rel (%p818) target = $region20
        $region19: #{tpu_custom_call.1} parent=11 // pred_region
          _
        $region20: #{tpu_custom_call.1} parent=11 // pred_fallthru
          _
        // Predicated region
        $region21: #{tpu_custom_call.1} parent=11 // pred_check
          %p821 = pneg %p165
        $region22: #{tpu_custom_call.1} parent=11 // pred_check_branch
          %823 = sbr.rel (%p821) target = $region24
        $region23: #{tpu_custom_call.1} parent=11 // pred_region
          _
        $region24: #{tpu_custom_call.1} parent=11 // pred_fallthru
          _
        // Predicated region
        $region25: #{tpu_custom_call.1} parent=11 // pred_check
          %p824 = pneg %p186
        $region26: #{tpu_custom_call.1} parent=11 // pred_check_branch
          %826 = sbr.rel (%p824) target = $region28
        $region27: #{tpu_custom_call.1} parent=11 // pred_region
          _
        $region28: #{tpu_custom_call.1} parent=11 // pred_fallthru
          _
        // Predicated region
        $region29: #{tpu_custom_call.1} parent=11 // pred_check
          %p827 = pneg %p207
        $region30: #{tpu_custom_call.1} parent=11 // pred_check_branch
          %829 = sbr.rel (%p827) target = $region32
        $region31: #{tpu_custom_call.1} parent=11 // pred_region
          _
        $region32: #{tpu_custom_call.1} parent=11 // pred_fallthru
          _
        // Predicated region
        $region33: #{tpu_custom_call.1} parent=11 // pred_check
          %p830 = pneg %p228
        $region34: #{tpu_custom_call.1} parent=11 // pred_check_branch
          %832 = sbr.rel (%p830) target = $region36
        $region35: #{tpu_custom_call.1} parent=11 // pred_region
          _
        $region36: #{tpu_custom_call.1} parent=11 // pred_fallthru
          _
        // Predicated region
        $region37: #{tpu_custom_call.1} parent=11 // pred_check
          %p833 = pneg %p249
        $region38: #{tpu_custom_call.1} parent=11 // pred_check_branch
          %835 = sbr.rel (%p833) target = $region40
        $region39: #{tpu_custom_call.1} parent=11 // pred_region
          _
        $region40: #{tpu_custom_call.1} parent=11 // pred_fallthru
          _
        // Predicated region
        $region41: #{tpu_custom_call.1} parent=11 // pred_check
          %p836 = pneg %p270
        $region42: #{tpu_custom_call.1} parent=11 // pred_check_branch
          %838 = sbr.rel (%p836) target = $region44
        $region43: #{tpu_custom_call.1} parent=11 // pred_region
          _
        $region44: #{tpu_custom_call.1} parent=11 // pred_fallthru
          _
        // Predicated region
        $region45: #{tpu_custom_call.1} parent=11 // pred_check
          %p839 = pneg %p291
        $region46: #{tpu_custom_call.1} parent=11 // pred_check_branch
          %841 = sbr.rel (%p839) target = $region48
        $region47: #{tpu_custom_call.1} parent=11 // pred_region
          _
        $region48: #{tpu_custom_call.1} parent=11 // pred_fallthru
          _
        // Predicated region
        $region49: #{tpu_custom_call.1} parent=11 // pred_check
          %p842 = pneg %p312
        $region50: #{tpu_custom_call.1} parent=11 // pred_check_branch
          %844 = sbr.rel (%p842) target = $region52
        $region51: #{tpu_custom_call.1} parent=11 // pred_region
          _
        $region52: #{tpu_custom_call.1} parent=11 // pred_fallthru
          _
        // Predicated region
        $region53: #{tpu_custom_call.1} parent=11 // pred_check
          %p845 = pneg %p333
        $region54: #{tpu_custom_call.1} parent=11 // pred_check_branch
          %847 = sbr.rel (%p845) target = $region56
        $region55: #{tpu_custom_call.1} parent=11 // pred_region
          _
        $region56: #{tpu_custom_call.1} parent=11 // pred_fallthru
          _
        // Predicated region
        $region57: #{tpu_custom_call.1} parent=11 // pred_check
          %p848 = pneg %p354
        $region58: #{tpu_custom_call.1} parent=11 // pred_check_branch
          %850 = sbr.rel (%p848) target = $region60
        $region59: #{tpu_custom_call.1} parent=11 // pred_region
          _
        $region60: #{tpu_custom_call.1} parent=11 // pred_fallthru
          _
        // Predicated region
        $region61: #{tpu_custom_call.1} parent=11 // pred_check
          %p851 = pneg %p375
        $region62: #{tpu_custom_call.1} parent=11 // pred_check_branch
          %853 = sbr.rel (%p851) target = $region64
        $region63: #{tpu_custom_call.1} parent=11 // pred_region
          _
        $region64: #{tpu_custom_call.1} parent=11 // pred_fallthru
          _
        // Predicated region
        $region65: #{tpu_custom_call.1} parent=11 // pred_check
          %p854 = pneg %p396
        $region66: #{tpu_custom_call.1} parent=11 // pred_check_branch
          %856 = sbr.rel (%p854) target = $region68
        $region67: #{tpu_custom_call.1} parent=11 // pred_region
          _
        $region68: #{tpu_custom_call.1} parent=11 // pred_fallthru
          _
        // Predicated region
        $region69: #{tpu_custom_call.1} parent=11 // pred_check
          %p857 = pneg %p417
        $region70: #{tpu_custom_call.1} parent=11 // pred_check_branch
          %859 = sbr.rel (%p857) target = $region72
        $region71: #{tpu_custom_call.1} parent=11 // pred_region
          _
        $region72: #{tpu_custom_call.1} parent=11 // pred_fallthru
          _
        // Predicated region
        $region73: #{tpu_custom_call.1} parent=11 // pred_check
          %p860 = pneg %p438
        $region74: #{tpu_custom_call.1} parent=11 // pred_check_branch
          %862 = sbr.rel (%p860) target = $region76
        $region75: #{tpu_custom_call.1} parent=11 // pred_region
          _
        $region76: #{tpu_custom_call.1} parent=11 // pred_fallthru
          _
        // Predicated region
        $region77: #{tpu_custom_call.1} parent=11 // pred_check
          %p863 = pneg %p459
        $region78: #{tpu_custom_call.1} parent=11 // pred_check_branch
          %865 = sbr.rel (%p863) target = $region80
        $region79: #{tpu_custom_call.1} parent=11 // pred_region
          _
        $region80: #{tpu_custom_call.1} parent=11 // pred_fallthru
          _
        // Predicated region
        $region81: #{tpu_custom_call.1} parent=11 // pred_check
          %p866 = pneg %p480
        $region82: #{tpu_custom_call.1} parent=11 // pred_check_branch
          %868 = sbr.rel (%p866) target = $region84
        $region83: #{tpu_custom_call.1} parent=11 // pred_region
          _
        $region84: #{tpu_custom_call.1} parent=11 // pred_fallthru
          _
        // Predicated region
        $region85: #{tpu_custom_call.1} parent=11 // pred_check
          %p869 = pneg %p501
        $region86: #{tpu_custom_call.1} parent=11 // pred_check_branch
          %871 = sbr.rel (%p869) target = $region88
        $region87: #{tpu_custom_call.1} parent=11 // pred_region
          _
        $region88: #{tpu_custom_call.1} parent=11 // pred_fallthru
          _
        // Predicated region
        $region89: #{tpu_custom_call.1} parent=11 // pred_check
          %p872 = pneg %p522
        $region90: #{tpu_custom_call.1} parent=11 // pred_check_branch
          %874 = sbr.rel (%p872) target = $region92
        $region91: #{tpu_custom_call.1} parent=11 // pred_region
          _
        $region92: #{tpu_custom_call.1} parent=11 // pred_fallthru
          _
        // Predicated region
        $region93: #{tpu_custom_call.1} parent=11 // pred_check
          %p875 = pneg %p543
        $region94: #{tpu_custom_call.1} parent=11 // pred_check_branch
          %877 = sbr.rel (%p875) target = $region96
        $region95: #{tpu_custom_call.1} parent=11 // pred_region
          _
        $region96: #{tpu_custom_call.1} parent=11 // pred_fallthru
          _
        // Predicated region
        $region97: #{tpu_custom_call.1} parent=11 // pred_check
          %p878 = pneg %p564
        $region98: #{tpu_custom_call.1} parent=11 // pred_check_branch
          %880 = sbr.rel (%p878) target = $region100
        $region99: #{tpu_custom_call.1} parent=11 // pred_region
          _
        $region100: #{tpu_custom_call.1} parent=11 // pred_fallthru
          _
        // Predicated region
        $region101: #{tpu_custom_call.1} parent=11 // pred_check
          %p881 = pneg %p585
        $region102: #{tpu_custom_call.1} parent=11 // pred_check_branch
          %883 = sbr.rel (%p881) target = $region104
        $region103: #{tpu_custom_call.1} parent=11 // pred_region
          _
        $region104: #{tpu_custom_call.1} parent=11 // pred_fallthru
          _
        // Predicated region
        $region105: #{tpu_custom_call.1} parent=11 // pred_check
          %p884 = pneg %p606
        $region106: #{tpu_custom_call.1} parent=11 // pred_check_branch
          %886 = sbr.rel (%p884) target = $region108
        $region107: #{tpu_custom_call.1} parent=11 // pred_region
          _
        $region108: #{tpu_custom_call.1} parent=11 // pred_fallthru
          _
        // Predicated region
        $region109: #{tpu_custom_call.1} parent=11 // pred_check
          %p887 = pneg %p627
        $region110: #{tpu_custom_call.1} parent=11 // pred_check_branch
          %889 = sbr.rel (%p887) target = $region112
        $region111: #{tpu_custom_call.1} parent=11 // pred_region
          _
        $region112: #{tpu_custom_call.1} parent=11 // pred_fallthru
          _
        // Predicated region
        $region113: #{tpu_custom_call.1} parent=11 // pred_check
          %p890 = pneg %p648
        $region114: #{tpu_custom_call.1} parent=11 // pred_check_branch
          %892 = sbr.rel (%p890) target = $region116
        $region115: #{tpu_custom_call.1} parent=11 // pred_region
          _
        $region116: #{tpu_custom_call.1} parent=11 // pred_fallthru
          _
        // Predicated region
        $region117: #{tpu_custom_call.1} parent=11 // pred_check
          %p893 = pneg %p669
        $region118: #{tpu_custom_call.1} parent=11 // pred_check_branch
          %895 = sbr.rel (%p893) target = $region120
        $region119: #{tpu_custom_call.1} parent=11 // pred_region
          _
        $region120: #{tpu_custom_call.1} parent=11 // pred_fallthru
          _
        // Predicated region
        $region121: #{tpu_custom_call.1} parent=11 // pred_check
          %p896 = pneg %p690
        $region122: #{tpu_custom_call.1} parent=11 // pred_check_branch
          %898 = sbr.rel (%p896) target = $region124
        $region123: #{tpu_custom_call.1} parent=11 // pred_region
          _
        $region124: #{tpu_custom_call.1} parent=11 // pred_fallthru
          _
        // Predicated region
        $region125: #{tpu_custom_call.1} parent=11 // pred_check
          %p899 = pneg %p711
        $region126: #{tpu_custom_call.1} parent=11 // pred_check_branch
          %901 = sbr.rel (%p899) target = $region128
        $region127: #{tpu_custom_call.1} parent=11 // pred_region
          _
        $region128: #{tpu_custom_call.1} parent=11 // pred_fallthru
          _
        // Predicated region
        $region129: #{tpu_custom_call.1} parent=11 // pred_check
          %p902 = pneg %p732
        $region130: #{tpu_custom_call.1} parent=11 // pred_check_branch
          %904 = sbr.rel (%p902) target = $region132
        $region131: #{tpu_custom_call.1} parent=11 // pred_region
          _
        $region132: #{tpu_custom_call.1} parent=11 // pred_fallthru
          _
        // Predicated region
        $region133: #{tpu_custom_call.1} parent=11 // pred_check
          %p905 = pneg %p753
        $region134: #{tpu_custom_call.1} parent=11 // pred_check_branch
          %907 = sbr.rel (%p905) target = $region136
        $region135: #{tpu_custom_call.1} parent=11 // pred_region
          _
        $region136: #{tpu_custom_call.1} parent=11 // pred_fallthru
          _
        // Predicated region
        $region137: #{tpu_custom_call.1} parent=11 // pred_check
          %p908 = pneg %p774
        $region138: #{tpu_custom_call.1} parent=11 // pred_check_branch
          %910 = sbr.rel (%p908) target = $region140
        $region139: #{tpu_custom_call.1} parent=11 // pred_region
          _
        $region140: #{tpu_custom_call.1} parent=11 // pred_fallthru
          _
      $region12: #{tpu_custom_call.1} parent=5 // pred_fallthru
        _
      %p911 = scmp.lt.s32.totalorder %s76, 2
      // Predicated region
      $region141: #{tpu_custom_call.1} parent=5 // pred_check
        %p912 = pneg %p911
      $region142: #{tpu_custom_call.1} parent=5 // pred_check_branch
        %914 = sbr.rel (%p912) target = $region144
      $region143: #{tpu_custom_call.1} parent=5 // pred_region
        // Predicated region
        $region145: #{tpu_custom_call.1} parent=143 // pred_check
          %p915 = pneg %p96
        $region146: #{tpu_custom_call.1} parent=143 // pred_check_branch
          %917 = sbr.rel (%p915) target = $region148
        $region147: #{tpu_custom_call.1} parent=143 // pred_region
          %p918 = scmp.lt.s32.totalorder %s76, 1
          %s919 = scalar_select %p918, %s76, 1
          %s920 = smul.addr %s919, 128
          %s921 = smul.addr %s920, 8
          %s922 = scalar_lea.vmem %s1, %s921
        $region148: #{tpu_custom_call.1} parent=143 // pred_fallthru
          _
      $region144: #{tpu_custom_call.1} parent=5 // pred_fallthru
        _
      %p923 = scmp.le.s32.totalorder 1, %s76
      %p924 = scmp.lt.s32.totalorder %s76, 3
      %p925 = pnand %p923, %p924
      %p926 = pneg %p925
      // Predicated region
      $region149: #{tpu_custom_call.1} parent=5 // pred_check
        _
      $region150: #{tpu_custom_call.1} parent=5 // pred_check_branch
        %928 = sbr.rel (%p925) target = $region152
      $region151: #{tpu_custom_call.1} parent=5 // pred_region
        %s929 = ssub.s32 %s76, 1
        %p930 = scmp.lt.s32.totalorder %s81, 1
        %s931 = scalar_select %p930, %s81, 1
        %s932 = smul.addr %s931, 128
        %s933 = smul.addr %s932, 8
        %s934 = scalar_lea.vmem %s1, %s933
        %p935 = pneg %p102
        %p936 = pneg %p99
        %p937 = pneg %p123
        %p938 = pneg %p120
        %p939 = pneg %p144
        %p940 = pneg %p141
        %p941 = pneg %p165
        %p942 = pneg %p162
        %p943 = pneg %p186
        %p944 = pneg %p183
        %p945 = pneg %p207
        %p946 = pneg %p204
        %p947 = pneg %p228
        %p948 = pneg %p225
        %p949 = pneg %p249
        %p950 = pneg %p246
        %p951 = pneg %p270
        %p952 = pneg %p267
        %p953 = pneg %p291
        %p954 = pneg %p288
        %p955 = pneg %p312
        %p956 = pneg %p309
        %p957 = pneg %p333
        %p958 = pneg %p330
        %p959 = pneg %p354
        %p960 = pneg %p351
        %p961 = pneg %p375
        %p962 = pneg %p372
        %p963 = pneg %p396
        %p964 = pneg %p393
        %p965 = pneg %p417
        %p966 = pneg %p414
        %p967 = pneg %p438
        %p968 = pneg %p435
        %p969 = pneg %p459
        %p970 = pneg %p456
        %p971 = pneg %p480
        %p972 = pneg %p477
        %p973 = pneg %p501
        %p974 = pneg %p498
        %p975 = pneg %p522
        %p976 = pneg %p519
        %p977 = pneg %p543
        %p978 = pneg %p540
        %p979 = pneg %p564
        %p980 = pneg %p561
        %p981 = pneg %p585
        %p982 = pneg %p582
        %p983 = pneg %p606
        %p984 = pneg %p603
        %p985 = pneg %p627
        %p986 = pneg %p624
        %p987 = pneg %p648
        %p988 = pneg %p645
        %p989 = pneg %p669
        %p990 = pneg %p666
        %p991 = pneg %p690
        %p992 = pneg %p687
        %p993 = pneg %p711
        %p994 = pneg %p708
        %p995 = pneg %p732
        %p996 = pneg %p729
        %p997 = pneg %p753
        %p998 = pneg %p750
        %p999 = pneg %p774
        %p1000 = pneg %p771
        %p1001 = pneg %p800
        %p1002 = pneg %p797
        %s1003 = sand.u32 %s787, 1
        %s1004 = scalar_lea.sflag [#allocation10], %s1003
        %s1005 = sand.u32 %s787, 1
        %s1006 = scalar_lea.vmem [#allocation9], %s1005
        %p1007 = scmp.lt.s32.totalorder %s81, 1
        %s1008 = scalar_select %p1007, %s81, 1
        %s1009 = smul.addr %s1008, 128
        %s1010 = smul.addr %s1009, 8
        %s1011 = scalar_lea.vmem %s1, %s1010
        %v1013 = vld [vmem:[%s1011] sm:$0xff]
        %v1014 = vld [vmem:[%s1011 + $0x8] sm:$0xff]
        %v1015 = vld [vmem:[%s1011 + $0x10] sm:$0xff]
        %v1016 = vld [vmem:[%s1011 + $0x18] sm:$0xff]
        %v1017 = vld [vmem:[%s1011 + $0x20] sm:$0xff]
        %v1018 = vld [vmem:[%s1011 + $0x28] sm:$0xff]
        %v1019 = vld [vmem:[%s1011 + $0x30] sm:$0xff]
        %v1020 = vld [vmem:[%s1011 + $0x38] sm:$0xff]
        %v1021 = vld [vmem:[%s1011 + $0x40] sm:$0xff]
        %v1022 = vld [vmem:[%s1011 + $0x48] sm:$0xff]
        %v1023 = vld [vmem:[%s1011 + $0x50] sm:$0xff]
        %v1024 = vld [vmem:[%s1011 + $0x58] sm:$0xff]
        %v1025 = vld [vmem:[%s1011 + $0x60] sm:$0xff]
        %v1026 = vld [vmem:[%s1011 + $0x68] sm:$0xff]
        %v1027 = vld [vmem:[%s1011 + $0x70] sm:$0xff]
        %v1028 = vld [vmem:[%s1011 + $0x78] sm:$0xff]
        %v1029 = vld [vmem:[%s1011 + $0x80] sm:$0xff]
        %v1030 = vld [vmem:[%s1011 + $0x88] sm:$0xff]
        %v1031 = vld [vmem:[%s1011 + $0x90] sm:$0xff]
        %v1032 = vld [vmem:[%s1011 + $0x98] sm:$0xff]
        %v1033 = vld [vmem:[%s1011 + $0xa0] sm:$0xff]
        %v1034 = vld [vmem:[%s1011 + $0xa8] sm:$0xff]
        %v1035 = vld [vmem:[%s1011 + $0xb0] sm:$0xff]
        %v1036 = vld [vmem:[%s1011 + $0xb8] sm:$0xff]
        %v1037 = vld [vmem:[%s1011 + $0xc0] sm:$0xff]
        %v1038 = vld [vmem:[%s1011 + $0xc8] sm:$0xff]
        %v1039 = vld [vmem:[%s1011 + $0xd0] sm:$0xff]
        %v1040 = vld [vmem:[%s1011 + $0xd8] sm:$0xff]
        %v1041 = vld [vmem:[%s1011 + $0xe0] sm:$0xff]
        %v1042 = vld [vmem:[%s1011 + $0xe8] sm:$0xff]
        %v1043 = vld [vmem:[%s1011 + $0xf0] sm:$0xff]
        %v1044 = vld [vmem:[%s1011 + $0xf8] sm:$0xff]
        %v1045 = vld [vmem:[%s1011 + $0x100] sm:$0xff]
        %v1046 = vld [vmem:[%s1011 + $0x108] sm:$0xff]
        %v1047 = vld [vmem:[%s1011 + $0x110] sm:$0xff]
        %v1048 = vld [vmem:[%s1011 + $0x118] sm:$0xff]
        %v1049 = vld [vmem:[%s1011 + $0x120] sm:$0xff]
        %v1050 = vld [vmem:[%s1011 + $0x128] sm:$0xff]
        %v1051 = vld [vmem:[%s1011 + $0x130] sm:$0xff]
        %v1052 = vld [vmem:[%s1011 + $0x138] sm:$0xff]
        %v1053 = vld [vmem:[%s1011 + $0x140] sm:$0xff]
        %v1054 = vld [vmem:[%s1011 + $0x148] sm:$0xff]
        %v1055 = vld [vmem:[%s1011 + $0x150] sm:$0xff]
        %v1056 = vld [vmem:[%s1011 + $0x158] sm:$0xff]
        %v1057 = vld [vmem:[%s1011 + $0x160] sm:$0xff]
        %v1058 = vld [vmem:[%s1011 + $0x168] sm:$0xff]
        %v1059 = vld [vmem:[%s1011 + $0x170] sm:$0xff]
        %v1060 = vld [vmem:[%s1011 + $0x178] sm:$0xff]
        %v1061 = vld [vmem:[%s1011 + $0x180] sm:$0xff]
        %v1062 = vld [vmem:[%s1011 + $0x188] sm:$0xff]
        %v1063 = vld [vmem:[%s1011 + $0x190] sm:$0xff]
        %v1064 = vld [vmem:[%s1011 + $0x198] sm:$0xff]
        %v1065 = vld [vmem:[%s1011 + $0x1a0] sm:$0xff]
        %v1066 = vld [vmem:[%s1011 + $0x1a8] sm:$0xff]
        %v1067 = vld [vmem:[%s1011 + $0x1b0] sm:$0xff]
        %v1068 = vld [vmem:[%s1011 + $0x1b8] sm:$0xff]
        %v1069 = vld [vmem:[%s1011 + $0x1c0] sm:$0xff]
        %v1070 = vld [vmem:[%s1011 + $0x1c8] sm:$0xff]
        %v1071 = vld [vmem:[%s1011 + $0x1d0] sm:$0xff]
        %v1072 = vld [vmem:[%s1011 + $0x1d8] sm:$0xff]
        %v1073 = vld [vmem:[%s1011 + $0x1e0] sm:$0xff]
        %v1074 = vld [vmem:[%s1011 + $0x1e8] sm:$0xff]
        %v1075 = vld [vmem:[%s1011 + $0x1f0] sm:$0xff]
        %v1076 = vld [vmem:[%s1011 + $0x1f8] sm:$0xff]
        %v1077 = vld [vmem:[%s1011 + $0x200] sm:$0xff]
        %v1078 = vld [vmem:[%s1011 + $0x208] sm:$0xff]
        %v1079 = vld [vmem:[%s1011 + $0x210] sm:$0xff]
        %v1080 = vld [vmem:[%s1011 + $0x218] sm:$0xff]
        %v1081 = vld [vmem:[%s1011 + $0x220] sm:$0xff]
        %v1082 = vld [vmem:[%s1011 + $0x228] sm:$0xff]
        %v1083 = vld [vmem:[%s1011 + $0x230] sm:$0xff]
        %v1084 = vld [vmem:[%s1011 + $0x238] sm:$0xff]
        %v1085 = vld [vmem:[%s1011 + $0x240] sm:$0xff]
        %v1086 = vld [vmem:[%s1011 + $0x248] sm:$0xff]
        %v1087 = vld [vmem:[%s1011 + $0x250] sm:$0xff]
        %v1088 = vld [vmem:[%s1011 + $0x258] sm:$0xff]
        %v1089 = vld [vmem:[%s1011 + $0x260] sm:$0xff]
        %v1090 = vld [vmem:[%s1011 + $0x268] sm:$0xff]
        %v1091 = vld [vmem:[%s1011 + $0x270] sm:$0xff]
        %v1092 = vld [vmem:[%s1011 + $0x278] sm:$0xff]
        %v1093 = vld [vmem:[%s1011 + $0x280] sm:$0xff]
        %v1094 = vld [vmem:[%s1011 + $0x288] sm:$0xff]
        %v1095 = vld [vmem:[%s1011 + $0x290] sm:$0xff]
        %v1096 = vld [vmem:[%s1011 + $0x298] sm:$0xff]
        %v1097 = vld [vmem:[%s1011 + $0x2a0] sm:$0xff]
        %v1098 = vld [vmem:[%s1011 + $0x2a8] sm:$0xff]
        %v1099 = vld [vmem:[%s1011 + $0x2b0] sm:$0xff]
        %v1100 = vld [vmem:[%s1011 + $0x2b8] sm:$0xff]
        %v1101 = vld [vmem:[%s1011 + $0x2c0] sm:$0xff]
        %v1102 = vld [vmem:[%s1011 + $0x2c8] sm:$0xff]
        %v1103 = vld [vmem:[%s1011 + $0x2d0] sm:$0xff]
        %v1104 = vld [vmem:[%s1011 + $0x2d8] sm:$0xff]
        %v1105 = vld [vmem:[%s1011 + $0x2e0] sm:$0xff]
        %v1106 = vld [vmem:[%s1011 + $0x2e8] sm:$0xff]
        %v1107 = vld [vmem:[%s1011 + $0x2f0] sm:$0xff]
        %v1108 = vld [vmem:[%s1011 + $0x2f8] sm:$0xff]
        %v1109 = vld [vmem:[%s1011 + $0x300] sm:$0xff]
        %v1110 = vld [vmem:[%s1011 + $0x308] sm:$0xff]
        %v1111 = vld [vmem:[%s1011 + $0x310] sm:$0xff]
        %v1112 = vld [vmem:[%s1011 + $0x318] sm:$0xff]
        %v1113 = vld [vmem:[%s1011 + $0x320] sm:$0xff]
        %v1114 = vld [vmem:[%s1011 + $0x328] sm:$0xff]
        %v1115 = vld [vmem:[%s1011 + $0x330] sm:$0xff]
        %v1116 = vld [vmem:[%s1011 + $0x338] sm:$0xff]
        %v1117 = vld [vmem:[%s1011 + $0x340] sm:$0xff]
        %v1118 = vld [vmem:[%s1011 + $0x348] sm:$0xff]
        %v1119 = vld [vmem:[%s1011 + $0x350] sm:$0xff]
        %v1120 = vld [vmem:[%s1011 + $0x358] sm:$0xff]
        %v1121 = vld [vmem:[%s1011 + $0x360] sm:$0xff]
        %v1122 = vld [vmem:[%s1011 + $0x368] sm:$0xff]
        %v1123 = vld [vmem:[%s1011 + $0x370] sm:$0xff]
        %v1124 = vld [vmem:[%s1011 + $0x378] sm:$0xff]
        %v1125 = vld [vmem:[%s1011 + $0x380] sm:$0xff]
        %v1126 = vld [vmem:[%s1011 + $0x388] sm:$0xff]
        %v1127 = vld [vmem:[%s1011 + $0x390] sm:$0xff]
        %v1128 = vld [vmem:[%s1011 + $0x398] sm:$0xff]
        %v1129 = vld [vmem:[%s1011 + $0x3a0] sm:$0xff]
        %v1130 = vld [vmem:[%s1011 + $0x3a8] sm:$0xff]
        %v1131 = vld [vmem:[%s1011 + $0x3b0] sm:$0xff]
        %v1132 = vld [vmem:[%s1011 + $0x3b8] sm:$0xff]
        %v1133 = vld [vmem:[%s1011 + $0x3c0] sm:$0xff]
        %v1134 = vld [vmem:[%s1011 + $0x3c8] sm:$0xff]
        %v1135 = vld [vmem:[%s1011 + $0x3d0] sm:$0xff]
        %v1136 = vld [vmem:[%s1011 + $0x3d8] sm:$0xff]
        %v1137 = vld [vmem:[%s1011 + $0x3e0] sm:$0xff]
        %v1138 = vld [vmem:[%s1011 + $0x3e8] sm:$0xff]
        %v1139 = vld [vmem:[%s1011 + $0x3f0] sm:$0xff]
        %v1140 = vld [vmem:[%s1011 + $0x3f8] sm:$0xff]
        %v1141 = vld [vmem:[%s3] sm:$0xff]
        %v1142 = vld [vmem:[%s3 + $0x8] sm:$0xff]
        %v1143 = vld [vmem:[%s3 + $0x10] sm:$0xff]
        %v1144 = vld [vmem:[%s3 + $0x18] sm:$0xff]
        %v1145 = vld [vmem:[%s5] sm:$0x1]
        %v1147 = vlaneseq
        %v1148 = vshrl.u32 %v1147, 7
        %v1149 = vsub.s32 0, %v1148
        %v1150 = vrot.slane %v1145, %v1149
        %vm1152 = vcmask 261120
        %v1154 = vsel %vm1152, %v1013, 0
        %v1157 = vsel %vm1152, %v1014, 0
        %v1160 = vsel %vm1152, %v1015, 0
        %v1163 = vsel %vm1152, %v1016, 0
        %v1166 = vsel %vm1152, %v1017, 0
        %v1169 = vsel %vm1152, %v1018, 0
        %v1172 = vsel %vm1152, %v1019, 0
        %v1175 = vsel %vm1152, %v1020, 0
        %v1178 = vsel %vm1152, %v1021, 0
        %v1181 = vsel %vm1152, %v1022, 0
        %v1184 = vsel %vm1152, %v1023, 0
        %v1187 = vsel %vm1152, %v1024, 0
        %v1190 = vsel %vm1152, %v1025, 0
        %v1193 = vsel %vm1152, %v1026, 0
        %v1196 = vsel %vm1152, %v1027, 0
        %v1199 = vsel %vm1152, %v1028, 0
        %v1202 = vsel %vm1152, %v1029, 0
        %v1205 = vsel %vm1152, %v1030, 0
        %v1208 = vsel %vm1152, %v1031, 0
        %v1211 = vsel %vm1152, %v1032, 0
        %v1214 = vsel %vm1152, %v1033, 0
        %v1217 = vsel %vm1152, %v1034, 0
        %v1220 = vsel %vm1152, %v1035, 0
        %v1223 = vsel %vm1152, %v1036, 0
        %v1226 = vsel %vm1152, %v1037, 0
        %v1229 = vsel %vm1152, %v1038, 0
        %v1232 = vsel %vm1152, %v1039, 0
        %v1235 = vsel %vm1152, %v1040, 0
        %v1238 = vsel %vm1152, %v1041, 0
        %v1241 = vsel %vm1152, %v1042, 0
        %v1244 = vsel %vm1152, %v1043, 0
        %v1247 = vsel %vm1152, %v1044, 0
        %v1250 = vsel %vm1152, %v1045, 0
        %v1253 = vsel %vm1152, %v1046, 0
        %v1256 = vsel %vm1152, %v1047, 0
        %v1259 = vsel %vm1152, %v1048, 0
        %v1262 = vsel %vm1152, %v1049, 0
        %v1265 = vsel %vm1152, %v1050, 0
        %v1268 = vsel %vm1152, %v1051, 0
        %v1271 = vsel %vm1152, %v1052, 0
        %v1274 = vsel %vm1152, %v1053, 0
        %v1277 = vsel %vm1152, %v1054, 0
        %v1280 = vsel %vm1152, %v1055, 0
        %v1283 = vsel %vm1152, %v1056, 0
        %v1286 = vsel %vm1152, %v1057, 0
        %v1289 = vsel %vm1152, %v1058, 0
        %v1292 = vsel %vm1152, %v1059, 0
        %v1295 = vsel %vm1152, %v1060, 0
        %v1298 = vsel %vm1152, %v1061, 0
        %v1301 = vsel %vm1152, %v1062, 0
        %v1304 = vsel %vm1152, %v1063, 0
        %v1307 = vsel %vm1152, %v1064, 0
        %v1310 = vsel %vm1152, %v1065, 0
        %v1313 = vsel %vm1152, %v1066, 0
        %v1316 = vsel %vm1152, %v1067, 0
        %v1319 = vsel %vm1152, %v1068, 0
        %v1322 = vsel %vm1152, %v1069, 0
        %v1325 = vsel %vm1152, %v1070, 0
        %v1328 = vsel %vm1152, %v1071, 0
        %v1331 = vsel %vm1152, %v1072, 0
        %v1334 = vsel %vm1152, %v1073, 0
        %v1337 = vsel %vm1152, %v1074, 0
        %v1340 = vsel %vm1152, %v1075, 0
        %v1343 = vsel %vm1152, %v1076, 0
        %v1346 = vsel %vm1152, %v1077, 0
        %v1349 = vsel %vm1152, %v1078, 0
        %v1352 = vsel %vm1152, %v1079, 0
        %v1355 = vsel %vm1152, %v1080, 0
        %v1358 = vsel %vm1152, %v1081, 0
        %v1361 = vsel %vm1152, %v1082, 0
        %v1364 = vsel %vm1152, %v1083, 0
        %v1367 = vsel %vm1152, %v1084, 0
        %v1370 = vsel %vm1152, %v1085, 0
        %v1373 = vsel %vm1152, %v1086, 0
        %v1376 = vsel %vm1152, %v1087, 0
        %v1379 = vsel %vm1152, %v1088, 0
        %v1382 = vsel %vm1152, %v1089, 0
        %v1385 = vsel %vm1152, %v1090, 0
        %v1388 = vsel %vm1152, %v1091, 0
        %v1391 = vsel %vm1152, %v1092, 0
        %v1394 = vsel %vm1152, %v1093, 0
        %v1397 = vsel %vm1152, %v1094, 0
        %v1400 = vsel %vm1152, %v1095, 0
        %v1403 = vsel %vm1152, %v1096, 0
        %v1406 = vsel %vm1152, %v1097, 0
        %v1409 = vsel %vm1152, %v1098, 0
        %v1412 = vsel %vm1152, %v1099, 0
        %v1415 = vsel %vm1152, %v1100, 0
        %v1418 = vsel %vm1152, %v1101, 0
        %v1421 = vsel %vm1152, %v1102, 0
        %v1424 = vsel %vm1152, %v1103, 0
        %v1427 = vsel %vm1152, %v1104, 0
        %v1430 = vsel %vm1152, %v1105, 0
        %v1433 = vsel %vm1152, %v1106, 0
        %v1436 = vsel %vm1152, %v1107, 0
        %v1439 = vsel %vm1152, %v1108, 0
        %v1442 = vsel %vm1152, %v1109, 0
        %v1445 = vsel %vm1152, %v1110, 0
        %v1448 = vsel %vm1152, %v1111, 0
        %v1451 = vsel %vm1152, %v1112, 0
        %v1454 = vsel %vm1152, %v1113, 0
        %v1457 = vsel %vm1152, %v1114, 0
        %v1460 = vsel %vm1152, %v1115, 0
        %v1463 = vsel %vm1152, %v1116, 0
        %v1466 = vsel %vm1152, %v1117, 0
        %v1469 = vsel %vm1152, %v1118, 0
        %v1472 = vsel %vm1152, %v1119, 0
        %v1475 = vsel %vm1152, %v1120, 0
        %v1478 = vsel %vm1152, %v1121, 0
        %v1481 = vsel %vm1152, %v1122, 0
        %v1484 = vsel %vm1152, %v1123, 0
        %v1487 = vsel %vm1152, %v1124, 0
        %v1490 = vsel %vm1152, %v1125, 0
        %v1493 = vsel %vm1152, %v1126, 0
        %v1496 = vsel %vm1152, %v1127, 0
        %v1499 = vsel %vm1152, %v1128, 0
        %v1502 = vsel %vm1152, %v1129, 0
        %v1505 = vsel %vm1152, %v1130, 0
        %v1508 = vsel %vm1152, %v1131, 0
        %v1511 = vsel %vm1152, %v1132, 0
        %v1514 = vsel %vm1152, %v1133, 0
        %v1517 = vsel %vm1152, %v1134, 0
        %v1520 = vsel %vm1152, %v1135, 0
        %v1523 = vsel %vm1152, %v1136, 0
        %v1526 = vsel %vm1152, %v1137, 0
        %v1529 = vsel %vm1152, %v1138, 0
        %v1532 = vsel %vm1152, %v1139, 0
        %v1535 = vsel %vm1152, %v1140, 0
        %1537 = vmatprep.subr.mxu0 0.0
        %1538 = vmatpush1.msra.mxu0 %v1141
        %1539 = vmatprep.subr.mxu0 0.0
        %1540 = vmatpush1.msra.mxu0 %v1142
        %1541 = vmatprep.subr.mxu0 0.0
        %1542 = vmatpush1.msra.mxu0 %v1143
        %1543 = vmatprep.subr.mxu0 0.0
        %1544 = vmatpush1.msra.mxu0 %v1144
        %1545 = vmatprep.subr.mxu0 0.0
        %1546 = vmatpush1.msra.mxu0 0.0
        %1547 = vmatprep.subr.mxu0 0.0
        %1548 = vmatpush1.msra.mxu0 0.0
        %1549 = vmatprep.subr.mxu0 0.0
        %1550 = vmatpush1.msra.mxu0 0.0
        %1551 = vmatprep.subr.mxu0 0.0
        %1552 = vmatpush1.msra.mxu0 0.0
        %1553 = vmatprep.subr.mxu0 0.0
        %1554 = vmatpush1.msra.mxu0 0.0
        %1555 = vmatprep.subr.mxu0 0.0
        %1556 = vmatpush1.msra.mxu0 0.0
        %1557 = vmatprep.subr.mxu0 0.0
        %1558 = vmatpush1.msra.mxu0 0.0
        %1559 = vmatprep.subr.mxu0 0.0
        %1560 = vmatpush1.msra.mxu0 0.0
        %1561 = vmatprep.subr.mxu0 0.0
        %1562 = vmatpush1.msra.mxu0 0.0
        %1563 = vmatprep.subr.mxu0 0.0
        %1564 = vmatpush1.msra.mxu0 0.0
        %1565 = vmatprep.subr.mxu0 0.0
        %1566 = vmatpush1.msra.mxu0 0.0
        %1567 = vmatprep.subr.mxu0 0.0
        %1568 = vmatpush1.msra.mxu0 0.0
        %1569 = vmatprep.subr.mxu0 0.0
        %1570 = vmatpush1.msra.mxu0 0.0
        %1571 = vmatprep.subr.mxu0 0.0
        %1572 = vmatpush1.msra.mxu0 0.0
        %1573 = vmatprep.subr.mxu0 0.0
        %1574 = vmatpush1.msra.mxu0 0.0
        %1575 = vmatprep.subr.mxu0 0.0
        %1576 = vmatpush1.msra.mxu0 0.0
        %1577 = vmatprep.subr.mxu0 0.0
        %1578 = vmatpush1.msra.mxu0 0.0
        %1579 = vmatprep.subr.mxu0 0.0
        %1580 = vmatpush1.msra.mxu0 0.0
        %1581 = vmatprep.subr.mxu0 0.0
        %1582 = vmatpush1.msra.mxu0 0.0
        %1583 = vmatprep.subr.mxu0 0.0
        %1584 = vmatpush1.msra.mxu0 0.0
        %1585 = vmatprep.subr.mxu0 0.0
        %1586 = vmatpush1.msra.mxu0 0.0
        %1587 = vmatprep.subr.mxu0 0.0
        %1588 = vmatpush1.msra.mxu0 0.0
        %1589 = vmatprep.subr.mxu0 0.0
        %1590 = vmatpush1.msra.mxu0 0.0
        %1591 = vmatprep.subr.mxu0 0.0
        %1592 = vmatpush1.msra.mxu0 0.0
        %1593 = vmatprep.subr.mxu0 0.0
        %1594 = vmatpush1.msra.mxu0 0.0
        %1595 = vmatprep.subr.mxu0 0.0
        %1596 = vmatpush1.msra.mxu0 0.0
        %1597 = vmatprep.subr.mxu0 0.0
        %1598 = vmatpush1.msra.mxu0 0.0
        %1599 = vmatprep.subr.mxu0 0.0
        %1600 = vmatpush1.msra.mxu0 0.0
        %1601 = vmatprep.mubr.f32.mxu0 0.0
        %1602 = vmatmul.mubr.f32.gmra.mrb[0].mxu0 %v1154
        %v1603 = vpop.f32.mrb[0].mxu0
        %v1604 = vadd.f32 %v1150, %v1603
        %v1605 = vpop.f32.mrb[0].mxu0
        %1606 = vmatprep.mubr.f32.mxu0 0.0
        %1607 = vmatmul.mubr.f32.gmra.mrb[0].mxu0 %v1157
        %v1608 = vpop.f32.mrb[0].mxu0
        %v1609 = vadd.f32 %v1150, %v1608
        %v1610 = vpop.f32.mrb[0].mxu0
        %1611 = vmatprep.mubr.f32.mxu0 0.0
        %1612 = vmatmul.mubr.f32.gmra.mrb[0].mxu0 %v1160
        %v1613 = vpop.f32.mrb[0].mxu0
        %v1614 = vadd.f32 %v1150, %v1613
        %v1615 = vpop.f32.mrb[0].mxu0
        %1616 = vmatprep.mubr.f32.mxu0 0.0
        %1617 = vmatmul.mubr.f32.gmra.mrb[0].mxu0 %v1163
        %v1618 = vpop.f32.mrb[0].mxu0
        %v1619 = vadd.f32 %v1150, %v1618
        %v1620 = vpop.f32.mrb[0].mxu0
        %1621 = vmatprep.mubr.f32.mxu0 0.0
        %1622 = vmatmul.mubr.f32.gmra.mrb[0].mxu0 %v1166
        %v1623 = vpop.f32.mrb[0].mxu0
        %v1624 = vadd.f32 %v1150, %v1623
        %v1625 = vpop.f32.mrb[0].mxu0
        %1626 = vmatprep.mubr.f32.mxu0 0.0
        %1627 = vmatmul.mubr.f32.gmra.mrb[0].mxu0 %v1169
        %v1628 = vpop.f32.mrb[0].mxu0
        %v1629 = vadd.f32 %v1150, %v1628
        %v1630 = vpop.f32.mrb[0].mxu0
        %1631 = vmatprep.mubr.f32.mxu0 0.0
        %1632 = vmatmul.mubr.f32.gmra.mrb[0].mxu0 %v1172
        %v1633 = vpop.f32.mrb[0].mxu0
        %v1634 = vadd.f32 %v1150, %v1633
        %v1635 = vpop.f32.mrb[0].mxu0
        %1636 = vmatprep.mubr.f32.mxu0 0.0
        %1637 = vmatmul.mubr.f32.gmra.mrb[0].mxu0 %v1175
        %v1638 = vpop.f32.mrb[0].mxu0
        %v1639 = vadd.f32 %v1150, %v1638
        %v1640 = vpop.f32.mrb[0].mxu0
        %1641 = vmatprep.mubr.f32.mxu0 0.0
        %1642 = vmatmul.mubr.f32.gmra.mrb[0].mxu0 %v1178
        %v1643 = vpop.f32.mrb[0].mxu0
        %v1644 = vadd.f32 %v1150, %v1643
        %v1645 = vpop.f32.mrb[0].mxu0
        %1646 = vmatprep.mubr.f32.mxu0 0.0
        %1647 = vmatmul.mubr.f32.gmra.mrb[0].mxu0 %v1181
        %v1648 = vpop.f32.mrb[0].mxu0
        %v1649 = vadd.f32 %v1150, %v1648
        %v1650 = vpop.f32.mrb[0].mxu0
        %1651 = vmatprep.mubr.f32.mxu0 0.0
        %1652 = vmatmul.mubr.f32.gmra.mrb[0].mxu0 %v1184
        %v1653 = vpop.f32.mrb[0].mxu0
        %v1654 = vadd.f32 %v1150, %v1653
        %v1655 = vpop.f32.mrb[0].mxu0
        %1656 = vmatprep.mubr.f32.mxu0 0.0
        %1657 = vmatmul.mubr.f32.gmra.mrb[0].mxu0 %v1187
        %v1658 = vpop.f32.mrb[0].mxu0
        %v1659 = vadd.f32 %v1150, %v1658
        %v1660 = vpop.f32.mrb[0].mxu0
        %1661 = vmatprep.mubr.f32.mxu0 0.0
        %1662 = vmatmul.mubr.f32.gmra.mrb[0].mxu0 %v1190
        %v1663 = vpop.f32.mrb[0].mxu0
        %v1664 = vadd.f32 %v1150, %v1663
        %v1665 = vpop.f32.mrb[0].mxu0
        %1666 = vmatprep.mubr.f32.mxu0 0.0
        %1667 = vmatmul.mubr.f32.gmra.mrb[0].mxu0 %v1193
        %v1668 = vpop.f32.mrb[0].mxu0
        %v1669 = vadd.f32 %v1150, %v1668
        %v1670 = vpop.f32.mrb[0].mxu0
        %1671 = vmatprep.mubr.f32.mxu0 0.0
        %1672 = vmatmul.mubr.f32.gmra.mrb[0].mxu0 %v1196
        %v1673 = vpop.f32.mrb[0].mxu0
        %v1674 = vadd.f32 %v1150, %v1673
        %v1675 = vpop.f32.mrb[0].mxu0
        %1676 = vmatprep.mubr.f32.mxu0 0.0
        %1677 = vmatmul.mubr.f32.gmra.mrb[0].mxu0 %v1199
        %v1678 = vpop.f32.mrb[0].mxu0
        %v1679 = vadd.f32 %v1150, %v1678
        %v1680 = vpop.f32.mrb[0].mxu0
        %1681 = vmatprep.mubr.f32.mxu0 0.0
        %1682 = vmatmul.mubr.f32.gmra.mrb[0].mxu0 %v1202
        %v1683 = vpop.f32.mrb[0].mxu0
        %v1684 = vadd.f32 %v1150, %v1683
        %v1685 = vpop.f32.mrb[0].mxu0
        %1686 = vmatprep.mubr.f32.mxu0 0.0
        %1687 = vmatmul.mubr.f32.gmra.mrb[0].mxu0 %v1205
        %v1688 = vpop.f32.mrb[0].mxu0
        %v1689 = vadd.f32 %v1150, %v1688
        %v1690 = vpop.f32.mrb[0].mxu0
        %1691 = vmatprep.mubr.f32.mxu0 0.0
        %1692 = vmatmul.mubr.f32.gmra.mrb[0].mxu0 %v1208
        %v1693 = vpop.f32.mrb[0].mxu0
        %v1694 = vadd.f32 %v1150, %v1693
        %v1695 = vpop.f32.mrb[0].mxu0
        %1696 = vmatprep.mubr.f32.mxu0 0.0
        %1697 = vmatmul.mubr.f32.gmra.mrb[0].mxu0 %v1211
        %v1698 = vpop.f32.mrb[0].mxu0
        %v1699 = vadd.f32 %v1150, %v1698
        %v1700 = vpop.f32.mrb[0].mxu0
        %1701 = vmatprep.mubr.f32.mxu0 0.0
        %1702 = vmatmul.mubr.f32.gmra.mrb[0].mxu0 %v1214
        %v1703 = vpop.f32.mrb[0].mxu0
        %v1704 = vadd.f32 %v1150, %v1703
        %v1705 = vpop.f32.mrb[0].mxu0
        %1706 = vmatprep.mubr.f32.mxu0 0.0
        %1707 = vmatmul.mubr.f32.gmra.mrb[0].mxu0 %v1217
        %v1708 = vpop.f32.mrb[0].mxu0
        %v1709 = vadd.f32 %v1150, %v1708
        %v1710 = vpop.f32.mrb[0].mxu0
        %1711 = vmatprep.mubr.f32.mxu0 0.0
        %1712 = vmatmul.mubr.f32.gmra.mrb[0].mxu0 %v1220
        %v1713 = vpop.f32.mrb[0].mxu0
        %v1714 = vadd.f32 %v1150, %v1713
        %v1715 = vpop.f32.mrb[0].mxu0
        %1716 = vmatprep.mubr.f32.mxu0 0.0
        %1717 = vmatmul.mubr.f32.gmra.mrb[0].mxu0 %v1223
        %v1718 = vpop.f32.mrb[0].mxu0
        %v1719 = vadd.f32 %v1150, %v1718
        %v1720 = vpop.f32.mrb[0].mxu0
        %1721 = vmatprep.mubr.f32.mxu0 0.0
        %1722 = vmatmul.mubr.f32.gmra.mrb[0].mxu0 %v1226
        %v1723 = vpop.f32.mrb[0].mxu0
        %v1724 = vadd.f32 %v1150, %v1723
        %v1725 = vpop.f32.mrb[0].mxu0
        %1726 = vmatprep.mubr.f32.mxu0 0.0
        %1727 = vmatmul.mubr.f32.gmra.mrb[0].mxu0 %v1229
        %v1728 = vpop.f32.mrb[0].mxu0
        %v1729 = vadd.f32 %v1150, %v1728
        %v1730 = vpop.f32.mrb[0].mxu0
        %1731 = vmatprep.mubr.f32.mxu0 0.0
        %1732 = vmatmul.mubr.f32.gmra.mrb[0].mxu0 %v1232
        %v1733 = vpop.f32.mrb[0].mxu0
        %v1734 = vadd.f32 %v1150, %v1733
        %v1735 = vpop.f32.mrb[0].mxu0
        %1736 = vmatprep.mubr.f32.mxu0 0.0
        %1737 = vmatmul.mubr.f32.gmra.mrb[0].mxu0 %v1235
        %v1738 = vpop.f32.mrb[0].mxu0
        %v1739 = vadd.f32 %v1150, %v1738
        %v1740 = vpop.f32.mrb[0].mxu0
        %1741 = vmatprep.mubr.f32.mxu0 0.0
        %1742 = vmatmul.mubr.f32.gmra.mrb[0].mxu0 %v1238
        %v1743 = vpop.f32.mrb[0].mxu0
        %v1744 = vadd.f32 %v1150, %v1743
        %v1745 = vpop.f32.mrb[0].mxu0
        %1746 = vmatprep.mubr.f32.mxu0 0.0
        %1747 = vmatmul.mubr.f32.gmra.mrb[0].mxu0 %v1241
        %v1748 = vpop.f32.mrb[0].mxu0
        %v1749 = vadd.f32 %v1150, %v1748
        %v1750 = vpop.f32.mrb[0].mxu0
        %1751 = vmatprep.mubr.f32.mxu0 0.0
        %1752 = vmatmul.mubr.f32.gmra.mrb[0].mxu0 %v1244
        %v1753 = vpop.f32.mrb[0].mxu0
        %v1754 = vadd.f32 %v1150, %v1753
        %v1755 = vpop.f32.mrb[0].mxu0
        %1756 = vmatprep.mubr.f32.mxu0 0.0
        %1757 = vmatmul.mubr.f32.gmra.mrb[0].mxu0 %v1247
        %v1758 = vpop.f32.mrb[0].mxu0
        %v1759 = vadd.f32 %v1150, %v1758
        %v1760 = vpop.f32.mrb[0].mxu0
        %1761 = vmatprep.mubr.f32.mxu0 0.0
        %1762 = vmatmul.mubr.f32.gmra.mrb[0].mxu0 %v1250
        %v1763 = vpop.f32.mrb[0].mxu0
        %v1764 = vadd.f32 %v1150, %v1763
        %v1765 = vpop.f32.mrb[0].mxu0
        %1766 = vmatprep.mubr.f32.mxu0 0.0
        %1767 = vmatmul.mubr.f32.gmra.mrb[0].mxu0 %v1253
        %v1768 = vpop.f32.mrb[0].mxu0
        %v1769 = vadd.f32 %v1150, %v1768
        %v1770 = vpop.f32.mrb[0].mxu0
        %1771 = vmatprep.mubr.f32.mxu0 0.0
        %1772 = vmatmul.mubr.f32.gmra.mrb[0].mxu0 %v1256
        %v1773 = vpop.f32.mrb[0].mxu0
        %v1774 = vadd.f32 %v1150, %v1773
        %v1775 = vpop.f32.mrb[0].mxu0
        %1776 = vmatprep.mubr.f32.mxu0 0.0
        %1777 = vmatmul.mubr.f32.gmra.mrb[0].mxu0 %v1259
        %v1778 = vpop.f32.mrb[0].mxu0
        %v1779 = vadd.f32 %v1150, %v1778
        %v1780 = vpop.f32.mrb[0].mxu0
        %1781 = vmatprep.mubr.f32.mxu0 0.0
        %1782 = vmatmul.mubr.f32.gmra.mrb[0].mxu0 %v1262
        %v1783 = vpop.f32.mrb[0].mxu0
        %v1784 = vadd.f32 %v1150, %v1783
        %v1785 = vpop.f32.mrb[0].mxu0
        %1786 = vmatprep.mubr.f32.mxu0 0.0
        %1787 = vmatmul.mubr.f32.gmra.mrb[0].mxu0 %v1265
        %v1788 = vpop.f32.mrb[0].mxu0
        %v1789 = vadd.f32 %v1150, %v1788
        %v1790 = vpop.f32.mrb[0].mxu0
        %1791 = vmatprep.mubr.f32.mxu0 0.0
        %1792 = vmatmul.mubr.f32.gmra.mrb[0].mxu0 %v1268
        %v1793 = vpop.f32.mrb[0].mxu0
        %v1794 = vadd.f32 %v1150, %v1793
        %v1795 = vpop.f32.mrb[0].mxu0
        %1796 = vmatprep.mubr.f32.mxu0 0.0
        %1797 = vmatmul.mubr.f32.gmra.mrb[0].mxu0 %v1271
        %v1798 = vpop.f32.mrb[0].mxu0
        %v1799 = vadd.f32 %v1150, %v1798
        %v1800 = vpop.f32.mrb[0].mxu0
        %1801 = vmatprep.mubr.f32.mxu0 0.0
        %1802 = vmatmul.mubr.f32.gmra.mrb[0].mxu0 %v1274
        %v1803 = vpop.f32.mrb[0].mxu0
        %v1804 = vadd.f32 %v1150, %v1803
        %v1805 = vpop.f32.mrb[0].mxu0
        %1806 = vmatprep.mubr.f32.mxu0 0.0
        %1807 = vmatmul.mubr.f32.gmra.mrb[0].mxu0 %v1277
        %v1808 = vpop.f32.mrb[0].mxu0
        %v1809 = vadd.f32 %v1150, %v1808
        %v1810 = vpop.f32.mrb[0].mxu0
        %1811 = vmatprep.mubr.f32.mxu0 0.0
        %1812 = vmatmul.mubr.f32.gmra.mrb[0].mxu0 %v1280
        %v1813 = vpop.f32.mrb[0].mxu0
        %v1814 = vadd.f32 %v1150, %v1813
        %v1815 = vpop.f32.mrb[0].mxu0
        %1816 = vmatprep.mubr.f32.mxu0 0.0
        %1817 = vmatmul.mubr.f32.gmra.mrb[0].mxu0 %v1283
        %v1818 = vpop.f32.mrb[0].mxu0
        %v1819 = vadd.f32 %v1150, %v1818
        %v1820 = vpop.f32.mrb[0].mxu0
        %1821 = vmatprep.mubr.f32.mxu0 0.0
        %1822 = vmatmul.mubr.f32.gmra.mrb[0].mxu0 %v1286
        %v1823 = vpop.f32.mrb[0].mxu0
        %v1824 = vadd.f32 %v1150, %v1823
        %v1825 = vpop.f32.mrb[0].mxu0
        %1826 = vmatprep.mubr.f32.mxu0 0.0
        %1827 = vmatmul.mubr.f32.gmra.mrb[0].mxu0 %v1289
        %v1828 = vpop.f32.mrb[0].mxu0
        %v1829 = vadd.f32 %v1150, %v1828
        %v1830 = vpop.f32.mrb[0].mxu0
        %1831 = vmatprep.mubr.f32.mxu0 0.0
        %1832 = vmatmul.mubr.f32.gmra.mrb[0].mxu0 %v1292
        %v1833 = vpop.f32.mrb[0].mxu0
        %v1834 = vadd.f32 %v1150, %v1833
        %v1835 = vpop.f32.mrb[0].mxu0
        %1836 = vmatprep.mubr.f32.mxu0 0.0
        %1837 = vmatmul.mubr.f32.gmra.mrb[0].mxu0 %v1295
        %v1838 = vpop.f32.mrb[0].mxu0
        %v1839 = vadd.f32 %v1150, %v1838
        %v1840 = vpop.f32.mrb[0].mxu0
        %1841 = vmatprep.mubr.f32.mxu0 0.0
        %1842 = vmatmul.mubr.f32.gmra.mrb[0].mxu0 %v1298
        %v1843 = vpop.f32.mrb[0].mxu0
        %v1844 = vadd.f32 %v1150, %v1843
        %v1845 = vpop.f32.mrb[0].mxu0
        %1846 = vmatprep.mubr.f32.mxu0 0.0
        %1847 = vmatmul.mubr.f32.gmra.mrb[0].mxu0 %v1301
        %v1848 = vpop.f32.mrb[0].mxu0
        %v1849 = vadd.f32 %v1150, %v1848
        %v1850 = vpop.f32.mrb[0].mxu0
        %1851 = vmatprep.mubr.f32.mxu0 0.0
        %1852 = vmatmul.mubr.f32.gmra.mrb[0].mxu0 %v1304
        %v1853 = vpop.f32.mrb[0].mxu0
        %v1854 = vadd.f32 %v1150, %v1853
        %v1855 = vpop.f32.mrb[0].mxu0
        %1856 = vmatprep.mubr.f32.mxu0 0.0
        %1857 = vmatmul.mubr.f32.gmra.mrb[0].mxu0 %v1307
        %v1858 = vpop.f32.mrb[0].mxu0
        %v1859 = vadd.f32 %v1150, %v1858
        %v1860 = vpop.f32.mrb[0].mxu0
        %1861 = vmatprep.mubr.f32.mxu0 0.0
        %1862 = vmatmul.mubr.f32.gmra.mrb[0].mxu0 %v1310
        %v1863 = vpop.f32.mrb[0].mxu0
        %v1864 = vadd.f32 %v1150, %v1863
        %v1865 = vpop.f32.mrb[0].mxu0
        %1866 = vmatprep.mubr.f32.mxu0 0.0
        %1867 = vmatmul.mubr.f32.gmra.mrb[0].mxu0 %v1313
        %v1868 = vpop.f32.mrb[0].mxu0
        %v1869 = vadd.f32 %v1150, %v1868
        %v1870 = vpop.f32.mrb[0].mxu0
        %1871 = vmatprep.mubr.f32.mxu0 0.0
        %1872 = vmatmul.mubr.f32.gmra.mrb[0].mxu0 %v1316
        %v1873 = vpop.f32.mrb[0].mxu0
        %v1874 = vadd.f32 %v1150, %v1873
        %v1875 = vpop.f32.mrb[0].mxu0
        %1876 = vmatprep.mubr.f32.mxu0 0.0
        %1877 = vmatmul.mubr.f32.gmra.mrb[0].mxu0 %v1319
        %v1878 = vpop.f32.mrb[0].mxu0
        %v1879 = vadd.f32 %v1150, %v1878
        %v1880 = vpop.f32.mrb[0].mxu0
        %1881 = vmatprep.mubr.f32.mxu0 0.0
        %1882 = vmatmul.mubr.f32.gmra.mrb[0].mxu0 %v1322
        %v1883 = vpop.f32.mrb[0].mxu0
        %v1884 = vadd.f32 %v1150, %v1883
        %v1885 = vpop.f32.mrb[0].mxu0
        %1886 = vmatprep.mubr.f32.mxu0 0.0
        %1887 = vmatmul.mubr.f32.gmra.mrb[0].mxu0 %v1325
        %v1888 = vpop.f32.mrb[0].mxu0
        %v1889 = vadd.f32 %v1150, %v1888
        %v1890 = vpop.f32.mrb[0].mxu0
        %1891 = vmatprep.mubr.f32.mxu0 0.0
        %1892 = vmatmul.mubr.f32.gmra.mrb[0].mxu0 %v1328
        %v1893 = vpop.f32.mrb[0].mxu0
        %v1894 = vadd.f32 %v1150, %v1893
        %v1895 = vpop.f32.mrb[0].mxu0
        %1896 = vmatprep.mubr.f32.mxu0 0.0
        %1897 = vmatmul.mubr.f32.gmra.mrb[0].mxu0 %v1331
        %v1898 = vpop.f32.mrb[0].mxu0
        %v1899 = vadd.f32 %v1150, %v1898
        %v1900 = vpop.f32.mrb[0].mxu0
        %1901 = vmatprep.mubr.f32.mxu0 0.0
        %1902 = vmatmul.mubr.f32.gmra.mrb[0].mxu0 %v1334
        %v1903 = vpop.f32.mrb[0].mxu0
        %v1904 = vadd.f32 %v1150, %v1903
        %v1905 = vpop.f32.mrb[0].mxu0
        %1906 = vmatprep.mubr.f32.mxu0 0.0
        %1907 = vmatmul.mubr.f32.gmra.mrb[0].mxu0 %v1337
        %v1908 = vpop.f32.mrb[0].mxu0
        %v1909 = vadd.f32 %v1150, %v1908
        %v1910 = vpop.f32.mrb[0].mxu0
        %1911 = vmatprep.mubr.f32.mxu0 0.0
        %1912 = vmatmul.mubr.f32.gmra.mrb[0].mxu0 %v1340
        %v1913 = vpop.f32.mrb[0].mxu0
        %v1914 = vadd.f32 %v1150, %v1913
        %v1915 = vpop.f32.mrb[0].mxu0
        %1916 = vmatprep.mubr.f32.mxu0 0.0
        %1917 = vmatmul.mubr.f32.gmra.mrb[0].mxu0 %v1343
        %v1918 = vpop.f32.mrb[0].mxu0
        %v1919 = vadd.f32 %v1150, %v1918
        %v1920 = vpop.f32.mrb[0].mxu0
        %1921 = vmatprep.mubr.f32.mxu0 0.0
        %1922 = vmatmul.mubr.f32.gmra.mrb[0].mxu0 %v1346
        %v1923 = vpop.f32.mrb[0].mxu0
        %v1924 = vadd.f32 %v1150, %v1923
        %v1925 = vpop.f32.mrb[0].mxu0
        %1926 = vmatprep.mubr.f32.mxu0 0.0
        %1927 = vmatmul.mubr.f32.gmra.mrb[0].mxu0 %v1349
        %v1928 = vpop.f32.mrb[0].mxu0
        %v1929 = vadd.f32 %v1150, %v1928
        %v1930 = vpop.f32.mrb[0].mxu0
        %1931 = vmatprep.mubr.f32.mxu0 0.0
        %1932 = vmatmul.mubr.f32.gmra.mrb[0].mxu0 %v1352
        %v1933 = vpop.f32.mrb[0].mxu0
        %v1934 = vadd.f32 %v1150, %v1933
        %v1935 = vpop.f32.mrb[0].mxu0
        %1936 = vmatprep.mubr.f32.mxu0 0.0
        %1937 = vmatmul.mubr.f32.gmra.mrb[0].mxu0 %v1355
        %v1938 = vpop.f32.mrb[0].mxu0
        %v1939 = vadd.f32 %v1150, %v1938
        %v1940 = vpop.f32.mrb[0].mxu0
        %1941 = vmatprep.mubr.f32.mxu0 0.0
        %1942 = vmatmul.mubr.f32.gmra.mrb[0].mxu0 %v1358
        %v1943 = vpop.f32.mrb[0].mxu0
        %v1944 = vadd.f32 %v1150, %v1943
        %v1945 = vpop.f32.mrb[0].mxu0
        %1946 = vmatprep.mubr.f32.mxu0 0.0
        %1947 = vmatmul.mubr.f32.gmra.mrb[0].mxu0 %v1361
        %v1948 = vpop.f32.mrb[0].mxu0
        %v1949 = vadd.f32 %v1150, %v1948
        %v1950 = vpop.f32.mrb[0].mxu0
        %1951 = vmatprep.mubr.f32.mxu0 0.0
        %1952 = vmatmul.mubr.f32.gmra.mrb[0].mxu0 %v1364
        %v1953 = vpop.f32.mrb[0].mxu0
        %v1954 = vadd.f32 %v1150, %v1953
        %v1955 = vpop.f32.mrb[0].mxu0
        %1956 = vmatprep.mubr.f32.mxu0 0.0
        %1957 = vmatmul.mubr.f32.gmra.mrb[0].mxu0 %v1367
        %v1958 = vpop.f32.mrb[0].mxu0
        %v1959 = vadd.f32 %v1150, %v1958
        %v1960 = vpop.f32.mrb[0].mxu0
        %1961 = vmatprep.mubr.f32.mxu0 0.0
        %1962 = vmatmul.mubr.f32.gmra.mrb[0].mxu0 %v1370
        %v1963 = vpop.f32.mrb[0].mxu0
        %v1964 = vadd.f32 %v1150, %v1963
        %v1965 = vpop.f32.mrb[0].mxu0
        %1966 = vmatprep.mubr.f32.mxu0 0.0
        %1967 = vmatmul.mubr.f32.gmra.mrb[0].mxu0 %v1373
        %v1968 = vpop.f32.mrb[0].mxu0
        %v1969 = vadd.f32 %v1150, %v1968
        %v1970 = vpop.f32.mrb[0].mxu0
        %1971 = vmatprep.mubr.f32.mxu0 0.0
        %1972 = vmatmul.mubr.f32.gmra.mrb[0].mxu0 %v1376
        %v1973 = vpop.f32.mrb[0].mxu0
        %v1974 = vadd.f32 %v1150, %v1973
        %v1975 = vpop.f32.mrb[0].mxu0
        %1976 = vmatprep.mubr.f32.mxu0 0.0
        %1977 = vmatmul.mubr.f32.gmra.mrb[0].mxu0 %v1379
        %v1978 = vpop.f32.mrb[0].mxu0
        %v1979 = vadd.f32 %v1150, %v1978
        %v1980 = vpop.f32.mrb[0].mxu0
        %1981 = vmatprep.mubr.f32.mxu0 0.0
        %1982 = vmatmul.mubr.f32.gmra.mrb[0].mxu0 %v1382
        %v1983 = vpop.f32.mrb[0].mxu0
        %v1984 = vadd.f32 %v1150, %v1983
        %v1985 = vpop.f32.mrb[0].mxu0
        %1986 = vmatprep.mubr.f32.mxu0 0.0
        %1987 = vmatmul.mubr.f32.gmra.mrb[0].mxu0 %v1385
        %v1988 = vpop.f32.mrb[0].mxu0
        %v1989 = vadd.f32 %v1150, %v1988
        %v1990 = vpop.f32.mrb[0].mxu0
        %1991 = vmatprep.mubr.f32.mxu0 0.0
        %1992 = vmatmul.mubr.f32.gmra.mrb[0].mxu0 %v1388
        %v1993 = vpop.f32.mrb[0].mxu0
        %v1994 = vadd.f32 %v1150, %v1993
        %v1995 = vpop.f32.mrb[0].mxu0
        %1996 = vmatprep.mubr.f32.mxu0 0.0
        %1997 = vmatmul.mubr.f32.gmra.mrb[0].mxu0 %v1391
        %v1998 = vpop.f32.mrb[0].mxu0
        %v1999 = vadd.f32 %v1150, %v1998
        %v2000 = vpop.f32.mrb[0].mxu0
        %2001 = vmatprep.mubr.f32.mxu0 0.0
        %2002 = vmatmul.mubr.f32.gmra.mrb[0].mxu0 %v1394
        %v2003 = vpop.f32.mrb[0].mxu0
        %v2004 = vadd.f32 %v1150, %v2003
        %v2005 = vpop.f32.mrb[0].mxu0
        %2006 = vmatprep.mubr.f32.mxu0 0.0
        %2007 = vmatmul.mubr.f32.gmra.mrb[0].mxu0 %v1397
        %v2008 = vpop.f32.mrb[0].mxu0
        %v2009 = vadd.f32 %v1150, %v2008
        %v2010 = vpop.f32.mrb[0].mxu0
        %2011 = vmatprep.mubr.f32.mxu0 0.0
        %2012 = vmatmul.mubr.f32.gmra.mrb[0].mxu0 %v1400
        %v2013 = vpop.f32.mrb[0].mxu0
        %v2014 = vadd.f32 %v1150, %v2013
        %v2015 = vpop.f32.mrb[0].mxu0
        %2016 = vmatprep.mubr.f32.mxu0 0.0
        %2017 = vmatmul.mubr.f32.gmra.mrb[0].mxu0 %v1403
        %v2018 = vpop.f32.mrb[0].mxu0
        %v2019 = vadd.f32 %v1150, %v2018
        %v2020 = vpop.f32.mrb[0].mxu0
        %2021 = vmatprep.mubr.f32.mxu0 0.0
        %2022 = vmatmul.mubr.f32.gmra.mrb[0].mxu0 %v1406
        %v2023 = vpop.f32.mrb[0].mxu0
        %v2024 = vadd.f32 %v1150, %v2023
        %v2025 = vpop.f32.mrb[0].mxu0
        %2026 = vmatprep.mubr.f32.mxu0 0.0
        %2027 = vmatmul.mubr.f32.gmra.mrb[0].mxu0 %v1409
        %v2028 = vpop.f32.mrb[0].mxu0
        %v2029 = vadd.f32 %v1150, %v2028
        %v2030 = vpop.f32.mrb[0].mxu0
        %2031 = vmatprep.mubr.f32.mxu0 0.0
        %2032 = vmatmul.mubr.f32.gmra.mrb[0].mxu0 %v1412
        %v2033 = vpop.f32.mrb[0].mxu0
        %v2034 = vadd.f32 %v1150, %v2033
        %v2035 = vpop.f32.mrb[0].mxu0
        %2036 = vmatprep.mubr.f32.mxu0 0.0
        %2037 = vmatmul.mubr.f32.gmra.mrb[0].mxu0 %v1415
        %v2038 = vpop.f32.mrb[0].mxu0
        %v2039 = vadd.f32 %v1150, %v2038
        %v2040 = vpop.f32.mrb[0].mxu0
        %2041 = vmatprep.mubr.f32.mxu0 0.0
        %2042 = vmatmul.mubr.f32.gmra.mrb[0].mxu0 %v1418
        %v2043 = vpop.f32.mrb[0].mxu0
        %v2044 = vadd.f32 %v1150, %v2043
        %v2045 = vpop.f32.mrb[0].mxu0
        %2046 = vmatprep.mubr.f32.mxu0 0.0
        %2047 = vmatmul.mubr.f32.gmra.mrb[0].mxu0 %v1421
        %v2048 = vpop.f32.mrb[0].mxu0
        %v2049 = vadd.f32 %v1150, %v2048
        %v2050 = vpop.f32.mrb[0].mxu0
        %2051 = vmatprep.mubr.f32.mxu0 0.0
        %2052 = vmatmul.mubr.f32.gmra.mrb[0].mxu0 %v1424
        %v2053 = vpop.f32.mrb[0].mxu0
        %v2054 = vadd.f32 %v1150, %v2053
        %v2055 = vpop.f32.mrb[0].mxu0
        %2056 = vmatprep.mubr.f32.mxu0 0.0
        %2057 = vmatmul.mubr.f32.gmra.mrb[0].mxu0 %v1427
        %v2058 = vpop.f32.mrb[0].mxu0
        %v2059 = vadd.f32 %v1150, %v2058
        %v2060 = vpop.f32.mrb[0].mxu0
        %2061 = vmatprep.mubr.f32.mxu0 0.0
        %2062 = vmatmul.mubr.f32.gmra.mrb[0].mxu0 %v1430
        %v2063 = vpop.f32.mrb[0].mxu0
        %v2064 = vadd.f32 %v1150, %v2063
        %v2065 = vpop.f32.mrb[0].mxu0
        %2066 = vmatprep.mubr.f32.mxu0 0.0
        %2067 = vmatmul.mubr.f32.gmra.mrb[0].mxu0 %v1433
        %v2068 = vpop.f32.mrb[0].mxu0
        %v2069 = vadd.f32 %v1150, %v2068
        %v2070 = vpop.f32.mrb[0].mxu0
        %2071 = vmatprep.mubr.f32.mxu0 0.0
        %2072 = vmatmul.mubr.f32.gmra.mrb[0].mxu0 %v1436
        %v2073 = vpop.f32.mrb[0].mxu0
        %v2074 = vadd.f32 %v1150, %v2073
        %v2075 = vpop.f32.mrb[0].mxu0
        %2076 = vmatprep.mubr.f32.mxu0 0.0
        %2077 = vmatmul.mubr.f32.gmra.mrb[0].mxu0 %v1439
        %v2078 = vpop.f32.mrb[0].mxu0
        %v2079 = vadd.f32 %v1150, %v2078
        %v2080 = vpop.f32.mrb[0].mxu0
        %2081 = vmatprep.mubr.f32.mxu0 0.0
        %2082 = vmatmul.mubr.f32.gmra.mrb[0].mxu0 %v1442
        %v2083 = vpop.f32.mrb[0].mxu0
        %v2084 = vadd.f32 %v1150, %v2083
        %v2085 = vpop.f32.mrb[0].mxu0
        %2086 = vmatprep.mubr.f32.mxu0 0.0
        %2087 = vmatmul.mubr.f32.gmra.mrb[0].mxu0 %v1445
        %v2088 = vpop.f32.mrb[0].mxu0
        %v2089 = vadd.f32 %v1150, %v2088
        %v2090 = vpop.f32.mrb[0].mxu0
        %2091 = vmatprep.mubr.f32.mxu0 0.0
        %2092 = vmatmul.mubr.f32.gmra.mrb[0].mxu0 %v1448
        %v2093 = vpop.f32.mrb[0].mxu0
        %v2094 = vadd.f32 %v1150, %v2093
        %v2095 = vpop.f32.mrb[0].mxu0
        %2096 = vmatprep.mubr.f32.mxu0 0.0
        %2097 = vmatmul.mubr.f32.gmra.mrb[0].mxu0 %v1451
        %v2098 = vpop.f32.mrb[0].mxu0
        %v2099 = vadd.f32 %v1150, %v2098
        %v2100 = vpop.f32.mrb[0].mxu0
        %2101 = vmatprep.mubr.f32.mxu0 0.0
        %2102 = vmatmul.mubr.f32.gmra.mrb[0].mxu0 %v1454
        %v2103 = vpop.f32.mrb[0].mxu0
        %v2104 = vadd.f32 %v1150, %v2103
        %v2105 = vpop.f32.mrb[0].mxu0
        %2106 = vmatprep.mubr.f32.mxu0 0.0
        %2107 = vmatmul.mubr.f32.gmra.mrb[0].mxu0 %v1457
        %v2108 = vpop.f32.mrb[0].mxu0
        %v2109 = vadd.f32 %v1150, %v2108
        %v2110 = vpop.f32.mrb[0].mxu0
        %2111 = vmatprep.mubr.f32.mxu0 0.0
        %2112 = vmatmul.mubr.f32.gmra.mrb[0].mxu0 %v1460
        %v2113 = vpop.f32.mrb[0].mxu0
        %v2114 = vadd.f32 %v1150, %v2113
        %v2115 = vpop.f32.mrb[0].mxu0
        %2116 = vmatprep.mubr.f32.mxu0 0.0
        %2117 = vmatmul.mubr.f32.gmra.mrb[0].mxu0 %v1463
        %v2118 = vpop.f32.mrb[0].mxu0
        %v2119 = vadd.f32 %v1150, %v2118
        %v2120 = vpop.f32.mrb[0].mxu0
        %2121 = vmatprep.mubr.f32.mxu0 0.0
        %2122 = vmatmul.mubr.f32.gmra.mrb[0].mxu0 %v1466
        %v2123 = vpop.f32.mrb[0].mxu0
        %v2124 = vadd.f32 %v1150, %v2123
        %v2125 = vpop.f32.mrb[0].mxu0
        %2126 = vmatprep.mubr.f32.mxu0 0.0
        %2127 = vmatmul.mubr.f32.gmra.mrb[0].mxu0 %v1469
        %v2128 = vpop.f32.mrb[0].mxu0
        %v2129 = vadd.f32 %v1150, %v2128
        %v2130 = vpop.f32.mrb[0].mxu0
        %2131 = vmatprep.mubr.f32.mxu0 0.0
        %2132 = vmatmul.mubr.f32.gmra.mrb[0].mxu0 %v1472
        %v2133 = vpop.f32.mrb[0].mxu0
        %v2134 = vadd.f32 %v1150, %v2133
        %v2135 = vpop.f32.mrb[0].mxu0
        %2136 = vmatprep.mubr.f32.mxu0 0.0
        %2137 = vmatmul.mubr.f32.gmra.mrb[0].mxu0 %v1475
        %v2138 = vpop.f32.mrb[0].mxu0
        %v2139 = vadd.f32 %v1150, %v2138
        %v2140 = vpop.f32.mrb[0].mxu0
        %2141 = vmatprep.mubr.f32.mxu0 0.0
        %2142 = vmatmul.mubr.f32.gmra.mrb[0].mxu0 %v1478
        %v2143 = vpop.f32.mrb[0].mxu0
        %v2144 = vadd.f32 %v1150, %v2143
        %v2145 = vpop.f32.mrb[0].mxu0
        %2146 = vmatprep.mubr.f32.mxu0 0.0
        %2147 = vmatmul.mubr.f32.gmra.mrb[0].mxu0 %v1481
        %v2148 = vpop.f32.mrb[0].mxu0
        %v2149 = vadd.f32 %v1150, %v2148
        %v2150 = vpop.f32.mrb[0].mxu0
        %2151 = vmatprep.mubr.f32.mxu0 0.0
        %2152 = vmatmul.mubr.f32.gmra.mrb[0].mxu0 %v1484
        %v2153 = vpop.f32.mrb[0].mxu0
        %v2154 = vadd.f32 %v1150, %v2153
        %v2155 = vpop.f32.mrb[0].mxu0
        %2156 = vmatprep.mubr.f32.mxu0 0.0
        %2157 = vmatmul.mubr.f32.gmra.mrb[0].mxu0 %v1487
        %v2158 = vpop.f32.mrb[0].mxu0
        %v2159 = vadd.f32 %v1150, %v2158
        %v2160 = vpop.f32.mrb[0].mxu0
        %2161 = vmatprep.mubr.f32.mxu0 0.0
        %2162 = vmatmul.mubr.f32.gmra.mrb[0].mxu0 %v1490
        %v2163 = vpop.f32.mrb[0].mxu0
        %v2164 = vadd.f32 %v1150, %v2163
        %v2165 = vpop.f32.mrb[0].mxu0
        %2166 = vmatprep.mubr.f32.mxu0 0.0
        %2167 = vmatmul.mubr.f32.gmra.mrb[0].mxu0 %v1493
        %v2168 = vpop.f32.mrb[0].mxu0
        %v2169 = vadd.f32 %v1150, %v2168
        %v2170 = vpop.f32.mrb[0].mxu0
        %2171 = vmatprep.mubr.f32.mxu0 0.0
        %2172 = vmatmul.mubr.f32.gmra.mrb[0].mxu0 %v1496
        %v2173 = vpop.f32.mrb[0].mxu0
        %v2174 = vadd.f32 %v1150, %v2173
        %v2175 = vpop.f32.mrb[0].mxu0
        %2176 = vmatprep.mubr.f32.mxu0 0.0
        %2177 = vmatmul.mubr.f32.gmra.mrb[0].mxu0 %v1499
        %v2178 = vpop.f32.mrb[0].mxu0
        %v2179 = vadd.f32 %v1150, %v2178
        %v2180 = vpop.f32.mrb[0].mxu0
        %2181 = vmatprep.mubr.f32.mxu0 0.0
        %2182 = vmatmul.mubr.f32.gmra.mrb[0].mxu0 %v1502
        %v2183 = vpop.f32.mrb[0].mxu0
        %v2184 = vadd.f32 %v1150, %v2183
        %v2185 = vpop.f32.mrb[0].mxu0
        %2186 = vmatprep.mubr.f32.mxu0 0.0
        %2187 = vmatmul.mubr.f32.gmra.mrb[0].mxu0 %v1505
        %v2188 = vpop.f32.mrb[0].mxu0
        %v2189 = vadd.f32 %v1150, %v2188
        %v2190 = vpop.f32.mrb[0].mxu0
        %2191 = vmatprep.mubr.f32.mxu0 0.0
        %2192 = vmatmul.mubr.f32.gmra.mrb[0].mxu0 %v1508
        %v2193 = vpop.f32.mrb[0].mxu0
        %v2194 = vadd.f32 %v1150, %v2193
        %v2195 = vpop.f32.mrb[0].mxu0
        %2196 = vmatprep.mubr.f32.mxu0 0.0
        %2197 = vmatmul.mubr.f32.gmra.mrb[0].mxu0 %v1511
        %v2198 = vpop.f32.mrb[0].mxu0
        %v2199 = vadd.f32 %v1150, %v2198
        %v2200 = vpop.f32.mrb[0].mxu0
        %2201 = vmatprep.mubr.f32.mxu0 0.0
        %2202 = vmatmul.mubr.f32.gmra.mrb[0].mxu0 %v1514
        %v2203 = vpop.f32.mrb[0].mxu0
        %v2204 = vadd.f32 %v1150, %v2203
        %v2205 = vpop.f32.mrb[0].mxu0
        %2206 = vmatprep.mubr.f32.mxu0 0.0
        %2207 = vmatmul.mubr.f32.gmra.mrb[0].mxu0 %v1517
        %v2208 = vpop.f32.mrb[0].mxu0
        %v2209 = vadd.f32 %v1150, %v2208
        %v2210 = vpop.f32.mrb[0].mxu0
        %2211 = vmatprep.mubr.f32.mxu0 0.0
        %2212 = vmatmul.mubr.f32.gmra.mrb[0].mxu0 %v1520
        %v2213 = vpop.f32.mrb[0].mxu0
        %v2214 = vadd.f32 %v1150, %v2213
        %v2215 = vpop.f32.mrb[0].mxu0
        %2216 = vmatprep.mubr.f32.mxu0 0.0
        %2217 = vmatmul.mubr.f32.gmra.mrb[0].mxu0 %v1523
        %v2218 = vpop.f32.mrb[0].mxu0
        %v2219 = vadd.f32 %v1150, %v2218
        %v2220 = vpop.f32.mrb[0].mxu0
        %2221 = vmatprep.mubr.f32.mxu0 0.0
        %2222 = vmatmul.mubr.f32.gmra.mrb[0].mxu0 %v1526
        %v2223 = vpop.f32.mrb[0].mxu0
        %v2224 = vadd.f32 %v1150, %v2223
        %v2225 = vpop.f32.mrb[0].mxu0
        %2226 = vmatprep.mubr.f32.mxu0 0.0
        %2227 = vmatmul.mubr.f32.gmra.mrb[0].mxu0 %v1529
        %v2228 = vpop.f32.mrb[0].mxu0
        %v2229 = vadd.f32 %v1150, %v2228
        %v2230 = vpop.f32.mrb[0].mxu0
        %2231 = vmatprep.mubr.f32.mxu0 0.0
        %2232 = vmatmul.mubr.f32.gmra.mrb[0].mxu0 %v1532
        %v2233 = vpop.f32.mrb[0].mxu0
        %v2234 = vadd.f32 %v1150, %v2233
        %v2235 = vpop.f32.mrb[0].mxu0
        %2236 = vmatprep.mubr.f32.mxu0 0.0
        %2237 = vmatmul.mubr.f32.gmra.mrb[0].mxu0 %v1535
        %v2238 = vpop.f32.mrb[0].mxu0
        %v2239 = vadd.f32 %v1150, %v2238
        %v2240 = vpop.f32.mrb[0].mxu0
        %2241 = vdwg.mxu0
        %v2242 = vmax.f32 %v1604, 0.0
        %v2243 = vmax.f32 %v1609, 0.0
        %v2244 = vmax.f32 %v1614, 0.0
        %v2245 = vmax.f32 %v1619, 0.0
        %v2246 = vmax.f32 %v1624, 0.0
        %v2247 = vmax.f32 %v1629, 0.0
        %v2248 = vmax.f32 %v1634, 0.0
        %v2249 = vmax.f32 %v1639, 0.0
        %v2250 = vmax.f32 %v1644, 0.0
        %v2251 = vmax.f32 %v1649, 0.0
        %v2252 = vmax.f32 %v1654, 0.0
        %v2253 = vmax.f32 %v1659, 0.0
        %v2254 = vmax.f32 %v1664, 0.0
        %v2255 = vmax.f32 %v1669, 0.0
        %v2256 = vmax.f32 %v1674, 0.0
        %v2257 = vmax.f32 %v1679, 0.0
        %v2258 = vmax.f32 %v1684, 0.0
        %v2259 = vmax.f32 %v1689, 0.0
        %v2260 = vmax.f32 %v1694, 0.0
        %v2261 = vmax.f32 %v1699, 0.0
        %v2262 = vmax.f32 %v1704, 0.0
        %v2263 = vmax.f32 %v1709, 0.0
        %v2264 = vmax.f32 %v1714, 0.0
        %v2265 = vmax.f32 %v1719, 0.0
        %v2266 = vmax.f32 %v1724, 0.0
        %v2267 = vmax.f32 %v1729, 0.0
        %v2268 = vmax.f32 %v1734, 0.0
        %v2269 = vmax.f32 %v1739, 0.0
        %v2270 = vmax.f32 %v1744, 0.0
        %v2271 = vmax.f32 %v1749, 0.0
        %v2272 = vmax.f32 %v1754, 0.0
        %v2273 = vmax.f32 %v1759, 0.0
        %v2274 = vmax.f32 %v1764, 0.0
        %v2275 = vmax.f32 %v1769, 0.0
        %v2276 = vmax.f32 %v1774, 0.0
        %v2277 = vmax.f32 %v1779, 0.0
        %v2278 = vmax.f32 %v1784, 0.0
        %v2279 = vmax.f32 %v1789, 0.0
        %v2280 = vmax.f32 %v1794, 0.0
        %v2281 = vmax.f32 %v1799, 0.0
        %v2282 = vmax.f32 %v1804, 0.0
        %v2283 = vmax.f32 %v1809, 0.0
        %v2284 = vmax.f32 %v1814, 0.0
        %v2285 = vmax.f32 %v1819, 0.0
        %v2286 = vmax.f32 %v1824, 0.0
        %v2287 = vmax.f32 %v1829, 0.0
        %v2288 = vmax.f32 %v1834, 0.0
        %v2289 = vmax.f32 %v1839, 0.0
        %v2290 = vmax.f32 %v1844, 0.0
        %v2291 = vmax.f32 %v1849, 0.0
        %v2292 = vmax.f32 %v1854, 0.0
        %v2293 = vmax.f32 %v1859, 0.0
        %v2294 = vmax.f32 %v1864, 0.0
        %v2295 = vmax.f32 %v1869, 0.0
        %v2296 = vmax.f32 %v1874, 0.0
        %v2297 = vmax.f32 %v1879, 0.0
        %v2298 = vmax.f32 %v1884, 0.0
        %v2299 = vmax.f32 %v1889, 0.0
        %v2300 = vmax.f32 %v1894, 0.0
        %v2301 = vmax.f32 %v1899, 0.0
        %v2302 = vmax.f32 %v1904, 0.0
        %v2303 = vmax.f32 %v1909, 0.0
        %v2304 = vmax.f32 %v1914, 0.0
        %v2305 = vmax.f32 %v1919, 0.0
        %v2306 = vmax.f32 %v1924, 0.0
        %v2307 = vmax.f32 %v1929, 0.0
        %v2308 = vmax.f32 %v1934, 0.0
        %v2309 = vmax.f32 %v1939, 0.0
        %v2310 = vmax.f32 %v1944, 0.0
        %v2311 = vmax.f32 %v1949, 0.0
        %v2312 = vmax.f32 %v1954, 0.0
        %v2313 = vmax.f32 %v1959, 0.0
        %v2314 = vmax.f32 %v1964, 0.0
        %v2315 = vmax.f32 %v1969, 0.0
        %v2316 = vmax.f32 %v1974, 0.0
        %v2317 = vmax.f32 %v1979, 0.0
        %v2318 = vmax.f32 %v1984, 0.0
        %v2319 = vmax.f32 %v1989, 0.0
        %v2320 = vmax.f32 %v1994, 0.0
        %v2321 = vmax.f32 %v1999, 0.0
        %v2322 = vmax.f32 %v2004, 0.0
        %v2323 = vmax.f32 %v2009, 0.0
        %v2324 = vmax.f32 %v2014, 0.0
        %v2325 = vmax.f32 %v2019, 0.0
        %v2326 = vmax.f32 %v2024, 0.0
        %v2327 = vmax.f32 %v2029, 0.0
        %v2328 = vmax.f32 %v2034, 0.0
        %v2329 = vmax.f32 %v2039, 0.0
        %v2330 = vmax.f32 %v2044, 0.0
        %v2331 = vmax.f32 %v2049, 0.0
        %v2332 = vmax.f32 %v2054, 0.0
        %v2333 = vmax.f32 %v2059, 0.0
        %v2334 = vmax.f32 %v2064, 0.0
        %v2335 = vmax.f32 %v2069, 0.0
        %v2336 = vmax.f32 %v2074, 0.0
        %v2337 = vmax.f32 %v2079, 0.0
        %v2338 = vmax.f32 %v2084, 0.0
        %v2339 = vmax.f32 %v2089, 0.0
        %v2340 = vmax.f32 %v2094, 0.0
        %v2341 = vmax.f32 %v2099, 0.0
        %v2342 = vmax.f32 %v2104, 0.0
        %v2343 = vmax.f32 %v2109, 0.0
        %v2344 = vmax.f32 %v2114, 0.0
        %v2345 = vmax.f32 %v2119, 0.0
        %v2346 = vmax.f32 %v2124, 0.0
        %v2347 = vmax.f32 %v2129, 0.0
        %v2348 = vmax.f32 %v2134, 0.0
        %v2349 = vmax.f32 %v2139, 0.0
        %v2350 = vmax.f32 %v2144, 0.0
        %v2351 = vmax.f32 %v2149, 0.0
        %v2352 = vmax.f32 %v2154, 0.0
        %v2353 = vmax.f32 %v2159, 0.0
        %v2354 = vmax.f32 %v2164, 0.0
        %v2355 = vmax.f32 %v2169, 0.0
        %v2356 = vmax.f32 %v2174, 0.0
        %v2357 = vmax.f32 %v2179, 0.0
        %v2358 = vmax.f32 %v2184, 0.0
        %v2359 = vmax.f32 %v2189, 0.0
        %v2360 = vmax.f32 %v2194, 0.0
        %v2361 = vmax.f32 %v2199, 0.0
        %v2362 = vmax.f32 %v2204, 0.0
        %v2363 = vmax.f32 %v2209, 0.0
        %v2364 = vmax.f32 %v2214, 0.0
        %v2365 = vmax.f32 %v2219, 0.0
        %v2366 = vmax.f32 %v2224, 0.0
        %v2367 = vmax.f32 %v2229, 0.0
        %v2368 = vmax.f32 %v2234, 0.0
        %v2369 = vmax.f32 %v2239, 0.0
        %v2370 = vmin.f32 %v2242, 6.0
        %v2371 = vmin.f32 %v2243, 6.0
        %v2372 = vmin.f32 %v2244, 6.0
        %v2373 = vmin.f32 %v2245, 6.0
        %v2374 = vmin.f32 %v2246, 6.0
        %v2375 = vmin.f32 %v2247, 6.0
        %v2376 = vmin.f32 %v2248, 6.0
        %v2377 = vmin.f32 %v2249, 6.0
        %v2378 = vmin.f32 %v2250, 6.0
        %v2379 = vmin.f32 %v2251, 6.0
        %v2380 = vmin.f32 %v2252, 6.0
        %v2381 = vmin.f32 %v2253, 6.0
        %v2382 = vmin.f32 %v2254, 6.0
        %v2383 = vmin.f32 %v2255, 6.0
        %v2384 = vmin.f32 %v2256, 6.0
        %v2385 = vmin.f32 %v2257, 6.0
        %v2386 = vmin.f32 %v2258, 6.0
        %v2387 = vmin.f32 %v2259, 6.0
        %v2388 = vmin.f32 %v2260, 6.0
        %v2389 = vmin.f32 %v2261, 6.0
        %v2390 = vmin.f32 %v2262, 6.0
        %v2391 = vmin.f32 %v2263, 6.0
        %v2392 = vmin.f32 %v2264, 6.0
        %v2393 = vmin.f32 %v2265, 6.0
        %v2394 = vmin.f32 %v2266, 6.0
        %v2395 = vmin.f32 %v2267, 6.0
        %v2396 = vmin.f32 %v2268, 6.0
        %v2397 = vmin.f32 %v2269, 6.0
        %v2398 = vmin.f32 %v2270, 6.0
        %v2399 = vmin.f32 %v2271, 6.0
        %v2400 = vmin.f32 %v2272, 6.0
        %v2401 = vmin.f32 %v2273, 6.0
        %v2402 = vmin.f32 %v2274, 6.0
        %v2403 = vmin.f32 %v2275, 6.0
        %v2404 = vmin.f32 %v2276, 6.0
        %v2405 = vmin.f32 %v2277, 6.0
        %v2406 = vmin.f32 %v2278, 6.0
        %v2407 = vmin.f32 %v2279, 6.0
        %v2408 = vmin.f32 %v2280, 6.0
        %v2409 = vmin.f32 %v2281, 6.0
        %v2410 = vmin.f32 %v2282, 6.0
        %v2411 = vmin.f32 %v2283, 6.0
        %v2412 = vmin.f32 %v2284, 6.0
        %v2413 = vmin.f32 %v2285, 6.0
        %v2414 = vmin.f32 %v2286, 6.0
        %v2415 = vmin.f32 %v2287, 6.0
        %v2416 = vmin.f32 %v2288, 6.0
        %v2417 = vmin.f32 %v2289, 6.0
        %v2418 = vmin.f32 %v2290, 6.0
        %v2419 = vmin.f32 %v2291, 6.0
        %v2420 = vmin.f32 %v2292, 6.0
        %v2421 = vmin.f32 %v2293, 6.0
        %v2422 = vmin.f32 %v2294, 6.0
        %v2423 = vmin.f32 %v2295, 6.0
        %v2424 = vmin.f32 %v2296, 6.0
        %v2425 = vmin.f32 %v2297, 6.0
        %v2426 = vmin.f32 %v2298, 6.0
        %v2427 = vmin.f32 %v2299, 6.0
        %v2428 = vmin.f32 %v2300, 6.0
        %v2429 = vmin.f32 %v2301, 6.0
        %v2430 = vmin.f32 %v2302, 6.0
        %v2431 = vmin.f32 %v2303, 6.0
        %v2432 = vmin.f32 %v2304, 6.0
        %v2433 = vmin.f32 %v2305, 6.0
        %v2434 = vmin.f32 %v2306, 6.0
        %v2435 = vmin.f32 %v2307, 6.0
        %v2436 = vmin.f32 %v2308, 6.0
        %v2437 = vmin.f32 %v2309, 6.0
        %v2438 = vmin.f32 %v2310, 6.0
        %v2439 = vmin.f32 %v2311, 6.0
        %v2440 = vmin.f32 %v2312, 6.0
        %v2441 = vmin.f32 %v2313, 6.0
        %v2442 = vmin.f32 %v2314, 6.0
        %v2443 = vmin.f32 %v2315, 6.0
        %v2444 = vmin.f32 %v2316, 6.0
        %v2445 = vmin.f32 %v2317, 6.0
        %v2446 = vmin.f32 %v2318, 6.0
        %v2447 = vmin.f32 %v2319, 6.0
        %v2448 = vmin.f32 %v2320, 6.0
        %v2449 = vmin.f32 %v2321, 6.0
        %v2450 = vmin.f32 %v2322, 6.0
        %v2451 = vmin.f32 %v2323, 6.0
        %v2452 = vmin.f32 %v2324, 6.0
        %v2453 = vmin.f32 %v2325, 6.0
        %v2454 = vmin.f32 %v2326, 6.0
        %v2455 = vmin.f32 %v2327, 6.0
        %v2456 = vmin.f32 %v2328, 6.0
        %v2457 = vmin.f32 %v2329, 6.0
        %v2458 = vmin.f32 %v2330, 6.0
        %v2459 = vmin.f32 %v2331, 6.0
        %v2460 = vmin.f32 %v2332, 6.0
        %v2461 = vmin.f32 %v2333, 6.0
        %v2462 = vmin.f32 %v2334, 6.0
        %v2463 = vmin.f32 %v2335, 6.0
        %v2464 = vmin.f32 %v2336, 6.0
        %v2465 = vmin.f32 %v2337, 6.0
        %v2466 = vmin.f32 %v2338, 6.0
        %v2467 = vmin.f32 %v2339, 6.0
        %v2468 = vmin.f32 %v2340, 6.0
        %v2469 = vmin.f32 %v2341, 6.0
        %v2470 = vmin.f32 %v2342, 6.0
        %v2471 = vmin.f32 %v2343, 6.0
        %v2472 = vmin.f32 %v2344, 6.0
        %v2473 = vmin.f32 %v2345, 6.0
        %v2474 = vmin.f32 %v2346, 6.0
        %v2475 = vmin.f32 %v2347, 6.0
        %v2476 = vmin.f32 %v2348, 6.0
        %v2477 = vmin.f32 %v2349, 6.0
        %v2478 = vmin.f32 %v2350, 6.0
        %v2479 = vmin.f32 %v2351, 6.0
        %v2480 = vmin.f32 %v2352, 6.0
        %v2481 = vmin.f32 %v2353, 6.0
        %v2482 = vmin.f32 %v2354, 6.0
        %v2483 = vmin.f32 %v2355, 6.0
        %v2484 = vmin.f32 %v2356, 6.0
        %v2485 = vmin.f32 %v2357, 6.0
        %v2486 = vmin.f32 %v2358, 6.0
        %v2487 = vmin.f32 %v2359, 6.0
        %v2488 = vmin.f32 %v2360, 6.0
        %v2489 = vmin.f32 %v2361, 6.0
        %v2490 = vmin.f32 %v2362, 6.0
        %v2491 = vmin.f32 %v2363, 6.0
        %v2492 = vmin.f32 %v2364, 6.0
        %v2493 = vmin.f32 %v2365, 6.0
        %v2494 = vmin.f32 %v2366, 6.0
        %v2495 = vmin.f32 %v2367, 6.0
        %v2496 = vmin.f32 %v2368, 6.0
        %v2497 = vmin.f32 %v2369, 6.0
        %v2626 = vcombine.high %v2370, %v2370
        %v2628 = vunpack.c.l.s4 1983009808
        %v2629 = vunpack.c.0.s8 %v2628
        %v2630 = vlaneseq
        %v2631 = vshrl.u32 %v2630, 7
        %v2632 = vsub.s32 %v2629, %v2631
        %v2633 = vrot.slane %v2370, %v2632
        %v2635 = vunpack.c.l.s4 1983009808
        %v2636 = vunpack.c.0.s8 %v2635
        %v2637 = vlaneseq
        %v2638 = vshrl.u32 %v2637, 7
        %v2639 = vsub.s32 %v2636, %v2638
        %v2640 = vrot.slane %v2626, %v2639
        %v2641 = vcombine.high %v2633, %v2633
        %v2642 = vcombine.high %v2640, %v2640
        %v2643 = vcombine.high %v2371, %v2371
        %v2645 = vunpack.c.l.s4 1983009808
        %v2646 = vunpack.c.0.s8 %v2645
        %v2647 = vlaneseq
        %v2648 = vshrl.u32 %v2647, 7
        %v2649 = vsub.s32 %v2646, %v2648
        %v2650 = vrot.slane %v2371, %v2649
        %v2652 = vunpack.c.l.s4 1983009808
        %v2653 = vunpack.c.0.s8 %v2652
        %v2654 = vlaneseq
        %v2655 = vshrl.u32 %v2654, 7
        %v2656 = vsub.s32 %v2653, %v2655
        %v2657 = vrot.slane %v2643, %v2656
        %v2658 = vcombine.high %v2650, %v2650
        %v2659 = vcombine.high %v2657, %v2657
        %v2660 = vcombine.high %v2372, %v2372
        %v2662 = vunpack.c.l.s4 1983009808
        %v2663 = vunpack.c.0.s8 %v2662
        %v2664 = vlaneseq
        %v2665 = vshrl.u32 %v2664, 7
        %v2666 = vsub.s32 %v2663, %v2665
        %v2667 = vrot.slane %v2372, %v2666
        %v2669 = vunpack.c.l.s4 1983009808
        %v2670 = vunpack.c.0.s8 %v2669
        %v2671 = vlaneseq
        %v2672 = vshrl.u32 %v2671, 7
        %v2673 = vsub.s32 %v2670, %v2672
        %v2674 = vrot.slane %v2660, %v2673
        %v2675 = vcombine.high %v2667, %v2667
        %v2676 = vcombine.high %v2674, %v2674
        %v2677 = vcombine.high %v2373, %v2373
        %v2679 = vunpack.c.l.s4 1983009808
        %v2680 = vunpack.c.0.s8 %v2679
        %v2681 = vlaneseq
        %v2682 = vshrl.u32 %v2681, 7
        %v2683 = vsub.s32 %v2680, %v2682
        %v2684 = vrot.slane %v2373, %v2683
        %v2686 = vunpack.c.l.s4 1983009808
        %v2687 = vunpack.c.0.s8 %v2686
        %v2688 = vlaneseq
        %v2689 = vshrl.u32 %v2688, 7
        %v2690 = vsub.s32 %v2687, %v2689
        %v2691 = vrot.slane %v2677, %v2690
        %v2692 = vcombine.high %v2684, %v2684
        %v2693 = vcombine.high %v2691, %v2691
        %v2694 = vcombine.high %v2374, %v2374
        %v2696 = vunpack.c.l.s4 1983009808
        %v2697 = vunpack.c.0.s8 %v2696
        %v2698 = vlaneseq
        %v2699 = vshrl.u32 %v2698, 7
        %v2700 = vsub.s32 %v2697, %v2699
        %v2701 = vrot.slane %v2374, %v2700
        %v2703 = vunpack.c.l.s4 1983009808
        %v2704 = vunpack.c.0.s8 %v2703
        %v2705 = vlaneseq
        %v2706 = vshrl.u32 %v2705, 7
        %v2707 = vsub.s32 %v2704, %v2706
        %v2708 = vrot.slane %v2694, %v2707
        %v2709 = vcombine.high %v2701, %v2701
        %v2710 = vcombine.high %v2708, %v2708
        %v2711 = vcombine.high %v2375, %v2375
        %v2713 = vunpack.c.l.s4 1983009808
        %v2714 = vunpack.c.0.s8 %v2713
        %v2715 = vlaneseq
        %v2716 = vshrl.u32 %v2715, 7
        %v2717 = vsub.s32 %v2714, %v2716
        %v2718 = vrot.slane %v2375, %v2717
        %v2720 = vunpack.c.l.s4 1983009808
        %v2721 = vunpack.c.0.s8 %v2720
        %v2722 = vlaneseq
        %v2723 = vshrl.u32 %v2722, 7
        %v2724 = vsub.s32 %v2721, %v2723
        %v2725 = vrot.slane %v2711, %v2724
        %v2726 = vcombine.high %v2718, %v2718
        %v2727 = vcombine.high %v2725, %v2725
        %v2728 = vcombine.high %v2376, %v2376
        %v2730 = vunpack.c.l.s4 1983009808
        %v2731 = vunpack.c.0.s8 %v2730
        %v2732 = vlaneseq
        %v2733 = vshrl.u32 %v2732, 7
        %v2734 = vsub.s32 %v2731, %v2733
        %v2735 = vrot.slane %v2376, %v2734
        %v2737 = vunpack.c.l.s4 1983009808
        %v2738 = vunpack.c.0.s8 %v2737
        %v2739 = vlaneseq
        %v2740 = vshrl.u32 %v2739, 7
        %v2741 = vsub.s32 %v2738, %v2740
        %v2742 = vrot.slane %v2728, %v2741
        %v2743 = vcombine.high %v2735, %v2735
        %v2744 = vcombine.high %v2742, %v2742
        %v2745 = vcombine.high %v2377, %v2377
        %v2747 = vunpack.c.l.s4 1983009808
        %v2748 = vunpack.c.0.s8 %v2747
        %v2749 = vlaneseq
        %v2750 = vshrl.u32 %v2749, 7
        %v2751 = vsub.s32 %v2748, %v2750
        %v2752 = vrot.slane %v2377, %v2751
        %v2754 = vunpack.c.l.s4 1983009808
        %v2755 = vunpack.c.0.s8 %v2754
        %v2756 = vlaneseq
        %v2757 = vshrl.u32 %v2756, 7
        %v2758 = vsub.s32 %v2755, %v2757
        %v2759 = vrot.slane %v2745, %v2758
        %v2760 = vcombine.high %v2752, %v2752
        %v2761 = vcombine.high %v2759, %v2759
        %v2762 = vcombine.high %v2378, %v2378
        %v2764 = vunpack.c.l.s4 1983009808
        %v2765 = vunpack.c.0.s8 %v2764
        %v2766 = vlaneseq
        %v2767 = vshrl.u32 %v2766, 7
        %v2768 = vsub.s32 %v2765, %v2767
        %v2769 = vrot.slane %v2378, %v2768
        %v2771 = vunpack.c.l.s4 1983009808
        %v2772 = vunpack.c.0.s8 %v2771
        %v2773 = vlaneseq
        %v2774 = vshrl.u32 %v2773, 7
        %v2775 = vsub.s32 %v2772, %v2774
        %v2776 = vrot.slane %v2762, %v2775
        %v2777 = vcombine.high %v2769, %v2769
        %v2778 = vcombine.high %v2776, %v2776
        %v2779 = vcombine.high %v2379, %v2379
        %v2781 = vunpack.c.l.s4 1983009808
        %v2782 = vunpack.c.0.s8 %v2781
        %v2783 = vlaneseq
        %v2784 = vshrl.u32 %v2783, 7
        %v2785 = vsub.s32 %v2782, %v2784
        %v2786 = vrot.slane %v2379, %v2785
        %v2788 = vunpack.c.l.s4 1983009808
        %v2789 = vunpack.c.0.s8 %v2788
        %v2790 = vlaneseq
        %v2791 = vshrl.u32 %v2790, 7
        %v2792 = vsub.s32 %v2789, %v2791
        %v2793 = vrot.slane %v2779, %v2792
        %v2794 = vcombine.high %v2786, %v2786
        %v2795 = vcombine.high %v2793, %v2793
        %v2796 = vcombine.high %v2380, %v2380
        %v2798 = vunpack.c.l.s4 1983009808
        %v2799 = vunpack.c.0.s8 %v2798
        %v2800 = vlaneseq
        %v2801 = vshrl.u32 %v2800, 7
        %v2802 = vsub.s32 %v2799, %v2801
        %v2803 = vrot.slane %v2380, %v2802
        %v2805 = vunpack.c.l.s4 1983009808
        %v2806 = vunpack.c.0.s8 %v2805
        %v2807 = vlaneseq
        %v2808 = vshrl.u32 %v2807, 7
        %v2809 = vsub.s32 %v2806, %v2808
        %v2810 = vrot.slane %v2796, %v2809
        %v2811 = vcombine.high %v2803, %v2803
        %v2812 = vcombine.high %v2810, %v2810
        %v2813 = vcombine.high %v2381, %v2381
        %v2815 = vunpack.c.l.s4 1983009808
        %v2816 = vunpack.c.0.s8 %v2815
        %v2817 = vlaneseq
        %v2818 = vshrl.u32 %v2817, 7
        %v2819 = vsub.s32 %v2816, %v2818
        %v2820 = vrot.slane %v2381, %v2819
        %v2822 = vunpack.c.l.s4 1983009808
        %v2823 = vunpack.c.0.s8 %v2822
        %v2824 = vlaneseq
        %v2825 = vshrl.u32 %v2824, 7
        %v2826 = vsub.s32 %v2823, %v2825
        %v2827 = vrot.slane %v2813, %v2826
        %v2828 = vcombine.high %v2820, %v2820
        %v2829 = vcombine.high %v2827, %v2827
        %v2830 = vcombine.high %v2382, %v2382
        %v2832 = vunpack.c.l.s4 1983009808
        %v2833 = vunpack.c.0.s8 %v2832
        %v2834 = vlaneseq
        %v2835 = vshrl.u32 %v2834, 7
        %v2836 = vsub.s32 %v2833, %v2835
        %v2837 = vrot.slane %v2382, %v2836
        %v2839 = vunpack.c.l.s4 1983009808
        %v2840 = vunpack.c.0.s8 %v2839
        %v2841 = vlaneseq
        %v2842 = vshrl.u32 %v2841, 7
        %v2843 = vsub.s32 %v2840, %v2842
        %v2844 = vrot.slane %v2830, %v2843
        %v2845 = vcombine.high %v2837, %v2837
        %v2846 = vcombine.high %v2844, %v2844
        %v2847 = vcombine.high %v2383, %v2383
        %v2849 = vunpack.c.l.s4 1983009808
        %v2850 = vunpack.c.0.s8 %v2849
        %v2851 = vlaneseq
        %v2852 = vshrl.u32 %v2851, 7
        %v2853 = vsub.s32 %v2850, %v2852
        %v2854 = vrot.slane %v2383, %v2853
        %v2856 = vunpack.c.l.s4 1983009808
        %v2857 = vunpack.c.0.s8 %v2856
        %v2858 = vlaneseq
        %v2859 = vshrl.u32 %v2858, 7
        %v2860 = vsub.s32 %v2857, %v2859
        %v2861 = vrot.slane %v2847, %v2860
        %v2862 = vcombine.high %v2854, %v2854
        %v2863 = vcombine.high %v2861, %v2861
        %v2864 = vcombine.high %v2384, %v2384
        %v2866 = vunpack.c.l.s4 1983009808
        %v2867 = vunpack.c.0.s8 %v2866
        %v2868 = vlaneseq
        %v2869 = vshrl.u32 %v2868, 7
        %v2870 = vsub.s32 %v2867, %v2869
        %v2871 = vrot.slane %v2384, %v2870
        %v2873 = vunpack.c.l.s4 1983009808
        %v2874 = vunpack.c.0.s8 %v2873
        %v2875 = vlaneseq
        %v2876 = vshrl.u32 %v2875, 7
        %v2877 = vsub.s32 %v2874, %v2876
        %v2878 = vrot.slane %v2864, %v2877
        %v2879 = vcombine.high %v2871, %v2871
        %v2880 = vcombine.high %v2878, %v2878
        %v2881 = vcombine.high %v2385, %v2385
        %v2883 = vunpack.c.l.s4 1983009808
        %v2884 = vunpack.c.0.s8 %v2883
        %v2885 = vlaneseq
        %v2886 = vshrl.u32 %v2885, 7
        %v2887 = vsub.s32 %v2884, %v2886
        %v2888 = vrot.slane %v2385, %v2887
        %v2890 = vunpack.c.l.s4 1983009808
        %v2891 = vunpack.c.0.s8 %v2890
        %v2892 = vlaneseq
        %v2893 = vshrl.u32 %v2892, 7
        %v2894 = vsub.s32 %v2891, %v2893
        %v2895 = vrot.slane %v2881, %v2894
        %v2896 = vcombine.high %v2888, %v2888
        %v2897 = vcombine.high %v2895, %v2895
        %v2898 = vcombine.high %v2386, %v2386
        %v2900 = vunpack.c.l.s4 1983009808
        %v2901 = vunpack.c.0.s8 %v2900
        %v2902 = vlaneseq
        %v2903 = vshrl.u32 %v2902, 7
        %v2904 = vsub.s32 %v2901, %v2903
        %v2905 = vrot.slane %v2386, %v2904
        %v2907 = vunpack.c.l.s4 1983009808
        %v2908 = vunpack.c.0.s8 %v2907
        %v2909 = vlaneseq
        %v2910 = vshrl.u32 %v2909, 7
        %v2911 = vsub.s32 %v2908, %v2910
        %v2912 = vrot.slane %v2898, %v2911
        %v2913 = vcombine.high %v2905, %v2905
        %v2914 = vcombine.high %v2912, %v2912
        %v2915 = vcombine.high %v2387, %v2387
        %v2917 = vunpack.c.l.s4 1983009808
        %v2918 = vunpack.c.0.s8 %v2917
        %v2919 = vlaneseq
        %v2920 = vshrl.u32 %v2919, 7
        %v2921 = vsub.s32 %v2918, %v2920
        %v2922 = vrot.slane %v2387, %v2921
        %v2924 = vunpack.c.l.s4 1983009808
        %v2925 = vunpack.c.0.s8 %v2924
        %v2926 = vlaneseq
        %v2927 = vshrl.u32 %v2926, 7
        %v2928 = vsub.s32 %v2925, %v2927
        %v2929 = vrot.slane %v2915, %v2928
        %v2930 = vcombine.high %v2922, %v2922
        %v2931 = vcombine.high %v2929, %v2929
        %v2932 = vcombine.high %v2388, %v2388
        %v2934 = vunpack.c.l.s4 1983009808
        %v2935 = vunpack.c.0.s8 %v2934
        %v2936 = vlaneseq
        %v2937 = vshrl.u32 %v2936, 7
        %v2938 = vsub.s32 %v2935, %v2937
        %v2939 = vrot.slane %v2388, %v2938
        %v2941 = vunpack.c.l.s4 1983009808
        %v2942 = vunpack.c.0.s8 %v2941
        %v2943 = vlaneseq
        %v2944 = vshrl.u32 %v2943, 7
        %v2945 = vsub.s32 %v2942, %v2944
        %v2946 = vrot.slane %v2932, %v2945
        %v2947 = vcombine.high %v2939, %v2939
        %v2948 = vcombine.high %v2946, %v2946
        %v2949 = vcombine.high %v2389, %v2389
        %v2951 = vunpack.c.l.s4 1983009808
        %v2952 = vunpack.c.0.s8 %v2951
        %v2953 = vlaneseq
        %v2954 = vshrl.u32 %v2953, 7
        %v2955 = vsub.s32 %v2952, %v2954
        %v2956 = vrot.slane %v2389, %v2955
        %v2958 = vunpack.c.l.s4 1983009808
        %v2959 = vunpack.c.0.s8 %v2958
        %v2960 = vlaneseq
        %v2961 = vshrl.u32 %v2960, 7
        %v2962 = vsub.s32 %v2959, %v2961
        %v2963 = vrot.slane %v2949, %v2962
        %v2964 = vcombine.high %v2956, %v2956
        %v2965 = vcombine.high %v2963, %v2963
        %v2966 = vcombine.high %v2390, %v2390
        %v2968 = vunpack.c.l.s4 1983009808
        %v2969 = vunpack.c.0.s8 %v2968
        %v2970 = vlaneseq
        %v2971 = vshrl.u32 %v2970, 7
        %v2972 = vsub.s32 %v2969, %v2971
        %v2973 = vrot.slane %v2390, %v2972
        %v2975 = vunpack.c.l.s4 1983009808
        %v2976 = vunpack.c.0.s8 %v2975
        %v2977 = vlaneseq
        %v2978 = vshrl.u32 %v2977, 7
        %v2979 = vsub.s32 %v2976, %v2978
        %v2980 = vrot.slane %v2966, %v2979
        %v2981 = vcombine.high %v2973, %v2973
        %v2982 = vcombine.high %v2980, %v2980
        %v2983 = vcombine.high %v2391, %v2391
        %v2985 = vunpack.c.l.s4 1983009808
        %v2986 = vunpack.c.0.s8 %v2985
        %v2987 = vlaneseq
        %v2988 = vshrl.u32 %v2987, 7
        %v2989 = vsub.s32 %v2986, %v2988
        %v2990 = vrot.slane %v2391, %v2989
        %v2992 = vunpack.c.l.s4 1983009808
        %v2993 = vunpack.c.0.s8 %v2992
        %v2994 = vlaneseq
        %v2995 = vshrl.u32 %v2994, 7
        %v2996 = vsub.s32 %v2993, %v2995
        %v2997 = vrot.slane %v2983, %v2996
        %v2998 = vcombine.high %v2990, %v2990
        %v2999 = vcombine.high %v2997, %v2997
        %v3000 = vcombine.high %v2392, %v2392
        %v3002 = vunpack.c.l.s4 1983009808
        %v3003 = vunpack.c.0.s8 %v3002
        %v3004 = vlaneseq
        %v3005 = vshrl.u32 %v3004, 7
        %v3006 = vsub.s32 %v3003, %v3005
        %v3007 = vrot.slane %v2392, %v3006
        %v3009 = vunpack.c.l.s4 1983009808
        %v3010 = vunpack.c.0.s8 %v3009
        %v3011 = vlaneseq
        %v3012 = vshrl.u32 %v3011, 7
        %v3013 = vsub.s32 %v3010, %v3012
        %v3014 = vrot.slane %v3000, %v3013
        %v3015 = vcombine.high %v3007, %v3007
        %v3016 = vcombine.high %v3014, %v3014
        %v3017 = vcombine.high %v2393, %v2393
        %v3019 = vunpack.c.l.s4 1983009808
        %v3020 = vunpack.c.0.s8 %v3019
        %v3021 = vlaneseq
        %v3022 = vshrl.u32 %v3021, 7
        %v3023 = vsub.s32 %v3020, %v3022
        %v3024 = vrot.slane %v2393, %v3023
        %v3026 = vunpack.c.l.s4 1983009808
        %v3027 = vunpack.c.0.s8 %v3026
        %v3028 = vlaneseq
        %v3029 = vshrl.u32 %v3028, 7
        %v3030 = vsub.s32 %v3027, %v3029
        %v3031 = vrot.slane %v3017, %v3030
        %v3032 = vcombine.high %v3024, %v3024
        %v3033 = vcombine.high %v3031, %v3031
        %v3034 = vcombine.high %v2394, %v2394
        %v3036 = vunpack.c.l.s4 1983009808
        %v3037 = vunpack.c.0.s8 %v3036
        %v3038 = vlaneseq
        %v3039 = vshrl.u32 %v3038, 7
        %v3040 = vsub.s32 %v3037, %v3039
        %v3041 = vrot.slane %v2394, %v3040
        %v3043 = vunpack.c.l.s4 1983009808
        %v3044 = vunpack.c.0.s8 %v3043
        %v3045 = vlaneseq
        %v3046 = vshrl.u32 %v3045, 7
        %v3047 = vsub.s32 %v3044, %v3046
        %v3048 = vrot.slane %v3034, %v3047
        %v3049 = vcombine.high %v3041, %v3041
        %v3050 = vcombine.high %v3048, %v3048
        %v3051 = vcombine.high %v2395, %v2395
        %v3053 = vunpack.c.l.s4 1983009808
        %v3054 = vunpack.c.0.s8 %v3053
        %v3055 = vlaneseq
        %v3056 = vshrl.u32 %v3055, 7
        %v3057 = vsub.s32 %v3054, %v3056
        %v3058 = vrot.slane %v2395, %v3057
        %v3060 = vunpack.c.l.s4 1983009808
        %v3061 = vunpack.c.0.s8 %v3060
        %v3062 = vlaneseq
        %v3063 = vshrl.u32 %v3062, 7
        %v3064 = vsub.s32 %v3061, %v3063
        %v3065 = vrot.slane %v3051, %v3064
        %v3066 = vcombine.high %v3058, %v3058
        %v3067 = vcombine.high %v3065, %v3065
        %v3068 = vcombine.high %v2396, %v2396
        %v3070 = vunpack.c.l.s4 1983009808
        %v3071 = vunpack.c.0.s8 %v3070
        %v3072 = vlaneseq
        %v3073 = vshrl.u32 %v3072, 7
        %v3074 = vsub.s32 %v3071, %v3073
        %v3075 = vrot.slane %v2396, %v3074
        %v3077 = vunpack.c.l.s4 1983009808
        %v3078 = vunpack.c.0.s8 %v3077
        %v3079 = vlaneseq
        %v3080 = vshrl.u32 %v3079, 7
        %v3081 = vsub.s32 %v3078, %v3080
        %v3082 = vrot.slane %v3068, %v3081
        %v3083 = vcombine.high %v3075, %v3075
        %v3084 = vcombine.high %v3082, %v3082
        %v3085 = vcombine.high %v2397, %v2397
        %v3087 = vunpack.c.l.s4 1983009808
        %v3088 = vunpack.c.0.s8 %v3087
        %v3089 = vlaneseq
        %v3090 = vshrl.u32 %v3089, 7
        %v3091 = vsub.s32 %v3088, %v3090
        %v3092 = vrot.slane %v2397, %v3091
        %v3094 = vunpack.c.l.s4 1983009808
        %v3095 = vunpack.c.0.s8 %v3094
        %v3096 = vlaneseq
        %v3097 = vshrl.u32 %v3096, 7
        %v3098 = vsub.s32 %v3095, %v3097
        %v3099 = vrot.slane %v3085, %v3098
        %v3100 = vcombine.high %v3092, %v3092
        %v3101 = vcombine.high %v3099, %v3099
        %v3102 = vcombine.high %v2398, %v2398
        %v3104 = vunpack.c.l.s4 1983009808
        %v3105 = vunpack.c.0.s8 %v3104
        %v3106 = vlaneseq
        %v3107 = vshrl.u32 %v3106, 7
        %v3108 = vsub.s32 %v3105, %v3107
        %v3109 = vrot.slane %v2398, %v3108
        %v3111 = vunpack.c.l.s4 1983009808
        %v3112 = vunpack.c.0.s8 %v3111
        %v3113 = vlaneseq
        %v3114 = vshrl.u32 %v3113, 7
        %v3115 = vsub.s32 %v3112, %v3114
        %v3116 = vrot.slane %v3102, %v3115
        %v3117 = vcombine.high %v3109, %v3109
        %v3118 = vcombine.high %v3116, %v3116
        %v3119 = vcombine.high %v2399, %v2399
        %v3121 = vunpack.c.l.s4 1983009808
        %v3122 = vunpack.c.0.s8 %v3121
        %v3123 = vlaneseq
        %v3124 = vshrl.u32 %v3123, 7
        %v3125 = vsub.s32 %v3122, %v3124
        %v3126 = vrot.slane %v2399, %v3125
        %v3128 = vunpack.c.l.s4 1983009808
        %v3129 = vunpack.c.0.s8 %v3128
        %v3130 = vlaneseq
        %v3131 = vshrl.u32 %v3130, 7
        %v3132 = vsub.s32 %v3129, %v3131
        %v3133 = vrot.slane %v3119, %v3132
        %v3134 = vcombine.high %v3126, %v3126
        %v3135 = vcombine.high %v3133, %v3133
        %v3136 = vcombine.high %v2400, %v2400
        %v3138 = vunpack.c.l.s4 1983009808
        %v3139 = vunpack.c.0.s8 %v3138
        %v3140 = vlaneseq
        %v3141 = vshrl.u32 %v3140, 7
        %v3142 = vsub.s32 %v3139, %v3141
        %v3143 = vrot.slane %v2400, %v3142
        %v3145 = vunpack.c.l.s4 1983009808
        %v3146 = vunpack.c.0.s8 %v3145
        %v3147 = vlaneseq
        %v3148 = vshrl.u32 %v3147, 7
        %v3149 = vsub.s32 %v3146, %v3148
        %v3150 = vrot.slane %v3136, %v3149
        %v3151 = vcombine.high %v3143, %v3143
        %v3152 = vcombine.high %v3150, %v3150
        %v3153 = vcombine.high %v2401, %v2401
        %v3155 = vunpack.c.l.s4 1983009808
        %v3156 = vunpack.c.0.s8 %v3155
        %v3157 = vlaneseq
        %v3158 = vshrl.u32 %v3157, 7
        %v3159 = vsub.s32 %v3156, %v3158
        %v3160 = vrot.slane %v2401, %v3159
        %v3162 = vunpack.c.l.s4 1983009808
        %v3163 = vunpack.c.0.s8 %v3162
        %v3164 = vlaneseq
        %v3165 = vshrl.u32 %v3164, 7
        %v3166 = vsub.s32 %v3163, %v3165
        %v3167 = vrot.slane %v3153, %v3166
        %v3168 = vcombine.high %v3160, %v3160
        %v3169 = vcombine.high %v3167, %v3167
        %v3170 = vcombine.high %v2402, %v2402
        %v3172 = vunpack.c.l.s4 1983009808
        %v3173 = vunpack.c.0.s8 %v3172
        %v3174 = vlaneseq
        %v3175 = vshrl.u32 %v3174, 7
        %v3176 = vsub.s32 %v3173, %v3175
        %v3177 = vrot.slane %v2402, %v3176
        %v3179 = vunpack.c.l.s4 1983009808
        %v3180 = vunpack.c.0.s8 %v3179
        %v3181 = vlaneseq
        %v3182 = vshrl.u32 %v3181, 7
        %v3183 = vsub.s32 %v3180, %v3182
        %v3184 = vrot.slane %v3170, %v3183
        %v3185 = vcombine.high %v3177, %v3177
        %v3186 = vcombine.high %v3184, %v3184
        %v3187 = vcombine.high %v2403, %v2403
        %v3189 = vunpack.c.l.s4 1983009808
        %v3190 = vunpack.c.0.s8 %v3189
        %v3191 = vlaneseq
        %v3192 = vshrl.u32 %v3191, 7
        %v3193 = vsub.s32 %v3190, %v3192
        %v3194 = vrot.slane %v2403, %v3193
        %v3196 = vunpack.c.l.s4 1983009808
        %v3197 = vunpack.c.0.s8 %v3196
        %v3198 = vlaneseq
        %v3199 = vshrl.u32 %v3198, 7
        %v3200 = vsub.s32 %v3197, %v3199
        %v3201 = vrot.slane %v3187, %v3200
        %v3202 = vcombine.high %v3194, %v3194
        %v3203 = vcombine.high %v3201, %v3201
        %v3204 = vcombine.high %v2404, %v2404
        %v3206 = vunpack.c.l.s4 1983009808
        %v3207 = vunpack.c.0.s8 %v3206
        %v3208 = vlaneseq
        %v3209 = vshrl.u32 %v3208, 7
        %v3210 = vsub.s32 %v3207, %v3209
        %v3211 = vrot.slane %v2404, %v3210
        %v3213 = vunpack.c.l.s4 1983009808
        %v3214 = vunpack.c.0.s8 %v3213
        %v3215 = vlaneseq
        %v3216 = vshrl.u32 %v3215, 7
        %v3217 = vsub.s32 %v3214, %v3216
        %v3218 = vrot.slane %v3204, %v3217
        %v3219 = vcombine.high %v3211, %v3211
        %v3220 = vcombine.high %v3218, %v3218
        %v3221 = vcombine.high %v2405, %v2405
        %v3223 = vunpack.c.l.s4 1983009808
        %v3224 = vunpack.c.0.s8 %v3223
        %v3225 = vlaneseq
        %v3226 = vshrl.u32 %v3225, 7
        %v3227 = vsub.s32 %v3224, %v3226
        %v3228 = vrot.slane %v2405, %v3227
        %v3230 = vunpack.c.l.s4 1983009808
        %v3231 = vunpack.c.0.s8 %v3230
        %v3232 = vlaneseq
        %v3233 = vshrl.u32 %v3232, 7
        %v3234 = vsub.s32 %v3231, %v3233
        %v3235 = vrot.slane %v3221, %v3234
        %v3236 = vcombine.high %v3228, %v3228
        %v3237 = vcombine.high %v3235, %v3235
        %v3238 = vcombine.high %v2406, %v2406
        %v3240 = vunpack.c.l.s4 1983009808
        %v3241 = vunpack.c.0.s8 %v3240
        %v3242 = vlaneseq
        %v3243 = vshrl.u32 %v3242, 7
        %v3244 = vsub.s32 %v3241, %v3243
        %v3245 = vrot.slane %v2406, %v3244
        %v3247 = vunpack.c.l.s4 1983009808
        %v3248 = vunpack.c.0.s8 %v3247
        %v3249 = vlaneseq
        %v3250 = vshrl.u32 %v3249, 7
        %v3251 = vsub.s32 %v3248, %v3250
        %v3252 = vrot.slane %v3238, %v3251
        %v3253 = vcombine.high %v3245, %v3245
        %v3254 = vcombine.high %v3252, %v3252
        %v3255 = vcombine.high %v2407, %v2407
        %v3257 = vunpack.c.l.s4 1983009808
        %v3258 = vunpack.c.0.s8 %v3257
        %v3259 = vlaneseq
        %v3260 = vshrl.u32 %v3259, 7
        %v3261 = vsub.s32 %v3258, %v3260
        %v3262 = vrot.slane %v2407, %v3261
        %v3264 = vunpack.c.l.s4 1983009808
        %v3265 = vunpack.c.0.s8 %v3264
        %v3266 = vlaneseq
        %v3267 = vshrl.u32 %v3266, 7
        %v3268 = vsub.s32 %v3265, %v3267
        %v3269 = vrot.slane %v3255, %v3268
        %v3270 = vcombine.high %v3262, %v3262
        %v3271 = vcombine.high %v3269, %v3269
        %v3272 = vcombine.high %v2408, %v2408
        %v3274 = vunpack.c.l.s4 1983009808
        %v3275 = vunpack.c.0.s8 %v3274
        %v3276 = vlaneseq
        %v3277 = vshrl.u32 %v3276, 7
        %v3278 = vsub.s32 %v3275, %v3277
        %v3279 = vrot.slane %v2408, %v3278
        %v3281 = vunpack.c.l.s4 1983009808
        %v3282 = vunpack.c.0.s8 %v3281
        %v3283 = vlaneseq
        %v3284 = vshrl.u32 %v3283, 7
        %v3285 = vsub.s32 %v3282, %v3284
        %v3286 = vrot.slane %v3272, %v3285
        %v3287 = vcombine.high %v3279, %v3279
        %v3288 = vcombine.high %v3286, %v3286
        %v3289 = vcombine.high %v2409, %v2409
        %v3291 = vunpack.c.l.s4 1983009808
        %v3292 = vunpack.c.0.s8 %v3291
        %v3293 = vlaneseq
        %v3294 = vshrl.u32 %v3293, 7
        %v3295 = vsub.s32 %v3292, %v3294
        %v3296 = vrot.slane %v2409, %v3295
        %v3298 = vunpack.c.l.s4 1983009808
        %v3299 = vunpack.c.0.s8 %v3298
        %v3300 = vlaneseq
        %v3301 = vshrl.u32 %v3300, 7
        %v3302 = vsub.s32 %v3299, %v3301
        %v3303 = vrot.slane %v3289, %v3302
        %v3304 = vcombine.high %v3296, %v3296
        %v3305 = vcombine.high %v3303, %v3303
        %v3306 = vcombine.high %v2410, %v2410
        %v3308 = vunpack.c.l.s4 1983009808
        %v3309 = vunpack.c.0.s8 %v3308
        %v3310 = vlaneseq
        %v3311 = vshrl.u32 %v3310, 7
        %v3312 = vsub.s32 %v3309, %v3311
        %v3313 = vrot.slane %v2410, %v3312
        %v3315 = vunpack.c.l.s4 1983009808
        %v3316 = vunpack.c.0.s8 %v3315
        %v3317 = vlaneseq
        %v3318 = vshrl.u32 %v3317, 7
        %v3319 = vsub.s32 %v3316, %v3318
        %v3320 = vrot.slane %v3306, %v3319
        %v3321 = vcombine.high %v3313, %v3313
        %v3322 = vcombine.high %v3320, %v3320
        %v3323 = vcombine.high %v2411, %v2411
        %v3325 = vunpack.c.l.s4 1983009808
        %v3326 = vunpack.c.0.s8 %v3325
        %v3327 = vlaneseq
        %v3328 = vshrl.u32 %v3327, 7
        %v3329 = vsub.s32 %v3326, %v3328
        %v3330 = vrot.slane %v2411, %v3329
        %v3332 = vunpack.c.l.s4 1983009808
        %v3333 = vunpack.c.0.s8 %v3332
        %v3334 = vlaneseq
        %v3335 = vshrl.u32 %v3334, 7
        %v3336 = vsub.s32 %v3333, %v3335
        %v3337 = vrot.slane %v3323, %v3336
        %v3338 = vcombine.high %v3330, %v3330
        %v3339 = vcombine.high %v3337, %v3337
        %v3340 = vcombine.high %v2412, %v2412
        %v3342 = vunpack.c.l.s4 1983009808
        %v3343 = vunpack.c.0.s8 %v3342
        %v3344 = vlaneseq
        %v3345 = vshrl.u32 %v3344, 7
        %v3346 = vsub.s32 %v3343, %v3345
        %v3347 = vrot.slane %v2412, %v3346
        %v3349 = vunpack.c.l.s4 1983009808
        %v3350 = vunpack.c.0.s8 %v3349
        %v3351 = vlaneseq
        %v3352 = vshrl.u32 %v3351, 7
        %v3353 = vsub.s32 %v3350, %v3352
        %v3354 = vrot.slane %v3340, %v3353
        %v3355 = vcombine.high %v3347, %v3347
        %v3356 = vcombine.high %v3354, %v3354
        %v3357 = vcombine.high %v2413, %v2413
        %v3359 = vunpack.c.l.s4 1983009808
        %v3360 = vunpack.c.0.s8 %v3359
        %v3361 = vlaneseq
        %v3362 = vshrl.u32 %v3361, 7
        %v3363 = vsub.s32 %v3360, %v3362
        %v3364 = vrot.slane %v2413, %v3363
        %v3366 = vunpack.c.l.s4 1983009808
        %v3367 = vunpack.c.0.s8 %v3366
        %v3368 = vlaneseq
        %v3369 = vshrl.u32 %v3368, 7
        %v3370 = vsub.s32 %v3367, %v3369
        %v3371 = vrot.slane %v3357, %v3370
        %v3372 = vcombine.high %v3364, %v3364
        %v3373 = vcombine.high %v3371, %v3371
        %v3374 = vcombine.high %v2414, %v2414
        %v3376 = vunpack.c.l.s4 1983009808
        %v3377 = vunpack.c.0.s8 %v3376
        %v3378 = vlaneseq
        %v3379 = vshrl.u32 %v3378, 7
        %v3380 = vsub.s32 %v3377, %v3379
        %v3381 = vrot.slane %v2414, %v3380
        %v3383 = vunpack.c.l.s4 1983009808
        %v3384 = vunpack.c.0.s8 %v3383
        %v3385 = vlaneseq
        %v3386 = vshrl.u32 %v3385, 7
        %v3387 = vsub.s32 %v3384, %v3386
        %v3388 = vrot.slane %v3374, %v3387
        %v3389 = vcombine.high %v3381, %v3381
        %v3390 = vcombine.high %v3388, %v3388
        %v3391 = vcombine.high %v2415, %v2415
        %v3393 = vunpack.c.l.s4 1983009808
        %v3394 = vunpack.c.0.s8 %v3393
        %v3395 = vlaneseq
        %v3396 = vshrl.u32 %v3395, 7
        %v3397 = vsub.s32 %v3394, %v3396
        %v3398 = vrot.slane %v2415, %v3397
        %v3400 = vunpack.c.l.s4 1983009808
        %v3401 = vunpack.c.0.s8 %v3400
        %v3402 = vlaneseq
        %v3403 = vshrl.u32 %v3402, 7
        %v3404 = vsub.s32 %v3401, %v3403
        %v3405 = vrot.slane %v3391, %v3404
        %v3406 = vcombine.high %v3398, %v3398
        %v3407 = vcombine.high %v3405, %v3405
        %v3408 = vcombine.high %v2416, %v2416
        %v3410 = vunpack.c.l.s4 1983009808
        %v3411 = vunpack.c.0.s8 %v3410
        %v3412 = vlaneseq
        %v3413 = vshrl.u32 %v3412, 7
        %v3414 = vsub.s32 %v3411, %v3413
        %v3415 = vrot.slane %v2416, %v3414
        %v3417 = vunpack.c.l.s4 1983009808
        %v3418 = vunpack.c.0.s8 %v3417
        %v3419 = vlaneseq
        %v3420 = vshrl.u32 %v3419, 7
        %v3421 = vsub.s32 %v3418, %v3420
        %v3422 = vrot.slane %v3408, %v3421
        %v3423 = vcombine.high %v3415, %v3415
        %v3424 = vcombine.high %v3422, %v3422
        %v3425 = vcombine.high %v2417, %v2417
        %v3427 = vunpack.c.l.s4 1983009808
        %v3428 = vunpack.c.0.s8 %v3427
        %v3429 = vlaneseq
        %v3430 = vshrl.u32 %v3429, 7
        %v3431 = vsub.s32 %v3428, %v3430
        %v3432 = vrot.slane %v2417, %v3431
        %v3434 = vunpack.c.l.s4 1983009808
        %v3435 = vunpack.c.0.s8 %v3434
        %v3436 = vlaneseq
        %v3437 = vshrl.u32 %v3436, 7
        %v3438 = vsub.s32 %v3435, %v3437
        %v3439 = vrot.slane %v3425, %v3438
        %v3440 = vcombine.high %v3432, %v3432
        %v3441 = vcombine.high %v3439, %v3439
        %v3442 = vcombine.high %v2418, %v2418
        %v3444 = vunpack.c.l.s4 1983009808
        %v3445 = vunpack.c.0.s8 %v3444
        %v3446 = vlaneseq
        %v3447 = vshrl.u32 %v3446, 7
        %v3448 = vsub.s32 %v3445, %v3447
        %v3449 = vrot.slane %v2418, %v3448
        %v3451 = vunpack.c.l.s4 1983009808
        %v3452 = vunpack.c.0.s8 %v3451
        %v3453 = vlaneseq
        %v3454 = vshrl.u32 %v3453, 7
        %v3455 = vsub.s32 %v3452, %v3454
        %v3456 = vrot.slane %v3442, %v3455
        %v3457 = vcombine.high %v3449, %v3449
        %v3458 = vcombine.high %v3456, %v3456
        %v3459 = vcombine.high %v2419, %v2419
        %v3461 = vunpack.c.l.s4 1983009808
        %v3462 = vunpack.c.0.s8 %v3461
        %v3463 = vlaneseq
        %v3464 = vshrl.u32 %v3463, 7
        %v3465 = vsub.s32 %v3462, %v3464
        %v3466 = vrot.slane %v2419, %v3465
        %v3468 = vunpack.c.l.s4 1983009808
        %v3469 = vunpack.c.0.s8 %v3468
        %v3470 = vlaneseq
        %v3471 = vshrl.u32 %v3470, 7
        %v3472 = vsub.s32 %v3469, %v3471
        %v3473 = vrot.slane %v3459, %v3472
        %v3474 = vcombine.high %v3466, %v3466
        %v3475 = vcombine.high %v3473, %v3473
        %v3476 = vcombine.high %v2420, %v2420
        %v3478 = vunpack.c.l.s4 1983009808
        %v3479 = vunpack.c.0.s8 %v3478
        %v3480 = vlaneseq
        %v3481 = vshrl.u32 %v3480, 7
        %v3482 = vsub.s32 %v3479, %v3481
        %v3483 = vrot.slane %v2420, %v3482
        %v3485 = vunpack.c.l.s4 1983009808
        %v3486 = vunpack.c.0.s8 %v3485
        %v3487 = vlaneseq
        %v3488 = vshrl.u32 %v3487, 7
        %v3489 = vsub.s32 %v3486, %v3488
        %v3490 = vrot.slane %v3476, %v3489
        %v3491 = vcombine.high %v3483, %v3483
        %v3492 = vcombine.high %v3490, %v3490
        %v3493 = vcombine.high %v2421, %v2421
        %v3495 = vunpack.c.l.s4 1983009808
        %v3496 = vunpack.c.0.s8 %v3495
        %v3497 = vlaneseq
        %v3498 = vshrl.u32 %v3497, 7
        %v3499 = vsub.s32 %v3496, %v3498
        %v3500 = vrot.slane %v2421, %v3499
        %v3502 = vunpack.c.l.s4 1983009808
        %v3503 = vunpack.c.0.s8 %v3502
        %v3504 = vlaneseq
        %v3505 = vshrl.u32 %v3504, 7
        %v3506 = vsub.s32 %v3503, %v3505
        %v3507 = vrot.slane %v3493, %v3506
        %v3508 = vcombine.high %v3500, %v3500
        %v3509 = vcombine.high %v3507, %v3507
        %v3510 = vcombine.high %v2422, %v2422
        %v3512 = vunpack.c.l.s4 1983009808
        %v3513 = vunpack.c.0.s8 %v3512
        %v3514 = vlaneseq
        %v3515 = vshrl.u32 %v3514, 7
        %v3516 = vsub.s32 %v3513, %v3515
        %v3517 = vrot.slane %v2422, %v3516
        %v3519 = vunpack.c.l.s4 1983009808
        %v3520 = vunpack.c.0.s8 %v3519
        %v3521 = vlaneseq
        %v3522 = vshrl.u32 %v3521, 7
        %v3523 = vsub.s32 %v3520, %v3522
        %v3524 = vrot.slane %v3510, %v3523
        %v3525 = vcombine.high %v3517, %v3517
        %v3526 = vcombine.high %v3524, %v3524
        %v3527 = vcombine.high %v2423, %v2423
        %v3529 = vunpack.c.l.s4 1983009808
        %v3530 = vunpack.c.0.s8 %v3529
        %v3531 = vlaneseq
        %v3532 = vshrl.u32 %v3531, 7
        %v3533 = vsub.s32 %v3530, %v3532
        %v3534 = vrot.slane %v2423, %v3533
        %v3536 = vunpack.c.l.s4 1983009808
        %v3537 = vunpack.c.0.s8 %v3536
        %v3538 = vlaneseq
        %v3539 = vshrl.u32 %v3538, 7
        %v3540 = vsub.s32 %v3537, %v3539
        %v3541 = vrot.slane %v3527, %v3540
        %v3542 = vcombine.high %v3534, %v3534
        %v3543 = vcombine.high %v3541, %v3541
        %v3544 = vcombine.high %v2424, %v2424
        %v3546 = vunpack.c.l.s4 1983009808
        %v3547 = vunpack.c.0.s8 %v3546
        %v3548 = vlaneseq
        %v3549 = vshrl.u32 %v3548, 7
        %v3550 = vsub.s32 %v3547, %v3549
        %v3551 = vrot.slane %v2424, %v3550
        %v3553 = vunpack.c.l.s4 1983009808
        %v3554 = vunpack.c.0.s8 %v3553
        %v3555 = vlaneseq
        %v3556 = vshrl.u32 %v3555, 7
        %v3557 = vsub.s32 %v3554, %v3556
        %v3558 = vrot.slane %v3544, %v3557
        %v3559 = vcombine.high %v3551, %v3551
        %v3560 = vcombine.high %v3558, %v3558
        %v3561 = vcombine.high %v2425, %v2425
        %v3563 = vunpack.c.l.s4 1983009808
        %v3564 = vunpack.c.0.s8 %v3563
        %v3565 = vlaneseq
        %v3566 = vshrl.u32 %v3565, 7
        %v3567 = vsub.s32 %v3564, %v3566
        %v3568 = vrot.slane %v2425, %v3567
        %v3570 = vunpack.c.l.s4 1983009808
        %v3571 = vunpack.c.0.s8 %v3570
        %v3572 = vlaneseq
        %v3573 = vshrl.u32 %v3572, 7
        %v3574 = vsub.s32 %v3571, %v3573
        %v3575 = vrot.slane %v3561, %v3574
        %v3576 = vcombine.high %v3568, %v3568
        %v3577 = vcombine.high %v3575, %v3575
        %v3578 = vcombine.high %v2426, %v2426
        %v3580 = vunpack.c.l.s4 1983009808
        %v3581 = vunpack.c.0.s8 %v3580
        %v3582 = vlaneseq
        %v3583 = vshrl.u32 %v3582, 7
        %v3584 = vsub.s32 %v3581, %v3583
        %v3585 = vrot.slane %v2426, %v3584
        %v3587 = vunpack.c.l.s4 1983009808
        %v3588 = vunpack.c.0.s8 %v3587
        %v3589 = vlaneseq
        %v3590 = vshrl.u32 %v3589, 7
        %v3591 = vsub.s32 %v3588, %v3590
        %v3592 = vrot.slane %v3578, %v3591
        %v3593 = vcombine.high %v3585, %v3585
        %v3594 = vcombine.high %v3592, %v3592
        %v3595 = vcombine.high %v2427, %v2427
        %v3597 = vunpack.c.l.s4 1983009808
        %v3598 = vunpack.c.0.s8 %v3597
        %v3599 = vlaneseq
        %v3600 = vshrl.u32 %v3599, 7
        %v3601 = vsub.s32 %v3598, %v3600
        %v3602 = vrot.slane %v2427, %v3601
        %v3604 = vunpack.c.l.s4 1983009808
        %v3605 = vunpack.c.0.s8 %v3604
        %v3606 = vlaneseq
        %v3607 = vshrl.u32 %v3606, 7
        %v3608 = vsub.s32 %v3605, %v3607
        %v3609 = vrot.slane %v3595, %v3608
        %v3610 = vcombine.high %v3602, %v3602
        %v3611 = vcombine.high %v3609, %v3609
        %v3612 = vcombine.high %v2428, %v2428
        %v3614 = vunpack.c.l.s4 1983009808
        %v3615 = vunpack.c.0.s8 %v3614
        %v3616 = vlaneseq
        %v3617 = vshrl.u32 %v3616, 7
        %v3618 = vsub.s32 %v3615, %v3617
        %v3619 = vrot.slane %v2428, %v3618
        %v3621 = vunpack.c.l.s4 1983009808
        %v3622 = vunpack.c.0.s8 %v3621
        %v3623 = vlaneseq
        %v3624 = vshrl.u32 %v3623, 7
        %v3625 = vsub.s32 %v3622, %v3624
        %v3626 = vrot.slane %v3612, %v3625
        %v3627 = vcombine.high %v3619, %v3619
        %v3628 = vcombine.high %v3626, %v3626
        %v3629 = vcombine.high %v2429, %v2429
        %v3631 = vunpack.c.l.s4 1983009808
        %v3632 = vunpack.c.0.s8 %v3631
        %v3633 = vlaneseq
        %v3634 = vshrl.u32 %v3633, 7
        %v3635 = vsub.s32 %v3632, %v3634
        %v3636 = vrot.slane %v2429, %v3635
        %v3638 = vunpack.c.l.s4 1983009808
        %v3639 = vunpack.c.0.s8 %v3638
        %v3640 = vlaneseq
        %v3641 = vshrl.u32 %v3640, 7
        %v3642 = vsub.s32 %v3639, %v3641
        %v3643 = vrot.slane %v3629, %v3642
        %v3644 = vcombine.high %v3636, %v3636
        %v3645 = vcombine.high %v3643, %v3643
        %v3646 = vcombine.high %v2430, %v2430
        %v3648 = vunpack.c.l.s4 1983009808
        %v3649 = vunpack.c.0.s8 %v3648
        %v3650 = vlaneseq
        %v3651 = vshrl.u32 %v3650, 7
        %v3652 = vsub.s32 %v3649, %v3651
        %v3653 = vrot.slane %v2430, %v3652
        %v3655 = vunpack.c.l.s4 1983009808
        %v3656 = vunpack.c.0.s8 %v3655
        %v3657 = vlaneseq
        %v3658 = vshrl.u32 %v3657, 7
        %v3659 = vsub.s32 %v3656, %v3658
        %v3660 = vrot.slane %v3646, %v3659
        %v3661 = vcombine.high %v3653, %v3653
        %v3662 = vcombine.high %v3660, %v3660
        %v3663 = vcombine.high %v2431, %v2431
        %v3665 = vunpack.c.l.s4 1983009808
        %v3666 = vunpack.c.0.s8 %v3665
        %v3667 = vlaneseq
        %v3668 = vshrl.u32 %v3667, 7
        %v3669 = vsub.s32 %v3666, %v3668
        %v3670 = vrot.slane %v2431, %v3669
        %v3672 = vunpack.c.l.s4 1983009808
        %v3673 = vunpack.c.0.s8 %v3672
        %v3674 = vlaneseq
        %v3675 = vshrl.u32 %v3674, 7
        %v3676 = vsub.s32 %v3673, %v3675
        %v3677 = vrot.slane %v3663, %v3676
        %v3678 = vcombine.high %v3670, %v3670
        %v3679 = vcombine.high %v3677, %v3677
        %v3680 = vcombine.high %v2432, %v2432
        %v3682 = vunpack.c.l.s4 1983009808
        %v3683 = vunpack.c.0.s8 %v3682
        %v3684 = vlaneseq
        %v3685 = vshrl.u32 %v3684, 7
        %v3686 = vsub.s32 %v3683, %v3685
        %v3687 = vrot.slane %v2432, %v3686
        %v3689 = vunpack.c.l.s4 1983009808
        %v3690 = vunpack.c.0.s8 %v3689
        %v3691 = vlaneseq
        %v3692 = vshrl.u32 %v3691, 7
        %v3693 = vsub.s32 %v3690, %v3692
        %v3694 = vrot.slane %v3680, %v3693
        %v3695 = vcombine.high %v3687, %v3687
        %v3696 = vcombine.high %v3694, %v3694
        %v3697 = vcombine.high %v2433, %v2433
        %v3699 = vunpack.c.l.s4 1983009808
        %v3700 = vunpack.c.0.s8 %v3699
        %v3701 = vlaneseq
        %v3702 = vshrl.u32 %v3701, 7
        %v3703 = vsub.s32 %v3700, %v3702
        %v3704 = vrot.slane %v2433, %v3703
        %v3706 = vunpack.c.l.s4 1983009808
        %v3707 = vunpack.c.0.s8 %v3706
        %v3708 = vlaneseq
        %v3709 = vshrl.u32 %v3708, 7
        %v3710 = vsub.s32 %v3707, %v3709
        %v3711 = vrot.slane %v3697, %v3710
        %v3712 = vcombine.high %v3704, %v3704
        %v3713 = vcombine.high %v3711, %v3711
        %v3714 = vcombine.high %v2434, %v2434
        %v3716 = vunpack.c.l.s4 1983009808
        %v3717 = vunpack.c.0.s8 %v3716
        %v3718 = vlaneseq
        %v3719 = vshrl.u32 %v3718, 7
        %v3720 = vsub.s32 %v3717, %v3719
        %v3721 = vrot.slane %v2434, %v3720
        %v3723 = vunpack.c.l.s4 1983009808
        %v3724 = vunpack.c.0.s8 %v3723
        %v3725 = vlaneseq
        %v3726 = vshrl.u32 %v3725, 7
        %v3727 = vsub.s32 %v3724, %v3726
        %v3728 = vrot.slane %v3714, %v3727
        %v3729 = vcombine.high %v3721, %v3721
        %v3730 = vcombine.high %v3728, %v3728
        %v3731 = vcombine.high %v2435, %v2435
        %v3733 = vunpack.c.l.s4 1983009808
        %v3734 = vunpack.c.0.s8 %v3733
        %v3735 = vlaneseq
        %v3736 = vshrl.u32 %v3735, 7
        %v3737 = vsub.s32 %v3734, %v3736
        %v3738 = vrot.slane %v2435, %v3737
        %v3740 = vunpack.c.l.s4 1983009808
        %v3741 = vunpack.c.0.s8 %v3740
        %v3742 = vlaneseq
        %v3743 = vshrl.u32 %v3742, 7
        %v3744 = vsub.s32 %v3741, %v3743
        %v3745 = vrot.slane %v3731, %v3744
        %v3746 = vcombine.high %v3738, %v3738
        %v3747 = vcombine.high %v3745, %v3745
        %v3748 = vcombine.high %v2436, %v2436
        %v3750 = vunpack.c.l.s4 1983009808
        %v3751 = vunpack.c.0.s8 %v3750
        %v3752 = vlaneseq
        %v3753 = vshrl.u32 %v3752, 7
        %v3754 = vsub.s32 %v3751, %v3753
        %v3755 = vrot.slane %v2436, %v3754
        %v3757 = vunpack.c.l.s4 1983009808
        %v3758 = vunpack.c.0.s8 %v3757
        %v3759 = vlaneseq
        %v3760 = vshrl.u32 %v3759, 7
        %v3761 = vsub.s32 %v3758, %v3760
        %v3762 = vrot.slane %v3748, %v3761
        %v3763 = vcombine.high %v3755, %v3755
        %v3764 = vcombine.high %v3762, %v3762
        %v3765 = vcombine.high %v2437, %v2437
        %v3767 = vunpack.c.l.s4 1983009808
        %v3768 = vunpack.c.0.s8 %v3767
        %v3769 = vlaneseq
        %v3770 = vshrl.u32 %v3769, 7
        %v3771 = vsub.s32 %v3768, %v3770
        %v3772 = vrot.slane %v2437, %v3771
        %v3774 = vunpack.c.l.s4 1983009808
        %v3775 = vunpack.c.0.s8 %v3774
        %v3776 = vlaneseq
        %v3777 = vshrl.u32 %v3776, 7
        %v3778 = vsub.s32 %v3775, %v3777
        %v3779 = vrot.slane %v3765, %v3778
        %v3780 = vcombine.high %v3772, %v3772
        %v3781 = vcombine.high %v3779, %v3779
        %v3782 = vcombine.high %v2438, %v2438
        %v3784 = vunpack.c.l.s4 1983009808
        %v3785 = vunpack.c.0.s8 %v3784
        %v3786 = vlaneseq
        %v3787 = vshrl.u32 %v3786, 7
        %v3788 = vsub.s32 %v3785, %v3787
        %v3789 = vrot.slane %v2438, %v3788
        %v3791 = vunpack.c.l.s4 1983009808
        %v3792 = vunpack.c.0.s8 %v3791
        %v3793 = vlaneseq
        %v3794 = vshrl.u32 %v3793, 7
        %v3795 = vsub.s32 %v3792, %v3794
        %v3796 = vrot.slane %v3782, %v3795
        %v3797 = vcombine.high %v3789, %v3789
        %v3798 = vcombine.high %v3796, %v3796
        %v3799 = vcombine.high %v2439, %v2439
        %v3801 = vunpack.c.l.s4 1983009808
        %v3802 = vunpack.c.0.s8 %v3801
        %v3803 = vlaneseq
        %v3804 = vshrl.u32 %v3803, 7
        %v3805 = vsub.s32 %v3802, %v3804
        %v3806 = vrot.slane %v2439, %v3805
        %v3808 = vunpack.c.l.s4 1983009808
        %v3809 = vunpack.c.0.s8 %v3808
        %v3810 = vlaneseq
        %v3811 = vshrl.u32 %v3810, 7
        %v3812 = vsub.s32 %v3809, %v3811
        %v3813 = vrot.slane %v3799, %v3812
        %v3814 = vcombine.high %v3806, %v3806
        %v3815 = vcombine.high %v3813, %v3813
        %v3816 = vcombine.high %v2440, %v2440
        %v3818 = vunpack.c.l.s4 1983009808
        %v3819 = vunpack.c.0.s8 %v3818
        %v3820 = vlaneseq
        %v3821 = vshrl.u32 %v3820, 7
        %v3822 = vsub.s32 %v3819, %v3821
        %v3823 = vrot.slane %v2440, %v3822
        %v3825 = vunpack.c.l.s4 1983009808
        %v3826 = vunpack.c.0.s8 %v3825
        %v3827 = vlaneseq
        %v3828 = vshrl.u32 %v3827, 7
        %v3829 = vsub.s32 %v3826, %v3828
        %v3830 = vrot.slane %v3816, %v3829
        %v3831 = vcombine.high %v3823, %v3823
        %v3832 = vcombine.high %v3830, %v3830
        %v3833 = vcombine.high %v2441, %v2441
        %v3835 = vunpack.c.l.s4 1983009808
        %v3836 = vunpack.c.0.s8 %v3835
        %v3837 = vlaneseq
        %v3838 = vshrl.u32 %v3837, 7
        %v3839 = vsub.s32 %v3836, %v3838
        %v3840 = vrot.slane %v2441, %v3839
        %v3842 = vunpack.c.l.s4 1983009808
        %v3843 = vunpack.c.0.s8 %v3842
        %v3844 = vlaneseq
        %v3845 = vshrl.u32 %v3844, 7
        %v3846 = vsub.s32 %v3843, %v3845
        %v3847 = vrot.slane %v3833, %v3846
        %v3848 = vcombine.high %v3840, %v3840
        %v3849 = vcombine.high %v3847, %v3847
        %v3850 = vcombine.high %v2442, %v2442
        %v3852 = vunpack.c.l.s4 1983009808
        %v3853 = vunpack.c.0.s8 %v3852
        %v3854 = vlaneseq
        %v3855 = vshrl.u32 %v3854, 7
        %v3856 = vsub.s32 %v3853, %v3855
        %v3857 = vrot.slane %v2442, %v3856
        %v3859 = vunpack.c.l.s4 1983009808
        %v3860 = vunpack.c.0.s8 %v3859
        %v3861 = vlaneseq
        %v3862 = vshrl.u32 %v3861, 7
        %v3863 = vsub.s32 %v3860, %v3862
        %v3864 = vrot.slane %v3850, %v3863
        %v3865 = vcombine.high %v3857, %v3857
        %v3866 = vcombine.high %v3864, %v3864
        %v3867 = vcombine.high %v2443, %v2443
        %v3869 = vunpack.c.l.s4 1983009808
        %v3870 = vunpack.c.0.s8 %v3869
        %v3871 = vlaneseq
        %v3872 = vshrl.u32 %v3871, 7
        %v3873 = vsub.s32 %v3870, %v3872
        %v3874 = vrot.slane %v2443, %v3873
        %v3876 = vunpack.c.l.s4 1983009808
        %v3877 = vunpack.c.0.s8 %v3876
        %v3878 = vlaneseq
        %v3879 = vshrl.u32 %v3878, 7
        %v3880 = vsub.s32 %v3877, %v3879
        %v3881 = vrot.slane %v3867, %v3880
        %v3882 = vcombine.high %v3874, %v3874
        %v3883 = vcombine.high %v3881, %v3881
        %v3884 = vcombine.high %v2444, %v2444
        %v3886 = vunpack.c.l.s4 1983009808
        %v3887 = vunpack.c.0.s8 %v3886
        %v3888 = vlaneseq
        %v3889 = vshrl.u32 %v3888, 7
        %v3890 = vsub.s32 %v3887, %v3889
        %v3891 = vrot.slane %v2444, %v3890
        %v3893 = vunpack.c.l.s4 1983009808
        %v3894 = vunpack.c.0.s8 %v3893
        %v3895 = vlaneseq
        %v3896 = vshrl.u32 %v3895, 7
        %v3897 = vsub.s32 %v3894, %v3896
        %v3898 = vrot.slane %v3884, %v3897
        %v3899 = vcombine.high %v3891, %v3891
        %v3900 = vcombine.high %v3898, %v3898
        %v3901 = vcombine.high %v2445, %v2445
        %v3903 = vunpack.c.l.s4 1983009808
        %v3904 = vunpack.c.0.s8 %v3903
        %v3905 = vlaneseq
        %v3906 = vshrl.u32 %v3905, 7
        %v3907 = vsub.s32 %v3904, %v3906
        %v3908 = vrot.slane %v2445, %v3907
        %v3910 = vunpack.c.l.s4 1983009808
        %v3911 = vunpack.c.0.s8 %v3910
        %v3912 = vlaneseq
        %v3913 = vshrl.u32 %v3912, 7
        %v3914 = vsub.s32 %v3911, %v3913
        %v3915 = vrot.slane %v3901, %v3914
        %v3916 = vcombine.high %v3908, %v3908
        %v3917 = vcombine.high %v3915, %v3915
        %v3918 = vcombine.high %v2446, %v2446
        %v3920 = vunpack.c.l.s4 1983009808
        %v3921 = vunpack.c.0.s8 %v3920
        %v3922 = vlaneseq
        %v3923 = vshrl.u32 %v3922, 7
        %v3924 = vsub.s32 %v3921, %v3923
        %v3925 = vrot.slane %v2446, %v3924
        %v3927 = vunpack.c.l.s4 1983009808
        %v3928 = vunpack.c.0.s8 %v3927
        %v3929 = vlaneseq
        %v3930 = vshrl.u32 %v3929, 7
        %v3931 = vsub.s32 %v3928, %v3930
        %v3932 = vrot.slane %v3918, %v3931
        %v3933 = vcombine.high %v3925, %v3925
        %v3934 = vcombine.high %v3932, %v3932
        %v3935 = vcombine.high %v2447, %v2447
        %v3937 = vunpack.c.l.s4 1983009808
        %v3938 = vunpack.c.0.s8 %v3937
        %v3939 = vlaneseq
        %v3940 = vshrl.u32 %v3939, 7
        %v3941 = vsub.s32 %v3938, %v3940
        %v3942 = vrot.slane %v2447, %v3941
        %v3944 = vunpack.c.l.s4 1983009808
        %v3945 = vunpack.c.0.s8 %v3944
        %v3946 = vlaneseq
        %v3947 = vshrl.u32 %v3946, 7
        %v3948 = vsub.s32 %v3945, %v3947
        %v3949 = vrot.slane %v3935, %v3948
        %v3950 = vcombine.high %v3942, %v3942
        %v3951 = vcombine.high %v3949, %v3949
        %v3952 = vcombine.high %v2448, %v2448
        %v3954 = vunpack.c.l.s4 1983009808
        %v3955 = vunpack.c.0.s8 %v3954
        %v3956 = vlaneseq
        %v3957 = vshrl.u32 %v3956, 7
        %v3958 = vsub.s32 %v3955, %v3957
        %v3959 = vrot.slane %v2448, %v3958
        %v3961 = vunpack.c.l.s4 1983009808
        %v3962 = vunpack.c.0.s8 %v3961
        %v3963 = vlaneseq
        %v3964 = vshrl.u32 %v3963, 7
        %v3965 = vsub.s32 %v3962, %v3964
        %v3966 = vrot.slane %v3952, %v3965
        %v3967 = vcombine.high %v3959, %v3959
        %v3968 = vcombine.high %v3966, %v3966
        %v3969 = vcombine.high %v2449, %v2449
        %v3971 = vunpack.c.l.s4 1983009808
        %v3972 = vunpack.c.0.s8 %v3971
        %v3973 = vlaneseq
        %v3974 = vshrl.u32 %v3973, 7
        %v3975 = vsub.s32 %v3972, %v3974
        %v3976 = vrot.slane %v2449, %v3975
        %v3978 = vunpack.c.l.s4 1983009808
        %v3979 = vunpack.c.0.s8 %v3978
        %v3980 = vlaneseq
        %v3981 = vshrl.u32 %v3980, 7
        %v3982 = vsub.s32 %v3979, %v3981
        %v3983 = vrot.slane %v3969, %v3982
        %v3984 = vcombine.high %v3976, %v3976
        %v3985 = vcombine.high %v3983, %v3983
        %v3986 = vcombine.high %v2450, %v2450
        %v3988 = vunpack.c.l.s4 1983009808
        %v3989 = vunpack.c.0.s8 %v3988
        %v3990 = vlaneseq
        %v3991 = vshrl.u32 %v3990, 7
        %v3992 = vsub.s32 %v3989, %v3991
        %v3993 = vrot.slane %v2450, %v3992
        %v3995 = vunpack.c.l.s4 1983009808
        %v3996 = vunpack.c.0.s8 %v3995
        %v3997 = vlaneseq
        %v3998 = vshrl.u32 %v3997, 7
        %v3999 = vsub.s32 %v3996, %v3998
        %v4000 = vrot.slane %v3986, %v3999
        %v4001 = vcombine.high %v3993, %v3993
        %v4002 = vcombine.high %v4000, %v4000
        %v4003 = vcombine.high %v2451, %v2451
        %v4005 = vunpack.c.l.s4 1983009808
        %v4006 = vunpack.c.0.s8 %v4005
        %v4007 = vlaneseq
        %v4008 = vshrl.u32 %v4007, 7
        %v4009 = vsub.s32 %v4006, %v4008
        %v4010 = vrot.slane %v2451, %v4009
        %v4012 = vunpack.c.l.s4 1983009808
        %v4013 = vunpack.c.0.s8 %v4012
        %v4014 = vlaneseq
        %v4015 = vshrl.u32 %v4014, 7
        %v4016 = vsub.s32 %v4013, %v4015
        %v4017 = vrot.slane %v4003, %v4016
        %v4018 = vcombine.high %v4010, %v4010
        %v4019 = vcombine.high %v4017, %v4017
        %v4020 = vcombine.high %v2452, %v2452
        %v4022 = vunpack.c.l.s4 1983009808
        %v4023 = vunpack.c.0.s8 %v4022
        %v4024 = vlaneseq
        %v4025 = vshrl.u32 %v4024, 7
        %v4026 = vsub.s32 %v4023, %v4025
        %v4027 = vrot.slane %v2452, %v4026
        %v4029 = vunpack.c.l.s4 1983009808
        %v4030 = vunpack.c.0.s8 %v4029
        %v4031 = vlaneseq
        %v4032 = vshrl.u32 %v4031, 7
        %v4033 = vsub.s32 %v4030, %v4032
        %v4034 = vrot.slane %v4020, %v4033
        %v4035 = vcombine.high %v4027, %v4027
        %v4036 = vcombine.high %v4034, %v4034
        %v4037 = vcombine.high %v2453, %v2453
        %v4039 = vunpack.c.l.s4 1983009808
        %v4040 = vunpack.c.0.s8 %v4039
        %v4041 = vlaneseq
        %v4042 = vshrl.u32 %v4041, 7
        %v4043 = vsub.s32 %v4040, %v4042
        %v4044 = vrot.slane %v2453, %v4043
        %v4046 = vunpack.c.l.s4 1983009808
        %v4047 = vunpack.c.0.s8 %v4046
        %v4048 = vlaneseq
        %v4049 = vshrl.u32 %v4048, 7
        %v4050 = vsub.s32 %v4047, %v4049
        %v4051 = vrot.slane %v4037, %v4050
        %v4052 = vcombine.high %v4044, %v4044
        %v4053 = vcombine.high %v4051, %v4051
        %v4054 = vcombine.high %v2454, %v2454
        %v4056 = vunpack.c.l.s4 1983009808
        %v4057 = vunpack.c.0.s8 %v4056
        %v4058 = vlaneseq
        %v4059 = vshrl.u32 %v4058, 7
        %v4060 = vsub.s32 %v4057, %v4059
        %v4061 = vrot.slane %v2454, %v4060
        %v4063 = vunpack.c.l.s4 1983009808
        %v4064 = vunpack.c.0.s8 %v4063
        %v4065 = vlaneseq
        %v4066 = vshrl.u32 %v4065, 7
        %v4067 = vsub.s32 %v4064, %v4066
        %v4068 = vrot.slane %v4054, %v4067
        %v4069 = vcombine.high %v4061, %v4061
        %v4070 = vcombine.high %v4068, %v4068
        %v4071 = vcombine.high %v2455, %v2455
        %v4073 = vunpack.c.l.s4 1983009808
        %v4074 = vunpack.c.0.s8 %v4073
        %v4075 = vlaneseq
        %v4076 = vshrl.u32 %v4075, 7
        %v4077 = vsub.s32 %v4074, %v4076
        %v4078 = vrot.slane %v2455, %v4077
        %v4080 = vunpack.c.l.s4 1983009808
        %v4081 = vunpack.c.0.s8 %v4080
        %v4082 = vlaneseq
        %v4083 = vshrl.u32 %v4082, 7
        %v4084 = vsub.s32 %v4081, %v4083
        %v4085 = vrot.slane %v4071, %v4084
        %v4086 = vcombine.high %v4078, %v4078
        %v4087 = vcombine.high %v4085, %v4085
        %v4088 = vcombine.high %v2456, %v2456
        %v4090 = vunpack.c.l.s4 1983009808
        %v4091 = vunpack.c.0.s8 %v4090
        %v4092 = vlaneseq
        %v4093 = vshrl.u32 %v4092, 7
        %v4094 = vsub.s32 %v4091, %v4093
        %v4095 = vrot.slane %v2456, %v4094
        %v4097 = vunpack.c.l.s4 1983009808
        %v4098 = vunpack.c.0.s8 %v4097
        %v4099 = vlaneseq
        %v4100 = vshrl.u32 %v4099, 7
        %v4101 = vsub.s32 %v4098, %v4100
        %v4102 = vrot.slane %v4088, %v4101
        %v4103 = vcombine.high %v4095, %v4095
        %v4104 = vcombine.high %v4102, %v4102
        %v4105 = vcombine.high %v2457, %v2457
        %v4107 = vunpack.c.l.s4 1983009808
        %v4108 = vunpack.c.0.s8 %v4107
        %v4109 = vlaneseq
        %v4110 = vshrl.u32 %v4109, 7
        %v4111 = vsub.s32 %v4108, %v4110
        %v4112 = vrot.slane %v2457, %v4111
        %v4114 = vunpack.c.l.s4 1983009808
        %v4115 = vunpack.c.0.s8 %v4114
        %v4116 = vlaneseq
        %v4117 = vshrl.u32 %v4116, 7
        %v4118 = vsub.s32 %v4115, %v4117
        %v4119 = vrot.slane %v4105, %v4118
        %v4120 = vcombine.high %v4112, %v4112
        %v4121 = vcombine.high %v4119, %v4119
        %v4122 = vcombine.high %v2458, %v2458
        %v4124 = vunpack.c.l.s4 1983009808
        %v4125 = vunpack.c.0.s8 %v4124
        %v4126 = vlaneseq
        %v4127 = vshrl.u32 %v4126, 7
        %v4128 = vsub.s32 %v4125, %v4127
        %v4129 = vrot.slane %v2458, %v4128
        %v4131 = vunpack.c.l.s4 1983009808
        %v4132 = vunpack.c.0.s8 %v4131
        %v4133 = vlaneseq
        %v4134 = vshrl.u32 %v4133, 7
        %v4135 = vsub.s32 %v4132, %v4134
        %v4136 = vrot.slane %v4122, %v4135
        %v4137 = vcombine.high %v4129, %v4129
        %v4138 = vcombine.high %v4136, %v4136
        %v4139 = vcombine.high %v2459, %v2459
        %v4141 = vunpack.c.l.s4 1983009808
        %v4142 = vunpack.c.0.s8 %v4141
        %v4143 = vlaneseq
        %v4144 = vshrl.u32 %v4143, 7
        %v4145 = vsub.s32 %v4142, %v4144
        %v4146 = vrot.slane %v2459, %v4145
        %v4148 = vunpack.c.l.s4 1983009808
        %v4149 = vunpack.c.0.s8 %v4148
        %v4150 = vlaneseq
        %v4151 = vshrl.u32 %v4150, 7
        %v4152 = vsub.s32 %v4149, %v4151
        %v4153 = vrot.slane %v4139, %v4152
        %v4154 = vcombine.high %v4146, %v4146
        %v4155 = vcombine.high %v4153, %v4153
        %v4156 = vcombine.high %v2460, %v2460
        %v4158 = vunpack.c.l.s4 1983009808
        %v4159 = vunpack.c.0.s8 %v4158
        %v4160 = vlaneseq
        %v4161 = vshrl.u32 %v4160, 7
        %v4162 = vsub.s32 %v4159, %v4161
        %v4163 = vrot.slane %v2460, %v4162
        %v4165 = vunpack.c.l.s4 1983009808
        %v4166 = vunpack.c.0.s8 %v4165
        %v4167 = vlaneseq
        %v4168 = vshrl.u32 %v4167, 7
        %v4169 = vsub.s32 %v4166, %v4168
        %v4170 = vrot.slane %v4156, %v4169
        %v4171 = vcombine.high %v4163, %v4163
        %v4172 = vcombine.high %v4170, %v4170
        %v4173 = vcombine.high %v2461, %v2461
        %v4175 = vunpack.c.l.s4 1983009808
        %v4176 = vunpack.c.0.s8 %v4175
        %v4177 = vlaneseq
        %v4178 = vshrl.u32 %v4177, 7
        %v4179 = vsub.s32 %v4176, %v4178
        %v4180 = vrot.slane %v2461, %v4179
        %v4182 = vunpack.c.l.s4 1983009808
        %v4183 = vunpack.c.0.s8 %v4182
        %v4184 = vlaneseq
        %v4185 = vshrl.u32 %v4184, 7
        %v4186 = vsub.s32 %v4183, %v4185
        %v4187 = vrot.slane %v4173, %v4186
        %v4188 = vcombine.high %v4180, %v4180
        %v4189 = vcombine.high %v4187, %v4187
        %v4190 = vcombine.high %v2462, %v2462
        %v4192 = vunpack.c.l.s4 1983009808
        %v4193 = vunpack.c.0.s8 %v4192
        %v4194 = vlaneseq
        %v4195 = vshrl.u32 %v4194, 7
        %v4196 = vsub.s32 %v4193, %v4195
        %v4197 = vrot.slane %v2462, %v4196
        %v4199 = vunpack.c.l.s4 1983009808
        %v4200 = vunpack.c.0.s8 %v4199
        %v4201 = vlaneseq
        %v4202 = vshrl.u32 %v4201, 7
        %v4203 = vsub.s32 %v4200, %v4202
        %v4204 = vrot.slane %v4190, %v4203
        %v4205 = vcombine.high %v4197, %v4197
        %v4206 = vcombine.high %v4204, %v4204
        %v4207 = vcombine.high %v2463, %v2463
        %v4209 = vunpack.c.l.s4 1983009808
        %v4210 = vunpack.c.0.s8 %v4209
        %v4211 = vlaneseq
        %v4212 = vshrl.u32 %v4211, 7
        %v4213 = vsub.s32 %v4210, %v4212
        %v4214 = vrot.slane %v2463, %v4213
        %v4216 = vunpack.c.l.s4 1983009808
        %v4217 = vunpack.c.0.s8 %v4216
        %v4218 = vlaneseq
        %v4219 = vshrl.u32 %v4218, 7
        %v4220 = vsub.s32 %v4217, %v4219
        %v4221 = vrot.slane %v4207, %v4220
        %v4222 = vcombine.high %v4214, %v4214
        %v4223 = vcombine.high %v4221, %v4221
        %v4224 = vcombine.high %v2464, %v2464
        %v4226 = vunpack.c.l.s4 1983009808
        %v4227 = vunpack.c.0.s8 %v4226
        %v4228 = vlaneseq
        %v4229 = vshrl.u32 %v4228, 7
        %v4230 = vsub.s32 %v4227, %v4229
        %v4231 = vrot.slane %v2464, %v4230
        %v4233 = vunpack.c.l.s4 1983009808
        %v4234 = vunpack.c.0.s8 %v4233
        %v4235 = vlaneseq
        %v4236 = vshrl.u32 %v4235, 7
        %v4237 = vsub.s32 %v4234, %v4236
        %v4238 = vrot.slane %v4224, %v4237
        %v4239 = vcombine.high %v4231, %v4231
        %v4240 = vcombine.high %v4238, %v4238
        %v4241 = vcombine.high %v2465, %v2465
        %v4243 = vunpack.c.l.s4 1983009808
        %v4244 = vunpack.c.0.s8 %v4243
        %v4245 = vlaneseq
        %v4246 = vshrl.u32 %v4245, 7
        %v4247 = vsub.s32 %v4244, %v4246
        %v4248 = vrot.slane %v2465, %v4247
        %v4250 = vunpack.c.l.s4 1983009808
        %v4251 = vunpack.c.0.s8 %v4250
        %v4252 = vlaneseq
        %v4253 = vshrl.u32 %v4252, 7
        %v4254 = vsub.s32 %v4251, %v4253
        %v4255 = vrot.slane %v4241, %v4254
        %v4256 = vcombine.high %v4248, %v4248
        %v4257 = vcombine.high %v4255, %v4255
        %v4258 = vcombine.high %v2466, %v2466
        %v4260 = vunpack.c.l.s4 1983009808
        %v4261 = vunpack.c.0.s8 %v4260
        %v4262 = vlaneseq
        %v4263 = vshrl.u32 %v4262, 7
        %v4264 = vsub.s32 %v4261, %v4263
        %v4265 = vrot.slane %v2466, %v4264
        %v4267 = vunpack.c.l.s4 1983009808
        %v4268 = vunpack.c.0.s8 %v4267
        %v4269 = vlaneseq
        %v4270 = vshrl.u32 %v4269, 7
        %v4271 = vsub.s32 %v4268, %v4270
        %v4272 = vrot.slane %v4258, %v4271
        %v4273 = vcombine.high %v4265, %v4265
        %v4274 = vcombine.high %v4272, %v4272
        %v4275 = vcombine.high %v2467, %v2467
        %v4277 = vunpack.c.l.s4 1983009808
        %v4278 = vunpack.c.0.s8 %v4277
        %v4279 = vlaneseq
        %v4280 = vshrl.u32 %v4279, 7
        %v4281 = vsub.s32 %v4278, %v4280
        %v4282 = vrot.slane %v2467, %v4281
        %v4284 = vunpack.c.l.s4 1983009808
        %v4285 = vunpack.c.0.s8 %v4284
        %v4286 = vlaneseq
        %v4287 = vshrl.u32 %v4286, 7
        %v4288 = vsub.s32 %v4285, %v4287
        %v4289 = vrot.slane %v4275, %v4288
        %v4290 = vcombine.high %v4282, %v4282
        %v4291 = vcombine.high %v4289, %v4289
        %v4292 = vcombine.high %v2468, %v2468
        %v4294 = vunpack.c.l.s4 1983009808
        %v4295 = vunpack.c.0.s8 %v4294
        %v4296 = vlaneseq
        %v4297 = vshrl.u32 %v4296, 7
        %v4298 = vsub.s32 %v4295, %v4297
        %v4299 = vrot.slane %v2468, %v4298
        %v4301 = vunpack.c.l.s4 1983009808
        %v4302 = vunpack.c.0.s8 %v4301
        %v4303 = vlaneseq
        %v4304 = vshrl.u32 %v4303, 7
        %v4305 = vsub.s32 %v4302, %v4304
        %v4306 = vrot.slane %v4292, %v4305
        %v4307 = vcombine.high %v4299, %v4299
        %v4308 = vcombine.high %v4306, %v4306
        %v4309 = vcombine.high %v2469, %v2469
        %v4311 = vunpack.c.l.s4 1983009808
        %v4312 = vunpack.c.0.s8 %v4311
        %v4313 = vlaneseq
        %v4314 = vshrl.u32 %v4313, 7
        %v4315 = vsub.s32 %v4312, %v4314
        %v4316 = vrot.slane %v2469, %v4315
        %v4318 = vunpack.c.l.s4 1983009808
        %v4319 = vunpack.c.0.s8 %v4318
        %v4320 = vlaneseq
        %v4321 = vshrl.u32 %v4320, 7
        %v4322 = vsub.s32 %v4319, %v4321
        %v4323 = vrot.slane %v4309, %v4322
        %v4324 = vcombine.high %v4316, %v4316
        %v4325 = vcombine.high %v4323, %v4323
        %v4326 = vcombine.high %v2470, %v2470
        %v4328 = vunpack.c.l.s4 1983009808
        %v4329 = vunpack.c.0.s8 %v4328
        %v4330 = vlaneseq
        %v4331 = vshrl.u32 %v4330, 7
        %v4332 = vsub.s32 %v4329, %v4331
        %v4333 = vrot.slane %v2470, %v4332
        %v4335 = vunpack.c.l.s4 1983009808
        %v4336 = vunpack.c.0.s8 %v4335
        %v4337 = vlaneseq
        %v4338 = vshrl.u32 %v4337, 7
        %v4339 = vsub.s32 %v4336, %v4338
        %v4340 = vrot.slane %v4326, %v4339
        %v4341 = vcombine.high %v4333, %v4333
        %v4342 = vcombine.high %v4340, %v4340
        %v4343 = vcombine.high %v2471, %v2471
        %v4345 = vunpack.c.l.s4 1983009808
        %v4346 = vunpack.c.0.s8 %v4345
        %v4347 = vlaneseq
        %v4348 = vshrl.u32 %v4347, 7
        %v4349 = vsub.s32 %v4346, %v4348
        %v4350 = vrot.slane %v2471, %v4349
        %v4352 = vunpack.c.l.s4 1983009808
        %v4353 = vunpack.c.0.s8 %v4352
        %v4354 = vlaneseq
        %v4355 = vshrl.u32 %v4354, 7
        %v4356 = vsub.s32 %v4353, %v4355
        %v4357 = vrot.slane %v4343, %v4356
        %v4358 = vcombine.high %v4350, %v4350
        %v4359 = vcombine.high %v4357, %v4357
        %v4360 = vcombine.high %v2472, %v2472
        %v4362 = vunpack.c.l.s4 1983009808
        %v4363 = vunpack.c.0.s8 %v4362
        %v4364 = vlaneseq
        %v4365 = vshrl.u32 %v4364, 7
        %v4366 = vsub.s32 %v4363, %v4365
        %v4367 = vrot.slane %v2472, %v4366
        %v4369 = vunpack.c.l.s4 1983009808
        %v4370 = vunpack.c.0.s8 %v4369
        %v4371 = vlaneseq
        %v4372 = vshrl.u32 %v4371, 7
        %v4373 = vsub.s32 %v4370, %v4372
        %v4374 = vrot.slane %v4360, %v4373
        %v4375 = vcombine.high %v4367, %v4367
        %v4376 = vcombine.high %v4374, %v4374
        %v4377 = vcombine.high %v2473, %v2473
        %v4379 = vunpack.c.l.s4 1983009808
        %v4380 = vunpack.c.0.s8 %v4379
        %v4381 = vlaneseq
        %v4382 = vshrl.u32 %v4381, 7
        %v4383 = vsub.s32 %v4380, %v4382
        %v4384 = vrot.slane %v2473, %v4383
        %v4386 = vunpack.c.l.s4 1983009808
        %v4387 = vunpack.c.0.s8 %v4386
        %v4388 = vlaneseq
        %v4389 = vshrl.u32 %v4388, 7
        %v4390 = vsub.s32 %v4387, %v4389
        %v4391 = vrot.slane %v4377, %v4390
        %v4392 = vcombine.high %v4384, %v4384
        %v4393 = vcombine.high %v4391, %v4391
        %v4394 = vcombine.high %v2474, %v2474
        %v4396 = vunpack.c.l.s4 1983009808
        %v4397 = vunpack.c.0.s8 %v4396
        %v4398 = vlaneseq
        %v4399 = vshrl.u32 %v4398, 7
        %v4400 = vsub.s32 %v4397, %v4399
        %v4401 = vrot.slane %v2474, %v4400
        %v4403 = vunpack.c.l.s4 1983009808
        %v4404 = vunpack.c.0.s8 %v4403
        %v4405 = vlaneseq
        %v4406 = vshrl.u32 %v4405, 7
        %v4407 = vsub.s32 %v4404, %v4406
        %v4408 = vrot.slane %v4394, %v4407
        %v4409 = vcombine.high %v4401, %v4401
        %v4410 = vcombine.high %v4408, %v4408
        %v4411 = vcombine.high %v2475, %v2475
        %v4413 = vunpack.c.l.s4 1983009808
        %v4414 = vunpack.c.0.s8 %v4413
        %v4415 = vlaneseq
        %v4416 = vshrl.u32 %v4415, 7
        %v4417 = vsub.s32 %v4414, %v4416
        %v4418 = vrot.slane %v2475, %v4417
        %v4420 = vunpack.c.l.s4 1983009808
        %v4421 = vunpack.c.0.s8 %v4420
        %v4422 = vlaneseq
        %v4423 = vshrl.u32 %v4422, 7
        %v4424 = vsub.s32 %v4421, %v4423
        %v4425 = vrot.slane %v4411, %v4424
        %v4426 = vcombine.high %v4418, %v4418
        %v4427 = vcombine.high %v4425, %v4425
        %v4428 = vcombine.high %v2476, %v2476
        %v4430 = vunpack.c.l.s4 1983009808
        %v4431 = vunpack.c.0.s8 %v4430
        %v4432 = vlaneseq
        %v4433 = vshrl.u32 %v4432, 7
        %v4434 = vsub.s32 %v4431, %v4433
        %v4435 = vrot.slane %v2476, %v4434
        %v4437 = vunpack.c.l.s4 1983009808
        %v4438 = vunpack.c.0.s8 %v4437
        %v4439 = vlaneseq
        %v4440 = vshrl.u32 %v4439, 7
        %v4441 = vsub.s32 %v4438, %v4440
        %v4442 = vrot.slane %v4428, %v4441
        %v4443 = vcombine.high %v4435, %v4435
        %v4444 = vcombine.high %v4442, %v4442
        %v4445 = vcombine.high %v2477, %v2477
        %v4447 = vunpack.c.l.s4 1983009808
        %v4448 = vunpack.c.0.s8 %v4447
        %v4449 = vlaneseq
        %v4450 = vshrl.u32 %v4449, 7
        %v4451 = vsub.s32 %v4448, %v4450
        %v4452 = vrot.slane %v2477, %v4451
        %v4454 = vunpack.c.l.s4 1983009808
        %v4455 = vunpack.c.0.s8 %v4454
        %v4456 = vlaneseq
        %v4457 = vshrl.u32 %v4456, 7
        %v4458 = vsub.s32 %v4455, %v4457
        %v4459 = vrot.slane %v4445, %v4458
        %v4460 = vcombine.high %v4452, %v4452
        %v4461 = vcombine.high %v4459, %v4459
        %v4462 = vcombine.high %v2478, %v2478
        %v4464 = vunpack.c.l.s4 1983009808
        %v4465 = vunpack.c.0.s8 %v4464
        %v4466 = vlaneseq
        %v4467 = vshrl.u32 %v4466, 7
        %v4468 = vsub.s32 %v4465, %v4467
        %v4469 = vrot.slane %v2478, %v4468
        %v4471 = vunpack.c.l.s4 1983009808
        %v4472 = vunpack.c.0.s8 %v4471
        %v4473 = vlaneseq
        %v4474 = vshrl.u32 %v4473, 7
        %v4475 = vsub.s32 %v4472, %v4474
        %v4476 = vrot.slane %v4462, %v4475
        %v4477 = vcombine.high %v4469, %v4469
        %v4478 = vcombine.high %v4476, %v4476
        %v4479 = vcombine.high %v2479, %v2479
        %v4481 = vunpack.c.l.s4 1983009808
        %v4482 = vunpack.c.0.s8 %v4481
        %v4483 = vlaneseq
        %v4484 = vshrl.u32 %v4483, 7
        %v4485 = vsub.s32 %v4482, %v4484
        %v4486 = vrot.slane %v2479, %v4485
        %v4488 = vunpack.c.l.s4 1983009808
        %v4489 = vunpack.c.0.s8 %v4488
        %v4490 = vlaneseq
        %v4491 = vshrl.u32 %v4490, 7
        %v4492 = vsub.s32 %v4489, %v4491
        %v4493 = vrot.slane %v4479, %v4492
        %v4494 = vcombine.high %v4486, %v4486
        %v4495 = vcombine.high %v4493, %v4493
        %v4496 = vcombine.high %v2480, %v2480
        %v4498 = vunpack.c.l.s4 1983009808
        %v4499 = vunpack.c.0.s8 %v4498
        %v4500 = vlaneseq
        %v4501 = vshrl.u32 %v4500, 7
        %v4502 = vsub.s32 %v4499, %v4501
        %v4503 = vrot.slane %v2480, %v4502
        %v4505 = vunpack.c.l.s4 1983009808
        %v4506 = vunpack.c.0.s8 %v4505
        %v4507 = vlaneseq
        %v4508 = vshrl.u32 %v4507, 7
        %v4509 = vsub.s32 %v4506, %v4508
        %v4510 = vrot.slane %v4496, %v4509
        %v4511 = vcombine.high %v4503, %v4503
        %v4512 = vcombine.high %v4510, %v4510
        %v4513 = vcombine.high %v2481, %v2481
        %v4515 = vunpack.c.l.s4 1983009808
        %v4516 = vunpack.c.0.s8 %v4515
        %v4517 = vlaneseq
        %v4518 = vshrl.u32 %v4517, 7
        %v4519 = vsub.s32 %v4516, %v4518
        %v4520 = vrot.slane %v2481, %v4519
        %v4522 = vunpack.c.l.s4 1983009808
        %v4523 = vunpack.c.0.s8 %v4522
        %v4524 = vlaneseq
        %v4525 = vshrl.u32 %v4524, 7
        %v4526 = vsub.s32 %v4523, %v4525
        %v4527 = vrot.slane %v4513, %v4526
        %v4528 = vcombine.high %v4520, %v4520
        %v4529 = vcombine.high %v4527, %v4527
        %v4530 = vcombine.high %v2482, %v2482
        %v4532 = vunpack.c.l.s4 1983009808
        %v4533 = vunpack.c.0.s8 %v4532
        %v4534 = vlaneseq
        %v4535 = vshrl.u32 %v4534, 7
        %v4536 = vsub.s32 %v4533, %v4535
        %v4537 = vrot.slane %v2482, %v4536
        %v4539 = vunpack.c.l.s4 1983009808
        %v4540 = vunpack.c.0.s8 %v4539
        %v4541 = vlaneseq
        %v4542 = vshrl.u32 %v4541, 7
        %v4543 = vsub.s32 %v4540, %v4542
        %v4544 = vrot.slane %v4530, %v4543
        %v4545 = vcombine.high %v4537, %v4537
        %v4546 = vcombine.high %v4544, %v4544
        %v4547 = vcombine.high %v2483, %v2483
        %v4549 = vunpack.c.l.s4 1983009808
        %v4550 = vunpack.c.0.s8 %v4549
        %v4551 = vlaneseq
        %v4552 = vshrl.u32 %v4551, 7
        %v4553 = vsub.s32 %v4550, %v4552
        %v4554 = vrot.slane %v2483, %v4553
        %v4556 = vunpack.c.l.s4 1983009808
        %v4557 = vunpack.c.0.s8 %v4556
        %v4558 = vlaneseq
        %v4559 = vshrl.u32 %v4558, 7
        %v4560 = vsub.s32 %v4557, %v4559
        %v4561 = vrot.slane %v4547, %v4560
        %v4562 = vcombine.high %v4554, %v4554
        %v4563 = vcombine.high %v4561, %v4561
        %v4564 = vcombine.high %v2484, %v2484
        %v4566 = vunpack.c.l.s4 1983009808
        %v4567 = vunpack.c.0.s8 %v4566
        %v4568 = vlaneseq
        %v4569 = vshrl.u32 %v4568, 7
        %v4570 = vsub.s32 %v4567, %v4569
        %v4571 = vrot.slane %v2484, %v4570
        %v4573 = vunpack.c.l.s4 1983009808
        %v4574 = vunpack.c.0.s8 %v4573
        %v4575 = vlaneseq
        %v4576 = vshrl.u32 %v4575, 7
        %v4577 = vsub.s32 %v4574, %v4576
        %v4578 = vrot.slane %v4564, %v4577
        %v4579 = vcombine.high %v4571, %v4571
        %v4580 = vcombine.high %v4578, %v4578
        %v4581 = vcombine.high %v2485, %v2485
        %v4583 = vunpack.c.l.s4 1983009808
        %v4584 = vunpack.c.0.s8 %v4583
        %v4585 = vlaneseq
        %v4586 = vshrl.u32 %v4585, 7
        %v4587 = vsub.s32 %v4584, %v4586
        %v4588 = vrot.slane %v2485, %v4587
        %v4590 = vunpack.c.l.s4 1983009808
        %v4591 = vunpack.c.0.s8 %v4590
        %v4592 = vlaneseq
        %v4593 = vshrl.u32 %v4592, 7
        %v4594 = vsub.s32 %v4591, %v4593
        %v4595 = vrot.slane %v4581, %v4594
        %v4596 = vcombine.high %v4588, %v4588
        %v4597 = vcombine.high %v4595, %v4595
        %v4598 = vcombine.high %v2486, %v2486
        %v4600 = vunpack.c.l.s4 1983009808
        %v4601 = vunpack.c.0.s8 %v4600
        %v4602 = vlaneseq
        %v4603 = vshrl.u32 %v4602, 7
        %v4604 = vsub.s32 %v4601, %v4603
        %v4605 = vrot.slane %v2486, %v4604
        %v4607 = vunpack.c.l.s4 1983009808
        %v4608 = vunpack.c.0.s8 %v4607
        %v4609 = vlaneseq
        %v4610 = vshrl.u32 %v4609, 7
        %v4611 = vsub.s32 %v4608, %v4610
        %v4612 = vrot.slane %v4598, %v4611
        %v4613 = vcombine.high %v4605, %v4605
        %v4614 = vcombine.high %v4612, %v4612
        %v4615 = vcombine.high %v2487, %v2487
        %v4617 = vunpack.c.l.s4 1983009808
        %v4618 = vunpack.c.0.s8 %v4617
        %v4619 = vlaneseq
        %v4620 = vshrl.u32 %v4619, 7
        %v4621 = vsub.s32 %v4618, %v4620
        %v4622 = vrot.slane %v2487, %v4621
        %v4624 = vunpack.c.l.s4 1983009808
        %v4625 = vunpack.c.0.s8 %v4624
        %v4626 = vlaneseq
        %v4627 = vshrl.u32 %v4626, 7
        %v4628 = vsub.s32 %v4625, %v4627
        %v4629 = vrot.slane %v4615, %v4628
        %v4630 = vcombine.high %v4622, %v4622
        %v4631 = vcombine.high %v4629, %v4629
        %v4632 = vcombine.high %v2488, %v2488
        %v4634 = vunpack.c.l.s4 1983009808
        %v4635 = vunpack.c.0.s8 %v4634
        %v4636 = vlaneseq
        %v4637 = vshrl.u32 %v4636, 7
        %v4638 = vsub.s32 %v4635, %v4637
        %v4639 = vrot.slane %v2488, %v4638
        %v4641 = vunpack.c.l.s4 1983009808
        %v4642 = vunpack.c.0.s8 %v4641
        %v4643 = vlaneseq
        %v4644 = vshrl.u32 %v4643, 7
        %v4645 = vsub.s32 %v4642, %v4644
        %v4646 = vrot.slane %v4632, %v4645
        %v4647 = vcombine.high %v4639, %v4639
        %v4648 = vcombine.high %v4646, %v4646
        %v4649 = vcombine.high %v2489, %v2489
        %v4651 = vunpack.c.l.s4 1983009808
        %v4652 = vunpack.c.0.s8 %v4651
        %v4653 = vlaneseq
        %v4654 = vshrl.u32 %v4653, 7
        %v4655 = vsub.s32 %v4652, %v4654
        %v4656 = vrot.slane %v2489, %v4655
        %v4658 = vunpack.c.l.s4 1983009808
        %v4659 = vunpack.c.0.s8 %v4658
        %v4660 = vlaneseq
        %v4661 = vshrl.u32 %v4660, 7
        %v4662 = vsub.s32 %v4659, %v4661
        %v4663 = vrot.slane %v4649, %v4662
        %v4664 = vcombine.high %v4656, %v4656
        %v4665 = vcombine.high %v4663, %v4663
        %v4666 = vcombine.high %v2490, %v2490
        %v4668 = vunpack.c.l.s4 1983009808
        %v4669 = vunpack.c.0.s8 %v4668
        %v4670 = vlaneseq
        %v4671 = vshrl.u32 %v4670, 7
        %v4672 = vsub.s32 %v4669, %v4671
        %v4673 = vrot.slane %v2490, %v4672
        %v4675 = vunpack.c.l.s4 1983009808
        %v4676 = vunpack.c.0.s8 %v4675
        %v4677 = vlaneseq
        %v4678 = vshrl.u32 %v4677, 7
        %v4679 = vsub.s32 %v4676, %v4678
        %v4680 = vrot.slane %v4666, %v4679
        %v4681 = vcombine.high %v4673, %v4673
        %v4682 = vcombine.high %v4680, %v4680
        %v4683 = vcombine.high %v2491, %v2491
        %v4685 = vunpack.c.l.s4 1983009808
        %v4686 = vunpack.c.0.s8 %v4685
        %v4687 = vlaneseq
        %v4688 = vshrl.u32 %v4687, 7
        %v4689 = vsub.s32 %v4686, %v4688
        %v4690 = vrot.slane %v2491, %v4689
        %v4692 = vunpack.c.l.s4 1983009808
        %v4693 = vunpack.c.0.s8 %v4692
        %v4694 = vlaneseq
        %v4695 = vshrl.u32 %v4694, 7
        %v4696 = vsub.s32 %v4693, %v4695
        %v4697 = vrot.slane %v4683, %v4696
        %v4698 = vcombine.high %v4690, %v4690
        %v4699 = vcombine.high %v4697, %v4697
        %v4700 = vcombine.high %v2492, %v2492
        %v4702 = vunpack.c.l.s4 1983009808
        %v4703 = vunpack.c.0.s8 %v4702
        %v4704 = vlaneseq
        %v4705 = vshrl.u32 %v4704, 7
        %v4706 = vsub.s32 %v4703, %v4705
        %v4707 = vrot.slane %v2492, %v4706
        %v4709 = vunpack.c.l.s4 1983009808
        %v4710 = vunpack.c.0.s8 %v4709
        %v4711 = vlaneseq
        %v4712 = vshrl.u32 %v4711, 7
        %v4713 = vsub.s32 %v4710, %v4712
        %v4714 = vrot.slane %v4700, %v4713
        %v4715 = vcombine.high %v4707, %v4707
        %v4716 = vcombine.high %v4714, %v4714
        %v4717 = vcombine.high %v2493, %v2493
        %v4719 = vunpack.c.l.s4 1983009808
        %v4720 = vunpack.c.0.s8 %v4719
        %v4721 = vlaneseq
        %v4722 = vshrl.u32 %v4721, 7
        %v4723 = vsub.s32 %v4720, %v4722
        %v4724 = vrot.slane %v2493, %v4723
        %v4726 = vunpack.c.l.s4 1983009808
        %v4727 = vunpack.c.0.s8 %v4726
        %v4728 = vlaneseq
        %v4729 = vshrl.u32 %v4728, 7
        %v4730 = vsub.s32 %v4727, %v4729
        %v4731 = vrot.slane %v4717, %v4730
        %v4732 = vcombine.high %v4724, %v4724
        %v4733 = vcombine.high %v4731, %v4731
        %v4734 = vcombine.high %v2494, %v2494
        %v4736 = vunpack.c.l.s4 1983009808
        %v4737 = vunpack.c.0.s8 %v4736
        %v4738 = vlaneseq
        %v4739 = vshrl.u32 %v4738, 7
        %v4740 = vsub.s32 %v4737, %v4739
        %v4741 = vrot.slane %v2494, %v4740
        %v4743 = vunpack.c.l.s4 1983009808
        %v4744 = vunpack.c.0.s8 %v4743
        %v4745 = vlaneseq
        %v4746 = vshrl.u32 %v4745, 7
        %v4747 = vsub.s32 %v4744, %v4746
        %v4748 = vrot.slane %v4734, %v4747
        %v4749 = vcombine.high %v4741, %v4741
        %v4750 = vcombine.high %v4748, %v4748
        %v4751 = vcombine.high %v2495, %v2495
        %v4753 = vunpack.c.l.s4 1983009808
        %v4754 = vunpack.c.0.s8 %v4753
        %v4755 = vlaneseq
        %v4756 = vshrl.u32 %v4755, 7
        %v4757 = vsub.s32 %v4754, %v4756
        %v4758 = vrot.slane %v2495, %v4757
        %v4760 = vunpack.c.l.s4 1983009808
        %v4761 = vunpack.c.0.s8 %v4760
        %v4762 = vlaneseq
        %v4763 = vshrl.u32 %v4762, 7
        %v4764 = vsub.s32 %v4761, %v4763
        %v4765 = vrot.slane %v4751, %v4764
        %v4766 = vcombine.high %v4758, %v4758
        %v4767 = vcombine.high %v4765, %v4765
        %v4768 = vcombine.high %v2496, %v2496
        %v4770 = vunpack.c.l.s4 1983009808
        %v4771 = vunpack.c.0.s8 %v4770
        %v4772 = vlaneseq
        %v4773 = vshrl.u32 %v4772, 7
        %v4774 = vsub.s32 %v4771, %v4773
        %v4775 = vrot.slane %v2496, %v4774
        %v4777 = vunpack.c.l.s4 1983009808
        %v4778 = vunpack.c.0.s8 %v4777
        %v4779 = vlaneseq
        %v4780 = vshrl.u32 %v4779, 7
        %v4781 = vsub.s32 %v4778, %v4780
        %v4782 = vrot.slane %v4768, %v4781
        %v4783 = vcombine.high %v4775, %v4775
        %v4784 = vcombine.high %v4782, %v4782
        %v4785 = vcombine.high %v2497, %v2497
        %v4787 = vunpack.c.l.s4 1983009808
        %v4788 = vunpack.c.0.s8 %v4787
        %v4789 = vlaneseq
        %v4790 = vshrl.u32 %v4789, 7
        %v4791 = vsub.s32 %v4788, %v4790
        %v4792 = vrot.slane %v2497, %v4791
        %v4794 = vunpack.c.l.s4 1983009808
        %v4795 = vunpack.c.0.s8 %v4794
        %v4796 = vlaneseq
        %v4797 = vshrl.u32 %v4796, 7
        %v4798 = vsub.s32 %v4795, %v4797
        %v4799 = vrot.slane %v4785, %v4798
        %v4800 = vcombine.high %v4792, %v4792
        %v4801 = vcombine.high %v4799, %v4799
        %v5314 = vrot.slane %v2633, 7
        %v5315 = vrot.slane %v5314, 2
        %v5316 = vrot.slane %v2641, 7
        %v5317 = vrot.slane %v5316, 2
        %v5318 = vrot.slane %v2640, 7
        %v5319 = vrot.slane %v5318, 2
        %v5320 = vrot.slane %v2642, 7
        %v5321 = vrot.slane %v5320, 2
        %v5322 = vrot.slane %v2650, 7
        %v5323 = vrot.slane %v5322, 2
        %v5324 = vrot.slane %v2658, 7
        %v5325 = vrot.slane %v5324, 2
        %v5326 = vrot.slane %v2657, 7
        %v5327 = vrot.slane %v5326, 2
        %v5328 = vrot.slane %v2659, 7
        %v5329 = vrot.slane %v5328, 2
        %v5330 = vrot.slane %v2667, 7
        %v5331 = vrot.slane %v5330, 2
        %v5332 = vrot.slane %v2675, 7
        %v5333 = vrot.slane %v5332, 2
        %v5334 = vrot.slane %v2674, 7
        %v5335 = vrot.slane %v5334, 2
        %v5336 = vrot.slane %v2676, 7
        %v5337 = vrot.slane %v5336, 2
        %v5338 = vrot.slane %v2684, 7
        %v5339 = vrot.slane %v5338, 2
        %v5340 = vrot.slane %v2692, 7
        %v5341 = vrot.slane %v5340, 2
        %v5342 = vrot.slane %v2691, 7
        %v5343 = vrot.slane %v5342, 2
        %v5344 = vrot.slane %v2693, 7
        %v5345 = vrot.slane %v5344, 2
        %v5346 = vrot.slane %v2769, 7
        %v5347 = vrot.slane %v5346, 2
        %v5348 = vrot.slane %v2777, 7
        %v5349 = vrot.slane %v5348, 2
        %v5350 = vrot.slane %v2776, 7
        %v5351 = vrot.slane %v5350, 2
        %v5352 = vrot.slane %v2778, 7
        %v5353 = vrot.slane %v5352, 2
        %v5354 = vrot.slane %v2786, 7
        %v5355 = vrot.slane %v5354, 2
        %v5356 = vrot.slane %v2794, 7
        %v5357 = vrot.slane %v5356, 2
        %v5358 = vrot.slane %v2793, 7
        %v5359 = vrot.slane %v5358, 2
        %v5360 = vrot.slane %v2795, 7
        %v5361 = vrot.slane %v5360, 2
        %v5362 = vrot.slane %v2803, 7
        %v5363 = vrot.slane %v5362, 2
        %v5364 = vrot.slane %v2811, 7
        %v5365 = vrot.slane %v5364, 2
        %v5366 = vrot.slane %v2810, 7
        %v5367 = vrot.slane %v5366, 2
        %v5368 = vrot.slane %v2812, 7
        %v5369 = vrot.slane %v5368, 2
        %v5370 = vrot.slane %v2820, 7
        %v5371 = vrot.slane %v5370, 2
        %v5372 = vrot.slane %v2828, 7
        %v5373 = vrot.slane %v5372, 2
        %v5374 = vrot.slane %v2827, 7
        %v5375 = vrot.slane %v5374, 2
        %v5376 = vrot.slane %v2829, 7
        %v5377 = vrot.slane %v5376, 2
        %v5378 = vrot.slane %v2905, 7
        %v5379 = vrot.slane %v5378, 2
        %v5380 = vrot.slane %v2913, 7
        %v5381 = vrot.slane %v5380, 2
        %v5382 = vrot.slane %v2912, 7
        %v5383 = vrot.slane %v5382, 2
        %v5384 = vrot.slane %v2914, 7
        %v5385 = vrot.slane %v5384, 2
        %v5386 = vrot.slane %v2922, 7
        %v5387 = vrot.slane %v5386, 2
        %v5388 = vrot.slane %v2930, 7
        %v5389 = vrot.slane %v5388, 2
        %v5390 = vrot.slane %v2929, 7
        %v5391 = vrot.slane %v5390, 2
        %v5392 = vrot.slane %v2931, 7
        %v5393 = vrot.slane %v5392, 2
        %v5394 = vrot.slane %v2939, 7
        %v5395 = vrot.slane %v5394, 2
        %v5396 = vrot.slane %v2947, 7
        %v5397 = vrot.slane %v5396, 2
        %v5398 = vrot.slane %v2946, 7
        %v5399 = vrot.slane %v5398, 2
        %v5400 = vrot.slane %v2948, 7
        %v5401 = vrot.slane %v5400, 2
        %v5402 = vrot.slane %v2956, 7
        %v5403 = vrot.slane %v5402, 2
        %v5404 = vrot.slane %v2964, 7
        %v5405 = vrot.slane %v5404, 2
        %v5406 = vrot.slane %v2963, 7
        %v5407 = vrot.slane %v5406, 2
        %v5408 = vrot.slane %v2965, 7
        %v5409 = vrot.slane %v5408, 2
        %v5410 = vrot.slane %v3041, 7
        %v5411 = vrot.slane %v5410, 2
        %v5412 = vrot.slane %v3049, 7
        %v5413 = vrot.slane %v5412, 2
        %v5414 = vrot.slane %v3048, 7
        %v5415 = vrot.slane %v5414, 2
        %v5416 = vrot.slane %v3050, 7
        %v5417 = vrot.slane %v5416, 2
        %v5418 = vrot.slane %v3058, 7
        %v5419 = vrot.slane %v5418, 2
        %v5420 = vrot.slane %v3066, 7
        %v5421 = vrot.slane %v5420, 2
        %v5422 = vrot.slane %v3065, 7
        %v5423 = vrot.slane %v5422, 2
        %v5424 = vrot.slane %v3067, 7
        %v5425 = vrot.slane %v5424, 2
        %v5426 = vrot.slane %v3075, 7
        %v5427 = vrot.slane %v5426, 2
        %v5428 = vrot.slane %v3083, 7
        %v5429 = vrot.slane %v5428, 2
        %v5430 = vrot.slane %v3082, 7
        %v5431 = vrot.slane %v5430, 2
        %v5432 = vrot.slane %v3084, 7
        %v5433 = vrot.slane %v5432, 2
        %v5434 = vrot.slane %v3092, 7
        %v5435 = vrot.slane %v5434, 2
        %v5436 = vrot.slane %v3100, 7
        %v5437 = vrot.slane %v5436, 2
        %v5438 = vrot.slane %v3099, 7
        %v5439 = vrot.slane %v5438, 2
        %v5440 = vrot.slane %v3101, 7
        %v5441 = vrot.slane %v5440, 2
        %v5442 = vrot.slane %v3177, 7
        %v5443 = vrot.slane %v5442, 2
        %v5444 = vrot.slane %v3185, 7
        %v5445 = vrot.slane %v5444, 2
        %v5446 = vrot.slane %v3184, 7
        %v5447 = vrot.slane %v5446, 2
        %v5448 = vrot.slane %v3186, 7
        %v5449 = vrot.slane %v5448, 2
        %v5450 = vrot.slane %v3194, 7
        %v5451 = vrot.slane %v5450, 2
        %v5452 = vrot.slane %v3202, 7
        %v5453 = vrot.slane %v5452, 2
        %v5454 = vrot.slane %v3201, 7
        %v5455 = vrot.slane %v5454, 2
        %v5456 = vrot.slane %v3203, 7
        %v5457 = vrot.slane %v5456, 2
        %v5458 = vrot.slane %v3211, 7
        %v5459 = vrot.slane %v5458, 2
        %v5460 = vrot.slane %v3219, 7
        %v5461 = vrot.slane %v5460, 2
        %v5462 = vrot.slane %v3218, 7
        %v5463 = vrot.slane %v5462, 2
        %v5464 = vrot.slane %v3220, 7
        %v5465 = vrot.slane %v5464, 2
        %v5466 = vrot.slane %v3228, 7
        %v5467 = vrot.slane %v5466, 2
        %v5468 = vrot.slane %v3236, 7
        %v5469 = vrot.slane %v5468, 2
        %v5470 = vrot.slane %v3235, 7
        %v5471 = vrot.slane %v5470, 2
        %v5472 = vrot.slane %v3237, 7
        %v5473 = vrot.slane %v5472, 2
        %v5474 = vrot.slane %v3313, 7
        %v5475 = vrot.slane %v5474, 2
        %v5476 = vrot.slane %v3321, 7
        %v5477 = vrot.slane %v5476, 2
        %v5478 = vrot.slane %v3320, 7
        %v5479 = vrot.slane %v5478, 2
        %v5480 = vrot.slane %v3322, 7
        %v5481 = vrot.slane %v5480, 2
        %v5482 = vrot.slane %v3330, 7
        %v5483 = vrot.slane %v5482, 2
        %v5484 = vrot.slane %v3338, 7
        %v5485 = vrot.slane %v5484, 2
        %v5486 = vrot.slane %v3337, 7
        %v5487 = vrot.slane %v5486, 2
        %v5488 = vrot.slane %v3339, 7
        %v5489 = vrot.slane %v5488, 2
        %v5490 = vrot.slane %v3347, 7
        %v5491 = vrot.slane %v5490, 2
        %v5492 = vrot.slane %v3355, 7
        %v5493 = vrot.slane %v5492, 2
        %v5494 = vrot.slane %v3354, 7
        %v5495 = vrot.slane %v5494, 2
        %v5496 = vrot.slane %v3356, 7
        %v5497 = vrot.slane %v5496, 2
        %v5498 = vrot.slane %v3364, 7
        %v5499 = vrot.slane %v5498, 2
        %v5500 = vrot.slane %v3372, 7
        %v5501 = vrot.slane %v5500, 2
        %v5502 = vrot.slane %v3371, 7
        %v5503 = vrot.slane %v5502, 2
        %v5504 = vrot.slane %v3373, 7
        %v5505 = vrot.slane %v5504, 2
        %v5506 = vrot.slane %v3449, 7
        %v5507 = vrot.slane %v5506, 2
        %v5508 = vrot.slane %v3457, 7
        %v5509 = vrot.slane %v5508, 2
        %v5510 = vrot.slane %v3456, 7
        %v5511 = vrot.slane %v5510, 2
        %v5512 = vrot.slane %v3458, 7
        %v5513 = vrot.slane %v5512, 2
        %v5514 = vrot.slane %v3466, 7
        %v5515 = vrot.slane %v5514, 2
        %v5516 = vrot.slane %v3474, 7
        %v5517 = vrot.slane %v5516, 2
        %v5518 = vrot.slane %v3473, 7
        %v5519 = vrot.slane %v5518, 2
        %v5520 = vrot.slane %v3475, 7
        %v5521 = vrot.slane %v5520, 2
        %v5522 = vrot.slane %v3483, 7
        %v5523 = vrot.slane %v5522, 2
        %v5524 = vrot.slane %v3491, 7
        %v5525 = vrot.slane %v5524, 2
        %v5526 = vrot.slane %v3490, 7
        %v5527 = vrot.slane %v5526, 2
        %v5528 = vrot.slane %v3492, 7
        %v5529 = vrot.slane %v5528, 2
        %v5530 = vrot.slane %v3500, 7
        %v5531 = vrot.slane %v5530, 2
        %v5532 = vrot.slane %v3508, 7
        %v5533 = vrot.slane %v5532, 2
        %v5534 = vrot.slane %v3507, 7
        %v5535 = vrot.slane %v5534, 2
        %v5536 = vrot.slane %v3509, 7
        %v5537 = vrot.slane %v5536, 2
        %v5538 = vrot.slane %v3585, 7
        %v5539 = vrot.slane %v5538, 2
        %v5540 = vrot.slane %v3593, 7
        %v5541 = vrot.slane %v5540, 2
        %v5542 = vrot.slane %v3592, 7
        %v5543 = vrot.slane %v5542, 2
        %v5544 = vrot.slane %v3594, 7
        %v5545 = vrot.slane %v5544, 2
        %v5546 = vrot.slane %v3602, 7
        %v5547 = vrot.slane %v5546, 2
        %v5548 = vrot.slane %v3610, 7
        %v5549 = vrot.slane %v5548, 2
        %v5550 = vrot.slane %v3609, 7
        %v5551 = vrot.slane %v5550, 2
        %v5552 = vrot.slane %v3611, 7
        %v5553 = vrot.slane %v5552, 2
        %v5554 = vrot.slane %v3619, 7
        %v5555 = vrot.slane %v5554, 2
        %v5556 = vrot.slane %v3627, 7
        %v5557 = vrot.slane %v5556, 2
        %v5558 = vrot.slane %v3626, 7
        %v5559 = vrot.slane %v5558, 2
        %v5560 = vrot.slane %v3628, 7
        %v5561 = vrot.slane %v5560, 2
        %v5562 = vrot.slane %v3636, 7
        %v5563 = vrot.slane %v5562, 2
        %v5564 = vrot.slane %v3644, 7
        %v5565 = vrot.slane %v5564, 2
        %v5566 = vrot.slane %v3643, 7
        %v5567 = vrot.slane %v5566, 2
        %v5568 = vrot.slane %v3645, 7
        %v5569 = vrot.slane %v5568, 2
        %v5570 = vrot.slane %v3721, 7
        %v5571 = vrot.slane %v5570, 2
        %v5572 = vrot.slane %v3729, 7
        %v5573 = vrot.slane %v5572, 2
        %v5574 = vrot.slane %v3728, 7
        %v5575 = vrot.slane %v5574, 2
        %v5576 = vrot.slane %v3730, 7
        %v5577 = vrot.slane %v5576, 2
        %v5578 = vrot.slane %v3738, 7
        %v5579 = vrot.slane %v5578, 2
        %v5580 = vrot.slane %v3746, 7
        %v5581 = vrot.slane %v5580, 2
        %v5582 = vrot.slane %v3745, 7
        %v5583 = vrot.slane %v5582, 2
        %v5584 = vrot.slane %v3747, 7
        %v5585 = vrot.slane %v5584, 2
        %v5586 = vrot.slane %v3755, 7
        %v5587 = vrot.slane %v5586, 2
        %v5588 = vrot.slane %v3763, 7
        %v5589 = vrot.slane %v5588, 2
        %v5590 = vrot.slane %v3762, 7
        %v5591 = vrot.slane %v5590, 2
        %v5592 = vrot.slane %v3764, 7
        %v5593 = vrot.slane %v5592, 2
        %v5594 = vrot.slane %v3772, 7
        %v5595 = vrot.slane %v5594, 2
        %v5596 = vrot.slane %v3780, 7
        %v5597 = vrot.slane %v5596, 2
        %v5598 = vrot.slane %v3779, 7
        %v5599 = vrot.slane %v5598, 2
        %v5600 = vrot.slane %v3781, 7
        %v5601 = vrot.slane %v5600, 2
        %v5602 = vrot.slane %v3857, 7
        %v5603 = vrot.slane %v5602, 2
        %v5604 = vrot.slane %v3865, 7
        %v5605 = vrot.slane %v5604, 2
        %v5606 = vrot.slane %v3864, 7
        %v5607 = vrot.slane %v5606, 2
        %v5608 = vrot.slane %v3866, 7
        %v5609 = vrot.slane %v5608, 2
        %v5610 = vrot.slane %v3874, 7
        %v5611 = vrot.slane %v5610, 2
        %v5612 = vrot.slane %v3882, 7
        %v5613 = vrot.slane %v5612, 2
        %v5614 = vrot.slane %v3881, 7
        %v5615 = vrot.slane %v5614, 2
        %v5616 = vrot.slane %v3883, 7
        %v5617 = vrot.slane %v5616, 2
        %v5618 = vrot.slane %v3891, 7
        %v5619 = vrot.slane %v5618, 2
        %v5620 = vrot.slane %v3899, 7
        %v5621 = vrot.slane %v5620, 2
        %v5622 = vrot.slane %v3898, 7
        %v5623 = vrot.slane %v5622, 2
        %v5624 = vrot.slane %v3900, 7
        %v5625 = vrot.slane %v5624, 2
        %v5626 = vrot.slane %v3908, 7
        %v5627 = vrot.slane %v5626, 2
        %v5628 = vrot.slane %v3916, 7
        %v5629 = vrot.slane %v5628, 2
        %v5630 = vrot.slane %v3915, 7
        %v5631 = vrot.slane %v5630, 2
        %v5632 = vrot.slane %v3917, 7
        %v5633 = vrot.slane %v5632, 2
        %v5634 = vrot.slane %v3993, 7
        %v5635 = vrot.slane %v5634, 2
        %v5636 = vrot.slane %v4001, 7
        %v5637 = vrot.slane %v5636, 2
        %v5638 = vrot.slane %v4000, 7
        %v5639 = vrot.slane %v5638, 2
        %v5640 = vrot.slane %v4002, 7
        %v5641 = vrot.slane %v5640, 2
        %v5642 = vrot.slane %v4010, 7
        %v5643 = vrot.slane %v5642, 2
        %v5644 = vrot.slane %v4018, 7
        %v5645 = vrot.slane %v5644, 2
        %v5646 = vrot.slane %v4017, 7
        %v5647 = vrot.slane %v5646, 2
        %v5648 = vrot.slane %v4019, 7
        %v5649 = vrot.slane %v5648, 2
        %v5650 = vrot.slane %v4027, 7
        %v5651 = vrot.slane %v5650, 2
        %v5652 = vrot.slane %v4035, 7
        %v5653 = vrot.slane %v5652, 2
        %v5654 = vrot.slane %v4034, 7
        %v5655 = vrot.slane %v5654, 2
        %v5656 = vrot.slane %v4036, 7
        %v5657 = vrot.slane %v5656, 2
        %v5658 = vrot.slane %v4044, 7
        %v5659 = vrot.slane %v5658, 2
        %v5660 = vrot.slane %v4052, 7
        %v5661 = vrot.slane %v5660, 2
        %v5662 = vrot.slane %v4051, 7
        %v5663 = vrot.slane %v5662, 2
        %v5664 = vrot.slane %v4053, 7
        %v5665 = vrot.slane %v5664, 2
        %v5666 = vrot.slane %v4129, 7
        %v5667 = vrot.slane %v5666, 2
        %v5668 = vrot.slane %v4137, 7
        %v5669 = vrot.slane %v5668, 2
        %v5670 = vrot.slane %v4136, 7
        %v5671 = vrot.slane %v5670, 2
        %v5672 = vrot.slane %v4138, 7
        %v5673 = vrot.slane %v5672, 2
        %v5674 = vrot.slane %v4146, 7
        %v5675 = vrot.slane %v5674, 2
        %v5676 = vrot.slane %v4154, 7
        %v5677 = vrot.slane %v5676, 2
        %v5678 = vrot.slane %v4153, 7
        %v5679 = vrot.slane %v5678, 2
        %v5680 = vrot.slane %v4155, 7
        %v5681 = vrot.slane %v5680, 2
        %v5682 = vrot.slane %v4163, 7
        %v5683 = vrot.slane %v5682, 2
        %v5684 = vrot.slane %v4171, 7
        %v5685 = vrot.slane %v5684, 2
        %v5686 = vrot.slane %v4170, 7
        %v5687 = vrot.slane %v5686, 2
        %v5688 = vrot.slane %v4172, 7
        %v5689 = vrot.slane %v5688, 2
        %v5690 = vrot.slane %v4180, 7
        %v5691 = vrot.slane %v5690, 2
        %v5692 = vrot.slane %v4188, 7
        %v5693 = vrot.slane %v5692, 2
        %v5694 = vrot.slane %v4187, 7
        %v5695 = vrot.slane %v5694, 2
        %v5696 = vrot.slane %v4189, 7
        %v5697 = vrot.slane %v5696, 2
        %v5698 = vrot.slane %v4265, 7
        %v5699 = vrot.slane %v5698, 2
        %v5700 = vrot.slane %v4273, 7
        %v5701 = vrot.slane %v5700, 2
        %v5702 = vrot.slane %v4272, 7
        %v5703 = vrot.slane %v5702, 2
        %v5704 = vrot.slane %v4274, 7
        %v5705 = vrot.slane %v5704, 2
        %v5706 = vrot.slane %v4282, 7
        %v5707 = vrot.slane %v5706, 2
        %v5708 = vrot.slane %v4290, 7
        %v5709 = vrot.slane %v5708, 2
        %v5710 = vrot.slane %v4289, 7
        %v5711 = vrot.slane %v5710, 2
        %v5712 = vrot.slane %v4291, 7
        %v5713 = vrot.slane %v5712, 2
        %v5714 = vrot.slane %v4299, 7
        %v5715 = vrot.slane %v5714, 2
        %v5716 = vrot.slane %v4307, 7
        %v5717 = vrot.slane %v5716, 2
        %v5718 = vrot.slane %v4306, 7
        %v5719 = vrot.slane %v5718, 2
        %v5720 = vrot.slane %v4308, 7
        %v5721 = vrot.slane %v5720, 2
        %v5722 = vrot.slane %v4316, 7
        %v5723 = vrot.slane %v5722, 2
        %v5724 = vrot.slane %v4324, 7
        %v5725 = vrot.slane %v5724, 2
        %v5726 = vrot.slane %v4323, 7
        %v5727 = vrot.slane %v5726, 2
        %v5728 = vrot.slane %v4325, 7
        %v5729 = vrot.slane %v5728, 2
        %v5730 = vrot.slane %v4401, 7
        %v5731 = vrot.slane %v5730, 2
        %v5732 = vrot.slane %v4409, 7
        %v5733 = vrot.slane %v5732, 2
        %v5734 = vrot.slane %v4408, 7
        %v5735 = vrot.slane %v5734, 2
        %v5736 = vrot.slane %v4410, 7
        %v5737 = vrot.slane %v5736, 2
        %v5738 = vrot.slane %v4418, 7
        %v5739 = vrot.slane %v5738, 2
        %v5740 = vrot.slane %v4426, 7
        %v5741 = vrot.slane %v5740, 2
        %v5742 = vrot.slane %v4425, 7
        %v5743 = vrot.slane %v5742, 2
        %v5744 = vrot.slane %v4427, 7
        %v5745 = vrot.slane %v5744, 2
        %v5746 = vrot.slane %v4435, 7
        %v5747 = vrot.slane %v5746, 2
        %v5748 = vrot.slane %v4443, 7
        %v5749 = vrot.slane %v5748, 2
        %v5750 = vrot.slane %v4442, 7
        %v5751 = vrot.slane %v5750, 2
        %v5752 = vrot.slane %v4444, 7
        %v5753 = vrot.slane %v5752, 2
        %v5754 = vrot.slane %v4452, 7
        %v5755 = vrot.slane %v5754, 2
        %v5756 = vrot.slane %v4460, 7
        %v5757 = vrot.slane %v5756, 2
        %v5758 = vrot.slane %v4459, 7
        %v5759 = vrot.slane %v5758, 2
        %v5760 = vrot.slane %v4461, 7
        %v5761 = vrot.slane %v5760, 2
        %v5762 = vrot.slane %v4537, 7
        %v5763 = vrot.slane %v5762, 2
        %v5764 = vrot.slane %v4545, 7
        %v5765 = vrot.slane %v5764, 2
        %v5766 = vrot.slane %v4544, 7
        %v5767 = vrot.slane %v5766, 2
        %v5768 = vrot.slane %v4546, 7
        %v5769 = vrot.slane %v5768, 2
        %v5770 = vrot.slane %v4554, 7
        %v5771 = vrot.slane %v5770, 2
        %v5772 = vrot.slane %v4562, 7
        %v5773 = vrot.slane %v5772, 2
        %v5774 = vrot.slane %v4561, 7
        %v5775 = vrot.slane %v5774, 2
        %v5776 = vrot.slane %v4563, 7
        %v5777 = vrot.slane %v5776, 2
        %v5778 = vrot.slane %v4571, 7
        %v5779 = vrot.slane %v5778, 2
        %v5780 = vrot.slane %v4579, 7
        %v5781 = vrot.slane %v5780, 2
        %v5782 = vrot.slane %v4578, 7
        %v5783 = vrot.slane %v5782, 2
        %v5784 = vrot.slane %v4580, 7
        %v5785 = vrot.slane %v5784, 2
        %v5786 = vrot.slane %v4588, 7
        %v5787 = vrot.slane %v5786, 2
        %v5788 = vrot.slane %v4596, 7
        %v5789 = vrot.slane %v5788, 2
        %v5790 = vrot.slane %v4595, 7
        %v5791 = vrot.slane %v5790, 2
        %v5792 = vrot.slane %v4597, 7
        %v5793 = vrot.slane %v5792, 2
        %v5794 = vrot.slane %v4673, 7
        %v5795 = vrot.slane %v5794, 2
        %v5796 = vrot.slane %v4681, 7
        %v5797 = vrot.slane %v5796, 2
        %v5798 = vrot.slane %v4680, 7
        %v5799 = vrot.slane %v5798, 2
        %v5800 = vrot.slane %v4682, 7
        %v5801 = vrot.slane %v5800, 2
        %v5802 = vrot.slane %v4690, 7
        %v5803 = vrot.slane %v5802, 2
        %v5804 = vrot.slane %v4698, 7
        %v5805 = vrot.slane %v5804, 2
        %v5806 = vrot.slane %v4697, 7
        %v5807 = vrot.slane %v5806, 2
        %v5808 = vrot.slane %v4699, 7
        %v5809 = vrot.slane %v5808, 2
        %v5810 = vrot.slane %v4707, 7
        %v5811 = vrot.slane %v5810, 2
        %v5812 = vrot.slane %v4715, 7
        %v5813 = vrot.slane %v5812, 2
        %v5814 = vrot.slane %v4714, 7
        %v5815 = vrot.slane %v5814, 2
        %v5816 = vrot.slane %v4716, 7
        %v5817 = vrot.slane %v5816, 2
        %v5818 = vrot.slane %v4724, 7
        %v5819 = vrot.slane %v5818, 2
        %v5820 = vrot.slane %v4732, 7
        %v5821 = vrot.slane %v5820, 2
        %v5822 = vrot.slane %v4731, 7
        %v5823 = vrot.slane %v5822, 2
        %v5824 = vrot.slane %v4733, 7
        %v5825 = vrot.slane %v5824, 2
        %v6082 = vmax.f32 %v2633, %v5315
        %v6083 = vmax.f32 %v2641, %v5317
        %v6084 = vmax.f32 %v2640, %v5319
        %v6085 = vmax.f32 %v2642, %v5321
        %v6086 = vmax.f32 %v2650, %v5323
        %v6087 = vmax.f32 %v2658, %v5325
        %v6088 = vmax.f32 %v2657, %v5327
        %v6089 = vmax.f32 %v2659, %v5329
        %v6090 = vmax.f32 %v2667, %v5331
        %v6091 = vmax.f32 %v2675, %v5333
        %v6092 = vmax.f32 %v2674, %v5335
        %v6093 = vmax.f32 %v2676, %v5337
        %v6094 = vmax.f32 %v2684, %v5339
        %v6095 = vmax.f32 %v2692, %v5341
        %v6096 = vmax.f32 %v2691, %v5343
        %v6097 = vmax.f32 %v2693, %v5345
        %v6098 = vmax.f32 %v2769, %v5347
        %v6099 = vmax.f32 %v2777, %v5349
        %v6100 = vmax.f32 %v2776, %v5351
        %v6101 = vmax.f32 %v2778, %v5353
        %v6102 = vmax.f32 %v2786, %v5355
        %v6103 = vmax.f32 %v2794, %v5357
        %v6104 = vmax.f32 %v2793, %v5359
        %v6105 = vmax.f32 %v2795, %v5361
        %v6106 = vmax.f32 %v2803, %v5363
        %v6107 = vmax.f32 %v2811, %v5365
        %v6108 = vmax.f32 %v2810, %v5367
        %v6109 = vmax.f32 %v2812, %v5369
        %v6110 = vmax.f32 %v2820, %v5371
        %v6111 = vmax.f32 %v2828, %v5373
        %v6112 = vmax.f32 %v2827, %v5375
        %v6113 = vmax.f32 %v2829, %v5377
        %v6114 = vmax.f32 %v2905, %v5379
        %v6115 = vmax.f32 %v2913, %v5381
        %v6116 = vmax.f32 %v2912, %v5383
        %v6117 = vmax.f32 %v2914, %v5385
        %v6118 = vmax.f32 %v2922, %v5387
        %v6119 = vmax.f32 %v2930, %v5389
        %v6120 = vmax.f32 %v2929, %v5391
        %v6121 = vmax.f32 %v2931, %v5393
        %v6122 = vmax.f32 %v2939, %v5395
        %v6123 = vmax.f32 %v2947, %v5397
        %v6124 = vmax.f32 %v2946, %v5399
        %v6125 = vmax.f32 %v2948, %v5401
        %v6126 = vmax.f32 %v2956, %v5403
        %v6127 = vmax.f32 %v2964, %v5405
        %v6128 = vmax.f32 %v2963, %v5407
        %v6129 = vmax.f32 %v2965, %v5409
        %v6130 = vmax.f32 %v3041, %v5411
        %v6131 = vmax.f32 %v3049, %v5413
        %v6132 = vmax.f32 %v3048, %v5415
        %v6133 = vmax.f32 %v3050, %v5417
        %v6134 = vmax.f32 %v3058, %v5419
        %v6135 = vmax.f32 %v3066, %v5421
        %v6136 = vmax.f32 %v3065, %v5423
        %v6137 = vmax.f32 %v3067, %v5425
        %v6138 = vmax.f32 %v3075, %v5427
        %v6139 = vmax.f32 %v3083, %v5429
        %v6140 = vmax.f32 %v3082, %v5431
        %v6141 = vmax.f32 %v3084, %v5433
        %v6142 = vmax.f32 %v3092, %v5435
        %v6143 = vmax.f32 %v3100, %v5437
        %v6144 = vmax.f32 %v3099, %v5439
        %v6145 = vmax.f32 %v3101, %v5441
        %v6146 = vmax.f32 %v3177, %v5443
        %v6147 = vmax.f32 %v3185, %v5445
        %v6148 = vmax.f32 %v3184, %v5447
        %v6149 = vmax.f32 %v3186, %v5449
        %v6150 = vmax.f32 %v3194, %v5451
        %v6151 = vmax.f32 %v3202, %v5453
        %v6152 = vmax.f32 %v3201, %v5455
        %v6153 = vmax.f32 %v3203, %v5457
        %v6154 = vmax.f32 %v3211, %v5459
        %v6155 = vmax.f32 %v3219, %v5461
        %v6156 = vmax.f32 %v3218, %v5463
        %v6157 = vmax.f32 %v3220, %v5465
        %v6158 = vmax.f32 %v3228, %v5467
        %v6159 = vmax.f32 %v3236, %v5469
        %v6160 = vmax.f32 %v3235, %v5471
        %v6161 = vmax.f32 %v3237, %v5473
        %v6162 = vmax.f32 %v3313, %v5475
        %v6163 = vmax.f32 %v3321, %v5477
        %v6164 = vmax.f32 %v3320, %v5479
        %v6165 = vmax.f32 %v3322, %v5481
        %v6166 = vmax.f32 %v3330, %v5483
        %v6167 = vmax.f32 %v3338, %v5485
        %v6168 = vmax.f32 %v3337, %v5487
        %v6169 = vmax.f32 %v3339, %v5489
        %v6170 = vmax.f32 %v3347, %v5491
        %v6171 = vmax.f32 %v3355, %v5493
        %v6172 = vmax.f32 %v3354, %v5495
        %v6173 = vmax.f32 %v3356, %v5497
        %v6174 = vmax.f32 %v3364, %v5499
        %v6175 = vmax.f32 %v3372, %v5501
        %v6176 = vmax.f32 %v3371, %v5503
        %v6177 = vmax.f32 %v3373, %v5505
        %v6178 = vmax.f32 %v3449, %v5507
        %v6179 = vmax.f32 %v3457, %v5509
        %v6180 = vmax.f32 %v3456, %v5511
        %v6181 = vmax.f32 %v3458, %v5513
        %v6182 = vmax.f32 %v3466, %v5515
        %v6183 = vmax.f32 %v3474, %v5517
        %v6184 = vmax.f32 %v3473, %v5519
        %v6185 = vmax.f32 %v3475, %v5521
        %v6186 = vmax.f32 %v3483, %v5523
        %v6187 = vmax.f32 %v3491, %v5525
        %v6188 = vmax.f32 %v3490, %v5527
        %v6189 = vmax.f32 %v3492, %v5529
        %v6190 = vmax.f32 %v3500, %v5531
        %v6191 = vmax.f32 %v3508, %v5533
        %v6192 = vmax.f32 %v3507, %v5535
        %v6193 = vmax.f32 %v3509, %v5537
        %v6194 = vmax.f32 %v3585, %v5539
        %v6195 = vmax.f32 %v3593, %v5541
        %v6196 = vmax.f32 %v3592, %v5543
        %v6197 = vmax.f32 %v3594, %v5545
        %v6198 = vmax.f32 %v3602, %v5547
        %v6199 = vmax.f32 %v3610, %v5549
        %v6200 = vmax.f32 %v3609, %v5551
        %v6201 = vmax.f32 %v3611, %v5553
        %v6202 = vmax.f32 %v3619, %v5555
        %v6203 = vmax.f32 %v3627, %v5557
        %v6204 = vmax.f32 %v3626, %v5559
        %v6205 = vmax.f32 %v3628, %v5561
        %v6206 = vmax.f32 %v3636, %v5563
        %v6207 = vmax.f32 %v3644, %v5565
        %v6208 = vmax.f32 %v3643, %v5567
        %v6209 = vmax.f32 %v3645, %v5569
        %v6210 = vmax.f32 %v3721, %v5571
        %v6211 = vmax.f32 %v3729, %v5573
        %v6212 = vmax.f32 %v3728, %v5575
        %v6213 = vmax.f32 %v3730, %v5577
        %v6214 = vmax.f32 %v3738, %v5579
        %v6215 = vmax.f32 %v3746, %v5581
        %v6216 = vmax.f32 %v3745, %v5583
        %v6217 = vmax.f32 %v3747, %v5585
        %v6218 = vmax.f32 %v3755, %v5587
        %v6219 = vmax.f32 %v3763, %v5589
        %v6220 = vmax.f32 %v3762, %v5591
        %v6221 = vmax.f32 %v3764, %v5593
        %v6222 = vmax.f32 %v3772, %v5595
        %v6223 = vmax.f32 %v3780, %v5597
        %v6224 = vmax.f32 %v3779, %v5599
        %v6225 = vmax.f32 %v3781, %v5601
        %v6226 = vmax.f32 %v3857, %v5603
        %v6227 = vmax.f32 %v3865, %v5605
        %v6228 = vmax.f32 %v3864, %v5607
        %v6229 = vmax.f32 %v3866, %v5609
        %v6230 = vmax.f32 %v3874, %v5611
        %v6231 = vmax.f32 %v3882, %v5613
        %v6232 = vmax.f32 %v3881, %v5615
        %v6233 = vmax.f32 %v3883, %v5617
        %v6234 = vmax.f32 %v3891, %v5619
        %v6235 = vmax.f32 %v3899, %v5621
        %v6236 = vmax.f32 %v3898, %v5623
        %v6237 = vmax.f32 %v3900, %v5625
        %v6238 = vmax.f32 %v3908, %v5627
        %v6239 = vmax.f32 %v3916, %v5629
        %v6240 = vmax.f32 %v3915, %v5631
        %v6241 = vmax.f32 %v3917, %v5633
        %v6242 = vmax.f32 %v3993, %v5635
        %v6243 = vmax.f32 %v4001, %v5637
        %v6244 = vmax.f32 %v4000, %v5639
        %v6245 = vmax.f32 %v4002, %v5641
        %v6246 = vmax.f32 %v4010, %v5643
        %v6247 = vmax.f32 %v4018, %v5645
        %v6248 = vmax.f32 %v4017, %v5647
        %v6249 = vmax.f32 %v4019, %v5649
        %v6250 = vmax.f32 %v4027, %v5651
        %v6251 = vmax.f32 %v4035, %v5653
        %v6252 = vmax.f32 %v4034, %v5655
        %v6253 = vmax.f32 %v4036, %v5657
        %v6254 = vmax.f32 %v4044, %v5659
        %v6255 = vmax.f32 %v4052, %v5661
        %v6256 = vmax.f32 %v4051, %v5663
        %v6257 = vmax.f32 %v4053, %v5665
        %v6258 = vmax.f32 %v4129, %v5667
        %v6259 = vmax.f32 %v4137, %v5669
        %v6260 = vmax.f32 %v4136, %v5671
        %v6261 = vmax.f32 %v4138, %v5673
        %v6262 = vmax.f32 %v4146, %v5675
        %v6263 = vmax.f32 %v4154, %v5677
        %v6264 = vmax.f32 %v4153, %v5679
        %v6265 = vmax.f32 %v4155, %v5681
        %v6266 = vmax.f32 %v4163, %v5683
        %v6267 = vmax.f32 %v4171, %v5685
        %v6268 = vmax.f32 %v4170, %v5687
        %v6269 = vmax.f32 %v4172, %v5689
        %v6270 = vmax.f32 %v4180, %v5691
        %v6271 = vmax.f32 %v4188, %v5693
        %v6272 = vmax.f32 %v4187, %v5695
        %v6273 = vmax.f32 %v4189, %v5697
        %v6274 = vmax.f32 %v4265, %v5699
        %v6275 = vmax.f32 %v4273, %v5701
        %v6276 = vmax.f32 %v4272, %v5703
        %v6277 = vmax.f32 %v4274, %v5705
        %v6278 = vmax.f32 %v4282, %v5707
        %v6279 = vmax.f32 %v4290, %v5709
        %v6280 = vmax.f32 %v4289, %v5711
        %v6281 = vmax.f32 %v4291, %v5713
        %v6282 = vmax.f32 %v4299, %v5715
        %v6283 = vmax.f32 %v4307, %v5717
        %v6284 = vmax.f32 %v4306, %v5719
        %v6285 = vmax.f32 %v4308, %v5721
        %v6286 = vmax.f32 %v4316, %v5723
        %v6287 = vmax.f32 %v4324, %v5725
        %v6288 = vmax.f32 %v4323, %v5727
        %v6289 = vmax.f32 %v4325, %v5729
        %v6290 = vmax.f32 %v4401, %v5731
        %v6291 = vmax.f32 %v4409, %v5733
        %v6292 = vmax.f32 %v4408, %v5735
        %v6293 = vmax.f32 %v4410, %v5737
        %v6294 = vmax.f32 %v4418, %v5739
        %v6295 = vmax.f32 %v4426, %v5741
        %v6296 = vmax.f32 %v4425, %v5743
        %v6297 = vmax.f32 %v4427, %v5745
        %v6298 = vmax.f32 %v4435, %v5747
        %v6299 = vmax.f32 %v4443, %v5749
        %v6300 = vmax.f32 %v4442, %v5751
        %v6301 = vmax.f32 %v4444, %v5753
        %v6302 = vmax.f32 %v4452, %v5755
        %v6303 = vmax.f32 %v4460, %v5757
        %v6304 = vmax.f32 %v4459, %v5759
        %v6305 = vmax.f32 %v4461, %v5761
        %v6306 = vmax.f32 %v4537, %v5763
        %v6307 = vmax.f32 %v4545, %v5765
        %v6308 = vmax.f32 %v4544, %v5767
        %v6309 = vmax.f32 %v4546, %v5769
        %v6310 = vmax.f32 %v4554, %v5771
        %v6311 = vmax.f32 %v4562, %v5773
        %v6312 = vmax.f32 %v4561, %v5775
        %v6313 = vmax.f32 %v4563, %v5777
        %v6314 = vmax.f32 %v4571, %v5779
        %v6315 = vmax.f32 %v4579, %v5781
        %v6316 = vmax.f32 %v4578, %v5783
        %v6317 = vmax.f32 %v4580, %v5785
        %v6318 = vmax.f32 %v4588, %v5787
        %v6319 = vmax.f32 %v4596, %v5789
        %v6320 = vmax.f32 %v4595, %v5791
        %v6321 = vmax.f32 %v4597, %v5793
        %v6322 = vmax.f32 %v4673, %v5795
        %v6323 = vmax.f32 %v4681, %v5797
        %v6324 = vmax.f32 %v4680, %v5799
        %v6325 = vmax.f32 %v4682, %v5801
        %v6326 = vmax.f32 %v4690, %v5803
        %v6327 = vmax.f32 %v4698, %v5805
        %v6328 = vmax.f32 %v4697, %v5807
        %v6329 = vmax.f32 %v4699, %v5809
        %v6330 = vmax.f32 %v4707, %v5811
        %v6331 = vmax.f32 %v4715, %v5813
        %v6332 = vmax.f32 %v4714, %v5815
        %v6333 = vmax.f32 %v4716, %v5817
        %v6334 = vmax.f32 %v4724, %v5819
        %v6335 = vmax.f32 %v4732, %v5821
        %v6336 = vmax.f32 %v4731, %v5823
        %v6337 = vmax.f32 %v4733, %v5825
        %v6338 = vrot.slane %v2701, 7
        %v6339 = vrot.slane %v6338, 2
        %v6340 = vrot.slane %v2709, 7
        %v6341 = vrot.slane %v6340, 2
        %v6342 = vrot.slane %v2708, 7
        %v6343 = vrot.slane %v6342, 2
        %v6344 = vrot.slane %v2710, 7
        %v6345 = vrot.slane %v6344, 2
        %v6346 = vrot.slane %v2718, 7
        %v6347 = vrot.slane %v6346, 2
        %v6348 = vrot.slane %v2726, 7
        %v6349 = vrot.slane %v6348, 2
        %v6350 = vrot.slane %v2725, 7
        %v6351 = vrot.slane %v6350, 2
        %v6352 = vrot.slane %v2727, 7
        %v6353 = vrot.slane %v6352, 2
        %v6354 = vrot.slane %v2735, 7
        %v6355 = vrot.slane %v6354, 2
        %v6356 = vrot.slane %v2743, 7
        %v6357 = vrot.slane %v6356, 2
        %v6358 = vrot.slane %v2742, 7
        %v6359 = vrot.slane %v6358, 2
        %v6360 = vrot.slane %v2744, 7
        %v6361 = vrot.slane %v6360, 2
        %v6362 = vrot.slane %v2752, 7
        %v6363 = vrot.slane %v6362, 2
        %v6364 = vrot.slane %v2760, 7
        %v6365 = vrot.slane %v6364, 2
        %v6366 = vrot.slane %v2759, 7
        %v6367 = vrot.slane %v6366, 2
        %v6368 = vrot.slane %v2761, 7
        %v6369 = vrot.slane %v6368, 2
        %v6370 = vrot.slane %v2837, 7
        %v6371 = vrot.slane %v6370, 2
        %v6372 = vrot.slane %v2845, 7
        %v6373 = vrot.slane %v6372, 2
        %v6374 = vrot.slane %v2844, 7
        %v6375 = vrot.slane %v6374, 2
        %v6376 = vrot.slane %v2846, 7
        %v6377 = vrot.slane %v6376, 2
        %v6378 = vrot.slane %v2854, 7
        %v6379 = vrot.slane %v6378, 2
        %v6380 = vrot.slane %v2862, 7
        %v6381 = vrot.slane %v6380, 2
        %v6382 = vrot.slane %v2861, 7
        %v6383 = vrot.slane %v6382, 2
        %v6384 = vrot.slane %v2863, 7
        %v6385 = vrot.slane %v6384, 2
        %v6386 = vrot.slane %v2871, 7
        %v6387 = vrot.slane %v6386, 2
        %v6388 = vrot.slane %v2879, 7
        %v6389 = vrot.slane %v6388, 2
        %v6390 = vrot.slane %v2878, 7
        %v6391 = vrot.slane %v6390, 2
        %v6392 = vrot.slane %v2880, 7
        %v6393 = vrot.slane %v6392, 2
        %v6394 = vrot.slane %v2888, 7
        %v6395 = vrot.slane %v6394, 2
        %v6396 = vrot.slane %v2896, 7
        %v6397 = vrot.slane %v6396, 2
        %v6398 = vrot.slane %v2895, 7
        %v6399 = vrot.slane %v6398, 2
        %v6400 = vrot.slane %v2897, 7
        %v6401 = vrot.slane %v6400, 2
        %v6402 = vrot.slane %v2973, 7
        %v6403 = vrot.slane %v6402, 2
        %v6404 = vrot.slane %v2981, 7
        %v6405 = vrot.slane %v6404, 2
        %v6406 = vrot.slane %v2980, 7
        %v6407 = vrot.slane %v6406, 2
        %v6408 = vrot.slane %v2982, 7
        %v6409 = vrot.slane %v6408, 2
        %v6410 = vrot.slane %v2990, 7
        %v6411 = vrot.slane %v6410, 2
        %v6412 = vrot.slane %v2998, 7
        %v6413 = vrot.slane %v6412, 2
        %v6414 = vrot.slane %v2997, 7
        %v6415 = vrot.slane %v6414, 2
        %v6416 = vrot.slane %v2999, 7
        %v6417 = vrot.slane %v6416, 2
        %v6418 = vrot.slane %v3007, 7
        %v6419 = vrot.slane %v6418, 2
        %v6420 = vrot.slane %v3015, 7
        %v6421 = vrot.slane %v6420, 2
        %v6422 = vrot.slane %v3014, 7
        %v6423 = vrot.slane %v6422, 2
        %v6424 = vrot.slane %v3016, 7
        %v6425 = vrot.slane %v6424, 2
        %v6426 = vrot.slane %v3024, 7
        %v6427 = vrot.slane %v6426, 2
        %v6428 = vrot.slane %v3032, 7
        %v6429 = vrot.slane %v6428, 2
        %v6430 = vrot.slane %v3031, 7
        %v6431 = vrot.slane %v6430, 2
        %v6432 = vrot.slane %v3033, 7
        %v6433 = vrot.slane %v6432, 2
        %v6434 = vrot.slane %v3109, 7
        %v6435 = vrot.slane %v6434, 2
        %v6436 = vrot.slane %v3117, 7
        %v6437 = vrot.slane %v6436, 2
        %v6438 = vrot.slane %v3116, 7
        %v6439 = vrot.slane %v6438, 2
        %v6440 = vrot.slane %v3118, 7
        %v6441 = vrot.slane %v6440, 2
        %v6442 = vrot.slane %v3126, 7
        %v6443 = vrot.slane %v6442, 2
        %v6444 = vrot.slane %v3134, 7
        %v6445 = vrot.slane %v6444, 2
        %v6446 = vrot.slane %v3133, 7
        %v6447 = vrot.slane %v6446, 2
        %v6448 = vrot.slane %v3135, 7
        %v6449 = vrot.slane %v6448, 2
        %v6450 = vrot.slane %v3143, 7
        %v6451 = vrot.slane %v6450, 2
        %v6452 = vrot.slane %v3151, 7
        %v6453 = vrot.slane %v6452, 2
        %v6454 = vrot.slane %v3150, 7
        %v6455 = vrot.slane %v6454, 2
        %v6456 = vrot.slane %v3152, 7
        %v6457 = vrot.slane %v6456, 2
        %v6458 = vrot.slane %v3160, 7
        %v6459 = vrot.slane %v6458, 2
        %v6460 = vrot.slane %v3168, 7
        %v6461 = vrot.slane %v6460, 2
        %v6462 = vrot.slane %v3167, 7
        %v6463 = vrot.slane %v6462, 2
        %v6464 = vrot.slane %v3169, 7
        %v6465 = vrot.slane %v6464, 2
        %v6466 = vrot.slane %v3245, 7
        %v6467 = vrot.slane %v6466, 2
        %v6468 = vrot.slane %v3253, 7
        %v6469 = vrot.slane %v6468, 2
        %v6470 = vrot.slane %v3252, 7
        %v6471 = vrot.slane %v6470, 2
        %v6472 = vrot.slane %v3254, 7
        %v6473 = vrot.slane %v6472, 2
        %v6474 = vrot.slane %v3262, 7
        %v6475 = vrot.slane %v6474, 2
        %v6476 = vrot.slane %v3270, 7
        %v6477 = vrot.slane %v6476, 2
        %v6478 = vrot.slane %v3269, 7
        %v6479 = vrot.slane %v6478, 2
        %v6480 = vrot.slane %v3271, 7
        %v6481 = vrot.slane %v6480, 2
        %v6482 = vrot.slane %v3279, 7
        %v6483 = vrot.slane %v6482, 2
        %v6484 = vrot.slane %v3287, 7
        %v6485 = vrot.slane %v6484, 2
        %v6486 = vrot.slane %v3286, 7
        %v6487 = vrot.slane %v6486, 2
        %v6488 = vrot.slane %v3288, 7
        %v6489 = vrot.slane %v6488, 2
        %v6490 = vrot.slane %v3296, 7
        %v6491 = vrot.slane %v6490, 2
        %v6492 = vrot.slane %v3304, 7
        %v6493 = vrot.slane %v6492, 2
        %v6494 = vrot.slane %v3303, 7
        %v6495 = vrot.slane %v6494, 2
        %v6496 = vrot.slane %v3305, 7
        %v6497 = vrot.slane %v6496, 2
        %v6498 = vrot.slane %v3381, 7
        %v6499 = vrot.slane %v6498, 2
        %v6500 = vrot.slane %v3389, 7
        %v6501 = vrot.slane %v6500, 2
        %v6502 = vrot.slane %v3388, 7
        %v6503 = vrot.slane %v6502, 2
        %v6504 = vrot.slane %v3390, 7
        %v6505 = vrot.slane %v6504, 2
        %v6506 = vrot.slane %v3398, 7
        %v6507 = vrot.slane %v6506, 2
        %v6508 = vrot.slane %v3406, 7
        %v6509 = vrot.slane %v6508, 2
        %v6510 = vrot.slane %v3405, 7
        %v6511 = vrot.slane %v6510, 2
        %v6512 = vrot.slane %v3407, 7
        %v6513 = vrot.slane %v6512, 2
        %v6514 = vrot.slane %v3415, 7
        %v6515 = vrot.slane %v6514, 2
        %v6516 = vrot.slane %v3423, 7
        %v6517 = vrot.slane %v6516, 2
        %v6518 = vrot.slane %v3422, 7
        %v6519 = vrot.slane %v6518, 2
        %v6520 = vrot.slane %v3424, 7
        %v6521 = vrot.slane %v6520, 2
        %v6522 = vrot.slane %v3432, 7
        %v6523 = vrot.slane %v6522, 2
        %v6524 = vrot.slane %v3440, 7
        %v6525 = vrot.slane %v6524, 2
        %v6526 = vrot.slane %v3439, 7
        %v6527 = vrot.slane %v6526, 2
        %v6528 = vrot.slane %v3441, 7
        %v6529 = vrot.slane %v6528, 2
        %v6530 = vrot.slane %v3517, 7
        %v6531 = vrot.slane %v6530, 2
        %v6532 = vrot.slane %v3525, 7
        %v6533 = vrot.slane %v6532, 2
        %v6534 = vrot.slane %v3524, 7
        %v6535 = vrot.slane %v6534, 2
        %v6536 = vrot.slane %v3526, 7
        %v6537 = vrot.slane %v6536, 2
        %v6538 = vrot.slane %v3534, 7
        %v6539 = vrot.slane %v6538, 2
        %v6540 = vrot.slane %v3542, 7
        %v6541 = vrot.slane %v6540, 2
        %v6542 = vrot.slane %v3541, 7
        %v6543 = vrot.slane %v6542, 2
        %v6544 = vrot.slane %v3543, 7
        %v6545 = vrot.slane %v6544, 2
        %v6546 = vrot.slane %v3551, 7
        %v6547 = vrot.slane %v6546, 2
        %v6548 = vrot.slane %v3559, 7
        %v6549 = vrot.slane %v6548, 2
        %v6550 = vrot.slane %v3558, 7
        %v6551 = vrot.slane %v6550, 2
        %v6552 = vrot.slane %v3560, 7
        %v6553 = vrot.slane %v6552, 2
        %v6554 = vrot.slane %v3568, 7
        %v6555 = vrot.slane %v6554, 2
        %v6556 = vrot.slane %v3576, 7
        %v6557 = vrot.slane %v6556, 2
        %v6558 = vrot.slane %v3575, 7
        %v6559 = vrot.slane %v6558, 2
        %v6560 = vrot.slane %v3577, 7
        %v6561 = vrot.slane %v6560, 2
        %v6562 = vrot.slane %v3653, 7
        %v6563 = vrot.slane %v6562, 2
        %v6564 = vrot.slane %v3661, 7
        %v6565 = vrot.slane %v6564, 2
        %v6566 = vrot.slane %v3660, 7
        %v6567 = vrot.slane %v6566, 2
        %v6568 = vrot.slane %v3662, 7
        %v6569 = vrot.slane %v6568, 2
        %v6570 = vrot.slane %v3670, 7
        %v6571 = vrot.slane %v6570, 2
        %v6572 = vrot.slane %v3678, 7
        %v6573 = vrot.slane %v6572, 2
        %v6574 = vrot.slane %v3677, 7
        %v6575 = vrot.slane %v6574, 2
        %v6576 = vrot.slane %v3679, 7
        %v6577 = vrot.slane %v6576, 2
        %v6578 = vrot.slane %v3687, 7
        %v6579 = vrot.slane %v6578, 2
        %v6580 = vrot.slane %v3695, 7
        %v6581 = vrot.slane %v6580, 2
        %v6582 = vrot.slane %v3694, 7
        %v6583 = vrot.slane %v6582, 2
        %v6584 = vrot.slane %v3696, 7
        %v6585 = vrot.slane %v6584, 2
        %v6586 = vrot.slane %v3704, 7
        %v6587 = vrot.slane %v6586, 2
        %v6588 = vrot.slane %v3712, 7
        %v6589 = vrot.slane %v6588, 2
        %v6590 = vrot.slane %v3711, 7
        %v6591 = vrot.slane %v6590, 2
        %v6592 = vrot.slane %v3713, 7
        %v6593 = vrot.slane %v6592, 2
        %v6594 = vrot.slane %v3789, 7
        %v6595 = vrot.slane %v6594, 2
        %v6596 = vrot.slane %v3797, 7
        %v6597 = vrot.slane %v6596, 2
        %v6598 = vrot.slane %v3796, 7
        %v6599 = vrot.slane %v6598, 2
        %v6600 = vrot.slane %v3798, 7
        %v6601 = vrot.slane %v6600, 2
        %v6602 = vrot.slane %v3806, 7
        %v6603 = vrot.slane %v6602, 2
        %v6604 = vrot.slane %v3814, 7
        %v6605 = vrot.slane %v6604, 2
        %v6606 = vrot.slane %v3813, 7
        %v6607 = vrot.slane %v6606, 2
        %v6608 = vrot.slane %v3815, 7
        %v6609 = vrot.slane %v6608, 2
        %v6610 = vrot.slane %v3823, 7
        %v6611 = vrot.slane %v6610, 2
        %v6612 = vrot.slane %v3831, 7
        %v6613 = vrot.slane %v6612, 2
        %v6614 = vrot.slane %v3830, 7
        %v6615 = vrot.slane %v6614, 2
        %v6616 = vrot.slane %v3832, 7
        %v6617 = vrot.slane %v6616, 2
        %v6618 = vrot.slane %v3840, 7
        %v6619 = vrot.slane %v6618, 2
        %v6620 = vrot.slane %v3848, 7
        %v6621 = vrot.slane %v6620, 2
        %v6622 = vrot.slane %v3847, 7
        %v6623 = vrot.slane %v6622, 2
        %v6624 = vrot.slane %v3849, 7
        %v6625 = vrot.slane %v6624, 2
        %v6626 = vrot.slane %v3925, 7
        %v6627 = vrot.slane %v6626, 2
        %v6628 = vrot.slane %v3933, 7
        %v6629 = vrot.slane %v6628, 2
        %v6630 = vrot.slane %v3932, 7
        %v6631 = vrot.slane %v6630, 2
        %v6632 = vrot.slane %v3934, 7
        %v6633 = vrot.slane %v6632, 2
        %v6634 = vrot.slane %v3942, 7
        %v6635 = vrot.slane %v6634, 2
        %v6636 = vrot.slane %v3950, 7
        %v6637 = vrot.slane %v6636, 2
        %v6638 = vrot.slane %v3949, 7
        %v6639 = vrot.slane %v6638, 2
        %v6640 = vrot.slane %v3951, 7
        %v6641 = vrot.slane %v6640, 2
        %v6642 = vrot.slane %v3959, 7
        %v6643 = vrot.slane %v6642, 2
        %v6644 = vrot.slane %v3967, 7
        %v6645 = vrot.slane %v6644, 2
        %v6646 = vrot.slane %v3966, 7
        %v6647 = vrot.slane %v6646, 2
        %v6648 = vrot.slane %v3968, 7
        %v6649 = vrot.slane %v6648, 2
        %v6650 = vrot.slane %v3976, 7
        %v6651 = vrot.slane %v6650, 2
        %v6652 = vrot.slane %v3984, 7
        %v6653 = vrot.slane %v6652, 2
        %v6654 = vrot.slane %v3983, 7
        %v6655 = vrot.slane %v6654, 2
        %v6656 = vrot.slane %v3985, 7
        %v6657 = vrot.slane %v6656, 2
        %v6658 = vrot.slane %v4061, 7
        %v6659 = vrot.slane %v6658, 2
        %v6660 = vrot.slane %v4069, 7
        %v6661 = vrot.slane %v6660, 2
        %v6662 = vrot.slane %v4068, 7
        %v6663 = vrot.slane %v6662, 2
        %v6664 = vrot.slane %v4070, 7
        %v6665 = vrot.slane %v6664, 2
        %v6666 = vrot.slane %v4078, 7
        %v6667 = vrot.slane %v6666, 2
        %v6668 = vrot.slane %v4086, 7
        %v6669 = vrot.slane %v6668, 2
        %v6670 = vrot.slane %v4085, 7
        %v6671 = vrot.slane %v6670, 2
        %v6672 = vrot.slane %v4087, 7
        %v6673 = vrot.slane %v6672, 2
        %v6674 = vrot.slane %v4095, 7
        %v6675 = vrot.slane %v6674, 2
        %v6676 = vrot.slane %v4103, 7
        %v6677 = vrot.slane %v6676, 2
        %v6678 = vrot.slane %v4102, 7
        %v6679 = vrot.slane %v6678, 2
        %v6680 = vrot.slane %v4104, 7
        %v6681 = vrot.slane %v6680, 2
        %v6682 = vrot.slane %v4112, 7
        %v6683 = vrot.slane %v6682, 2
        %v6684 = vrot.slane %v4120, 7
        %v6685 = vrot.slane %v6684, 2
        %v6686 = vrot.slane %v4119, 7
        %v6687 = vrot.slane %v6686, 2
        %v6688 = vrot.slane %v4121, 7
        %v6689 = vrot.slane %v6688, 2
        %v6690 = vrot.slane %v4197, 7
        %v6691 = vrot.slane %v6690, 2
        %v6692 = vrot.slane %v4205, 7
        %v6693 = vrot.slane %v6692, 2
        %v6694 = vrot.slane %v4204, 7
        %v6695 = vrot.slane %v6694, 2
        %v6696 = vrot.slane %v4206, 7
        %v6697 = vrot.slane %v6696, 2
        %v6698 = vrot.slane %v4214, 7
        %v6699 = vrot.slane %v6698, 2
        %v6700 = vrot.slane %v4222, 7
        %v6701 = vrot.slane %v6700, 2
        %v6702 = vrot.slane %v4221, 7
        %v6703 = vrot.slane %v6702, 2
        %v6704 = vrot.slane %v4223, 7
        %v6705 = vrot.slane %v6704, 2
        %v6706 = vrot.slane %v4231, 7
        %v6707 = vrot.slane %v6706, 2
        %v6708 = vrot.slane %v4239, 7
        %v6709 = vrot.slane %v6708, 2
        %v6710 = vrot.slane %v4238, 7
        %v6711 = vrot.slane %v6710, 2
        %v6712 = vrot.slane %v4240, 7
        %v6713 = vrot.slane %v6712, 2
        %v6714 = vrot.slane %v4248, 7
        %v6715 = vrot.slane %v6714, 2
        %v6716 = vrot.slane %v4256, 7
        %v6717 = vrot.slane %v6716, 2
        %v6718 = vrot.slane %v4255, 7
        %v6719 = vrot.slane %v6718, 2
        %v6720 = vrot.slane %v4257, 7
        %v6721 = vrot.slane %v6720, 2
        %v6722 = vrot.slane %v4333, 7
        %v6723 = vrot.slane %v6722, 2
        %v6724 = vrot.slane %v4341, 7
        %v6725 = vrot.slane %v6724, 2
        %v6726 = vrot.slane %v4340, 7
        %v6727 = vrot.slane %v6726, 2
        %v6728 = vrot.slane %v4342, 7
        %v6729 = vrot.slane %v6728, 2
        %v6730 = vrot.slane %v4350, 7
        %v6731 = vrot.slane %v6730, 2
        %v6732 = vrot.slane %v4358, 7
        %v6733 = vrot.slane %v6732, 2
        %v6734 = vrot.slane %v4357, 7
        %v6735 = vrot.slane %v6734, 2
        %v6736 = vrot.slane %v4359, 7
        %v6737 = vrot.slane %v6736, 2
        %v6738 = vrot.slane %v4367, 7
        %v6739 = vrot.slane %v6738, 2
        %v6740 = vrot.slane %v4375, 7
        %v6741 = vrot.slane %v6740, 2
        %v6742 = vrot.slane %v4374, 7
        %v6743 = vrot.slane %v6742, 2
        %v6744 = vrot.slane %v4376, 7
        %v6745 = vrot.slane %v6744, 2
        %v6746 = vrot.slane %v4384, 7
        %v6747 = vrot.slane %v6746, 2
        %v6748 = vrot.slane %v4392, 7
        %v6749 = vrot.slane %v6748, 2
        %v6750 = vrot.slane %v4391, 7
        %v6751 = vrot.slane %v6750, 2
        %v6752 = vrot.slane %v4393, 7
        %v6753 = vrot.slane %v6752, 2
        %v6754 = vrot.slane %v4469, 7
        %v6755 = vrot.slane %v6754, 2
        %v6756 = vrot.slane %v4477, 7
        %v6757 = vrot.slane %v6756, 2
        %v6758 = vrot.slane %v4476, 7
        %v6759 = vrot.slane %v6758, 2
        %v6760 = vrot.slane %v4478, 7
        %v6761 = vrot.slane %v6760, 2
        %v6762 = vrot.slane %v4486, 7
        %v6763 = vrot.slane %v6762, 2
        %v6764 = vrot.slane %v4494, 7
        %v6765 = vrot.slane %v6764, 2
        %v6766 = vrot.slane %v4493, 7
        %v6767 = vrot.slane %v6766, 2
        %v6768 = vrot.slane %v4495, 7
        %v6769 = vrot.slane %v6768, 2
        %v6770 = vrot.slane %v4503, 7
        %v6771 = vrot.slane %v6770, 2
        %v6772 = vrot.slane %v4511, 7
        %v6773 = vrot.slane %v6772, 2
        %v6774 = vrot.slane %v4510, 7
        %v6775 = vrot.slane %v6774, 2
        %v6776 = vrot.slane %v4512, 7
        %v6777 = vrot.slane %v6776, 2
        %v6778 = vrot.slane %v4520, 7
        %v6779 = vrot.slane %v6778, 2
        %v6780 = vrot.slane %v4528, 7
        %v6781 = vrot.slane %v6780, 2
        %v6782 = vrot.slane %v4527, 7
        %v6783 = vrot.slane %v6782, 2
        %v6784 = vrot.slane %v4529, 7
        %v6785 = vrot.slane %v6784, 2
        %v6786 = vrot.slane %v4605, 7
        %v6787 = vrot.slane %v6786, 2
        %v6788 = vrot.slane %v4613, 7
        %v6789 = vrot.slane %v6788, 2
        %v6790 = vrot.slane %v4612, 7
        %v6791 = vrot.slane %v6790, 2
        %v6792 = vrot.slane %v4614, 7
        %v6793 = vrot.slane %v6792, 2
        %v6794 = vrot.slane %v4622, 7
        %v6795 = vrot.slane %v6794, 2
        %v6796 = vrot.slane %v4630, 7
        %v6797 = vrot.slane %v6796, 2
        %v6798 = vrot.slane %v4629, 7
        %v6799 = vrot.slane %v6798, 2
        %v6800 = vrot.slane %v4631, 7
        %v6801 = vrot.slane %v6800, 2
        %v6802 = vrot.slane %v4639, 7
        %v6803 = vrot.slane %v6802, 2
        %v6804 = vrot.slane %v4647, 7
        %v6805 = vrot.slane %v6804, 2
        %v6806 = vrot.slane %v4646, 7
        %v6807 = vrot.slane %v6806, 2
        %v6808 = vrot.slane %v4648, 7
        %v6809 = vrot.slane %v6808, 2
        %v6810 = vrot.slane %v4656, 7
        %v6811 = vrot.slane %v6810, 2
        %v6812 = vrot.slane %v4664, 7
        %v6813 = vrot.slane %v6812, 2
        %v6814 = vrot.slane %v4663, 7
        %v6815 = vrot.slane %v6814, 2
        %v6816 = vrot.slane %v4665, 7
        %v6817 = vrot.slane %v6816, 2
        %v6818 = vrot.slane %v4741, 7
        %v6819 = vrot.slane %v6818, 2
        %v6820 = vrot.slane %v4749, 7
        %v6821 = vrot.slane %v6820, 2
        %v6822 = vrot.slane %v4748, 7
        %v6823 = vrot.slane %v6822, 2
        %v6824 = vrot.slane %v4750, 7
        %v6825 = vrot.slane %v6824, 2
        %v6826 = vrot.slane %v4758, 7
        %v6827 = vrot.slane %v6826, 2
        %v6828 = vrot.slane %v4766, 7
        %v6829 = vrot.slane %v6828, 2
        %v6830 = vrot.slane %v4765, 7
        %v6831 = vrot.slane %v6830, 2
        %v6832 = vrot.slane %v4767, 7
        %v6833 = vrot.slane %v6832, 2
        %v6834 = vrot.slane %v4775, 7
        %v6835 = vrot.slane %v6834, 2
        %v6836 = vrot.slane %v4783, 7
        %v6837 = vrot.slane %v6836, 2
        %v6838 = vrot.slane %v4782, 7
        %v6839 = vrot.slane %v6838, 2
        %v6840 = vrot.slane %v4784, 7
        %v6841 = vrot.slane %v6840, 2
        %v6842 = vrot.slane %v4792, 7
        %v6843 = vrot.slane %v6842, 2
        %v6844 = vrot.slane %v4800, 7
        %v6845 = vrot.slane %v6844, 2
        %v6846 = vrot.slane %v4799, 7
        %v6847 = vrot.slane %v6846, 2
        %v6848 = vrot.slane %v4801, 7
        %v6849 = vrot.slane %v6848, 2
        %v7106 = vmax.f32 %v2701, %v6339
        %v7107 = vmax.f32 %v2709, %v6341
        %v7108 = vmax.f32 %v2708, %v6343
        %v7109 = vmax.f32 %v2710, %v6345
        %v7110 = vmax.f32 %v2718, %v6347
        %v7111 = vmax.f32 %v2726, %v6349
        %v7112 = vmax.f32 %v2725, %v6351
        %v7113 = vmax.f32 %v2727, %v6353
        %v7114 = vmax.f32 %v2735, %v6355
        %v7115 = vmax.f32 %v2743, %v6357
        %v7116 = vmax.f32 %v2742, %v6359
        %v7117 = vmax.f32 %v2744, %v6361
        %v7118 = vmax.f32 %v2752, %v6363
        %v7119 = vmax.f32 %v2760, %v6365
        %v7120 = vmax.f32 %v2759, %v6367
        %v7121 = vmax.f32 %v2761, %v6369
        %v7122 = vmax.f32 %v2837, %v6371
        %v7123 = vmax.f32 %v2845, %v6373
        %v7124 = vmax.f32 %v2844, %v6375
        %v7125 = vmax.f32 %v2846, %v6377
        %v7126 = vmax.f32 %v2854, %v6379
        %v7127 = vmax.f32 %v2862, %v6381
        %v7128 = vmax.f32 %v2861, %v6383
        %v7129 = vmax.f32 %v2863, %v6385
        %v7130 = vmax.f32 %v2871, %v6387
        %v7131 = vmax.f32 %v2879, %v6389
        %v7132 = vmax.f32 %v2878, %v6391
        %v7133 = vmax.f32 %v2880, %v6393
        %v7134 = vmax.f32 %v2888, %v6395
        %v7135 = vmax.f32 %v2896, %v6397
        %v7136 = vmax.f32 %v2895, %v6399
        %v7137 = vmax.f32 %v2897, %v6401
        %v7138 = vmax.f32 %v2973, %v6403
        %v7139 = vmax.f32 %v2981, %v6405
        %v7140 = vmax.f32 %v2980, %v6407
        %v7141 = vmax.f32 %v2982, %v6409
        %v7142 = vmax.f32 %v2990, %v6411
        %v7143 = vmax.f32 %v2998, %v6413
        %v7144 = vmax.f32 %v2997, %v6415
        %v7145 = vmax.f32 %v2999, %v6417
        %v7146 = vmax.f32 %v3007, %v6419
        %v7147 = vmax.f32 %v3015, %v6421
        %v7148 = vmax.f32 %v3014, %v6423
        %v7149 = vmax.f32 %v3016, %v6425
        %v7150 = vmax.f32 %v3024, %v6427
        %v7151 = vmax.f32 %v3032, %v6429
        %v7152 = vmax.f32 %v3031, %v6431
        %v7153 = vmax.f32 %v3033, %v6433
        %v7154 = vmax.f32 %v3109, %v6435
        %v7155 = vmax.f32 %v3117, %v6437
        %v7156 = vmax.f32 %v3116, %v6439
        %v7157 = vmax.f32 %v3118, %v6441
        %v7158 = vmax.f32 %v3126, %v6443
        %v7159 = vmax.f32 %v3134, %v6445
        %v7160 = vmax.f32 %v3133, %v6447
        %v7161 = vmax.f32 %v3135, %v6449
        %v7162 = vmax.f32 %v3143, %v6451
        %v7163 = vmax.f32 %v3151, %v6453
        %v7164 = vmax.f32 %v3150, %v6455
        %v7165 = vmax.f32 %v3152, %v6457
        %v7166 = vmax.f32 %v3160, %v6459
        %v7167 = vmax.f32 %v3168, %v6461
        %v7168 = vmax.f32 %v3167, %v6463
        %v7169 = vmax.f32 %v3169, %v6465
        %v7170 = vmax.f32 %v3245, %v6467
        %v7171 = vmax.f32 %v3253, %v6469
        %v7172 = vmax.f32 %v3252, %v6471
        %v7173 = vmax.f32 %v3254, %v6473
        %v7174 = vmax.f32 %v3262, %v6475
        %v7175 = vmax.f32 %v3270, %v6477
        %v7176 = vmax.f32 %v3269, %v6479
        %v7177 = vmax.f32 %v3271, %v6481
        %v7178 = vmax.f32 %v3279, %v6483
        %v7179 = vmax.f32 %v3287, %v6485
        %v7180 = vmax.f32 %v3286, %v6487
        %v7181 = vmax.f32 %v3288, %v6489
        %v7182 = vmax.f32 %v3296, %v6491
        %v7183 = vmax.f32 %v3304, %v6493
        %v7184 = vmax.f32 %v3303, %v6495
        %v7185 = vmax.f32 %v3305, %v6497
        %v7186 = vmax.f32 %v3381, %v6499
        %v7187 = vmax.f32 %v3389, %v6501
        %v7188 = vmax.f32 %v3388, %v6503
        %v7189 = vmax.f32 %v3390, %v6505
        %v7190 = vmax.f32 %v3398, %v6507
        %v7191 = vmax.f32 %v3406, %v6509
        %v7192 = vmax.f32 %v3405, %v6511
        %v7193 = vmax.f32 %v3407, %v6513
        %v7194 = vmax.f32 %v3415, %v6515
        %v7195 = vmax.f32 %v3423, %v6517
        %v7196 = vmax.f32 %v3422, %v6519
        %v7197 = vmax.f32 %v3424, %v6521
        %v7198 = vmax.f32 %v3432, %v6523
        %v7199 = vmax.f32 %v3440, %v6525
        %v7200 = vmax.f32 %v3439, %v6527
        %v7201 = vmax.f32 %v3441, %v6529
        %v7202 = vmax.f32 %v3517, %v6531
        %v7203 = vmax.f32 %v3525, %v6533
        %v7204 = vmax.f32 %v3524, %v6535
        %v7205 = vmax.f32 %v3526, %v6537
        %v7206 = vmax.f32 %v3534, %v6539
        %v7207 = vmax.f32 %v3542, %v6541
        %v7208 = vmax.f32 %v3541, %v6543
        %v7209 = vmax.f32 %v3543, %v6545
        %v7210 = vmax.f32 %v3551, %v6547
        %v7211 = vmax.f32 %v3559, %v6549
        %v7212 = vmax.f32 %v3558, %v6551
        %v7213 = vmax.f32 %v3560, %v6553
        %v7214 = vmax.f32 %v3568, %v6555
        %v7215 = vmax.f32 %v3576, %v6557
        %v7216 = vmax.f32 %v3575, %v6559
        %v7217 = vmax.f32 %v3577, %v6561
        %v7218 = vmax.f32 %v3653, %v6563
        %v7219 = vmax.f32 %v3661, %v6565
        %v7220 = vmax.f32 %v3660, %v6567
        %v7221 = vmax.f32 %v3662, %v6569
        %v7222 = vmax.f32 %v3670, %v6571
        %v7223 = vmax.f32 %v3678, %v6573
        %v7224 = vmax.f32 %v3677, %v6575
        %v7225 = vmax.f32 %v3679, %v6577
        %v7226 = vmax.f32 %v3687, %v6579
        %v7227 = vmax.f32 %v3695, %v6581
        %v7228 = vmax.f32 %v3694, %v6583
        %v7229 = vmax.f32 %v3696, %v6585
        %v7230 = vmax.f32 %v3704, %v6587
        %v7231 = vmax.f32 %v3712, %v6589
        %v7232 = vmax.f32 %v3711, %v6591
        %v7233 = vmax.f32 %v3713, %v6593
        %v7234 = vmax.f32 %v3789, %v6595
        %v7235 = vmax.f32 %v3797, %v6597
        %v7236 = vmax.f32 %v3796, %v6599
        %v7237 = vmax.f32 %v3798, %v6601
        %v7238 = vmax.f32 %v3806, %v6603
        %v7239 = vmax.f32 %v3814, %v6605
        %v7240 = vmax.f32 %v3813, %v6607
        %v7241 = vmax.f32 %v3815, %v6609
        %v7242 = vmax.f32 %v3823, %v6611
        %v7243 = vmax.f32 %v3831, %v6613
        %v7244 = vmax.f32 %v3830, %v6615
        %v7245 = vmax.f32 %v3832, %v6617
        %v7246 = vmax.f32 %v3840, %v6619
        %v7247 = vmax.f32 %v3848, %v6621
        %v7248 = vmax.f32 %v3847, %v6623
        %v7249 = vmax.f32 %v3849, %v6625
        %v7250 = vmax.f32 %v3925, %v6627
        %v7251 = vmax.f32 %v3933, %v6629
        %v7252 = vmax.f32 %v3932, %v6631
        %v7253 = vmax.f32 %v3934, %v6633
        %v7254 = vmax.f32 %v3942, %v6635
        %v7255 = vmax.f32 %v3950, %v6637
        %v7256 = vmax.f32 %v3949, %v6639
        %v7257 = vmax.f32 %v3951, %v6641
        %v7258 = vmax.f32 %v3959, %v6643
        %v7259 = vmax.f32 %v3967, %v6645
        %v7260 = vmax.f32 %v3966, %v6647
        %v7261 = vmax.f32 %v3968, %v6649
        %v7262 = vmax.f32 %v3976, %v6651
        %v7263 = vmax.f32 %v3984, %v6653
        %v7264 = vmax.f32 %v3983, %v6655
        %v7265 = vmax.f32 %v3985, %v6657
        %v7266 = vmax.f32 %v4061, %v6659
        %v7267 = vmax.f32 %v4069, %v6661
        %v7268 = vmax.f32 %v4068, %v6663
        %v7269 = vmax.f32 %v4070, %v6665
        %v7270 = vmax.f32 %v4078, %v6667
        %v7271 = vmax.f32 %v4086, %v6669
        %v7272 = vmax.f32 %v4085, %v6671
        %v7273 = vmax.f32 %v4087, %v6673
        %v7274 = vmax.f32 %v4095, %v6675
        %v7275 = vmax.f32 %v4103, %v6677
        %v7276 = vmax.f32 %v4102, %v6679
        %v7277 = vmax.f32 %v4104, %v6681
        %v7278 = vmax.f32 %v4112, %v6683
        %v7279 = vmax.f32 %v4120, %v6685
        %v7280 = vmax.f32 %v4119, %v6687
        %v7281 = vmax.f32 %v4121, %v6689
        %v7282 = vmax.f32 %v4197, %v6691
        %v7283 = vmax.f32 %v4205, %v6693
        %v7284 = vmax.f32 %v4204, %v6695
        %v7285 = vmax.f32 %v4206, %v6697
        %v7286 = vmax.f32 %v4214, %v6699
        %v7287 = vmax.f32 %v4222, %v6701
        %v7288 = vmax.f32 %v4221, %v6703
        %v7289 = vmax.f32 %v4223, %v6705
        %v7290 = vmax.f32 %v4231, %v6707
        %v7291 = vmax.f32 %v4239, %v6709
        %v7292 = vmax.f32 %v4238, %v6711
        %v7293 = vmax.f32 %v4240, %v6713
        %v7294 = vmax.f32 %v4248, %v6715
        %v7295 = vmax.f32 %v4256, %v6717
        %v7296 = vmax.f32 %v4255, %v6719
        %v7297 = vmax.f32 %v4257, %v6721
        %v7298 = vmax.f32 %v4333, %v6723
        %v7299 = vmax.f32 %v4341, %v6725
        %v7300 = vmax.f32 %v4340, %v6727
        %v7301 = vmax.f32 %v4342, %v6729
        %v7302 = vmax.f32 %v4350, %v6731
        %v7303 = vmax.f32 %v4358, %v6733
        %v7304 = vmax.f32 %v4357, %v6735
        %v7305 = vmax.f32 %v4359, %v6737
        %v7306 = vmax.f32 %v4367, %v6739
        %v7307 = vmax.f32 %v4375, %v6741
        %v7308 = vmax.f32 %v4374, %v6743
        %v7309 = vmax.f32 %v4376, %v6745
        %v7310 = vmax.f32 %v4384, %v6747
        %v7311 = vmax.f32 %v4392, %v6749
        %v7312 = vmax.f32 %v4391, %v6751
        %v7313 = vmax.f32 %v4393, %v6753
        %v7314 = vmax.f32 %v4469, %v6755
        %v7315 = vmax.f32 %v4477, %v6757
        %v7316 = vmax.f32 %v4476, %v6759
        %v7317 = vmax.f32 %v4478, %v6761
        %v7318 = vmax.f32 %v4486, %v6763
        %v7319 = vmax.f32 %v4494, %v6765
        %v7320 = vmax.f32 %v4493, %v6767
        %v7321 = vmax.f32 %v4495, %v6769
        %v7322 = vmax.f32 %v4503, %v6771
        %v7323 = vmax.f32 %v4511, %v6773
        %v7324 = vmax.f32 %v4510, %v6775
        %v7325 = vmax.f32 %v4512, %v6777
        %v7326 = vmax.f32 %v4520, %v6779
        %v7327 = vmax.f32 %v4528, %v6781
        %v7328 = vmax.f32 %v4527, %v6783
        %v7329 = vmax.f32 %v4529, %v6785
        %v7330 = vmax.f32 %v4605, %v6787
        %v7331 = vmax.f32 %v4613, %v6789
        %v7332 = vmax.f32 %v4612, %v6791
        %v7333 = vmax.f32 %v4614, %v6793
        %v7334 = vmax.f32 %v4622, %v6795
        %v7335 = vmax.f32 %v4630, %v6797
        %v7336 = vmax.f32 %v4629, %v6799
        %v7337 = vmax.f32 %v4631, %v6801
        %v7338 = vmax.f32 %v4639, %v6803
        %v7339 = vmax.f32 %v4647, %v6805
        %v7340 = vmax.f32 %v4646, %v6807
        %v7341 = vmax.f32 %v4648, %v6809
        %v7342 = vmax.f32 %v4656, %v6811
        %v7343 = vmax.f32 %v4664, %v6813
        %v7344 = vmax.f32 %v4663, %v6815
        %v7345 = vmax.f32 %v4665, %v6817
        %v7346 = vmax.f32 %v4741, %v6819
        %v7347 = vmax.f32 %v4749, %v6821
        %v7348 = vmax.f32 %v4748, %v6823
        %v7349 = vmax.f32 %v4750, %v6825
        %v7350 = vmax.f32 %v4758, %v6827
        %v7351 = vmax.f32 %v4766, %v6829
        %v7352 = vmax.f32 %v4765, %v6831
        %v7353 = vmax.f32 %v4767, %v6833
        %v7354 = vmax.f32 %v4775, %v6835
        %v7355 = vmax.f32 %v4783, %v6837
        %v7356 = vmax.f32 %v4782, %v6839
        %v7357 = vmax.f32 %v4784, %v6841
        %v7358 = vmax.f32 %v4792, %v6843
        %v7359 = vmax.f32 %v4800, %v6845
        %v7360 = vmax.f32 %v4799, %v6847
        %v7361 = vmax.f32 %v4801, %v6849
        %v7362 = vmax.f32 %v6082, %v7106
        %v7363 = vmax.f32 %v6083, %v7107
        %v7364 = vmax.f32 %v6084, %v7108
        %v7365 = vmax.f32 %v6085, %v7109
        %v7366 = vmax.f32 %v6086, %v7110
        %v7367 = vmax.f32 %v6087, %v7111
        %v7368 = vmax.f32 %v6088, %v7112
        %v7369 = vmax.f32 %v6089, %v7113
        %v7370 = vmax.f32 %v6090, %v7114
        %v7371 = vmax.f32 %v6091, %v7115
        %v7372 = vmax.f32 %v6092, %v7116
        %v7373 = vmax.f32 %v6093, %v7117
        %v7374 = vmax.f32 %v6094, %v7118
        %v7375 = vmax.f32 %v6095, %v7119
        %v7376 = vmax.f32 %v6096, %v7120
        %v7377 = vmax.f32 %v6097, %v7121
        %v7378 = vmax.f32 %v6098, %v7122
        %v7379 = vmax.f32 %v6099, %v7123
        %v7380 = vmax.f32 %v6100, %v7124
        %v7381 = vmax.f32 %v6101, %v7125
        %v7382 = vmax.f32 %v6102, %v7126
        %v7383 = vmax.f32 %v6103, %v7127
        %v7384 = vmax.f32 %v6104, %v7128
        %v7385 = vmax.f32 %v6105, %v7129
        %v7386 = vmax.f32 %v6106, %v7130
        %v7387 = vmax.f32 %v6107, %v7131
        %v7388 = vmax.f32 %v6108, %v7132
        %v7389 = vmax.f32 %v6109, %v7133
        %v7390 = vmax.f32 %v6110, %v7134
        %v7391 = vmax.f32 %v6111, %v7135
        %v7392 = vmax.f32 %v6112, %v7136
        %v7393 = vmax.f32 %v6113, %v7137
        %v7394 = vmax.f32 %v6114, %v7138
        %v7395 = vmax.f32 %v6115, %v7139
        %v7396 = vmax.f32 %v6116, %v7140
        %v7397 = vmax.f32 %v6117, %v7141
        %v7398 = vmax.f32 %v6118, %v7142
        %v7399 = vmax.f32 %v6119, %v7143
        %v7400 = vmax.f32 %v6120, %v7144
        %v7401 = vmax.f32 %v6121, %v7145
        %v7402 = vmax.f32 %v6122, %v7146
        %v7403 = vmax.f32 %v6123, %v7147
        %v7404 = vmax.f32 %v6124, %v7148
        %v7405 = vmax.f32 %v6125, %v7149
        %v7406 = vmax.f32 %v6126, %v7150
        %v7407 = vmax.f32 %v6127, %v7151
        %v7408 = vmax.f32 %v6128, %v7152
        %v7409 = vmax.f32 %v6129, %v7153
        %v7410 = vmax.f32 %v6130, %v7154
        %v7411 = vmax.f32 %v6131, %v7155
        %v7412 = vmax.f32 %v6132, %v7156
        %v7413 = vmax.f32 %v6133, %v7157
        %v7414 = vmax.f32 %v6134, %v7158
        %v7415 = vmax.f32 %v6135, %v7159
        %v7416 = vmax.f32 %v6136, %v7160
        %v7417 = vmax.f32 %v6137, %v7161
        %v7418 = vmax.f32 %v6138, %v7162
        %v7419 = vmax.f32 %v6139, %v7163
        %v7420 = vmax.f32 %v6140, %v7164
        %v7421 = vmax.f32 %v6141, %v7165
        %v7422 = vmax.f32 %v6142, %v7166
        %v7423 = vmax.f32 %v6143, %v7167
        %v7424 = vmax.f32 %v6144, %v7168
        %v7425 = vmax.f32 %v6145, %v7169
        %v7426 = vmax.f32 %v6146, %v7170
        %v7427 = vmax.f32 %v6147, %v7171
        %v7428 = vmax.f32 %v6148, %v7172
        %v7429 = vmax.f32 %v6149, %v7173
        %v7430 = vmax.f32 %v6150, %v7174
        %v7431 = vmax.f32 %v6151, %v7175
        %v7432 = vmax.f32 %v6152, %v7176
        %v7433 = vmax.f32 %v6153, %v7177
        %v7434 = vmax.f32 %v6154, %v7178
        %v7435 = vmax.f32 %v6155, %v7179
        %v7436 = vmax.f32 %v6156, %v7180
        %v7437 = vmax.f32 %v6157, %v7181
        %v7438 = vmax.f32 %v6158, %v7182
        %v7439 = vmax.f32 %v6159, %v7183
        %v7440 = vmax.f32 %v6160, %v7184
        %v7441 = vmax.f32 %v6161, %v7185
        %v7442 = vmax.f32 %v6162, %v7186
        %v7443 = vmax.f32 %v6163, %v7187
        %v7444 = vmax.f32 %v6164, %v7188
        %v7445 = vmax.f32 %v6165, %v7189
        %v7446 = vmax.f32 %v6166, %v7190
        %v7447 = vmax.f32 %v6167, %v7191
        %v7448 = vmax.f32 %v6168, %v7192
        %v7449 = vmax.f32 %v6169, %v7193
        %v7450 = vmax.f32 %v6170, %v7194
        %v7451 = vmax.f32 %v6171, %v7195
        %v7452 = vmax.f32 %v6172, %v7196
        %v7453 = vmax.f32 %v6173, %v7197
        %v7454 = vmax.f32 %v6174, %v7198
        %v7455 = vmax.f32 %v6175, %v7199
        %v7456 = vmax.f32 %v6176, %v7200
        %v7457 = vmax.f32 %v6177, %v7201
        %v7458 = vmax.f32 %v6178, %v7202
        %v7459 = vmax.f32 %v6179, %v7203
        %v7460 = vmax.f32 %v6180, %v7204
        %v7461 = vmax.f32 %v6181, %v7205
        %v7462 = vmax.f32 %v6182, %v7206
        %v7463 = vmax.f32 %v6183, %v7207
        %v7464 = vmax.f32 %v6184, %v7208
        %v7465 = vmax.f32 %v6185, %v7209
        %v7466 = vmax.f32 %v6186, %v7210
        %v7467 = vmax.f32 %v6187, %v7211
        %v7468 = vmax.f32 %v6188, %v7212
        %v7469 = vmax.f32 %v6189, %v7213
        %v7470 = vmax.f32 %v6190, %v7214
        %v7471 = vmax.f32 %v6191, %v7215
        %v7472 = vmax.f32 %v6192, %v7216
        %v7473 = vmax.f32 %v6193, %v7217
        %v7474 = vmax.f32 %v6194, %v7218
        %v7475 = vmax.f32 %v6195, %v7219
        %v7476 = vmax.f32 %v6196, %v7220
        %v7477 = vmax.f32 %v6197, %v7221
        %v7478 = vmax.f32 %v6198, %v7222
        %v7479 = vmax.f32 %v6199, %v7223
        %v7480 = vmax.f32 %v6200, %v7224
        %v7481 = vmax.f32 %v6201, %v7225
        %v7482 = vmax.f32 %v6202, %v7226
        %v7483 = vmax.f32 %v6203, %v7227
        %v7484 = vmax.f32 %v6204, %v7228
        %v7485 = vmax.f32 %v6205, %v7229
        %v7486 = vmax.f32 %v6206, %v7230
        %v7487 = vmax.f32 %v6207, %v7231
        %v7488 = vmax.f32 %v6208, %v7232
        %v7489 = vmax.f32 %v6209, %v7233
        %v7490 = vmax.f32 %v6210, %v7234
        %v7491 = vmax.f32 %v6211, %v7235
        %v7492 = vmax.f32 %v6212, %v7236
        %v7493 = vmax.f32 %v6213, %v7237
        %v7494 = vmax.f32 %v6214, %v7238
        %v7495 = vmax.f32 %v6215, %v7239
        %v7496 = vmax.f32 %v6216, %v7240
        %v7497 = vmax.f32 %v6217, %v7241
        %v7498 = vmax.f32 %v6218, %v7242
        %v7499 = vmax.f32 %v6219, %v7243
        %v7500 = vmax.f32 %v6220, %v7244
        %v7501 = vmax.f32 %v6221, %v7245
        %v7502 = vmax.f32 %v6222, %v7246
        %v7503 = vmax.f32 %v6223, %v7247
        %v7504 = vmax.f32 %v6224, %v7248
        %v7505 = vmax.f32 %v6225, %v7249
        %v7506 = vmax.f32 %v6226, %v7250
        %v7507 = vmax.f32 %v6227, %v7251
        %v7508 = vmax.f32 %v6228, %v7252
        %v7509 = vmax.f32 %v6229, %v7253
        %v7510 = vmax.f32 %v6230, %v7254
        %v7511 = vmax.f32 %v6231, %v7255
        %v7512 = vmax.f32 %v6232, %v7256
        %v7513 = vmax.f32 %v6233, %v7257
        %v7514 = vmax.f32 %v6234, %v7258
        %v7515 = vmax.f32 %v6235, %v7259
        %v7516 = vmax.f32 %v6236, %v7260
        %v7517 = vmax.f32 %v6237, %v7261
        %v7518 = vmax.f32 %v6238, %v7262
        %v7519 = vmax.f32 %v6239, %v7263
        %v7520 = vmax.f32 %v6240, %v7264
        %v7521 = vmax.f32 %v6241, %v7265
        %v7522 = vmax.f32 %v6242, %v7266
        %v7523 = vmax.f32 %v6243, %v7267
        %v7524 = vmax.f32 %v6244, %v7268
        %v7525 = vmax.f32 %v6245, %v7269
        %v7526 = vmax.f32 %v6246, %v7270
        %v7527 = vmax.f32 %v6247, %v7271
        %v7528 = vmax.f32 %v6248, %v7272
        %v7529 = vmax.f32 %v6249, %v7273
        %v7530 = vmax.f32 %v6250, %v7274
        %v7531 = vmax.f32 %v6251, %v7275
        %v7532 = vmax.f32 %v6252, %v7276
        %v7533 = vmax.f32 %v6253, %v7277
        %v7534 = vmax.f32 %v6254, %v7278
        %v7535 = vmax.f32 %v6255, %v7279
        %v7536 = vmax.f32 %v6256, %v7280
        %v7537 = vmax.f32 %v6257, %v7281
        %v7538 = vmax.f32 %v6258, %v7282
        %v7539 = vmax.f32 %v6259, %v7283
        %v7540 = vmax.f32 %v6260, %v7284
        %v7541 = vmax.f32 %v6261, %v7285
        %v7542 = vmax.f32 %v6262, %v7286
        %v7543 = vmax.f32 %v6263, %v7287
        %v7544 = vmax.f32 %v6264, %v7288
        %v7545 = vmax.f32 %v6265, %v7289
        %v7546 = vmax.f32 %v6266, %v7290
        %v7547 = vmax.f32 %v6267, %v7291
        %v7548 = vmax.f32 %v6268, %v7292
        %v7549 = vmax.f32 %v6269, %v7293
        %v7550 = vmax.f32 %v6270, %v7294
        %v7551 = vmax.f32 %v6271, %v7295
        %v7552 = vmax.f32 %v6272, %v7296
        %v7553 = vmax.f32 %v6273, %v7297
        %v7554 = vmax.f32 %v6274, %v7298
        %v7555 = vmax.f32 %v6275, %v7299
        %v7556 = vmax.f32 %v6276, %v7300
        %v7557 = vmax.f32 %v6277, %v7301
        %v7558 = vmax.f32 %v6278, %v7302
        %v7559 = vmax.f32 %v6279, %v7303
        %v7560 = vmax.f32 %v6280, %v7304
        %v7561 = vmax.f32 %v6281, %v7305
        %v7562 = vmax.f32 %v6282, %v7306
        %v7563 = vmax.f32 %v6283, %v7307
        %v7564 = vmax.f32 %v6284, %v7308
        %v7565 = vmax.f32 %v6285, %v7309
        %v7566 = vmax.f32 %v6286, %v7310
        %v7567 = vmax.f32 %v6287, %v7311
        %v7568 = vmax.f32 %v6288, %v7312
        %v7569 = vmax.f32 %v6289, %v7313
        %v7570 = vmax.f32 %v6290, %v7314
        %v7571 = vmax.f32 %v6291, %v7315
        %v7572 = vmax.f32 %v6292, %v7316
        %v7573 = vmax.f32 %v6293, %v7317
        %v7574 = vmax.f32 %v6294, %v7318
        %v7575 = vmax.f32 %v6295, %v7319
        %v7576 = vmax.f32 %v6296, %v7320
        %v7577 = vmax.f32 %v6297, %v7321
        %v7578 = vmax.f32 %v6298, %v7322
        %v7579 = vmax.f32 %v6299, %v7323
        %v7580 = vmax.f32 %v6300, %v7324
        %v7581 = vmax.f32 %v6301, %v7325
        %v7582 = vmax.f32 %v6302, %v7326
        %v7583 = vmax.f32 %v6303, %v7327
        %v7584 = vmax.f32 %v6304, %v7328
        %v7585 = vmax.f32 %v6305, %v7329
        %v7586 = vmax.f32 %v6306, %v7330
        %v7587 = vmax.f32 %v6307, %v7331
        %v7588 = vmax.f32 %v6308, %v7332
        %v7589 = vmax.f32 %v6309, %v7333
        %v7590 = vmax.f32 %v6310, %v7334
        %v7591 = vmax.f32 %v6311, %v7335
        %v7592 = vmax.f32 %v6312, %v7336
        %v7593 = vmax.f32 %v6313, %v7337
        %v7594 = vmax.f32 %v6314, %v7338
        %v7595 = vmax.f32 %v6315, %v7339
        %v7596 = vmax.f32 %v6316, %v7340
        %v7597 = vmax.f32 %v6317, %v7341
        %v7598 = vmax.f32 %v6318, %v7342
        %v7599 = vmax.f32 %v6319, %v7343
        %v7600 = vmax.f32 %v6320, %v7344
        %v7601 = vmax.f32 %v6321, %v7345
        %v7602 = vmax.f32 %v6322, %v7346
        %v7603 = vmax.f32 %v6323, %v7347
        %v7604 = vmax.f32 %v6324, %v7348
        %v7605 = vmax.f32 %v6325, %v7349
        %v7606 = vmax.f32 %v6326, %v7350
        %v7607 = vmax.f32 %v6327, %v7351
        %v7608 = vmax.f32 %v6328, %v7352
        %v7609 = vmax.f32 %v6329, %v7353
        %v7610 = vmax.f32 %v6330, %v7354
        %v7611 = vmax.f32 %v6331, %v7355
        %v7612 = vmax.f32 %v6332, %v7356
        %v7613 = vmax.f32 %v6333, %v7357
        %v7614 = vmax.f32 %v6334, %v7358
        %v7615 = vmax.f32 %v6335, %v7359
        %v7616 = vmax.f32 %v6336, %v7360
        %v7617 = vmax.f32 %v6337, %v7361
        %7618 = vst [vmem:[#allocation2] sm:$0xff] 0.0
        %7619 = vst [vmem:[#allocation2 + $0x8] sm:$0xff] 0.0
        %7620 = vst [vmem:[#allocation2 + $0x10] sm:$0x3] 0.0
        %7621 = vst [vmem:[#allocation2 + $0x18] sm:$0xff] 0.0
        %7622 = vst [vmem:[#allocation2 + $0x20] sm:$0xff] 0.0
        %7623 = vst [vmem:[#allocation2 + $0x28] sm:$0x3] 0.0
        %7624 = vst [vmem:[#allocation2 + $0x30] sm:$0xff] 0.0
        %7625 = vst [vmem:[#allocation2 + $0x38] sm:$0xff] 0.0
        %7626 = vst [vmem:[#allocation2 + $0x40] sm:$0x3] 0.0
        %7627 = vst [vmem:[#allocation2 + $0x48] sm:$0xff] 0.0
        %7628 = vst [vmem:[#allocation2 + $0x50] sm:$0xff] 0.0
        %7629 = vst [vmem:[#allocation2 + $0x58] sm:$0x3] 0.0
        %7630 = vst [vmem:[#allocation2 + $0x60] sm:$0xff] 0.0
        %7631 = vst [vmem:[#allocation2 + $0x68] sm:$0xff] 0.0
        %7632 = vst [vmem:[#allocation2 + $0x70] sm:$0x3] 0.0
        %7633 = vst [vmem:[#allocation2 + $0x78] sm:$0xff] 0.0
        %7634 = vst [vmem:[#allocation2 + $0x80] sm:$0xff] 0.0
        %7635 = vst [vmem:[#allocation2 + $0x88] sm:$0x3] 0.0
        %7636 = vst [vmem:[#allocation2 + $0x90] sm:$0xff] 0.0
        %7637 = vst [vmem:[#allocation2 + $0x98] sm:$0xff] 0.0
        %7638 = vst [vmem:[#allocation2 + $0xa0] sm:$0x3] 0.0
        %7639 = vst [vmem:[#allocation2 + $0xa8] sm:$0xff] 0.0
        %7640 = vst [vmem:[#allocation2 + $0xb0] sm:$0xff] 0.0
        %7641 = vst [vmem:[#allocation2 + $0xb8] sm:$0x3] 0.0
        %7642 = vst [vmem:[#allocation2 + $0xc0] sm:$0xff] 0.0
        %7643 = vst [vmem:[#allocation2 + $0xc8] sm:$0xff] 0.0
        %7644 = vst [vmem:[#allocation2 + $0xd0] sm:$0x3] 0.0
        %7645 = vst [vmem:[#allocation2 + $0xd8] sm:$0xff] 0.0
        %7646 = vst [vmem:[#allocation2 + $0xe0] sm:$0xff] 0.0
        %7647 = vst [vmem:[#allocation2 + $0xe8] sm:$0x3] 0.0
        %7648 = vst [vmem:[#allocation2 + $0xf0] sm:$0xff] 0.0
        %7649 = vst [vmem:[#allocation2 + $0xf8] sm:$0xff] 0.0
        %7650 = vst [vmem:[#allocation2 + $0x100] sm:$0x3] 0.0
        %7651 = vst [vmem:[#allocation2 + $0x108] sm:$0xff] 0.0
        %7652 = vst [vmem:[#allocation2 + $0x110] sm:$0xff] 0.0
        %7653 = vst [vmem:[#allocation2 + $0x118] sm:$0x3] 0.0
        %7654 = vst [vmem:[#allocation2 + $0x120] sm:$0xff] 0.0
        %7655 = vst [vmem:[#allocation2 + $0x128] sm:$0xff] 0.0
        %7656 = vst [vmem:[#allocation2 + $0x130] sm:$0x3] 0.0
        %7657 = vst [vmem:[#allocation2 + $0x138] sm:$0xff] 0.0
        %7658 = vst [vmem:[#allocation2 + $0x140] sm:$0xff] 0.0
        %7659 = vst [vmem:[#allocation2 + $0x148] sm:$0x3] 0.0
        %7660 = vst [vmem:[#allocation2 + $0x150] sm:$0xff] 0.0
        %7661 = vst [vmem:[#allocation2 + $0x158] sm:$0xff] 0.0
        %7662 = vst [vmem:[#allocation2 + $0x160] sm:$0x3] 0.0
        %7663 = vst [vmem:[#allocation2 + $0x168] sm:$0xff] 0.0
        %7664 = vst [vmem:[#allocation2 + $0x170] sm:$0xff] 0.0
        %7665 = vst [vmem:[#allocation2 + $0x178] sm:$0x3] 0.0
        %7666 = vst [vmem:[#allocation2 + $0x180] sm:$0xff] 0.0
        %7667 = vst [vmem:[#allocation2 + $0x188] sm:$0xff] 0.0
        %7668 = vst [vmem:[#allocation2 + $0x190] sm:$0x3] 0.0
        %7669 = vst [vmem:[#allocation2 + $0x198] sm:$0xff] 0.0
        %7670 = vst [vmem:[#allocation2 + $0x1a0] sm:$0xff] 0.0
        %7671 = vst [vmem:[#allocation2 + $0x1a8] sm:$0x3] 0.0
        %v7928 = vlaneseq
        %v7929 = vshrl.u32 %v7928, 7
        %v7930 = vsub.s32 0, %v7929
        %v7931 = vrot.slane %v7362, %v7930
        %v7932 = vlaneseq
        %v7933 = vshrl.u32 %v7932, 7
        %v7934 = vsub.s32 0, %v7933
        %v7935 = vrot.slane %v7363, %v7934
        %v7936 = vlaneseq
        %v7937 = vshrl.u32 %v7936, 7
        %v7938 = vsub.s32 0, %v7937
        %v7939 = vrot.slane %v7364, %v7938
        %v7940 = vlaneseq
        %v7941 = vshrl.u32 %v7940, 7
        %v7942 = vsub.s32 0, %v7941
        %v7943 = vrot.slane %v7365, %v7942
        %v7944 = vlaneseq
        %v7945 = vshrl.u32 %v7944, 7
        %v7946 = vsub.s32 0, %v7945
        %v7947 = vrot.slane %v7366, %v7946
        %v7948 = vlaneseq
        %v7949 = vshrl.u32 %v7948, 7
        %v7950 = vsub.s32 0, %v7949
        %v7951 = vrot.slane %v7367, %v7950
        %v7952 = vlaneseq
        %v7953 = vshrl.u32 %v7952, 7
        %v7954 = vsub.s32 0, %v7953
        %v7955 = vrot.slane %v7368, %v7954
        %v7956 = vlaneseq
        %v7957 = vshrl.u32 %v7956, 7
        %v7958 = vsub.s32 0, %v7957
        %v7959 = vrot.slane %v7369, %v7958
        %v7960 = vlaneseq
        %v7961 = vshrl.u32 %v7960, 7
        %v7962 = vsub.s32 0, %v7961
        %v7963 = vrot.slane %v7370, %v7962
        %v7964 = vlaneseq
        %v7965 = vshrl.u32 %v7964, 7
        %v7966 = vsub.s32 0, %v7965
        %v7967 = vrot.slane %v7371, %v7966
        %v7968 = vlaneseq
        %v7969 = vshrl.u32 %v7968, 7
        %v7970 = vsub.s32 0, %v7969
        %v7971 = vrot.slane %v7372, %v7970
        %v7972 = vlaneseq
        %v7973 = vshrl.u32 %v7972, 7
        %v7974 = vsub.s32 0, %v7973
        %v7975 = vrot.slane %v7373, %v7974
        %v7976 = vlaneseq
        %v7977 = vshrl.u32 %v7976, 7
        %v7978 = vsub.s32 0, %v7977
        %v7979 = vrot.slane %v7374, %v7978
        %v7980 = vlaneseq
        %v7981 = vshrl.u32 %v7980, 7
        %v7982 = vsub.s32 0, %v7981
        %v7983 = vrot.slane %v7375, %v7982
        %v7984 = vlaneseq
        %v7985 = vshrl.u32 %v7984, 7
        %v7986 = vsub.s32 0, %v7985
        %v7987 = vrot.slane %v7376, %v7986
        %v7988 = vlaneseq
        %v7989 = vshrl.u32 %v7988, 7
        %v7990 = vsub.s32 0, %v7989
        %v7991 = vrot.slane %v7377, %v7990
        %v7992 = vlaneseq
        %v7993 = vshrl.u32 %v7992, 7
        %v7994 = vsub.s32 0, %v7993
        %v7995 = vrot.slane %v7378, %v7994
        %v7996 = vlaneseq
        %v7997 = vshrl.u32 %v7996, 7
        %v7998 = vsub.s32 0, %v7997
        %v7999 = vrot.slane %v7379, %v7998
        %v8000 = vlaneseq
        %v8001 = vshrl.u32 %v8000, 7
        %v8002 = vsub.s32 0, %v8001
        %v8003 = vrot.slane %v7380, %v8002
        %v8004 = vlaneseq
        %v8005 = vshrl.u32 %v8004, 7
        %v8006 = vsub.s32 0, %v8005
        %v8007 = vrot.slane %v7381, %v8006
        %v8008 = vlaneseq
        %v8009 = vshrl.u32 %v8008, 7
        %v8010 = vsub.s32 0, %v8009
        %v8011 = vrot.slane %v7382, %v8010
        %v8012 = vlaneseq
        %v8013 = vshrl.u32 %v8012, 7
        %v8014 = vsub.s32 0, %v8013
        %v8015 = vrot.slane %v7383, %v8014
        %v8016 = vlaneseq
        %v8017 = vshrl.u32 %v8016, 7
        %v8018 = vsub.s32 0, %v8017
        %v8019 = vrot.slane %v7384, %v8018
        %v8020 = vlaneseq
        %v8021 = vshrl.u32 %v8020, 7
        %v8022 = vsub.s32 0, %v8021
        %v8023 = vrot.slane %v7385, %v8022
        %v8024 = vlaneseq
        %v8025 = vshrl.u32 %v8024, 7
        %v8026 = vsub.s32 0, %v8025
        %v8027 = vrot.slane %v7386, %v8026
        %v8028 = vlaneseq
        %v8029 = vshrl.u32 %v8028, 7
        %v8030 = vsub.s32 0, %v8029
        %v8031 = vrot.slane %v7387, %v8030
        %v8032 = vlaneseq
        %v8033 = vshrl.u32 %v8032, 7
        %v8034 = vsub.s32 0, %v8033
        %v8035 = vrot.slane %v7388, %v8034
        %v8036 = vlaneseq
        %v8037 = vshrl.u32 %v8036, 7
        %v8038 = vsub.s32 0, %v8037
        %v8039 = vrot.slane %v7389, %v8038
        %v8040 = vlaneseq
        %v8041 = vshrl.u32 %v8040, 7
        %v8042 = vsub.s32 0, %v8041
        %v8043 = vrot.slane %v7390, %v8042
        %v8044 = vlaneseq
        %v8045 = vshrl.u32 %v8044, 7
        %v8046 = vsub.s32 0, %v8045
        %v8047 = vrot.slane %v7391, %v8046
        %v8048 = vlaneseq
        %v8049 = vshrl.u32 %v8048, 7
        %v8050 = vsub.s32 0, %v8049
        %v8051 = vrot.slane %v7392, %v8050
        %v8052 = vlaneseq
        %v8053 = vshrl.u32 %v8052, 7
        %v8054 = vsub.s32 0, %v8053
        %v8055 = vrot.slane %v7393, %v8054
        %v8056 = vlaneseq
        %v8057 = vshrl.u32 %v8056, 7
        %v8058 = vsub.s32 0, %v8057
        %v8059 = vrot.slane %v7394, %v8058
        %v8060 = vlaneseq
        %v8061 = vshrl.u32 %v8060, 7
        %v8062 = vsub.s32 0, %v8061
        %v8063 = vrot.slane %v7395, %v8062
        %v8064 = vlaneseq
        %v8065 = vshrl.u32 %v8064, 7
        %v8066 = vsub.s32 0, %v8065
        %v8067 = vrot.slane %v7396, %v8066
        %v8068 = vlaneseq
        %v8069 = vshrl.u32 %v8068, 7
        %v8070 = vsub.s32 0, %v8069
        %v8071 = vrot.slane %v7397, %v8070
        %v8072 = vlaneseq
        %v8073 = vshrl.u32 %v8072, 7
        %v8074 = vsub.s32 0, %v8073
        %v8075 = vrot.slane %v7398, %v8074
        %v8076 = vlaneseq
        %v8077 = vshrl.u32 %v8076, 7
        %v8078 = vsub.s32 0, %v8077
        %v8079 = vrot.slane %v7399, %v8078
        %v8080 = vlaneseq
        %v8081 = vshrl.u32 %v8080, 7
        %v8082 = vsub.s32 0, %v8081
        %v8083 = vrot.slane %v7400, %v8082
        %v8084 = vlaneseq
        %v8085 = vshrl.u32 %v8084, 7
        %v8086 = vsub.s32 0, %v8085
        %v8087 = vrot.slane %v7401, %v8086
        %v8088 = vlaneseq
        %v8089 = vshrl.u32 %v8088, 7
        %v8090 = vsub.s32 0, %v8089
        %v8091 = vrot.slane %v7402, %v8090
        %v8092 = vlaneseq
        %v8093 = vshrl.u32 %v8092, 7
        %v8094 = vsub.s32 0, %v8093
        %v8095 = vrot.slane %v7403, %v8094
        %v8096 = vlaneseq
        %v8097 = vshrl.u32 %v8096, 7
        %v8098 = vsub.s32 0, %v8097
        %v8099 = vrot.slane %v7404, %v8098
        %v8100 = vlaneseq
        %v8101 = vshrl.u32 %v8100, 7
        %v8102 = vsub.s32 0, %v8101
        %v8103 = vrot.slane %v7405, %v8102
        %v8104 = vlaneseq
        %v8105 = vshrl.u32 %v8104, 7
        %v8106 = vsub.s32 0, %v8105
        %v8107 = vrot.slane %v7406, %v8106
        %v8108 = vlaneseq
        %v8109 = vshrl.u32 %v8108, 7
        %v8110 = vsub.s32 0, %v8109
        %v8111 = vrot.slane %v7407, %v8110
        %v8112 = vlaneseq
        %v8113 = vshrl.u32 %v8112, 7
        %v8114 = vsub.s32 0, %v8113
        %v8115 = vrot.slane %v7408, %v8114
        %v8116 = vlaneseq
        %v8117 = vshrl.u32 %v8116, 7
        %v8118 = vsub.s32 0, %v8117
        %v8119 = vrot.slane %v7409, %v8118
        %v8120 = vlaneseq
        %v8121 = vshrl.u32 %v8120, 7
        %v8122 = vsub.s32 0, %v8121
        %v8123 = vrot.slane %v7410, %v8122
        %v8124 = vlaneseq
        %v8125 = vshrl.u32 %v8124, 7
        %v8126 = vsub.s32 0, %v8125
        %v8127 = vrot.slane %v7411, %v8126
        %v8128 = vlaneseq
        %v8129 = vshrl.u32 %v8128, 7
        %v8130 = vsub.s32 0, %v8129
        %v8131 = vrot.slane %v7412, %v8130
        %v8132 = vlaneseq
        %v8133 = vshrl.u32 %v8132, 7
        %v8134 = vsub.s32 0, %v8133
        %v8135 = vrot.slane %v7413, %v8134
        %v8136 = vlaneseq
        %v8137 = vshrl.u32 %v8136, 7
        %v8138 = vsub.s32 0, %v8137
        %v8139 = vrot.slane %v7414, %v8138
        %v8140 = vlaneseq
        %v8141 = vshrl.u32 %v8140, 7
        %v8142 = vsub.s32 0, %v8141
        %v8143 = vrot.slane %v7415, %v8142
        %v8144 = vlaneseq
        %v8145 = vshrl.u32 %v8144, 7
        %v8146 = vsub.s32 0, %v8145
        %v8147 = vrot.slane %v7416, %v8146
        %v8148 = vlaneseq
        %v8149 = vshrl.u32 %v8148, 7
        %v8150 = vsub.s32 0, %v8149
        %v8151 = vrot.slane %v7417, %v8150
        %v8152 = vlaneseq
        %v8153 = vshrl.u32 %v8152, 7
        %v8154 = vsub.s32 0, %v8153
        %v8155 = vrot.slane %v7418, %v8154
        %v8156 = vlaneseq
        %v8157 = vshrl.u32 %v8156, 7
        %v8158 = vsub.s32 0, %v8157
        %v8159 = vrot.slane %v7419, %v8158
        %v8160 = vlaneseq
        %v8161 = vshrl.u32 %v8160, 7
        %v8162 = vsub.s32 0, %v8161
        %v8163 = vrot.slane %v7420, %v8162
        %v8164 = vlaneseq
        %v8165 = vshrl.u32 %v8164, 7
        %v8166 = vsub.s32 0, %v8165
        %v8167 = vrot.slane %v7421, %v8166
        %v8168 = vlaneseq
        %v8169 = vshrl.u32 %v8168, 7
        %v8170 = vsub.s32 0, %v8169
        %v8171 = vrot.slane %v7422, %v8170
        %v8172 = vlaneseq
        %v8173 = vshrl.u32 %v8172, 7
        %v8174 = vsub.s32 0, %v8173
        %v8175 = vrot.slane %v7423, %v8174
        %v8176 = vlaneseq
        %v8177 = vshrl.u32 %v8176, 7
        %v8178 = vsub.s32 0, %v8177
        %v8179 = vrot.slane %v7424, %v8178
        %v8180 = vlaneseq
        %v8181 = vshrl.u32 %v8180, 7
        %v8182 = vsub.s32 0, %v8181
        %v8183 = vrot.slane %v7425, %v8182
        %v8184 = vlaneseq
        %v8185 = vshrl.u32 %v8184, 7
        %v8186 = vsub.s32 0, %v8185
        %v8187 = vrot.slane %v7426, %v8186
        %v8188 = vlaneseq
        %v8189 = vshrl.u32 %v8188, 7
        %v8190 = vsub.s32 0, %v8189
        %v8191 = vrot.slane %v7427, %v8190
        %v8192 = vlaneseq
        %v8193 = vshrl.u32 %v8192, 7
        %v8194 = vsub.s32 0, %v8193
        %v8195 = vrot.slane %v7428, %v8194
        %v8196 = vlaneseq
        %v8197 = vshrl.u32 %v8196, 7
        %v8198 = vsub.s32 0, %v8197
        %v8199 = vrot.slane %v7429, %v8198
        %v8200 = vlaneseq
        %v8201 = vshrl.u32 %v8200, 7
        %v8202 = vsub.s32 0, %v8201
        %v8203 = vrot.slane %v7430, %v8202
        %v8204 = vlaneseq
        %v8205 = vshrl.u32 %v8204, 7
        %v8206 = vsub.s32 0, %v8205
        %v8207 = vrot.slane %v7431, %v8206
        %v8208 = vlaneseq
        %v8209 = vshrl.u32 %v8208, 7
        %v8210 = vsub.s32 0, %v8209
        %v8211 = vrot.slane %v7432, %v8210
        %v8212 = vlaneseq
        %v8213 = vshrl.u32 %v8212, 7
        %v8214 = vsub.s32 0, %v8213
        %v8215 = vrot.slane %v7433, %v8214
        %v8216 = vlaneseq
        %v8217 = vshrl.u32 %v8216, 7
        %v8218 = vsub.s32 0, %v8217
        %v8219 = vrot.slane %v7434, %v8218
        %v8220 = vlaneseq
        %v8221 = vshrl.u32 %v8220, 7
        %v8222 = vsub.s32 0, %v8221
        %v8223 = vrot.slane %v7435, %v8222
        %v8224 = vlaneseq
        %v8225 = vshrl.u32 %v8224, 7
        %v8226 = vsub.s32 0, %v8225
        %v8227 = vrot.slane %v7436, %v8226
        %v8228 = vlaneseq
        %v8229 = vshrl.u32 %v8228, 7
        %v8230 = vsub.s32 0, %v8229
        %v8231 = vrot.slane %v7437, %v8230
        %v8232 = vlaneseq
        %v8233 = vshrl.u32 %v8232, 7
        %v8234 = vsub.s32 0, %v8233
        %v8235 = vrot.slane %v7438, %v8234
        %v8236 = vlaneseq
        %v8237 = vshrl.u32 %v8236, 7
        %v8238 = vsub.s32 0, %v8237
        %v8239 = vrot.slane %v7439, %v8238
        %v8240 = vlaneseq
        %v8241 = vshrl.u32 %v8240, 7
        %v8242 = vsub.s32 0, %v8241
        %v8243 = vrot.slane %v7440, %v8242
        %v8244 = vlaneseq
        %v8245 = vshrl.u32 %v8244, 7
        %v8246 = vsub.s32 0, %v8245
        %v8247 = vrot.slane %v7441, %v8246
        %v8248 = vlaneseq
        %v8249 = vshrl.u32 %v8248, 7
        %v8250 = vsub.s32 0, %v8249
        %v8251 = vrot.slane %v7442, %v8250
        %v8252 = vlaneseq
        %v8253 = vshrl.u32 %v8252, 7
        %v8254 = vsub.s32 0, %v8253
        %v8255 = vrot.slane %v7443, %v8254
        %v8256 = vlaneseq
        %v8257 = vshrl.u32 %v8256, 7
        %v8258 = vsub.s32 0, %v8257
        %v8259 = vrot.slane %v7444, %v8258
        %v8260 = vlaneseq
        %v8261 = vshrl.u32 %v8260, 7
        %v8262 = vsub.s32 0, %v8261
        %v8263 = vrot.slane %v7445, %v8262
        %v8264 = vlaneseq
        %v8265 = vshrl.u32 %v8264, 7
        %v8266 = vsub.s32 0, %v8265
        %v8267 = vrot.slane %v7446, %v8266
        %v8268 = vlaneseq
        %v8269 = vshrl.u32 %v8268, 7
        %v8270 = vsub.s32 0, %v8269
        %v8271 = vrot.slane %v7447, %v8270
        %v8272 = vlaneseq
        %v8273 = vshrl.u32 %v8272, 7
        %v8274 = vsub.s32 0, %v8273
        %v8275 = vrot.slane %v7448, %v8274
        %v8276 = vlaneseq
        %v8277 = vshrl.u32 %v8276, 7
        %v8278 = vsub.s32 0, %v8277
        %v8279 = vrot.slane %v7449, %v8278
        %v8280 = vlaneseq
        %v8281 = vshrl.u32 %v8280, 7
        %v8282 = vsub.s32 0, %v8281
        %v8283 = vrot.slane %v7450, %v8282
        %v8284 = vlaneseq
        %v8285 = vshrl.u32 %v8284, 7
        %v8286 = vsub.s32 0, %v8285
        %v8287 = vrot.slane %v7451, %v8286
        %v8288 = vlaneseq
        %v8289 = vshrl.u32 %v8288, 7
        %v8290 = vsub.s32 0, %v8289
        %v8291 = vrot.slane %v7452, %v8290
        %v8292 = vlaneseq
        %v8293 = vshrl.u32 %v8292, 7
        %v8294 = vsub.s32 0, %v8293
        %v8295 = vrot.slane %v7453, %v8294
        %v8296 = vlaneseq
        %v8297 = vshrl.u32 %v8296, 7
        %v8298 = vsub.s32 0, %v8297
        %v8299 = vrot.slane %v7454, %v8298
        %v8300 = vlaneseq
        %v8301 = vshrl.u32 %v8300, 7
        %v8302 = vsub.s32 0, %v8301
        %v8303 = vrot.slane %v7455, %v8302
        %v8304 = vlaneseq
        %v8305 = vshrl.u32 %v8304, 7
        %v8306 = vsub.s32 0, %v8305
        %v8307 = vrot.slane %v7456, %v8306
        %v8308 = vlaneseq
        %v8309 = vshrl.u32 %v8308, 7
        %v8310 = vsub.s32 0, %v8309
        %v8311 = vrot.slane %v7457, %v8310
        %v8312 = vlaneseq
        %v8313 = vshrl.u32 %v8312, 7
        %v8314 = vsub.s32 0, %v8313
        %v8315 = vrot.slane %v7458, %v8314
        %v8316 = vlaneseq
        %v8317 = vshrl.u32 %v8316, 7
        %v8318 = vsub.s32 0, %v8317
        %v8319 = vrot.slane %v7459, %v8318
        %v8320 = vlaneseq
        %v8321 = vshrl.u32 %v8320, 7
        %v8322 = vsub.s32 0, %v8321
        %v8323 = vrot.slane %v7460, %v8322
        %v8324 = vlaneseq
        %v8325 = vshrl.u32 %v8324, 7
        %v8326 = vsub.s32 0, %v8325
        %v8327 = vrot.slane %v7461, %v8326
        %v8328 = vlaneseq
        %v8329 = vshrl.u32 %v8328, 7
        %v8330 = vsub.s32 0, %v8329
        %v8331 = vrot.slane %v7462, %v8330
        %v8332 = vlaneseq
        %v8333 = vshrl.u32 %v8332, 7
        %v8334 = vsub.s32 0, %v8333
        %v8335 = vrot.slane %v7463, %v8334
        %v8336 = vlaneseq
        %v8337 = vshrl.u32 %v8336, 7
        %v8338 = vsub.s32 0, %v8337
        %v8339 = vrot.slane %v7464, %v8338
        %v8340 = vlaneseq
        %v8341 = vshrl.u32 %v8340, 7
        %v8342 = vsub.s32 0, %v8341
        %v8343 = vrot.slane %v7465, %v8342
        %v8344 = vlaneseq
        %v8345 = vshrl.u32 %v8344, 7
        %v8346 = vsub.s32 0, %v8345
        %v8347 = vrot.slane %v7466, %v8346
        %v8348 = vlaneseq
        %v8349 = vshrl.u32 %v8348, 7
        %v8350 = vsub.s32 0, %v8349
        %v8351 = vrot.slane %v7467, %v8350
        %v8352 = vlaneseq
        %v8353 = vshrl.u32 %v8352, 7
        %v8354 = vsub.s32 0, %v8353
        %v8355 = vrot.slane %v7468, %v8354
        %v8356 = vlaneseq
        %v8357 = vshrl.u32 %v8356, 7
        %v8358 = vsub.s32 0, %v8357
        %v8359 = vrot.slane %v7469, %v8358
        %v8360 = vlaneseq
        %v8361 = vshrl.u32 %v8360, 7
        %v8362 = vsub.s32 0, %v8361
        %v8363 = vrot.slane %v7470, %v8362
        %v8364 = vlaneseq
        %v8365 = vshrl.u32 %v8364, 7
        %v8366 = vsub.s32 0, %v8365
        %v8367 = vrot.slane %v7471, %v8366
        %v8368 = vlaneseq
        %v8369 = vshrl.u32 %v8368, 7
        %v8370 = vsub.s32 0, %v8369
        %v8371 = vrot.slane %v7472, %v8370
        %v8372 = vlaneseq
        %v8373 = vshrl.u32 %v8372, 7
        %v8374 = vsub.s32 0, %v8373
        %v8375 = vrot.slane %v7473, %v8374
        %v8376 = vlaneseq
        %v8377 = vshrl.u32 %v8376, 7
        %v8378 = vsub.s32 0, %v8377
        %v8379 = vrot.slane %v7474, %v8378
        %v8380 = vlaneseq
        %v8381 = vshrl.u32 %v8380, 7
        %v8382 = vsub.s32 0, %v8381
        %v8383 = vrot.slane %v7475, %v8382
        %v8384 = vlaneseq
        %v8385 = vshrl.u32 %v8384, 7
        %v8386 = vsub.s32 0, %v8385
        %v8387 = vrot.slane %v7476, %v8386
        %v8388 = vlaneseq
        %v8389 = vshrl.u32 %v8388, 7
        %v8390 = vsub.s32 0, %v8389
        %v8391 = vrot.slane %v7477, %v8390
        %v8392 = vlaneseq
        %v8393 = vshrl.u32 %v8392, 7
        %v8394 = vsub.s32 0, %v8393
        %v8395 = vrot.slane %v7478, %v8394
        %v8396 = vlaneseq
        %v8397 = vshrl.u32 %v8396, 7
        %v8398 = vsub.s32 0, %v8397
        %v8399 = vrot.slane %v7479, %v8398
        %v8400 = vlaneseq
        %v8401 = vshrl.u32 %v8400, 7
        %v8402 = vsub.s32 0, %v8401
        %v8403 = vrot.slane %v7480, %v8402
        %v8404 = vlaneseq
        %v8405 = vshrl.u32 %v8404, 7
        %v8406 = vsub.s32 0, %v8405
        %v8407 = vrot.slane %v7481, %v8406
        %v8408 = vlaneseq
        %v8409 = vshrl.u32 %v8408, 7
        %v8410 = vsub.s32 0, %v8409
        %v8411 = vrot.slane %v7482, %v8410
        %v8412 = vlaneseq
        %v8413 = vshrl.u32 %v8412, 7
        %v8414 = vsub.s32 0, %v8413
        %v8415 = vrot.slane %v7483, %v8414
        %v8416 = vlaneseq
        %v8417 = vshrl.u32 %v8416, 7
        %v8418 = vsub.s32 0, %v8417
        %v8419 = vrot.slane %v7484, %v8418
        %v8420 = vlaneseq
        %v8421 = vshrl.u32 %v8420, 7
        %v8422 = vsub.s32 0, %v8421
        %v8423 = vrot.slane %v7485, %v8422
        %v8424 = vlaneseq
        %v8425 = vshrl.u32 %v8424, 7
        %v8426 = vsub.s32 0, %v8425
        %v8427 = vrot.slane %v7486, %v8426
        %v8428 = vlaneseq
        %v8429 = vshrl.u32 %v8428, 7
        %v8430 = vsub.s32 0, %v8429
        %v8431 = vrot.slane %v7487, %v8430
        %v8432 = vlaneseq
        %v8433 = vshrl.u32 %v8432, 7
        %v8434 = vsub.s32 0, %v8433
        %v8435 = vrot.slane %v7488, %v8434
        %v8436 = vlaneseq
        %v8437 = vshrl.u32 %v8436, 7
        %v8438 = vsub.s32 0, %v8437
        %v8439 = vrot.slane %v7489, %v8438
        %v8440 = vlaneseq
        %v8441 = vshrl.u32 %v8440, 7
        %v8442 = vsub.s32 0, %v8441
        %v8443 = vrot.slane %v7490, %v8442
        %v8444 = vlaneseq
        %v8445 = vshrl.u32 %v8444, 7
        %v8446 = vsub.s32 0, %v8445
        %v8447 = vrot.slane %v7491, %v8446
        %v8448 = vlaneseq
        %v8449 = vshrl.u32 %v8448, 7
        %v8450 = vsub.s32 0, %v8449
        %v8451 = vrot.slane %v7492, %v8450
        %v8452 = vlaneseq
        %v8453 = vshrl.u32 %v8452, 7
        %v8454 = vsub.s32 0, %v8453
        %v8455 = vrot.slane %v7493, %v8454
        %v8456 = vlaneseq
        %v8457 = vshrl.u32 %v8456, 7
        %v8458 = vsub.s32 0, %v8457
        %v8459 = vrot.slane %v7494, %v8458
        %v8460 = vlaneseq
        %v8461 = vshrl.u32 %v8460, 7
        %v8462 = vsub.s32 0, %v8461
        %v8463 = vrot.slane %v7495, %v8462
        %v8464 = vlaneseq
        %v8465 = vshrl.u32 %v8464, 7
        %v8466 = vsub.s32 0, %v8465
        %v8467 = vrot.slane %v7496, %v8466
        %v8468 = vlaneseq
        %v8469 = vshrl.u32 %v8468, 7
        %v8470 = vsub.s32 0, %v8469
        %v8471 = vrot.slane %v7497, %v8470
        %v8472 = vlaneseq
        %v8473 = vshrl.u32 %v8472, 7
        %v8474 = vsub.s32 0, %v8473
        %v8475 = vrot.slane %v7498, %v8474
        %v8476 = vlaneseq
        %v8477 = vshrl.u32 %v8476, 7
        %v8478 = vsub.s32 0, %v8477
        %v8479 = vrot.slane %v7499, %v8478
        %v8480 = vlaneseq
        %v8481 = vshrl.u32 %v8480, 7
        %v8482 = vsub.s32 0, %v8481
        %v8483 = vrot.slane %v7500, %v8482
        %v8484 = vlaneseq
        %v8485 = vshrl.u32 %v8484, 7
        %v8486 = vsub.s32 0, %v8485
        %v8487 = vrot.slane %v7501, %v8486
        %v8488 = vlaneseq
        %v8489 = vshrl.u32 %v8488, 7
        %v8490 = vsub.s32 0, %v8489
        %v8491 = vrot.slane %v7502, %v8490
        %v8492 = vlaneseq
        %v8493 = vshrl.u32 %v8492, 7
        %v8494 = vsub.s32 0, %v8493
        %v8495 = vrot.slane %v7503, %v8494
        %v8496 = vlaneseq
        %v8497 = vshrl.u32 %v8496, 7
        %v8498 = vsub.s32 0, %v8497
        %v8499 = vrot.slane %v7504, %v8498
        %v8500 = vlaneseq
        %v8501 = vshrl.u32 %v8500, 7
        %v8502 = vsub.s32 0, %v8501
        %v8503 = vrot.slane %v7505, %v8502
        %v8504 = vlaneseq
        %v8505 = vshrl.u32 %v8504, 7
        %v8506 = vsub.s32 0, %v8505
        %v8507 = vrot.slane %v7506, %v8506
        %v8508 = vlaneseq
        %v8509 = vshrl.u32 %v8508, 7
        %v8510 = vsub.s32 0, %v8509
        %v8511 = vrot.slane %v7507, %v8510
        %v8512 = vlaneseq
        %v8513 = vshrl.u32 %v8512, 7
        %v8514 = vsub.s32 0, %v8513
        %v8515 = vrot.slane %v7508, %v8514
        %v8516 = vlaneseq
        %v8517 = vshrl.u32 %v8516, 7
        %v8518 = vsub.s32 0, %v8517
        %v8519 = vrot.slane %v7509, %v8518
        %v8520 = vlaneseq
        %v8521 = vshrl.u32 %v8520, 7
        %v8522 = vsub.s32 0, %v8521
        %v8523 = vrot.slane %v7510, %v8522
        %v8524 = vlaneseq
        %v8525 = vshrl.u32 %v8524, 7
        %v8526 = vsub.s32 0, %v8525
        %v8527 = vrot.slane %v7511, %v8526
        %v8528 = vlaneseq
        %v8529 = vshrl.u32 %v8528, 7
        %v8530 = vsub.s32 0, %v8529
        %v8531 = vrot.slane %v7512, %v8530
        %v8532 = vlaneseq
        %v8533 = vshrl.u32 %v8532, 7
        %v8534 = vsub.s32 0, %v8533
        %v8535 = vrot.slane %v7513, %v8534
        %v8536 = vlaneseq
        %v8537 = vshrl.u32 %v8536, 7
        %v8538 = vsub.s32 0, %v8537
        %v8539 = vrot.slane %v7514, %v8538
        %v8540 = vlaneseq
        %v8541 = vshrl.u32 %v8540, 7
        %v8542 = vsub.s32 0, %v8541
        %v8543 = vrot.slane %v7515, %v8542
        %v8544 = vlaneseq
        %v8545 = vshrl.u32 %v8544, 7
        %v8546 = vsub.s32 0, %v8545
        %v8547 = vrot.slane %v7516, %v8546
        %v8548 = vlaneseq
        %v8549 = vshrl.u32 %v8548, 7
        %v8550 = vsub.s32 0, %v8549
        %v8551 = vrot.slane %v7517, %v8550
        %v8552 = vlaneseq
        %v8553 = vshrl.u32 %v8552, 7
        %v8554 = vsub.s32 0, %v8553
        %v8555 = vrot.slane %v7518, %v8554
        %v8556 = vlaneseq
        %v8557 = vshrl.u32 %v8556, 7
        %v8558 = vsub.s32 0, %v8557
        %v8559 = vrot.slane %v7519, %v8558
        %v8560 = vlaneseq
        %v8561 = vshrl.u32 %v8560, 7
        %v8562 = vsub.s32 0, %v8561
        %v8563 = vrot.slane %v7520, %v8562
        %v8564 = vlaneseq
        %v8565 = vshrl.u32 %v8564, 7
        %v8566 = vsub.s32 0, %v8565
        %v8567 = vrot.slane %v7521, %v8566
        %v8568 = vlaneseq
        %v8569 = vshrl.u32 %v8568, 7
        %v8570 = vsub.s32 0, %v8569
        %v8571 = vrot.slane %v7522, %v8570
        %v8572 = vlaneseq
        %v8573 = vshrl.u32 %v8572, 7
        %v8574 = vsub.s32 0, %v8573
        %v8575 = vrot.slane %v7523, %v8574
        %v8576 = vlaneseq
        %v8577 = vshrl.u32 %v8576, 7
        %v8578 = vsub.s32 0, %v8577
        %v8579 = vrot.slane %v7524, %v8578
        %v8580 = vlaneseq
        %v8581 = vshrl.u32 %v8580, 7
        %v8582 = vsub.s32 0, %v8581
        %v8583 = vrot.slane %v7525, %v8582
        %v8584 = vlaneseq
        %v8585 = vshrl.u32 %v8584, 7
        %v8586 = vsub.s32 0, %v8585
        %v8587 = vrot.slane %v7526, %v8586
        %v8588 = vlaneseq
        %v8589 = vshrl.u32 %v8588, 7
        %v8590 = vsub.s32 0, %v8589
        %v8591 = vrot.slane %v7527, %v8590
        %v8592 = vlaneseq
        %v8593 = vshrl.u32 %v8592, 7
        %v8594 = vsub.s32 0, %v8593
        %v8595 = vrot.slane %v7528, %v8594
        %v8596 = vlaneseq
        %v8597 = vshrl.u32 %v8596, 7
        %v8598 = vsub.s32 0, %v8597
        %v8599 = vrot.slane %v7529, %v8598
        %v8600 = vlaneseq
        %v8601 = vshrl.u32 %v8600, 7
        %v8602 = vsub.s32 0, %v8601
        %v8603 = vrot.slane %v7530, %v8602
        %v8604 = vlaneseq
        %v8605 = vshrl.u32 %v8604, 7
        %v8606 = vsub.s32 0, %v8605
        %v8607 = vrot.slane %v7531, %v8606
        %v8608 = vlaneseq
        %v8609 = vshrl.u32 %v8608, 7
        %v8610 = vsub.s32 0, %v8609
        %v8611 = vrot.slane %v7532, %v8610
        %v8612 = vlaneseq
        %v8613 = vshrl.u32 %v8612, 7
        %v8614 = vsub.s32 0, %v8613
        %v8615 = vrot.slane %v7533, %v8614
        %v8616 = vlaneseq
        %v8617 = vshrl.u32 %v8616, 7
        %v8618 = vsub.s32 0, %v8617
        %v8619 = vrot.slane %v7534, %v8618
        %v8620 = vlaneseq
        %v8621 = vshrl.u32 %v8620, 7
        %v8622 = vsub.s32 0, %v8621
        %v8623 = vrot.slane %v7535, %v8622
        %v8624 = vlaneseq
        %v8625 = vshrl.u32 %v8624, 7
        %v8626 = vsub.s32 0, %v8625
        %v8627 = vrot.slane %v7536, %v8626
        %v8628 = vlaneseq
        %v8629 = vshrl.u32 %v8628, 7
        %v8630 = vsub.s32 0, %v8629
        %v8631 = vrot.slane %v7537, %v8630
        %v8632 = vlaneseq
        %v8633 = vshrl.u32 %v8632, 7
        %v8634 = vsub.s32 0, %v8633
        %v8635 = vrot.slane %v7538, %v8634
        %v8636 = vlaneseq
        %v8637 = vshrl.u32 %v8636, 7
        %v8638 = vsub.s32 0, %v8637
        %v8639 = vrot.slane %v7539, %v8638
        %v8640 = vlaneseq
        %v8641 = vshrl.u32 %v8640, 7
        %v8642 = vsub.s32 0, %v8641
        %v8643 = vrot.slane %v7540, %v8642
        %v8644 = vlaneseq
        %v8645 = vshrl.u32 %v8644, 7
        %v8646 = vsub.s32 0, %v8645
        %v8647 = vrot.slane %v7541, %v8646
        %v8648 = vlaneseq
        %v8649 = vshrl.u32 %v8648, 7
        %v8650 = vsub.s32 0, %v8649
        %v8651 = vrot.slane %v7542, %v8650
        %v8652 = vlaneseq
        %v8653 = vshrl.u32 %v8652, 7
        %v8654 = vsub.s32 0, %v8653
        %v8655 = vrot.slane %v7543, %v8654
        %v8656 = vlaneseq
        %v8657 = vshrl.u32 %v8656, 7
        %v8658 = vsub.s32 0, %v8657
        %v8659 = vrot.slane %v7544, %v8658
        %v8660 = vlaneseq
        %v8661 = vshrl.u32 %v8660, 7
        %v8662 = vsub.s32 0, %v8661
        %v8663 = vrot.slane %v7545, %v8662
        %v8664 = vlaneseq
        %v8665 = vshrl.u32 %v8664, 7
        %v8666 = vsub.s32 0, %v8665
        %v8667 = vrot.slane %v7546, %v8666
        %v8668 = vlaneseq
        %v8669 = vshrl.u32 %v8668, 7
        %v8670 = vsub.s32 0, %v8669
        %v8671 = vrot.slane %v7547, %v8670
        %v8672 = vlaneseq
        %v8673 = vshrl.u32 %v8672, 7
        %v8674 = vsub.s32 0, %v8673
        %v8675 = vrot.slane %v7548, %v8674
        %v8676 = vlaneseq
        %v8677 = vshrl.u32 %v8676, 7
        %v8678 = vsub.s32 0, %v8677
        %v8679 = vrot.slane %v7549, %v8678
        %v8680 = vlaneseq
        %v8681 = vshrl.u32 %v8680, 7
        %v8682 = vsub.s32 0, %v8681
        %v8683 = vrot.slane %v7550, %v8682
        %v8684 = vlaneseq
        %v8685 = vshrl.u32 %v8684, 7
        %v8686 = vsub.s32 0, %v8685
        %v8687 = vrot.slane %v7551, %v8686
        %v8688 = vlaneseq
        %v8689 = vshrl.u32 %v8688, 7
        %v8690 = vsub.s32 0, %v8689
        %v8691 = vrot.slane %v7552, %v8690
        %v8692 = vlaneseq
        %v8693 = vshrl.u32 %v8692, 7
        %v8694 = vsub.s32 0, %v8693
        %v8695 = vrot.slane %v7553, %v8694
        %v8696 = vlaneseq
        %v8697 = vshrl.u32 %v8696, 7
        %v8698 = vsub.s32 0, %v8697
        %v8699 = vrot.slane %v7554, %v8698
        %v8700 = vlaneseq
        %v8701 = vshrl.u32 %v8700, 7
        %v8702 = vsub.s32 0, %v8701
        %v8703 = vrot.slane %v7555, %v8702
        %v8704 = vlaneseq
        %v8705 = vshrl.u32 %v8704, 7
        %v8706 = vsub.s32 0, %v8705
        %v8707 = vrot.slane %v7556, %v8706
        %v8708 = vlaneseq
        %v8709 = vshrl.u32 %v8708, 7
        %v8710 = vsub.s32 0, %v8709
        %v8711 = vrot.slane %v7557, %v8710
        %v8712 = vlaneseq
        %v8713 = vshrl.u32 %v8712, 7
        %v8714 = vsub.s32 0, %v8713
        %v8715 = vrot.slane %v7558, %v8714
        %v8716 = vlaneseq
        %v8717 = vshrl.u32 %v8716, 7
        %v8718 = vsub.s32 0, %v8717
        %v8719 = vrot.slane %v7559, %v8718
        %v8720 = vlaneseq
        %v8721 = vshrl.u32 %v8720, 7
        %v8722 = vsub.s32 0, %v8721
        %v8723 = vrot.slane %v7560, %v8722
        %v8724 = vlaneseq
        %v8725 = vshrl.u32 %v8724, 7
        %v8726 = vsub.s32 0, %v8725
        %v8727 = vrot.slane %v7561, %v8726
        %v8728 = vlaneseq
        %v8729 = vshrl.u32 %v8728, 7
        %v8730 = vsub.s32 0, %v8729
        %v8731 = vrot.slane %v7562, %v8730
        %v8732 = vlaneseq
        %v8733 = vshrl.u32 %v8732, 7
        %v8734 = vsub.s32 0, %v8733
        %v8735 = vrot.slane %v7563, %v8734
        %v8736 = vlaneseq
        %v8737 = vshrl.u32 %v8736, 7
        %v8738 = vsub.s32 0, %v8737
        %v8739 = vrot.slane %v7564, %v8738
        %v8740 = vlaneseq
        %v8741 = vshrl.u32 %v8740, 7
        %v8742 = vsub.s32 0, %v8741
        %v8743 = vrot.slane %v7565, %v8742
        %v8744 = vlaneseq
        %v8745 = vshrl.u32 %v8744, 7
        %v8746 = vsub.s32 0, %v8745
        %v8747 = vrot.slane %v7566, %v8746
        %v8748 = vlaneseq
        %v8749 = vshrl.u32 %v8748, 7
        %v8750 = vsub.s32 0, %v8749
        %v8751 = vrot.slane %v7567, %v8750
        %v8752 = vlaneseq
        %v8753 = vshrl.u32 %v8752, 7
        %v8754 = vsub.s32 0, %v8753
        %v8755 = vrot.slane %v7568, %v8754
        %v8756 = vlaneseq
        %v8757 = vshrl.u32 %v8756, 7
        %v8758 = vsub.s32 0, %v8757
        %v8759 = vrot.slane %v7569, %v8758
        %v8760 = vlaneseq
        %v8761 = vshrl.u32 %v8760, 7
        %v8762 = vsub.s32 0, %v8761
        %v8763 = vrot.slane %v7570, %v8762
        %v8764 = vlaneseq
        %v8765 = vshrl.u32 %v8764, 7
        %v8766 = vsub.s32 0, %v8765
        %v8767 = vrot.slane %v7571, %v8766
        %v8768 = vlaneseq
        %v8769 = vshrl.u32 %v8768, 7
        %v8770 = vsub.s32 0, %v8769
        %v8771 = vrot.slane %v7572, %v8770
        %v8772 = vlaneseq
        %v8773 = vshrl.u32 %v8772, 7
        %v8774 = vsub.s32 0, %v8773
        %v8775 = vrot.slane %v7573, %v8774
        %v8776 = vlaneseq
        %v8777 = vshrl.u32 %v8776, 7
        %v8778 = vsub.s32 0, %v8777
        %v8779 = vrot.slane %v7574, %v8778
        %v8780 = vlaneseq
        %v8781 = vshrl.u32 %v8780, 7
        %v8782 = vsub.s32 0, %v8781
        %v8783 = vrot.slane %v7575, %v8782
        %v8784 = vlaneseq
        %v8785 = vshrl.u32 %v8784, 7
        %v8786 = vsub.s32 0, %v8785
        %v8787 = vrot.slane %v7576, %v8786
        %v8788 = vlaneseq
        %v8789 = vshrl.u32 %v8788, 7
        %v8790 = vsub.s32 0, %v8789
        %v8791 = vrot.slane %v7577, %v8790
        %v8792 = vlaneseq
        %v8793 = vshrl.u32 %v8792, 7
        %v8794 = vsub.s32 0, %v8793
        %v8795 = vrot.slane %v7578, %v8794
        %v8796 = vlaneseq
        %v8797 = vshrl.u32 %v8796, 7
        %v8798 = vsub.s32 0, %v8797
        %v8799 = vrot.slane %v7579, %v8798
        %v8800 = vlaneseq
        %v8801 = vshrl.u32 %v8800, 7
        %v8802 = vsub.s32 0, %v8801
        %v8803 = vrot.slane %v7580, %v8802
        %v8804 = vlaneseq
        %v8805 = vshrl.u32 %v8804, 7
        %v8806 = vsub.s32 0, %v8805
        %v8807 = vrot.slane %v7581, %v8806
        %v8808 = vlaneseq
        %v8809 = vshrl.u32 %v8808, 7
        %v8810 = vsub.s32 0, %v8809
        %v8811 = vrot.slane %v7582, %v8810
        %v8812 = vlaneseq
        %v8813 = vshrl.u32 %v8812, 7
        %v8814 = vsub.s32 0, %v8813
        %v8815 = vrot.slane %v7583, %v8814
        %v8816 = vlaneseq
        %v8817 = vshrl.u32 %v8816, 7
        %v8818 = vsub.s32 0, %v8817
        %v8819 = vrot.slane %v7584, %v8818
        %v8820 = vlaneseq
        %v8821 = vshrl.u32 %v8820, 7
        %v8822 = vsub.s32 0, %v8821
        %v8823 = vrot.slane %v7585, %v8822
        %v8824 = vlaneseq
        %v8825 = vshrl.u32 %v8824, 7
        %v8826 = vsub.s32 0, %v8825
        %v8827 = vrot.slane %v7586, %v8826
        %v8828 = vlaneseq
        %v8829 = vshrl.u32 %v8828, 7
        %v8830 = vsub.s32 0, %v8829
        %v8831 = vrot.slane %v7587, %v8830
        %v8832 = vlaneseq
        %v8833 = vshrl.u32 %v8832, 7
        %v8834 = vsub.s32 0, %v8833
        %v8835 = vrot.slane %v7588, %v8834
        %v8836 = vlaneseq
        %v8837 = vshrl.u32 %v8836, 7
        %v8838 = vsub.s32 0, %v8837
        %v8839 = vrot.slane %v7589, %v8838
        %v8840 = vlaneseq
        %v8841 = vshrl.u32 %v8840, 7
        %v8842 = vsub.s32 0, %v8841
        %v8843 = vrot.slane %v7590, %v8842
        %v8844 = vlaneseq
        %v8845 = vshrl.u32 %v8844, 7
        %v8846 = vsub.s32 0, %v8845
        %v8847 = vrot.slane %v7591, %v8846
        %v8848 = vlaneseq
        %v8849 = vshrl.u32 %v8848, 7
        %v8850 = vsub.s32 0, %v8849
        %v8851 = vrot.slane %v7592, %v8850
        %v8852 = vlaneseq
        %v8853 = vshrl.u32 %v8852, 7
        %v8854 = vsub.s32 0, %v8853
        %v8855 = vrot.slane %v7593, %v8854
        %v8856 = vlaneseq
        %v8857 = vshrl.u32 %v8856, 7
        %v8858 = vsub.s32 0, %v8857
        %v8859 = vrot.slane %v7594, %v8858
        %v8860 = vlaneseq
        %v8861 = vshrl.u32 %v8860, 7
        %v8862 = vsub.s32 0, %v8861
        %v8863 = vrot.slane %v7595, %v8862
        %v8864 = vlaneseq
        %v8865 = vshrl.u32 %v8864, 7
        %v8866 = vsub.s32 0, %v8865
        %v8867 = vrot.slane %v7596, %v8866
        %v8868 = vlaneseq
        %v8869 = vshrl.u32 %v8868, 7
        %v8870 = vsub.s32 0, %v8869
        %v8871 = vrot.slane %v7597, %v8870
        %v8872 = vlaneseq
        %v8873 = vshrl.u32 %v8872, 7
        %v8874 = vsub.s32 0, %v8873
        %v8875 = vrot.slane %v7598, %v8874
        %v8876 = vlaneseq
        %v8877 = vshrl.u32 %v8876, 7
        %v8878 = vsub.s32 0, %v8877
        %v8879 = vrot.slane %v7599, %v8878
        %v8880 = vlaneseq
        %v8881 = vshrl.u32 %v8880, 7
        %v8882 = vsub.s32 0, %v8881
        %v8883 = vrot.slane %v7600, %v8882
        %v8884 = vlaneseq
        %v8885 = vshrl.u32 %v8884, 7
        %v8886 = vsub.s32 0, %v8885
        %v8887 = vrot.slane %v7601, %v8886
        %v8888 = vlaneseq
        %v8889 = vshrl.u32 %v8888, 7
        %v8890 = vsub.s32 0, %v8889
        %v8891 = vrot.slane %v7602, %v8890
        %v8892 = vlaneseq
        %v8893 = vshrl.u32 %v8892, 7
        %v8894 = vsub.s32 0, %v8893
        %v8895 = vrot.slane %v7603, %v8894
        %v8896 = vlaneseq
        %v8897 = vshrl.u32 %v8896, 7
        %v8898 = vsub.s32 0, %v8897
        %v8899 = vrot.slane %v7604, %v8898
        %v8900 = vlaneseq
        %v8901 = vshrl.u32 %v8900, 7
        %v8902 = vsub.s32 0, %v8901
        %v8903 = vrot.slane %v7605, %v8902
        %v8904 = vlaneseq
        %v8905 = vshrl.u32 %v8904, 7
        %v8906 = vsub.s32 0, %v8905
        %v8907 = vrot.slane %v7606, %v8906
        %v8908 = vlaneseq
        %v8909 = vshrl.u32 %v8908, 7
        %v8910 = vsub.s32 0, %v8909
        %v8911 = vrot.slane %v7607, %v8910
        %v8912 = vlaneseq
        %v8913 = vshrl.u32 %v8912, 7
        %v8914 = vsub.s32 0, %v8913
        %v8915 = vrot.slane %v7608, %v8914
        %v8916 = vlaneseq
        %v8917 = vshrl.u32 %v8916, 7
        %v8918 = vsub.s32 0, %v8917
        %v8919 = vrot.slane %v7609, %v8918
        %v8920 = vlaneseq
        %v8921 = vshrl.u32 %v8920, 7
        %v8922 = vsub.s32 0, %v8921
        %v8923 = vrot.slane %v7610, %v8922
        %v8924 = vlaneseq
        %v8925 = vshrl.u32 %v8924, 7
        %v8926 = vsub.s32 0, %v8925
        %v8927 = vrot.slane %v7611, %v8926
        %v8928 = vlaneseq
        %v8929 = vshrl.u32 %v8928, 7
        %v8930 = vsub.s32 0, %v8929
        %v8931 = vrot.slane %v7612, %v8930
        %v8932 = vlaneseq
        %v8933 = vshrl.u32 %v8932, 7
        %v8934 = vsub.s32 0, %v8933
        %v8935 = vrot.slane %v7613, %v8934
        %v8936 = vlaneseq
        %v8937 = vshrl.u32 %v8936, 7
        %v8938 = vsub.s32 0, %v8937
        %v8939 = vrot.slane %v7614, %v8938
        %v8940 = vlaneseq
        %v8941 = vshrl.u32 %v8940, 7
        %v8942 = vsub.s32 0, %v8941
        %v8943 = vrot.slane %v7615, %v8942
        %v8944 = vlaneseq
        %v8945 = vshrl.u32 %v8944, 7
        %v8946 = vsub.s32 0, %v8945
        %v8947 = vrot.slane %v7616, %v8946
        %v8948 = vlaneseq
        %v8949 = vshrl.u32 %v8948, 7
        %v8950 = vsub.s32 0, %v8949
        %v8951 = vrot.slane %v7617, %v8950
        %vm8952 = vcmask 1041409
        %v8953 = vsel %vm8952, %v7935, %v7931
        %vm8954 = vcmask 1042434
        %v8955 = vsel %vm8954, %v7939, %v8953
        %vm8956 = vcmask 1043459
        %v8957 = vsel %vm8956, %v7943, %v8955
        %vm8958 = vcmask 1044484
        %v8959 = vsel %vm8958, %v7947, %v8957
        %vm8960 = vcmask 1045509
        %v8961 = vsel %vm8960, %v7951, %v8959
        %vm8962 = vcmask 1046534
        %v8963 = vsel %vm8962, %v7955, %v8961
        %vm8964 = vcmask 1047559
        %v8965 = vsel %vm8964, %v7959, %v8963
        %v8966 = vsel %vm8952, %v7967, %v7963
        %v8967 = vsel %vm8954, %v7971, %v8966
        %v8968 = vsel %vm8956, %v7975, %v8967
        %v8969 = vsel %vm8958, %v7979, %v8968
        %v8970 = vsel %vm8960, %v7983, %v8969
        %v8971 = vsel %vm8962, %v7987, %v8970
        %v8972 = vsel %vm8964, %v7991, %v8971
        %v8973 = vsel %vm8952, %v7999, %v7995
        %v8974 = vsel %vm8954, %v8003, %v8973
        %v8975 = vsel %vm8956, %v8007, %v8974
        %v8976 = vsel %vm8958, %v8011, %v8975
        %v8977 = vsel %vm8960, %v8015, %v8976
        %v8978 = vsel %vm8962, %v8019, %v8977
        %v8979 = vsel %vm8964, %v8023, %v8978
        %v8980 = vsel %vm8952, %v8031, %v8027
        %v8981 = vsel %vm8954, %v8035, %v8980
        %v8982 = vsel %vm8956, %v8039, %v8981
        %v8983 = vsel %vm8958, %v8043, %v8982
        %v8984 = vsel %vm8960, %v8047, %v8983
        %v8985 = vsel %vm8962, %v8051, %v8984
        %v8986 = vsel %vm8964, %v8055, %v8985
        %v8987 = vsel %vm8952, %v8063, %v8059
        %v8988 = vsel %vm8954, %v8067, %v8987
        %v8989 = vsel %vm8956, %v8071, %v8988
        %v8990 = vsel %vm8958, %v8075, %v8989
        %v8991 = vsel %vm8960, %v8079, %v8990
        %v8992 = vsel %vm8962, %v8083, %v8991
        %v8993 = vsel %vm8964, %v8087, %v8992
        %v8994 = vsel %vm8952, %v8095, %v8091
        %v8995 = vsel %vm8954, %v8099, %v8994
        %v8996 = vsel %vm8956, %v8103, %v8995
        %v8997 = vsel %vm8958, %v8107, %v8996
        %v8998 = vsel %vm8960, %v8111, %v8997
        %v8999 = vsel %vm8962, %v8115, %v8998
        %v9000 = vsel %vm8964, %v8119, %v8999
        %v9001 = vsel %vm8952, %v8127, %v8123
        %v9002 = vsel %vm8954, %v8131, %v9001
        %v9003 = vsel %vm8956, %v8135, %v9002
        %v9004 = vsel %vm8958, %v8139, %v9003
        %v9005 = vsel %vm8960, %v8143, %v9004
        %v9006 = vsel %vm8962, %v8147, %v9005
        %v9007 = vsel %vm8964, %v8151, %v9006
        %v9008 = vsel %vm8952, %v8159, %v8155
        %v9009 = vsel %vm8954, %v8163, %v9008
        %v9010 = vsel %vm8956, %v8167, %v9009
        %v9011 = vsel %vm8958, %v8171, %v9010
        %v9012 = vsel %vm8960, %v8175, %v9011
        %v9013 = vsel %vm8962, %v8179, %v9012
        %v9014 = vsel %vm8964, %v8183, %v9013
        %v9015 = vsel %vm8952, %v8191, %v8187
        %v9016 = vsel %vm8954, %v8195, %v9015
        %v9017 = vsel %vm8956, %v8199, %v9016
        %v9018 = vsel %vm8958, %v8203, %v9017
        %v9019 = vsel %vm8960, %v8207, %v9018
        %v9020 = vsel %vm8962, %v8211, %v9019
        %v9021 = vsel %vm8964, %v8215, %v9020
        %v9022 = vsel %vm8952, %v8223, %v8219
        %v9023 = vsel %vm8954, %v8227, %v9022
        %v9024 = vsel %vm8956, %v8231, %v9023
        %v9025 = vsel %vm8958, %v8235, %v9024
        %v9026 = vsel %vm8960, %v8239, %v9025
        %v9027 = vsel %vm8962, %v8243, %v9026
        %v9028 = vsel %vm8964, %v8247, %v9027
        %v9029 = vsel %vm8952, %v8255, %v8251
        %v9030 = vsel %vm8954, %v8259, %v9029
        %v9031 = vsel %vm8956, %v8263, %v9030
        %v9032 = vsel %vm8958, %v8267, %v9031
        %v9033 = vsel %vm8960, %v8271, %v9032
        %v9034 = vsel %vm8962, %v8275, %v9033
        %v9035 = vsel %vm8964, %v8279, %v9034
        %v9036 = vsel %vm8952, %v8287, %v8283
        %v9037 = vsel %vm8954, %v8291, %v9036
        %v9038 = vsel %vm8956, %v8295, %v9037
        %v9039 = vsel %vm8958, %v8299, %v9038
        %v9040 = vsel %vm8960, %v8303, %v9039
        %v9041 = vsel %vm8962, %v8307, %v9040
        %v9042 = vsel %vm8964, %v8311, %v9041
        %v9043 = vsel %vm8952, %v8319, %v8315
        %v9044 = vsel %vm8954, %v8323, %v9043
        %v9045 = vsel %vm8956, %v8327, %v9044
        %v9046 = vsel %vm8958, %v8331, %v9045
        %v9047 = vsel %vm8960, %v8335, %v9046
        %v9048 = vsel %vm8962, %v8339, %v9047
        %v9049 = vsel %vm8964, %v8343, %v9048
        %v9050 = vsel %vm8952, %v8351, %v8347
        %v9051 = vsel %vm8954, %v8355, %v9050
        %v9052 = vsel %vm8956, %v8359, %v9051
        %v9053 = vsel %vm8958, %v8363, %v9052
        %v9054 = vsel %vm8960, %v8367, %v9053
        %v9055 = vsel %vm8962, %v8371, %v9054
        %v9056 = vsel %vm8964, %v8375, %v9055
        %v9057 = vsel %vm8952, %v8383, %v8379
        %v9058 = vsel %vm8954, %v8387, %v9057
        %v9059 = vsel %vm8956, %v8391, %v9058
        %v9060 = vsel %vm8958, %v8395, %v9059
        %v9061 = vsel %vm8960, %v8399, %v9060
        %v9062 = vsel %vm8962, %v8403, %v9061
        %v9063 = vsel %vm8964, %v8407, %v9062
        %v9064 = vsel %vm8952, %v8415, %v8411
        %v9065 = vsel %vm8954, %v8419, %v9064
        %v9066 = vsel %vm8956, %v8423, %v9065
        %v9067 = vsel %vm8958, %v8427, %v9066
        %v9068 = vsel %vm8960, %v8431, %v9067
        %v9069 = vsel %vm8962, %v8435, %v9068
        %v9070 = vsel %vm8964, %v8439, %v9069
        %v9071 = vsel %vm8952, %v8447, %v8443
        %v9072 = vsel %vm8954, %v8451, %v9071
        %v9073 = vsel %vm8956, %v8455, %v9072
        %v9074 = vsel %vm8958, %v8459, %v9073
        %v9075 = vsel %vm8960, %v8463, %v9074
        %v9076 = vsel %vm8962, %v8467, %v9075
        %v9077 = vsel %vm8964, %v8471, %v9076
        %v9078 = vsel %vm8952, %v8479, %v8475
        %v9079 = vsel %vm8954, %v8483, %v9078
        %v9080 = vsel %vm8956, %v8487, %v9079
        %v9081 = vsel %vm8958, %v8491, %v9080
        %v9082 = vsel %vm8960, %v8495, %v9081
        %v9083 = vsel %vm8962, %v8499, %v9082
        %v9084 = vsel %vm8964, %v8503, %v9083
        %v9085 = vsel %vm8952, %v8511, %v8507
        %v9086 = vsel %vm8954, %v8515, %v9085
        %v9087 = vsel %vm8956, %v8519, %v9086
        %v9088 = vsel %vm8958, %v8523, %v9087
        %v9089 = vsel %vm8960, %v8527, %v9088
        %v9090 = vsel %vm8962, %v8531, %v9089
        %v9091 = vsel %vm8964, %v8535, %v9090
        %v9092 = vsel %vm8952, %v8543, %v8539
        %v9093 = vsel %vm8954, %v8547, %v9092
        %v9094 = vsel %vm8956, %v8551, %v9093
        %v9095 = vsel %vm8958, %v8555, %v9094
        %v9096 = vsel %vm8960, %v8559, %v9095
        %v9097 = vsel %vm8962, %v8563, %v9096
        %v9098 = vsel %vm8964, %v8567, %v9097
        %v9099 = vsel %vm8952, %v8575, %v8571
        %v9100 = vsel %vm8954, %v8579, %v9099
        %v9101 = vsel %vm8956, %v8583, %v9100
        %v9102 = vsel %vm8958, %v8587, %v9101
        %v9103 = vsel %vm8960, %v8591, %v9102
        %v9104 = vsel %vm8962, %v8595, %v9103
        %v9105 = vsel %vm8964, %v8599, %v9104
        %v9106 = vsel %vm8952, %v8607, %v8603
        %v9107 = vsel %vm8954, %v8611, %v9106
        %v9108 = vsel %vm8956, %v8615, %v9107
        %v9109 = vsel %vm8958, %v8619, %v9108
        %v9110 = vsel %vm8960, %v8623, %v9109
        %v9111 = vsel %vm8962, %v8627, %v9110
        %v9112 = vsel %vm8964, %v8631, %v9111
        %v9113 = vsel %vm8952, %v8639, %v8635
        %v9114 = vsel %vm8954, %v8643, %v9113
        %v9115 = vsel %vm8956, %v8647, %v9114
        %v9116 = vsel %vm8958, %v8651, %v9115
        %v9117 = vsel %vm8960, %v8655, %v9116
        %v9118 = vsel %vm8962, %v8659, %v9117
        %v9119 = vsel %vm8964, %v8663, %v9118
        %v9120 = vsel %vm8952, %v8671, %v8667
        %v9121 = vsel %vm8954, %v8675, %v9120
        %v9122 = vsel %vm8956, %v8679, %v9121
        %v9123 = vsel %vm8958, %v8683, %v9122
        %v9124 = vsel %vm8960, %v8687, %v9123
        %v9125 = vsel %vm8962, %v8691, %v9124
        %v9126 = vsel %vm8964, %v8695, %v9125
        %v9127 = vsel %vm8952, %v8703, %v8699
        %v9128 = vsel %vm8954, %v8707, %v9127
        %v9129 = vsel %vm8956, %v8711, %v9128
        %v9130 = vsel %vm8958, %v8715, %v9129
        %v9131 = vsel %vm8960, %v8719, %v9130
        %v9132 = vsel %vm8962, %v8723, %v9131
        %v9133 = vsel %vm8964, %v8727, %v9132
        %v9134 = vsel %vm8952, %v8735, %v8731
        %v9135 = vsel %vm8954, %v8739, %v9134
        %v9136 = vsel %vm8956, %v8743, %v9135
        %v9137 = vsel %vm8958, %v8747, %v9136
        %v9138 = vsel %vm8960, %v8751, %v9137
        %v9139 = vsel %vm8962, %v8755, %v9138
        %v9140 = vsel %vm8964, %v8759, %v9139
        %v9141 = vsel %vm8952, %v8767, %v8763
        %v9142 = vsel %vm8954, %v8771, %v9141
        %v9143 = vsel %vm8956, %v8775, %v9142
        %v9144 = vsel %vm8958, %v8779, %v9143
        %v9145 = vsel %vm8960, %v8783, %v9144
        %v9146 = vsel %vm8962, %v8787, %v9145
        %v9147 = vsel %vm8964, %v8791, %v9146
        %v9148 = vsel %vm8952, %v8799, %v8795
        %v9149 = vsel %vm8954, %v8803, %v9148
        %v9150 = vsel %vm8956, %v8807, %v9149
        %v9151 = vsel %vm8958, %v8811, %v9150
        %v9152 = vsel %vm8960, %v8815, %v9151
        %v9153 = vsel %vm8962, %v8819, %v9152
        %v9154 = vsel %vm8964, %v8823, %v9153
        %v9155 = vsel %vm8952, %v8831, %v8827
        %v9156 = vsel %vm8954, %v8835, %v9155
        %v9157 = vsel %vm8956, %v8839, %v9156
        %v9158 = vsel %vm8958, %v8843, %v9157
        %v9159 = vsel %vm8960, %v8847, %v9158
        %v9160 = vsel %vm8962, %v8851, %v9159
        %v9161 = vsel %vm8964, %v8855, %v9160
        %v9162 = vsel %vm8952, %v8863, %v8859
        %v9163 = vsel %vm8954, %v8867, %v9162
        %v9164 = vsel %vm8956, %v8871, %v9163
        %v9165 = vsel %vm8958, %v8875, %v9164
        %v9166 = vsel %vm8960, %v8879, %v9165
        %v9167 = vsel %vm8962, %v8883, %v9166
        %v9168 = vsel %vm8964, %v8887, %v9167
        %v9169 = vsel %vm8952, %v8895, %v8891
        %v9170 = vsel %vm8954, %v8899, %v9169
        %v9171 = vsel %vm8956, %v8903, %v9170
        %v9172 = vsel %vm8958, %v8907, %v9171
        %v9173 = vsel %vm8960, %v8911, %v9172
        %v9174 = vsel %vm8962, %v8915, %v9173
        %v9175 = vsel %vm8964, %v8919, %v9174
        %v9176 = vsel %vm8952, %v8927, %v8923
        %v9177 = vsel %vm8954, %v8931, %v9176
        %v9178 = vsel %vm8956, %v8935, %v9177
        %v9179 = vsel %vm8958, %v8939, %v9178
        %v9180 = vsel %vm8960, %v8943, %v9179
        %v9181 = vsel %vm8962, %v8947, %v9180
        %v9182 = vsel %vm8964, %v8951, %v9181
        %s9215 = scalar_lea.vmem [#allocation2], 24
        %9216 = vst [vmem:[%s9215 + $0x1] sm:$0xff] %v8965
        %9217 = vst [vmem:[%s9215 + $0x9] sm:$0xff] %v8972
        %9218 = vst [vmem:[%s9215 + $0x19] sm:$0xff] %v8979
        %9219 = vst [vmem:[%s9215 + $0x21] sm:$0xff] %v8986
        %9220 = vst [vmem:[%s9215 + $0x31] sm:$0xff] %v8993
        %9221 = vst [vmem:[%s9215 + $0x39] sm:$0xff] %v9000
        %9222 = vst [vmem:[%s9215 + $0x49] sm:$0xff] %v9007
        %9223 = vst [vmem:[%s9215 + $0x51] sm:$0xff] %v9014
        %9224 = vst [vmem:[%s9215 + $0x61] sm:$0xff] %v9021
        %9225 = vst [vmem:[%s9215 + $0x69] sm:$0xff] %v9028
        %9226 = vst [vmem:[%s9215 + $0x79] sm:$0xff] %v9035
        %9227 = vst [vmem:[%s9215 + $0x81] sm:$0xff] %v9042
        %9228 = vst [vmem:[%s9215 + $0x91] sm:$0xff] %v9049
        %9229 = vst [vmem:[%s9215 + $0x99] sm:$0xff] %v9056
        %9230 = vst [vmem:[%s9215 + $0xa9] sm:$0xff] %v9063
        %9231 = vst [vmem:[%s9215 + $0xb1] sm:$0xff] %v9070
        %9232 = vst [vmem:[%s9215 + $0xc1] sm:$0xff] %v9077
        %9233 = vst [vmem:[%s9215 + $0xc9] sm:$0xff] %v9084
        %9234 = vst [vmem:[%s9215 + $0xd9] sm:$0xff] %v9091
        %9235 = vst [vmem:[%s9215 + $0xe1] sm:$0xff] %v9098
        %9236 = vst [vmem:[%s9215 + $0xf1] sm:$0xff] %v9105
        %9237 = vst [vmem:[%s9215 + $0xf9] sm:$0xff] %v9112
        %9238 = vst [vmem:[%s9215 + $0x109] sm:$0xff] %v9119
        %9239 = vst [vmem:[%s9215 + $0x111] sm:$0xff] %v9126
        %9240 = vst [vmem:[%s9215 + $0x121] sm:$0xff] %v9133
        %9241 = vst [vmem:[%s9215 + $0x129] sm:$0xff] %v9140
        %9242 = vst [vmem:[%s9215 + $0x139] sm:$0xff] %v9147
        %9243 = vst [vmem:[%s9215 + $0x141] sm:$0xff] %v9154
        %9244 = vst [vmem:[%s9215 + $0x151] sm:$0xff] %v9161
        %9245 = vst [vmem:[%s9215 + $0x159] sm:$0xff] %v9168
        %9246 = vst [vmem:[%s9215 + $0x169] sm:$0xff] %v9175
        %9247 = vst [vmem:[%s9215 + $0x171] sm:$0xff] %v9182
        %v9248 = vld [vmem:[%s7] sm:$0xff]
        %v9249 = vld [vmem:[%s7 + $0x8] sm:$0x1]
        %v9250 = vld [vmem:[#allocation2] ss:$2 sm:$0xff]
        %s9251 = scalar_lea.vmem [#allocation2], 48
        %v9252 = vld [vmem:[%s9251] ss:$2 sm:$0xff]
        %s9253 = scalar_lea.vmem [#allocation2], 96
        %v9254 = vld [vmem:[%s9253] ss:$2 sm:$0xff]
        %s9255 = scalar_lea.vmem [#allocation2], 144
        %v9256 = vld [vmem:[%s9255] ss:$2 sm:$0xff]
        %s9257 = scalar_lea.vmem [#allocation2], 192
        %v9258 = vld [vmem:[%s9257] ss:$2 sm:$0xff]
        %s9259 = scalar_lea.vmem [#allocation2], 240
        %v9260 = vld [vmem:[%s9259] ss:$2 sm:$0xff]
        %s9261 = scalar_lea.vmem [#allocation2], 288
        %v9262 = vld [vmem:[%s9261] ss:$2 sm:$0xff]
        %s9263 = scalar_lea.vmem [#allocation2], 336
        %v9264 = vld [vmem:[%s9263] ss:$2 sm:$0xff]
        %v9265 = vlaneseq
        %v9266 = vshrl.u32 %v9265, 7
        %v9267 = vsub.s32 0, %v9266
        %v9268 = vrot.slane %v9248, %v9267
        %v9269 = vmul.f32 %v9250, %v9268
        %v9270 = vmul.f32 %v9252, %v9268
        %v9271 = vmul.f32 %v9254, %v9268
        %v9272 = vmul.f32 %v9256, %v9268
        %v9273 = vmul.f32 %v9258, %v9268
        %v9274 = vmul.f32 %v9260, %v9268
        %v9275 = vmul.f32 %v9262, %v9268
        %v9276 = vmul.f32 %v9264, %v9268
        %v9277 = vadd.f32 %v9269, 0.0
        %v9278 = vadd.f32 %v9270, 0.0
        %v9279 = vadd.f32 %v9271, 0.0
        %v9280 = vadd.f32 %v9272, 0.0
        %v9281 = vadd.f32 %v9273, 0.0
        %v9282 = vadd.f32 %v9274, 0.0
        %v9283 = vadd.f32 %v9275, 0.0
        %v9284 = vadd.f32 %v9276, 0.0
        %s9285 = scalar_lea.vmem [#allocation2], 1
        %v9286 = vld [vmem:[%s9285] ss:$2 sm:$0xff]
        %s9287 = scalar_lea.vmem [#allocation2], 49
        %v9288 = vld [vmem:[%s9287] ss:$2 sm:$0xff]
        %s9289 = scalar_lea.vmem [#allocation2], 97
        %v9290 = vld [vmem:[%s9289] ss:$2 sm:$0xff]
        %s9291 = scalar_lea.vmem [#allocation2], 145
        %v9292 = vld [vmem:[%s9291] ss:$2 sm:$0xff]
        %s9293 = scalar_lea.vmem [#allocation2], 193
        %v9294 = vld [vmem:[%s9293] ss:$2 sm:$0xff]
        %s9295 = scalar_lea.vmem [#allocation2], 241
        %v9296 = vld [vmem:[%s9295] ss:$2 sm:$0xff]
        %s9297 = scalar_lea.vmem [#allocation2], 289
        %v9298 = vld [vmem:[%s9297] ss:$2 sm:$0xff]
        %s9299 = scalar_lea.vmem [#allocation2], 337
        %v9300 = vld [vmem:[%s9299] ss:$2 sm:$0xff]
        %v9301 = vlaneseq
        %v9302 = vshrl.u32 %v9301, 7
        %v9303 = vsub.s32 1, %v9302
        %v9304 = vrot.slane %v9248, %v9303
        %v9305 = vmul.f32 %v9286, %v9304
        %v9306 = vmul.f32 %v9288, %v9304
        %v9307 = vmul.f32 %v9290, %v9304
        %v9308 = vmul.f32 %v9292, %v9304
        %v9309 = vmul.f32 %v9294, %v9304
        %v9310 = vmul.f32 %v9296, %v9304
        %v9311 = vmul.f32 %v9298, %v9304
        %v9312 = vmul.f32 %v9300, %v9304
        %v9313 = vadd.f32 %v9277, %v9305
        %v9314 = vadd.f32 %v9278, %v9306
        %v9315 = vadd.f32 %v9279, %v9307
        %v9316 = vadd.f32 %v9280, %v9308
        %v9317 = vadd.f32 %v9281, %v9309
        %v9318 = vadd.f32 %v9282, %v9310
        %v9319 = vadd.f32 %v9283, %v9311
        %v9320 = vadd.f32 %v9284, %v9312
        %s9321 = scalar_lea.vmem [#allocation2], 2
        %v9322 = vld [vmem:[%s9321] ss:$2 sm:$0xff]
        %s9323 = scalar_lea.vmem [#allocation2], 50
        %v9324 = vld [vmem:[%s9323] ss:$2 sm:$0xff]
        %s9325 = scalar_lea.vmem [#allocation2], 98
        %v9326 = vld [vmem:[%s9325] ss:$2 sm:$0xff]
        %s9327 = scalar_lea.vmem [#allocation2], 146
        %v9328 = vld [vmem:[%s9327] ss:$2 sm:$0xff]
        %s9329 = scalar_lea.vmem [#allocation2], 194
        %v9330 = vld [vmem:[%s9329] ss:$2 sm:$0xff]
        %s9331 = scalar_lea.vmem [#allocation2], 242
        %v9332 = vld [vmem:[%s9331] ss:$2 sm:$0xff]
        %s9333 = scalar_lea.vmem [#allocation2], 290
        %v9334 = vld [vmem:[%s9333] ss:$2 sm:$0xff]
        %s9335 = scalar_lea.vmem [#allocation2], 338
        %v9336 = vld [vmem:[%s9335] ss:$2 sm:$0xff]
        %v9337 = vlaneseq
        %v9338 = vshrl.u32 %v9337, 7
        %v9339 = vsub.s32 2, %v9338
        %v9340 = vrot.slane %v9248, %v9339
        %v9341 = vmul.f32 %v9322, %v9340
        %v9342 = vmul.f32 %v9324, %v9340
        %v9343 = vmul.f32 %v9326, %v9340
        %v9344 = vmul.f32 %v9328, %v9340
        %v9345 = vmul.f32 %v9330, %v9340
        %v9346 = vmul.f32 %v9332, %v9340
        %v9347 = vmul.f32 %v9334, %v9340
        %v9348 = vmul.f32 %v9336, %v9340
        %v9349 = vadd.f32 %v9313, %v9341
        %v9350 = vadd.f32 %v9314, %v9342
        %v9351 = vadd.f32 %v9315, %v9343
        %v9352 = vadd.f32 %v9316, %v9344
        %v9353 = vadd.f32 %v9317, %v9345
        %v9354 = vadd.f32 %v9318, %v9346
        %v9355 = vadd.f32 %v9319, %v9347
        %v9356 = vadd.f32 %v9320, %v9348
        %v9357 = vld [vmem:[%s9215] ss:$2 sm:$0xff]
        %s9358 = scalar_lea.vmem %s9215, 48 [#allocation2]
        %v9359 = vld [vmem:[%s9358] ss:$2 sm:$0xff]
        %s9360 = scalar_lea.vmem %s9215, 96 [#allocation2]
        %v9361 = vld [vmem:[%s9360] ss:$2 sm:$0xff]
        %s9362 = scalar_lea.vmem %s9215, 144 [#allocation2]
        %v9363 = vld [vmem:[%s9362] ss:$2 sm:$0xff]
        %s9364 = scalar_lea.vmem %s9215, 192 [#allocation2]
        %v9365 = vld [vmem:[%s9364] ss:$2 sm:$0xff]
        %s9366 = scalar_lea.vmem %s9215, 240 [#allocation2]
        %v9367 = vld [vmem:[%s9366] ss:$2 sm:$0xff]
        %s9368 = scalar_lea.vmem %s9215, 288 [#allocation2]
        %v9369 = vld [vmem:[%s9368] ss:$2 sm:$0xff]
        %s9370 = scalar_lea.vmem %s9215, 336 [#allocation2]
        %v9371 = vld [vmem:[%s9370] ss:$2 sm:$0xff]
        %v9372 = vlaneseq
        %v9373 = vshrl.u32 %v9372, 7
        %v9374 = vsub.s32 3, %v9373
        %v9375 = vrot.slane %v9248, %v9374
        %v9376 = vmul.f32 %v9357, %v9375
        %v9377 = vmul.f32 %v9359, %v9375
        %v9378 = vmul.f32 %v9361, %v9375
        %v9379 = vmul.f32 %v9363, %v9375
        %v9380 = vmul.f32 %v9365, %v9375
        %v9381 = vmul.f32 %v9367, %v9375
        %v9382 = vmul.f32 %v9369, %v9375
        %v9383 = vmul.f32 %v9371, %v9375
        %v9384 = vadd.f32 %v9349, %v9376
        %v9385 = vadd.f32 %v9350, %v9377
        %v9386 = vadd.f32 %v9351, %v9378
        %v9387 = vadd.f32 %v9352, %v9379
        %v9388 = vadd.f32 %v9353, %v9380
        %v9389 = vadd.f32 %v9354, %v9381
        %v9390 = vadd.f32 %v9355, %v9382
        %v9391 = vadd.f32 %v9356, %v9383
        %s9392 = scalar_lea.vmem %s9215, 1 [#allocation2]
        %v9393 = vld [vmem:[%s9392] ss:$2 sm:$0xff]
        %s9394 = scalar_lea.vmem %s9215, 49 [#allocation2]
        %v9395 = vld [vmem:[%s9394] ss:$2 sm:$0xff]
        %s9396 = scalar_lea.vmem %s9215, 97 [#allocation2]
        %v9397 = vld [vmem:[%s9396] ss:$2 sm:$0xff]
        %s9398 = scalar_lea.vmem %s9215, 145 [#allocation2]
        %v9399 = vld [vmem:[%s9398] ss:$2 sm:$0xff]
        %s9400 = scalar_lea.vmem %s9215, 193 [#allocation2]
        %v9401 = vld [vmem:[%s9400] ss:$2 sm:$0xff]
        %s9402 = scalar_lea.vmem %s9215, 241 [#allocation2]
        %v9403 = vld [vmem:[%s9402] ss:$2 sm:$0xff]
        %s9404 = scalar_lea.vmem %s9215, 289 [#allocation2]
        %v9405 = vld [vmem:[%s9404] ss:$2 sm:$0xff]
        %s9406 = scalar_lea.vmem %s9215, 337 [#allocation2]
        %v9407 = vld [vmem:[%s9406] ss:$2 sm:$0xff]
        %v9408 = vlaneseq
        %v9409 = vshrl.u32 %v9408, 7
        %v9410 = vsub.s32 4, %v9409
        %v9411 = vrot.slane %v9248, %v9410
        %v9412 = vmul.f32 %v9393, %v9411
        %v9413 = vmul.f32 %v9395, %v9411
        %v9414 = vmul.f32 %v9397, %v9411
        %v9415 = vmul.f32 %v9399, %v9411
        %v9416 = vmul.f32 %v9401, %v9411
        %v9417 = vmul.f32 %v9403, %v9411
        %v9418 = vmul.f32 %v9405, %v9411
        %v9419 = vmul.f32 %v9407, %v9411
        %v9420 = vadd.f32 %v9384, %v9412
        %v9421 = vadd.f32 %v9385, %v9413
        %v9422 = vadd.f32 %v9386, %v9414
        %v9423 = vadd.f32 %v9387, %v9415
        %v9424 = vadd.f32 %v9388, %v9416
        %v9425 = vadd.f32 %v9389, %v9417
        %v9426 = vadd.f32 %v9390, %v9418
        %v9427 = vadd.f32 %v9391, %v9419
        %s9428 = scalar_lea.vmem %s9215, 2 [#allocation2]
        %v9429 = vld [vmem:[%s9428] ss:$2 sm:$0xff]
        %s9430 = scalar_lea.vmem %s9215, 50 [#allocation2]
        %v9431 = vld [vmem:[%s9430] ss:$2 sm:$0xff]
        %s9432 = scalar_lea.vmem %s9215, 98 [#allocation2]
        %v9433 = vld [vmem:[%s9432] ss:$2 sm:$0xff]
        %s9434 = scalar_lea.vmem %s9215, 146 [#allocation2]
        %v9435 = vld [vmem:[%s9434] ss:$2 sm:$0xff]
        %s9436 = scalar_lea.vmem %s9215, 194 [#allocation2]
        %v9437 = vld [vmem:[%s9436] ss:$2 sm:$0xff]
        %s9438 = scalar_lea.vmem %s9215, 242 [#allocation2]
        %v9439 = vld [vmem:[%s9438] ss:$2 sm:$0xff]
        %s9440 = scalar_lea.vmem %s9215, 290 [#allocation2]
        %v9441 = vld [vmem:[%s9440] ss:$2 sm:$0xff]
        %s9442 = scalar_lea.vmem %s9215, 338 [#allocation2]
        %v9443 = vld [vmem:[%s9442] ss:$2 sm:$0xff]
        %v9444 = vlaneseq
        %v9445 = vshrl.u32 %v9444, 7
        %v9446 = vsub.s32 5, %v9445
        %v9447 = vrot.slane %v9248, %v9446
        %v9448 = vmul.f32 %v9429, %v9447
        %v9449 = vmul.f32 %v9431, %v9447
        %v9450 = vmul.f32 %v9433, %v9447
        %v9451 = vmul.f32 %v9435, %v9447
        %v9452 = vmul.f32 %v9437, %v9447
        %v9453 = vmul.f32 %v9439, %v9447
        %v9454 = vmul.f32 %v9441, %v9447
        %v9455 = vmul.f32 %v9443, %v9447
        %v9456 = vadd.f32 %v9420, %v9448
        %v9457 = vadd.f32 %v9421, %v9449
        %v9458 = vadd.f32 %v9422, %v9450
        %v9459 = vadd.f32 %v9423, %v9451
        %v9460 = vadd.f32 %v9424, %v9452
        %v9461 = vadd.f32 %v9425, %v9453
        %v9462 = vadd.f32 %v9426, %v9454
        %v9463 = vadd.f32 %v9427, %v9455
        %s9464 = scalar_lea.vmem [#allocation2], 48
        %v9465 = vld [vmem:[%s9464] ss:$2 sm:$0xff]
        %s9466 = scalar_lea.vmem %s9464, 48 [#allocation2]
        %v9467 = vld [vmem:[%s9466] ss:$2 sm:$0xff]
        %s9468 = scalar_lea.vmem %s9464, 96 [#allocation2]
        %v9469 = vld [vmem:[%s9468] ss:$2 sm:$0xff]
        %s9470 = scalar_lea.vmem %s9464, 144 [#allocation2]
        %v9471 = vld [vmem:[%s9470] ss:$2 sm:$0xff]
        %s9472 = scalar_lea.vmem %s9464, 192 [#allocation2]
        %v9473 = vld [vmem:[%s9472] ss:$2 sm:$0xff]
        %s9474 = scalar_lea.vmem %s9464, 240 [#allocation2]
        %v9475 = vld [vmem:[%s9474] ss:$2 sm:$0xff]
        %s9476 = scalar_lea.vmem %s9464, 288 [#allocation2]
        %v9477 = vld [vmem:[%s9476] ss:$2 sm:$0xff]
        %s9478 = scalar_lea.vmem %s9464, 336 [#allocation2]
        %v9479 = vld [vmem:[%s9478] ss:$2 sm:$0xff]
        %v9480 = vlaneseq
        %v9481 = vshrl.u32 %v9480, 7
        %v9482 = vsub.s32 6, %v9481
        %v9483 = vrot.slane %v9248, %v9482
        %v9484 = vmul.f32 %v9465, %v9483
        %v9485 = vmul.f32 %v9467, %v9483
        %v9486 = vmul.f32 %v9469, %v9483
        %v9487 = vmul.f32 %v9471, %v9483
        %v9488 = vmul.f32 %v9473, %v9483
        %v9489 = vmul.f32 %v9475, %v9483
        %v9490 = vmul.f32 %v9477, %v9483
        %v9491 = vmul.f32 %v9479, %v9483
        %v9492 = vadd.f32 %v9456, %v9484
        %v9493 = vadd.f32 %v9457, %v9485
        %v9494 = vadd.f32 %v9458, %v9486
        %v9495 = vadd.f32 %v9459, %v9487
        %v9496 = vadd.f32 %v9460, %v9488
        %v9497 = vadd.f32 %v9461, %v9489
        %v9498 = vadd.f32 %v9462, %v9490
        %v9499 = vadd.f32 %v9463, %v9491
        %s9500 = scalar_lea.vmem %s9464, 1 [#allocation2]
        %v9501 = vld [vmem:[%s9500] ss:$2 sm:$0xff]
        %s9502 = scalar_lea.vmem %s9464, 49 [#allocation2]
        %v9503 = vld [vmem:[%s9502] ss:$2 sm:$0xff]
        %s9504 = scalar_lea.vmem %s9464, 97 [#allocation2]
        %v9505 = vld [vmem:[%s9504] ss:$2 sm:$0xff]
        %s9506 = scalar_lea.vmem %s9464, 145 [#allocation2]
        %v9507 = vld [vmem:[%s9506] ss:$2 sm:$0xff]
        %s9508 = scalar_lea.vmem %s9464, 193 [#allocation2]
        %v9509 = vld [vmem:[%s9508] ss:$2 sm:$0xff]
        %s9510 = scalar_lea.vmem %s9464, 241 [#allocation2]
        %v9511 = vld [vmem:[%s9510] ss:$2 sm:$0xff]
        %s9512 = scalar_lea.vmem %s9464, 289 [#allocation2]
        %v9513 = vld [vmem:[%s9512] ss:$2 sm:$0xff]
        %s9514 = scalar_lea.vmem %s9464, 337 [#allocation2]
        %v9515 = vld [vmem:[%s9514] ss:$2 sm:$0xff]
        %v9516 = vlaneseq
        %v9517 = vshrl.u32 %v9516, 7
        %v9518 = vsub.s32 7, %v9517
        %v9519 = vrot.slane %v9248, %v9518
        %v9520 = vmul.f32 %v9501, %v9519
        %v9521 = vmul.f32 %v9503, %v9519
        %v9522 = vmul.f32 %v9505, %v9519
        %v9523 = vmul.f32 %v9507, %v9519
        %v9524 = vmul.f32 %v9509, %v9519
        %v9525 = vmul.f32 %v9511, %v9519
        %v9526 = vmul.f32 %v9513, %v9519
        %v9527 = vmul.f32 %v9515, %v9519
        %v9528 = vadd.f32 %v9492, %v9520
        %v9529 = vadd.f32 %v9493, %v9521
        %v9530 = vadd.f32 %v9494, %v9522
        %v9531 = vadd.f32 %v9495, %v9523
        %v9532 = vadd.f32 %v9496, %v9524
        %v9533 = vadd.f32 %v9497, %v9525
        %v9534 = vadd.f32 %v9498, %v9526
        %v9535 = vadd.f32 %v9499, %v9527
        %s9536 = scalar_lea.vmem %s9464, 2 [#allocation2]
        %v9537 = vld [vmem:[%s9536] ss:$2 sm:$0xff]
        %s9538 = scalar_lea.vmem %s9464, 50 [#allocation2]
        %v9539 = vld [vmem:[%s9538] ss:$2 sm:$0xff]
        %s9540 = scalar_lea.vmem %s9464, 98 [#allocation2]
        %v9541 = vld [vmem:[%s9540] ss:$2 sm:$0xff]
        %s9542 = scalar_lea.vmem %s9464, 146 [#allocation2]
        %v9543 = vld [vmem:[%s9542] ss:$2 sm:$0xff]
        %s9544 = scalar_lea.vmem %s9464, 194 [#allocation2]
        %v9545 = vld [vmem:[%s9544] ss:$2 sm:$0xff]
        %s9546 = scalar_lea.vmem %s9464, 242 [#allocation2]
        %v9547 = vld [vmem:[%s9546] ss:$2 sm:$0xff]
        %s9548 = scalar_lea.vmem %s9464, 290 [#allocation2]
        %v9549 = vld [vmem:[%s9548] ss:$2 sm:$0xff]
        %s9550 = scalar_lea.vmem %s9464, 338 [#allocation2]
        %v9551 = vld [vmem:[%s9550] ss:$2 sm:$0xff]
        %v9552 = vlaneseq
        %v9553 = vshrl.u32 %v9552, 7
        %v9554 = vsub.s32 0, %v9553
        %v9555 = vrot.slane %v9249, %v9554
        %v9556 = vmul.f32 %v9537, %v9555
        %v9557 = vmul.f32 %v9539, %v9555
        %v9558 = vmul.f32 %v9541, %v9555
        %v9559 = vmul.f32 %v9543, %v9555
        %v9560 = vmul.f32 %v9545, %v9555
        %v9561 = vmul.f32 %v9547, %v9555
        %v9562 = vmul.f32 %v9549, %v9555
        %v9563 = vmul.f32 %v9551, %v9555
        %v9564 = vadd.f32 %v9528, %v9556
        %v9565 = vadd.f32 %v9529, %v9557
        %v9566 = vadd.f32 %v9530, %v9558
        %v9567 = vadd.f32 %v9531, %v9559
        %v9568 = vadd.f32 %v9532, %v9560
        %v9569 = vadd.f32 %v9533, %v9561
        %v9570 = vadd.f32 %v9534, %v9562
        %v9571 = vadd.f32 %v9535, %v9563
        %v9572 = vld [vmem:[%s9] sm:$0x1]
        %v9574 = vlaneseq
        %v9575 = vshrl.u32 %v9574, 7
        %v9576 = vsub.s32 0, %v9575
        %v9577 = vrot.slane %v9572, %v9576
        %v9579 = vadd.f32 %v9564, %v9577
        %v9580 = vadd.f32 %v9565, %v9577
        %v9581 = vadd.f32 %v9566, %v9577
        %v9582 = vadd.f32 %v9567, %v9577
        %v9583 = vadd.f32 %v9568, %v9577
        %v9584 = vadd.f32 %v9569, %v9577
        %v9585 = vadd.f32 %v9570, %v9577
        %v9586 = vadd.f32 %v9571, %v9577
        %v9587 = vmax.f32 %v9579, 0.0
        %v9588 = vmax.f32 %v9580, 0.0
        %v9589 = vmax.f32 %v9581, 0.0
        %v9590 = vmax.f32 %v9582, 0.0
        %v9591 = vmax.f32 %v9583, 0.0
        %v9592 = vmax.f32 %v9584, 0.0
        %v9593 = vmax.f32 %v9585, 0.0
        %v9594 = vmax.f32 %v9586, 0.0
        %v9595 = vmin.f32 %v9587, 6.0
        %v9596 = vmin.f32 %v9588, 6.0
        %v9597 = vmin.f32 %v9589, 6.0
        %v9598 = vmin.f32 %v9590, 6.0
        %v9599 = vmin.f32 %v9591, 6.0
        %v9600 = vmin.f32 %v9592, 6.0
        %v9601 = vmin.f32 %v9593, 6.0
        %v9602 = vmin.f32 %v9594, 6.0
        %v9603 = vpack.c.bf16 %v9596, %v9595
        %v9604 = vpack.c.bf16 %v9598, %v9597
        %v9605 = vpack.c.bf16 %v9600, %v9599
        %v9606 = vpack.c.bf16 %v9602, %v9601
        %v9607 = vld [vmem:[%s11] sm:$0xf]
        %v9608 = vld [vmem:[%s11 + $0x4] sm:$0xf]
        %v9609 = vld [vmem:[%s11 + $0x8] sm:$0xf]
        %v9610 = vld [vmem:[%s11 + $0xc] sm:$0xf]
        %v9611 = vld [vmem:[%s11 + $0x10] sm:$0xf]
        %v9612 = vld [vmem:[%s11 + $0x14] sm:$0xf]
        %v9613 = vld [vmem:[%s11 + $0x18] sm:$0xf]
        %v9614 = vld [vmem:[%s11 + $0x1c] sm:$0xf]
        %v9615 = vld [vmem:[%s11 + $0x20] sm:$0xf]
        %v9616 = vld [vmem:[%s11 + $0x24] sm:$0xf]
        %v9617 = vld [vmem:[%s11 + $0x28] sm:$0xf]
        %v9618 = vld [vmem:[%s11 + $0x2c] sm:$0xf]
        %v9619 = vld [vmem:[%s11 + $0x30] sm:$0xf]
        %v9620 = vld [vmem:[%s11 + $0x34] sm:$0xf]
        %v9621 = vld [vmem:[%s11 + $0x38] sm:$0xf]
        %v9622 = vld [vmem:[%s11 + $0x3c] sm:$0xf]
        %v9623 = vld [vmem:[%s13] sm:$0x1]
        %v9625 = vlaneseq
        %v9626 = vshrl.u32 %v9625, 7
        %v9627 = vsub.s32 0, %v9626
        %v9628 = vrot.slane %v9623, %v9627
        %v9646 = vunpack.c.l.b16 %v9607
        %v9647 = vunpack.c.l.b16 %v9608
        %v9648 = vunpack.c.l.b16 %v9609
        %v9649 = vunpack.c.l.b16 %v9610
        %v9650 = vunpack.c.l.b16 %v9611
        %v9651 = vunpack.c.l.b16 %v9612
        %v9652 = vunpack.c.l.b16 %v9613
        %v9653 = vunpack.c.l.b16 %v9614
        %v9654 = vunpack.c.l.b16 %v9615
        %v9655 = vunpack.c.l.b16 %v9616
        %v9656 = vunpack.c.l.b16 %v9617
        %v9657 = vunpack.c.l.b16 %v9618
        %v9658 = vunpack.c.l.b16 %v9619
        %v9659 = vunpack.c.l.b16 %v9620
        %v9660 = vunpack.c.l.b16 %v9621
        %v9661 = vunpack.c.l.b16 %v9622
        %v9662 = vpack.c.b16 %v9647, %v9646
        %v9663 = vpack.c.b16 %v9649, %v9648
        %v9664 = vpack.c.b16 %v9651, %v9650
        %v9665 = vpack.c.b16 %v9653, %v9652
        %v9666 = vpack.c.b16 %v9655, %v9654
        %v9667 = vpack.c.b16 %v9657, %v9656
        %v9668 = vpack.c.b16 %v9659, %v9658
        %v9669 = vpack.c.b16 %v9661, %v9660
        %9678 = vmatprep.subr.bf16.mxu0 0
        %9679 = vmatpush1.bf16.msra.mxu0 %v9662
        %9680 = vmatprep.subr.bf16.mxu0 0
        %9681 = vmatpush1.bf16.msra.mxu0 %v9663
        %9682 = vmatprep.subr.bf16.mxu0 0
        %9683 = vmatpush1.bf16.msra.mxu0 %v9664
        %9684 = vmatprep.subr.bf16.mxu0 0
        %9685 = vmatpush1.bf16.msra.mxu0 %v9665
        %9686 = vmatprep.subr.bf16.mxu0 0
        %9687 = vmatpush1.bf16.msra.mxu0 %v9666
        %9688 = vmatprep.subr.bf16.mxu0 0
        %9689 = vmatpush1.bf16.msra.mxu0 %v9667
        %9690 = vmatprep.subr.bf16.mxu0 0
        %9691 = vmatpush1.bf16.msra.mxu0 %v9668
        %9692 = vmatprep.subr.bf16.mxu0 0
        %9693 = vmatpush1.bf16.msra.mxu0 %v9669
        %9694 = vmatprep.subr.bf16.mxu0 0
        %9695 = vmatpush1.bf16.msra.mxu0 0
        %9696 = vmatprep.subr.bf16.mxu0 0
        %9697 = vmatpush1.bf16.msra.mxu0 0
        %9698 = vmatprep.subr.bf16.mxu0 0
        %9699 = vmatpush1.bf16.msra.mxu0 0
        %9700 = vmatprep.subr.bf16.mxu0 0
        %9701 = vmatpush1.bf16.msra.mxu0 0
        %9702 = vmatprep.subr.bf16.mxu0 0
        %9703 = vmatpush1.bf16.msra.mxu0 0
        %9704 = vmatprep.subr.bf16.mxu0 0
        %9705 = vmatpush1.bf16.msra.mxu0 0
        %9706 = vmatprep.subr.bf16.mxu0 0
        %9707 = vmatpush1.bf16.msra.mxu0 0
        %9708 = vmatprep.subr.bf16.mxu0 0
        %9709 = vmatpush1.bf16.msra.mxu0 0
        %9710 = vmatprep.mubr.bf16.mxu0 0
        %9711 = vmatmul.mubr.bf16.gmra.mrb[0].mxu0 %v9603
        %v9712 = vpop.f32.mrb[0].mxu0
        %v9713 = vadd.f32 %v9628, %v9712
        %v9714 = vpop.f32.mrb[0].mxu0
        %v9715 = vpop.f32.mrb[0].mxu0
        %v9716 = vadd.f32 %v9628, %v9715
        %v9717 = vpop.f32.mrb[0].mxu0
        %9718 = vmatprep.mubr.bf16.mxu0 0
        %9719 = vmatmul.mubr.bf16.gmra.mrb[0].mxu0 %v9604
        %v9720 = vpop.f32.mrb[0].mxu0
        %v9721 = vadd.f32 %v9628, %v9720
        %v9722 = vpop.f32.mrb[0].mxu0
        %v9723 = vpop.f32.mrb[0].mxu0
        %v9724 = vadd.f32 %v9628, %v9723
        %v9725 = vpop.f32.mrb[0].mxu0
        %9726 = vmatprep.mubr.bf16.mxu0 0
        %9727 = vmatmul.mubr.bf16.gmra.mrb[0].mxu0 %v9605
        %v9728 = vpop.f32.mrb[0].mxu0
        %v9729 = vadd.f32 %v9628, %v9728
        %v9730 = vpop.f32.mrb[0].mxu0
        %v9731 = vpop.f32.mrb[0].mxu0
        %v9732 = vadd.f32 %v9628, %v9731
        %v9733 = vpop.f32.mrb[0].mxu0
        %9734 = vmatprep.mubr.bf16.mxu0 0
        %9735 = vmatmul.mubr.bf16.gmra.mrb[0].mxu0 %v9606
        %v9736 = vpop.f32.mrb[0].mxu0
        %v9737 = vadd.f32 %v9628, %v9736
        %v9738 = vpop.f32.mrb[0].mxu0
        %v9739 = vpop.f32.mrb[0].mxu0
        %v9740 = vadd.f32 %v9628, %v9739
        %v9741 = vpop.f32.mrb[0].mxu0
        %9742 = vdwg.mxu0
        %9743 = vst [vmem:[#allocation3] sm:$0xff] 0.0
        %9744 = vst [vmem:[#allocation3 + $0x8] sm:$0x3] 0.0
        %9745 = vst [vmem:[#allocation3 + $0x10] sm:$0xff] 0.0
        %9746 = vst [vmem:[#allocation3 + $0x18] sm:$0x3] 0.0
        %9747 = vst [vmem:[#allocation3 + $0x20] sm:$0xff] 0.0
        %9748 = vst [vmem:[#allocation3 + $0x28] sm:$0x3] 0.0
        %9749 = vst [vmem:[#allocation3 + $0x30] sm:$0xff] 0.0
        %9750 = vst [vmem:[#allocation3 + $0x38] sm:$0x3] 0.0
        %9751 = vst [vmem:[#allocation3 + $0x40] sm:$0xff] 0.0
        %9752 = vst [vmem:[#allocation3 + $0x48] sm:$0x3] 0.0
        %9753 = vst [vmem:[#allocation3 + $0x50] sm:$0xff] 0.0
        %9754 = vst [vmem:[#allocation3 + $0x58] sm:$0x3] 0.0
        %9755 = vst [vmem:[#allocation3 + $0x60] sm:$0xff] 0.0
        %9756 = vst [vmem:[#allocation3 + $0x68] sm:$0x3] 0.0
        %9757 = vst [vmem:[#allocation3 + $0x70] sm:$0xff] 0.0
        %9758 = vst [vmem:[#allocation3 + $0x78] sm:$0x3] 0.0
        %9759 = vst [vmem:[#allocation3 + $0x80] sm:$0xff] 0.0
        %9760 = vst [vmem:[#allocation3 + $0x88] sm:$0x3] 0.0
        %9761 = vst [vmem:[#allocation3 + $0x90] sm:$0xff] 0.0
        %9762 = vst [vmem:[#allocation3 + $0x98] sm:$0x3] 0.0
        %s9763 = scalar_lea.vmem [#allocation3], 16
        %9764 = vst [vmem:[%s9763 + $0x1] sm:$0xff] %v9713
        %9765 = vst [vmem:[%s9763 + $0x11] sm:$0xff] %v9716
        %9766 = vst [vmem:[%s9763 + $0x21] sm:$0xff] %v9721
        %9767 = vst [vmem:[%s9763 + $0x31] sm:$0xff] %v9724
        %9768 = vst [vmem:[%s9763 + $0x41] sm:$0xff] %v9729
        %9769 = vst [vmem:[%s9763 + $0x51] sm:$0xff] %v9732
        %9770 = vst [vmem:[%s9763 + $0x61] sm:$0xff] %v9737
        %9771 = vst [vmem:[%s9763 + $0x71] sm:$0xff] %v9740
        %v9772 = vld [vmem:[%s15] sm:$0xff]
        %v9773 = vld [vmem:[%s15 + $0x8] sm:$0x1]
        %v9774 = vld [vmem:[#allocation3] ss:$2 sm:$0xf]
        %s9775 = scalar_lea.vmem [#allocation3], 32
        %v9776 = vld [vmem:[%s9775] ss:$2 sm:$0xf]
        %s9777 = scalar_lea.vmem [#allocation3], 64
        %v9778 = vld [vmem:[%s9777] ss:$2 sm:$0xf]
        %s9779 = scalar_lea.vmem [#allocation3], 96
        %v9780 = vld [vmem:[%s9779] ss:$2 sm:$0xf]
        %v9781 = vlaneseq
        %v9782 = vshrl.u32 %v9781, 7
        %v9783 = vsub.s32 0, %v9782
        %v9784 = vrot.slane %v9772, %v9783
        %v9785 = vmul.f32 %v9774, %v9784
        %v9786 = vmul.f32 %v9776, %v9784
        %v9787 = vmul.f32 %v9778, %v9784
        %v9788 = vmul.f32 %v9780, %v9784
        %v9789 = vadd.f32 %v9785, 0.0
        %v9790 = vadd.f32 %v9786, 0.0
        %v9791 = vadd.f32 %v9787, 0.0
        %v9792 = vadd.f32 %v9788, 0.0
        %s9793 = scalar_lea.vmem [#allocation3], 1
        %v9794 = vld [vmem:[%s9793] ss:$2 sm:$0xf]
        %s9795 = scalar_lea.vmem [#allocation3], 33
        %v9796 = vld [vmem:[%s9795] ss:$2 sm:$0xf]
        %s9797 = scalar_lea.vmem [#allocation3], 65
        %v9798 = vld [vmem:[%s9797] ss:$2 sm:$0xf]
        %s9799 = scalar_lea.vmem [#allocation3], 97
        %v9800 = vld [vmem:[%s9799] ss:$2 sm:$0xf]
        %v9801 = vlaneseq
        %v9802 = vshrl.u32 %v9801, 7
        %v9803 = vsub.s32 1, %v9802
        %v9804 = vrot.slane %v9772, %v9803
        %v9805 = vmul.f32 %v9794, %v9804
        %v9806 = vmul.f32 %v9796, %v9804
        %v9807 = vmul.f32 %v9798, %v9804
        %v9808 = vmul.f32 %v9800, %v9804
        %v9809 = vadd.f32 %v9789, %v9805
        %v9810 = vadd.f32 %v9790, %v9806
        %v9811 = vadd.f32 %v9791, %v9807
        %v9812 = vadd.f32 %v9792, %v9808
        %s9813 = scalar_lea.vmem [#allocation3], 2
        %v9814 = vld [vmem:[%s9813] ss:$2 sm:$0xf]
        %s9815 = scalar_lea.vmem [#allocation3], 34
        %v9816 = vld [vmem:[%s9815] ss:$2 sm:$0xf]
        %s9817 = scalar_lea.vmem [#allocation3], 66
        %v9818 = vld [vmem:[%s9817] ss:$2 sm:$0xf]
        %s9819 = scalar_lea.vmem [#allocation3], 98
        %v9820 = vld [vmem:[%s9819] ss:$2 sm:$0xf]
        %v9821 = vlaneseq
        %v9822 = vshrl.u32 %v9821, 7
        %v9823 = vsub.s32 2, %v9822
        %v9824 = vrot.slane %v9772, %v9823
        %v9825 = vmul.f32 %v9814, %v9824
        %v9826 = vmul.f32 %v9816, %v9824
        %v9827 = vmul.f32 %v9818, %v9824
        %v9828 = vmul.f32 %v9820, %v9824
        %v9829 = vadd.f32 %v9809, %v9825
        %v9830 = vadd.f32 %v9810, %v9826
        %v9831 = vadd.f32 %v9811, %v9827
        %v9832 = vadd.f32 %v9812, %v9828
        %v9833 = vld [vmem:[%s9763] ss:$2 sm:$0xf]
        %s9834 = scalar_lea.vmem %s9763, 32 [#allocation3]
        %v9835 = vld [vmem:[%s9834] ss:$2 sm:$0xf]
        %s9836 = scalar_lea.vmem %s9763, 64 [#allocation3]
        %v9837 = vld [vmem:[%s9836] ss:$2 sm:$0xf]
        %s9838 = scalar_lea.vmem %s9763, 96 [#allocation3]
        %v9839 = vld [vmem:[%s9838] ss:$2 sm:$0xf]
        %v9840 = vlaneseq
        %v9841 = vshrl.u32 %v9840, 7
        %v9842 = vsub.s32 3, %v9841
        %v9843 = vrot.slane %v9772, %v9842
        %v9844 = vmul.f32 %v9833, %v9843
        %v9845 = vmul.f32 %v9835, %v9843
        %v9846 = vmul.f32 %v9837, %v9843
        %v9847 = vmul.f32 %v9839, %v9843
        %v9848 = vadd.f32 %v9829, %v9844
        %v9849 = vadd.f32 %v9830, %v9845
        %v9850 = vadd.f32 %v9831, %v9846
        %v9851 = vadd.f32 %v9832, %v9847
        %s9852 = scalar_lea.vmem %s9763, 1 [#allocation3]
        %v9853 = vld [vmem:[%s9852] ss:$2 sm:$0xf]
        %s9854 = scalar_lea.vmem %s9763, 33 [#allocation3]
        %v9855 = vld [vmem:[%s9854] ss:$2 sm:$0xf]
        %s9856 = scalar_lea.vmem %s9763, 65 [#allocation3]
        %v9857 = vld [vmem:[%s9856] ss:$2 sm:$0xf]
        %s9858 = scalar_lea.vmem %s9763, 97 [#allocation3]
        %v9859 = vld [vmem:[%s9858] ss:$2 sm:$0xf]
        %v9860 = vlaneseq
        %v9861 = vshrl.u32 %v9860, 7
        %v9862 = vsub.s32 4, %v9861
        %v9863 = vrot.slane %v9772, %v9862
        %v9864 = vmul.f32 %v9853, %v9863
        %v9865 = vmul.f32 %v9855, %v9863
        %v9866 = vmul.f32 %v9857, %v9863
        %v9867 = vmul.f32 %v9859, %v9863
        %v9868 = vadd.f32 %v9848, %v9864
        %v9869 = vadd.f32 %v9849, %v9865
        %v9870 = vadd.f32 %v9850, %v9866
        %v9871 = vadd.f32 %v9851, %v9867
        %s9872 = scalar_lea.vmem %s9763, 2 [#allocation3]
        %v9873 = vld [vmem:[%s9872] ss:$2 sm:$0xf]
        %s9874 = scalar_lea.vmem %s9763, 34 [#allocation3]
        %v9875 = vld [vmem:[%s9874] ss:$2 sm:$0xf]
        %s9876 = scalar_lea.vmem %s9763, 66 [#allocation3]
        %v9877 = vld [vmem:[%s9876] ss:$2 sm:$0xf]
        %s9878 = scalar_lea.vmem %s9763, 98 [#allocation3]
        %v9879 = vld [vmem:[%s9878] ss:$2 sm:$0xf]
        %v9880 = vlaneseq
        %v9881 = vshrl.u32 %v9880, 7
        %v9882 = vsub.s32 5, %v9881
        %v9883 = vrot.slane %v9772, %v9882
        %v9884 = vmul.f32 %v9873, %v9883
        %v9885 = vmul.f32 %v9875, %v9883
        %v9886 = vmul.f32 %v9877, %v9883
        %v9887 = vmul.f32 %v9879, %v9883
        %v9888 = vadd.f32 %v9868, %v9884
        %v9889 = vadd.f32 %v9869, %v9885
        %v9890 = vadd.f32 %v9870, %v9886
        %v9891 = vadd.f32 %v9871, %v9887
        %s9892 = scalar_lea.vmem [#allocation3], 32
        %v9893 = vld [vmem:[%s9892] ss:$2 sm:$0xf]
        %s9894 = scalar_lea.vmem %s9892, 32 [#allocation3]
        %v9895 = vld [vmem:[%s9894] ss:$2 sm:$0xf]
        %s9896 = scalar_lea.vmem %s9892, 64 [#allocation3]
        %v9897 = vld [vmem:[%s9896] ss:$2 sm:$0xf]
        %s9898 = scalar_lea.vmem %s9892, 96 [#allocation3]
        %v9899 = vld [vmem:[%s9898] ss:$2 sm:$0xf]
        %v9900 = vlaneseq
        %v9901 = vshrl.u32 %v9900, 7
        %v9902 = vsub.s32 6, %v9901
        %v9903 = vrot.slane %v9772, %v9902
        %v9904 = vmul.f32 %v9893, %v9903
        %v9905 = vmul.f32 %v9895, %v9903
        %v9906 = vmul.f32 %v9897, %v9903
        %v9907 = vmul.f32 %v9899, %v9903
        %v9908 = vadd.f32 %v9888, %v9904
        %v9909 = vadd.f32 %v9889, %v9905
        %v9910 = vadd.f32 %v9890, %v9906
        %v9911 = vadd.f32 %v9891, %v9907
        %s9912 = scalar_lea.vmem %s9892, 1 [#allocation3]
        %v9913 = vld [vmem:[%s9912] ss:$2 sm:$0xf]
        %s9914 = scalar_lea.vmem %s9892, 33 [#allocation3]
        %v9915 = vld [vmem:[%s9914] ss:$2 sm:$0xf]
        %s9916 = scalar_lea.vmem %s9892, 65 [#allocation3]
        %v9917 = vld [vmem:[%s9916] ss:$2 sm:$0xf]
        %s9918 = scalar_lea.vmem %s9892, 97 [#allocation3]
        %v9919 = vld [vmem:[%s9918] ss:$2 sm:$0xf]
        %v9920 = vlaneseq
        %v9921 = vshrl.u32 %v9920, 7
        %v9922 = vsub.s32 7, %v9921
        %v9923 = vrot.slane %v9772, %v9922
        %v9924 = vmul.f32 %v9913, %v9923
        %v9925 = vmul.f32 %v9915, %v9923
        %v9926 = vmul.f32 %v9917, %v9923
        %v9927 = vmul.f32 %v9919, %v9923
        %v9928 = vadd.f32 %v9908, %v9924
        %v9929 = vadd.f32 %v9909, %v9925
        %v9930 = vadd.f32 %v9910, %v9926
        %v9931 = vadd.f32 %v9911, %v9927
        %s9932 = scalar_lea.vmem %s9892, 2 [#allocation3]
        %v9933 = vld [vmem:[%s9932] ss:$2 sm:$0xf]
        %s9934 = scalar_lea.vmem %s9892, 34 [#allocation3]
        %v9935 = vld [vmem:[%s9934] ss:$2 sm:$0xf]
        %s9936 = scalar_lea.vmem %s9892, 66 [#allocation3]
        %v9937 = vld [vmem:[%s9936] ss:$2 sm:$0xf]
        %s9938 = scalar_lea.vmem %s9892, 98 [#allocation3]
        %v9939 = vld [vmem:[%s9938] ss:$2 sm:$0xf]
        %v9940 = vlaneseq
        %v9941 = vshrl.u32 %v9940, 7
        %v9942 = vsub.s32 0, %v9941
        %v9943 = vrot.slane %v9773, %v9942
        %v9944 = vmul.f32 %v9933, %v9943
        %v9945 = vmul.f32 %v9935, %v9943
        %v9946 = vmul.f32 %v9937, %v9943
        %v9947 = vmul.f32 %v9939, %v9943
        %v9948 = vadd.f32 %v9928, %v9944
        %v9949 = vadd.f32 %v9929, %v9945
        %v9950 = vadd.f32 %v9930, %v9946
        %v9951 = vadd.f32 %v9931, %v9947
        %v9952 = vld [vmem:[%s17] sm:$0x1]
        %v9954 = vlaneseq
        %v9955 = vshrl.u32 %v9954, 7
        %v9956 = vsub.s32 0, %v9955
        %v9957 = vrot.slane %v9952, %v9956
        %v9959 = vadd.f32 %v9948, %v9957
        %v9960 = vadd.f32 %v9949, %v9957
        %v9961 = vadd.f32 %v9950, %v9957
        %v9962 = vadd.f32 %v9951, %v9957
        %v9963 = vmax.f32 %v9959, 0.0
        %v9964 = vmax.f32 %v9960, 0.0
        %v9965 = vmax.f32 %v9961, 0.0
        %v9966 = vmax.f32 %v9962, 0.0
        %v9967 = vmin.f32 %v9963, 6.0
        %v9968 = vmin.f32 %v9964, 6.0
        %v9969 = vmin.f32 %v9965, 6.0
        %v9970 = vmin.f32 %v9966, 6.0
        %v9975 = vcombine.low %v9967, %v9968
        %v9976 = vcombine.low %v9969, %v9970
        %v9979 = vpack.c.bf16 %v9976, %v9975
        %v9980 = vld [vmem:[%s19] sm:$0xf]
        %v9981 = vld [vmem:[%s19 + $0x4] sm:$0xf]
        %v9982 = vld [vmem:[%s19 + $0x8] sm:$0xf]
        %v9983 = vld [vmem:[%s19 + $0xc] sm:$0xf]
        %v9984 = vld [vmem:[%s19 + $0x10] sm:$0xf]
        %v9985 = vld [vmem:[%s19 + $0x14] sm:$0xf]
        %v9986 = vld [vmem:[%s19 + $0x18] sm:$0xf]
        %v9987 = vld [vmem:[%s19 + $0x1c] sm:$0xf]
        %v9988 = vld [vmem:[%s19 + $0x20] sm:$0xf]
        %v9989 = vld [vmem:[%s19 + $0x24] sm:$0xf]
        %v9990 = vld [vmem:[%s19 + $0x28] sm:$0xf]
        %v9991 = vld [vmem:[%s19 + $0x2c] sm:$0xf]
        %v9992 = vld [vmem:[%s19 + $0x30] sm:$0xf]
        %v9993 = vld [vmem:[%s19 + $0x34] sm:$0xf]
        %v9994 = vld [vmem:[%s19 + $0x38] sm:$0xf]
        %v9995 = vld [vmem:[%s19 + $0x3c] sm:$0xf]
        %v9996 = vld [vmem:[%s21] sm:$0x1]
        %v9998 = vlaneseq
        %v9999 = vshrl.u32 %v9998, 7
        %v10000 = vsub.s32 0, %v9999
        %v10001 = vrot.slane %v9996, %v10000
        %v10019 = vunpack.c.l.b16 %v9980
        %v10020 = vunpack.c.l.b16 %v9981
        %v10021 = vunpack.c.l.b16 %v9982
        %v10022 = vunpack.c.l.b16 %v9983
        %v10023 = vunpack.c.l.b16 %v9984
        %v10024 = vunpack.c.l.b16 %v9985
        %v10025 = vunpack.c.l.b16 %v9986
        %v10026 = vunpack.c.l.b16 %v9987
        %v10027 = vunpack.c.l.b16 %v9988
        %v10028 = vunpack.c.l.b16 %v9989
        %v10029 = vunpack.c.l.b16 %v9990
        %v10030 = vunpack.c.l.b16 %v9991
        %v10031 = vunpack.c.l.b16 %v9992
        %v10032 = vunpack.c.l.b16 %v9993
        %v10033 = vunpack.c.l.b16 %v9994
        %v10034 = vunpack.c.l.b16 %v9995
        %v10035 = vpack.c.b16 %v10020, %v10019
        %v10036 = vpack.c.b16 %v10022, %v10021
        %v10037 = vpack.c.b16 %v10024, %v10023
        %v10038 = vpack.c.b16 %v10026, %v10025
        %v10039 = vpack.c.b16 %v10028, %v10027
        %v10040 = vpack.c.b16 %v10030, %v10029
        %v10041 = vpack.c.b16 %v10032, %v10031
        %v10042 = vpack.c.b16 %v10034, %v10033
        %10051 = vmatprep.subr.bf16.mxu0 0
        %10052 = vmatpush1.bf16.msra.mxu0 %v10035
        %10053 = vmatprep.subr.bf16.mxu0 0
        %10054 = vmatpush1.bf16.msra.mxu0 %v10036
        %10055 = vmatprep.subr.bf16.mxu0 0
        %10056 = vmatpush1.bf16.msra.mxu0 %v10037
        %10057 = vmatprep.subr.bf16.mxu0 0
        %10058 = vmatpush1.bf16.msra.mxu0 %v10038
        %10059 = vmatprep.subr.bf16.mxu0 0
        %10060 = vmatpush1.bf16.msra.mxu0 %v10039
        %10061 = vmatprep.subr.bf16.mxu0 0
        %10062 = vmatpush1.bf16.msra.mxu0 %v10040
        %10063 = vmatprep.subr.bf16.mxu0 0
        %10064 = vmatpush1.bf16.msra.mxu0 %v10041
        %10065 = vmatprep.subr.bf16.mxu0 0
        %10066 = vmatpush1.bf16.msra.mxu0 %v10042
        %10067 = vmatprep.subr.bf16.mxu0 0
        %10068 = vmatpush1.bf16.msra.mxu0 0
        %10069 = vmatprep.subr.bf16.mxu0 0
        %10070 = vmatpush1.bf16.msra.mxu0 0
        %10071 = vmatprep.subr.bf16.mxu0 0
        %10072 = vmatpush1.bf16.msra.mxu0 0
        %10073 = vmatprep.subr.bf16.mxu0 0
        %10074 = vmatpush1.bf16.msra.mxu0 0
        %10075 = vmatprep.subr.bf16.mxu0 0
        %10076 = vmatpush1.bf16.msra.mxu0 0
        %10077 = vmatprep.subr.bf16.mxu0 0
        %10078 = vmatpush1.bf16.msra.mxu0 0
        %10079 = vmatprep.subr.bf16.mxu0 0
        %10080 = vmatpush1.bf16.msra.mxu0 0
        %10081 = vmatprep.subr.bf16.mxu0 0
        %10082 = vmatpush1.bf16.msra.mxu0 0
        %10083 = vmatprep.mubr.bf16.mxu0 0
        %10084 = vmatmul.mubr.bf16.gmra.mrb[0].mxu0 %v9979
        %v10085 = vpop.f32.mrb[0].mxu0
        %v10086 = vadd.f32 %v10001, %v10085
        %v10087 = vpop.f32.mrb[0].mxu0
        %v10088 = vpop.f32.mrb[0].mxu0
        %v10089 = vadd.f32 %v10001, %v10088
        %v10090 = vpop.f32.mrb[0].mxu0
        %10091 = vdwg.mxu0
        %v10094 = vcombine.high %v10086, %v10086
        %v10095 = vcombine.high %v10089, %v10089
        %10098 = vst [vmem:[#allocation4] sm:$0x3f] 0.0
        %10099 = vst [vmem:[#allocation4 + $0x8] sm:$0x3f] 0.0
        %10100 = vst [vmem:[#allocation4 + $0x10] sm:$0x3f] 0.0
        %10101 = vst [vmem:[#allocation4 + $0x18] sm:$0x3f] 0.0
        %10102 = vst [vmem:[#allocation4 + $0x20] sm:$0x3f] 0.0
        %10103 = vst [vmem:[#allocation4 + $0x28] sm:$0x3f] 0.0
        %s10104 = scalar_lea.vmem [#allocation4], 8
        %10105 = vst [vmem:[%s10104 + $0x1] sm:$0xf] %v10086
        %10106 = vst [vmem:[%s10104 + $0x9] sm:$0xf] %v10094
        %10107 = vst [vmem:[%s10104 + $0x11] sm:$0xf] %v10089
        %10108 = vst [vmem:[%s10104 + $0x19] sm:$0xf] %v10095
        %v10109 = vld [vmem:[%s23] sm:$0xff]
        %v10110 = vld [vmem:[%s23 + $0x8] sm:$0x1]
        %v10111 = vld [vmem:[#allocation4] ss:$2 sm:$0x3]
        %s10112 = scalar_lea.vmem [#allocation4], 16
        %v10113 = vld [vmem:[%s10112] ss:$2 sm:$0x3]
        %v10114 = vlaneseq
        %v10115 = vshrl.u32 %v10114, 7
        %v10116 = vsub.s32 0, %v10115
        %v10117 = vrot.slane %v10109, %v10116
        %v10118 = vmul.f32 %v10111, %v10117
        %v10119 = vmul.f32 %v10113, %v10117
        %v10120 = vadd.f32 %v10118, 0.0
        %v10121 = vadd.f32 %v10119, 0.0
        %s10122 = scalar_lea.vmem [#allocation4], 1
        %v10123 = vld [vmem:[%s10122] ss:$2 sm:$0x3]
        %s10124 = scalar_lea.vmem [#allocation4], 17
        %v10125 = vld [vmem:[%s10124] ss:$2 sm:$0x3]
        %v10126 = vlaneseq
        %v10127 = vshrl.u32 %v10126, 7
        %v10128 = vsub.s32 1, %v10127
        %v10129 = vrot.slane %v10109, %v10128
        %v10130 = vmul.f32 %v10123, %v10129
        %v10131 = vmul.f32 %v10125, %v10129
        %v10132 = vadd.f32 %v10120, %v10130
        %v10133 = vadd.f32 %v10121, %v10131
        %s10134 = scalar_lea.vmem [#allocation4], 2
        %v10135 = vld [vmem:[%s10134] ss:$2 sm:$0x3]
        %s10136 = scalar_lea.vmem [#allocation4], 18
        %v10137 = vld [vmem:[%s10136] ss:$2 sm:$0x3]
        %v10138 = vlaneseq
        %v10139 = vshrl.u32 %v10138, 7
        %v10140 = vsub.s32 2, %v10139
        %v10141 = vrot.slane %v10109, %v10140
        %v10142 = vmul.f32 %v10135, %v10141
        %v10143 = vmul.f32 %v10137, %v10141
        %v10144 = vadd.f32 %v10132, %v10142
        %v10145 = vadd.f32 %v10133, %v10143
        %v10146 = vld [vmem:[%s10104] ss:$2 sm:$0x3]
        %s10147 = scalar_lea.vmem %s10104, 16 [#allocation4]
        %v10148 = vld [vmem:[%s10147] ss:$2 sm:$0x3]
        %v10149 = vlaneseq
        %v10150 = vshrl.u32 %v10149, 7
        %v10151 = vsub.s32 3, %v10150
        %v10152 = vrot.slane %v10109, %v10151
        %v10153 = vmul.f32 %v10146, %v10152
        %v10154 = vmul.f32 %v10148, %v10152
        %v10155 = vadd.f32 %v10144, %v10153
        %v10156 = vadd.f32 %v10145, %v10154
        %s10157 = scalar_lea.vmem %s10104, 1 [#allocation4]
        %v10158 = vld [vmem:[%s10157] ss:$2 sm:$0x3]
        %s10159 = scalar_lea.vmem %s10104, 17 [#allocation4]
        %v10160 = vld [vmem:[%s10159] ss:$2 sm:$0x3]
        %v10161 = vlaneseq
        %v10162 = vshrl.u32 %v10161, 7
        %v10163 = vsub.s32 4, %v10162
        %v10164 = vrot.slane %v10109, %v10163
        %v10165 = vmul.f32 %v10158, %v10164
        %v10166 = vmul.f32 %v10160, %v10164
        %v10167 = vadd.f32 %v10155, %v10165
        %v10168 = vadd.f32 %v10156, %v10166
        %s10169 = scalar_lea.vmem %s10104, 2 [#allocation4]
        %v10170 = vld [vmem:[%s10169] ss:$2 sm:$0x3]
        %s10171 = scalar_lea.vmem %s10104, 18 [#allocation4]
        %v10172 = vld [vmem:[%s10171] ss:$2 sm:$0x3]
        %v10173 = vlaneseq
        %v10174 = vshrl.u32 %v10173, 7
        %v10175 = vsub.s32 5, %v10174
        %v10176 = vrot.slane %v10109, %v10175
        %v10177 = vmul.f32 %v10170, %v10176
        %v10178 = vmul.f32 %v10172, %v10176
        %v10179 = vadd.f32 %v10167, %v10177
        %v10180 = vadd.f32 %v10168, %v10178
        %s10181 = scalar_lea.vmem [#allocation4], 16
        %v10182 = vld [vmem:[%s10181] ss:$2 sm:$0x3]
        %s10183 = scalar_lea.vmem %s10181, 16 [#allocation4]
        %v10184 = vld [vmem:[%s10183] ss:$2 sm:$0x3]
        %v10185 = vlaneseq
        %v10186 = vshrl.u32 %v10185, 7
        %v10187 = vsub.s32 6, %v10186
        %v10188 = vrot.slane %v10109, %v10187
        %v10189 = vmul.f32 %v10182, %v10188
        %v10190 = vmul.f32 %v10184, %v10188
        %v10191 = vadd.f32 %v10179, %v10189
        %v10192 = vadd.f32 %v10180, %v10190
        %s10193 = scalar_lea.vmem %s10181, 1 [#allocation4]
        %v10194 = vld [vmem:[%s10193] ss:$2 sm:$0x3]
        %s10195 = scalar_lea.vmem %s10181, 17 [#allocation4]
        %v10196 = vld [vmem:[%s10195] ss:$2 sm:$0x3]
        %v10197 = vlaneseq
        %v10198 = vshrl.u32 %v10197, 7
        %v10199 = vsub.s32 7, %v10198
        %v10200 = vrot.slane %v10109, %v10199
        %v10201 = vmul.f32 %v10194, %v10200
        %v10202 = vmul.f32 %v10196, %v10200
        %v10203 = vadd.f32 %v10191, %v10201
        %v10204 = vadd.f32 %v10192, %v10202
        %s10205 = scalar_lea.vmem %s10181, 2 [#allocation4]
        %v10206 = vld [vmem:[%s10205] ss:$2 sm:$0x3]
        %s10207 = scalar_lea.vmem %s10181, 18 [#allocation4]
        %v10208 = vld [vmem:[%s10207] ss:$2 sm:$0x3]
        %v10209 = vlaneseq
        %v10210 = vshrl.u32 %v10209, 7
        %v10211 = vsub.s32 0, %v10210
        %v10212 = vrot.slane %v10110, %v10211
        %v10213 = vmul.f32 %v10206, %v10212
        %v10214 = vmul.f32 %v10208, %v10212
        %v10215 = vadd.f32 %v10203, %v10213
        %v10216 = vadd.f32 %v10204, %v10214
        %v10217 = vld [vmem:[%s25] sm:$0x1]
        %v10219 = vlaneseq
        %v10220 = vshrl.u32 %v10219, 7
        %v10221 = vsub.s32 0, %v10220
        %v10222 = vrot.slane %v10217, %v10221
        %v10224 = vadd.f32 %v10215, %v10222
        %v10225 = vadd.f32 %v10216, %v10222
        %v10226 = vmax.f32 %v10224, 0.0
        %v10227 = vmax.f32 %v10225, 0.0
        %v10228 = vmin.f32 %v10226, 6.0
        %v10229 = vmin.f32 %v10227, 6.0
        %v10232 = vcombine.low %v10228, %v10229
        %v10234 = vunpack.c.l.s4 1983009808
        %v10235 = vunpack.c.0.s8 %v10234
        %v10236 = vlaneseq
        %v10237 = vshrl.u32 %v10236, 7
        %v10238 = vsub.s32 %v10235, %v10237
        %v10239 = vrot.slane %v10232, %v10238
        %v10241 = vpack.c.bf16 %v10239, %v10239
        %v10242 = vld [vmem:[%s27] sm:$0xf]
        %v10243 = vld [vmem:[%s27 + $0x4] sm:$0xf]
        %v10244 = vld [vmem:[%s27 + $0x8] sm:$0xf]
        %v10245 = vld [vmem:[%s27 + $0xc] sm:$0xf]
        %v10246 = vld [vmem:[%s27 + $0x10] sm:$0xf]
        %v10247 = vld [vmem:[%s27 + $0x14] sm:$0xf]
        %v10248 = vld [vmem:[%s27 + $0x18] sm:$0xf]
        %v10249 = vld [vmem:[%s27 + $0x1c] sm:$0xf]
        %v10250 = vld [vmem:[%s27 + $0x20] sm:$0xf]
        %v10251 = vld [vmem:[%s27 + $0x24] sm:$0xf]
        %v10252 = vld [vmem:[%s27 + $0x28] sm:$0xf]
        %v10253 = vld [vmem:[%s27 + $0x2c] sm:$0xf]
        %v10254 = vld [vmem:[%s27 + $0x30] sm:$0xf]
        %v10255 = vld [vmem:[%s27 + $0x34] sm:$0xf]
        %v10256 = vld [vmem:[%s27 + $0x38] sm:$0xf]
        %v10257 = vld [vmem:[%s27 + $0x3c] sm:$0xf]
        %v10258 = vld [vmem:[%s29] sm:$0x1]
        %v10260 = vlaneseq
        %v10261 = vshrl.u32 %v10260, 7
        %v10262 = vsub.s32 0, %v10261
        %v10263 = vrot.slane %v10258, %v10262
        %v10281 = vunpack.c.l.b16 %v10242
        %v10282 = vunpack.c.l.b16 %v10243
        %v10283 = vunpack.c.l.b16 %v10244
        %v10284 = vunpack.c.l.b16 %v10245
        %v10285 = vunpack.c.l.b16 %v10246
        %v10286 = vunpack.c.l.b16 %v10247
        %v10287 = vunpack.c.l.b16 %v10248
        %v10288 = vunpack.c.l.b16 %v10249
        %v10289 = vunpack.c.l.b16 %v10250
        %v10290 = vunpack.c.l.b16 %v10251
        %v10291 = vunpack.c.l.b16 %v10252
        %v10292 = vunpack.c.l.b16 %v10253
        %v10293 = vunpack.c.l.b16 %v10254
        %v10294 = vunpack.c.l.b16 %v10255
        %v10295 = vunpack.c.l.b16 %v10256
        %v10296 = vunpack.c.l.b16 %v10257
        %v10297 = vpack.c.b16 %v10282, %v10281
        %v10298 = vpack.c.b16 %v10284, %v10283
        %v10299 = vpack.c.b16 %v10286, %v10285
        %v10300 = vpack.c.b16 %v10288, %v10287
        %v10301 = vpack.c.b16 %v10290, %v10289
        %v10302 = vpack.c.b16 %v10292, %v10291
        %v10303 = vpack.c.b16 %v10294, %v10293
        %v10304 = vpack.c.b16 %v10296, %v10295
        %10313 = vmatprep.subr.bf16.mxu0 0
        %10314 = vmatpush1.bf16.msra.mxu0 %v10297
        %10315 = vmatprep.subr.bf16.mxu0 0
        %10316 = vmatpush1.bf16.msra.mxu0 %v10298
        %10317 = vmatprep.subr.bf16.mxu0 0
        %10318 = vmatpush1.bf16.msra.mxu0 %v10299
        %10319 = vmatprep.subr.bf16.mxu0 0
        %10320 = vmatpush1.bf16.msra.mxu0 %v10300
        %10321 = vmatprep.subr.bf16.mxu0 0
        %10322 = vmatpush1.bf16.msra.mxu0 %v10301
        %10323 = vmatprep.subr.bf16.mxu0 0
        %10324 = vmatpush1.bf16.msra.mxu0 %v10302
        %10325 = vmatprep.subr.bf16.mxu0 0
        %10326 = vmatpush1.bf16.msra.mxu0 %v10303
        %10327 = vmatprep.subr.bf16.mxu0 0
        %10328 = vmatpush1.bf16.msra.mxu0 %v10304
        %10329 = vmatprep.subr.bf16.mxu0 0
        %10330 = vmatpush1.bf16.msra.mxu0 0
        %10331 = vmatprep.subr.bf16.mxu0 0
        %10332 = vmatpush1.bf16.msra.mxu0 0
        %10333 = vmatprep.subr.bf16.mxu0 0
        %10334 = vmatpush1.bf16.msra.mxu0 0
        %10335 = vmatprep.subr.bf16.mxu0 0
        %10336 = vmatpush1.bf16.msra.mxu0 0
        %10337 = vmatprep.subr.bf16.mxu0 0
        %10338 = vmatpush1.bf16.msra.mxu0 0
        %10339 = vmatprep.subr.bf16.mxu0 0
        %10340 = vmatpush1.bf16.msra.mxu0 0
        %10341 = vmatprep.subr.bf16.mxu0 0
        %10342 = vmatpush1.bf16.msra.mxu0 0
        %10343 = vmatprep.subr.bf16.mxu0 0
        %10344 = vmatpush1.bf16.msra.mxu0 0
        %10345 = vmatprep.mubr.bf16.mxu0 0
        %10346 = vmatmul.mubr.bf16.gmra.mrb[0].mxu0 %v10241
        %v10347 = vpop.f32.mrb[0].mxu0
        %v10348 = vadd.f32 %v10263, %v10347
        %v10349 = vpop.f32.mrb[0].mxu0
        %v10350 = vpop.f32.mrb[0].mxu0
        %v10351 = vpop.f32.mrb[0].mxu0
        %10352 = vdwg.mxu0
        %v10355 = vunpack.c.l.s4 1983009808
        %v10356 = vunpack.c.0.s8 %v10355
        %v10357 = vlaneseq
        %v10358 = vshrl.u32 %v10357, 7
        %v10359 = vsub.s32 %v10356, %v10358
        %v10360 = vrot.slane %v10348, %v10359
        %v10361 = vcombine.high %v10360, %v10360
        %10364 = vst [vmem:[#allocation5] sm:$0xf] 0.0
        %10365 = vst [vmem:[#allocation5 + $0x4] sm:$0xf] 0.0
        %10366 = vst [vmem:[#allocation5 + $0x8] sm:$0xf] 0.0
        %10367 = vst [vmem:[#allocation5 + $0xc] sm:$0xf] 0.0
        %s10368 = scalar_lea.vmem [#allocation5], 4
        %10369 = vst [vmem:[%s10368 + $0x1] sm:$0x3] %v10360
        %10370 = vst [vmem:[%s10368 + $0x5] sm:$0x3] %v10361
        %v10371 = vld [vmem:[%s31] sm:$0xff]
        %v10372 = vld [vmem:[%s31 + $0x8] sm:$0x1]
        %v10373 = vld [vmem:[#allocation5] sm:$0x3]
        %v10374 = vld [vmem:[#allocation5 + $0x4] sm:$0x3]
        %v10375 = vlaneseq
        %v10376 = vshrl.u32 %v10375, 7
        %v10377 = vsub.s32 0, %v10376
        %v10378 = vrot.slane %v10371, %v10377
        %v10379 = vmul.f32 %v10373, %v10378
        %v10380 = vmul.f32 %v10374, %v10378
        %v10381 = vadd.f32 %v10379, 0.0
        %v10382 = vadd.f32 %v10380, 0.0
        %v10383 = vld [vmem:[#allocation5 + $0x1] sm:$0x3]
        %v10384 = vld [vmem:[#allocation5 + $0x5] sm:$0x3]
        %v10385 = vlaneseq
        %v10386 = vshrl.u32 %v10385, 7
        %v10387 = vsub.s32 1, %v10386
        %v10388 = vrot.slane %v10371, %v10387
        %v10389 = vmul.f32 %v10383, %v10388
        %v10390 = vmul.f32 %v10384, %v10388
        %v10391 = vadd.f32 %v10381, %v10389
        %v10392 = vadd.f32 %v10382, %v10390
        %v10393 = vld [vmem:[#allocation5 + $0x2] sm:$0x3]
        %v10394 = vld [vmem:[#allocation5 + $0x6] sm:$0x3]
        %v10395 = vlaneseq
        %v10396 = vshrl.u32 %v10395, 7
        %v10397 = vsub.s32 2, %v10396
        %v10398 = vrot.slane %v10371, %v10397
        %v10399 = vmul.f32 %v10393, %v10398
        %v10400 = vmul.f32 %v10394, %v10398
        %v10401 = vadd.f32 %v10391, %v10399
        %v10402 = vadd.f32 %v10392, %v10400
        %v10403 = vld [vmem:[%s10368] sm:$0x3]
        %v10404 = vld [vmem:[%s10368 + $0x4] sm:$0x3]
        %v10405 = vlaneseq
        %v10406 = vshrl.u32 %v10405, 7
        %v10407 = vsub.s32 3, %v10406
        %v10408 = vrot.slane %v10371, %v10407
        %v10409 = vmul.f32 %v10403, %v10408
        %v10410 = vmul.f32 %v10404, %v10408
        %v10411 = vadd.f32 %v10401, %v10409
        %v10412 = vadd.f32 %v10402, %v10410
        %v10413 = vld [vmem:[%s10368 + $0x1] sm:$0x3]
        %v10414 = vld [vmem:[%s10368 + $0x5] sm:$0x3]
        %v10415 = vlaneseq
        %v10416 = vshrl.u32 %v10415, 7
        %v10417 = vsub.s32 4, %v10416
        %v10418 = vrot.slane %v10371, %v10417
        %v10419 = vmul.f32 %v10413, %v10418
        %v10420 = vmul.f32 %v10414, %v10418
        %v10421 = vadd.f32 %v10411, %v10419
        %v10422 = vadd.f32 %v10412, %v10420
        %v10423 = vld [vmem:[%s10368 + $0x2] sm:$0x3]
        %v10424 = vld [vmem:[%s10368 + $0x6] sm:$0x3]
        %v10425 = vlaneseq
        %v10426 = vshrl.u32 %v10425, 7
        %v10427 = vsub.s32 5, %v10426
        %v10428 = vrot.slane %v10371, %v10427
        %v10429 = vmul.f32 %v10423, %v10428
        %v10430 = vmul.f32 %v10424, %v10428
        %v10431 = vadd.f32 %v10421, %v10429
        %v10432 = vadd.f32 %v10422, %v10430
        %s10433 = scalar_lea.vmem [#allocation5], 8
        %v10434 = vld [vmem:[%s10433] sm:$0x3]
        %v10435 = vld [vmem:[%s10433 + $0x4] sm:$0x3]
        %v10436 = vlaneseq
        %v10437 = vshrl.u32 %v10436, 7
        %v10438 = vsub.s32 6, %v10437
        %v10439 = vrot.slane %v10371, %v10438
        %v10440 = vmul.f32 %v10434, %v10439
        %v10441 = vmul.f32 %v10435, %v10439
        %v10442 = vadd.f32 %v10431, %v10440
        %v10443 = vadd.f32 %v10432, %v10441
        %v10444 = vld [vmem:[%s10433 + $0x1] sm:$0x3]
        %v10445 = vld [vmem:[%s10433 + $0x5] sm:$0x3]
        %v10446 = vlaneseq
        %v10447 = vshrl.u32 %v10446, 7
        %v10448 = vsub.s32 7, %v10447
        %v10449 = vrot.slane %v10371, %v10448
        %v10450 = vmul.f32 %v10444, %v10449
        %v10451 = vmul.f32 %v10445, %v10449
        %v10452 = vadd.f32 %v10442, %v10450
        %v10453 = vadd.f32 %v10443, %v10451
        %v10454 = vld [vmem:[%s10433 + $0x2] sm:$0x3]
        %v10455 = vld [vmem:[%s10433 + $0x6] sm:$0x3]
        %v10456 = vlaneseq
        %v10457 = vshrl.u32 %v10456, 7
        %v10458 = vsub.s32 0, %v10457
        %v10459 = vrot.slane %v10372, %v10458
        %v10460 = vmul.f32 %v10454, %v10459
        %v10461 = vmul.f32 %v10455, %v10459
        %v10462 = vadd.f32 %v10452, %v10460
        %v10463 = vadd.f32 %v10453, %v10461
        %v10464 = vld [vmem:[%s33] sm:$0x1]
        %v10466 = vlaneseq
        %v10467 = vshrl.u32 %v10466, 7
        %v10468 = vsub.s32 0, %v10467
        %v10469 = vrot.slane %v10464, %v10468
        %v10471 = vadd.f32 %v10462, %v10469
        %v10472 = vadd.f32 %v10463, %v10469
        %v10473 = vmax.f32 %v10471, 0.0
        %v10474 = vmax.f32 %v10472, 0.0
        %v10475 = vmin.f32 %v10473, 6.0
        %v10476 = vmin.f32 %v10474, 6.0
        %v10479 = vcombine.low %v10475, %v10476
        %v10481 = vunpack.c.l.s4 1983009808
        %v10482 = vunpack.c.0.s8 %v10481
        %v10483 = vlaneseq
        %v10484 = vshrl.u32 %v10483, 7
        %v10485 = vsub.s32 %v10482, %v10484
        %v10486 = vrot.slane %v10479, %v10485
        %v10488 = vpack.c.bf16 %v10486, %v10486
        %v10489 = vld [vmem:[%s35] sm:$0xf]
        %v10490 = vld [vmem:[%s35 + $0x4] sm:$0xf]
        %v10491 = vld [vmem:[%s35 + $0x8] sm:$0xf]
        %v10492 = vld [vmem:[%s35 + $0xc] sm:$0xf]
        %v10493 = vld [vmem:[%s35 + $0x10] sm:$0xf]
        %v10494 = vld [vmem:[%s35 + $0x14] sm:$0xf]
        %v10495 = vld [vmem:[%s35 + $0x18] sm:$0xf]
        %v10496 = vld [vmem:[%s35 + $0x1c] sm:$0xf]
        %v10497 = vld [vmem:[%s35 + $0x20] sm:$0xf]
        %v10498 = vld [vmem:[%s35 + $0x24] sm:$0xf]
        %v10499 = vld [vmem:[%s35 + $0x28] sm:$0xf]
        %v10500 = vld [vmem:[%s35 + $0x2c] sm:$0xf]
        %v10501 = vld [vmem:[%s35 + $0x30] sm:$0xf]
        %v10502 = vld [vmem:[%s35 + $0x34] sm:$0xf]
        %v10503 = vld [vmem:[%s35 + $0x38] sm:$0xf]
        %v10504 = vld [vmem:[%s35 + $0x3c] sm:$0xf]
        %v10505 = vld [vmem:[%s37] sm:$0x1]
        %v10507 = vlaneseq
        %v10508 = vshrl.u32 %v10507, 7
        %v10509 = vsub.s32 0, %v10508
        %v10510 = vrot.slane %v10505, %v10509
        %v10528 = vunpack.c.l.b16 %v10489
        %v10529 = vunpack.c.l.b16 %v10490
        %v10530 = vunpack.c.l.b16 %v10491
        %v10531 = vunpack.c.l.b16 %v10492
        %v10532 = vunpack.c.l.b16 %v10493
        %v10533 = vunpack.c.l.b16 %v10494
        %v10534 = vunpack.c.l.b16 %v10495
        %v10535 = vunpack.c.l.b16 %v10496
        %v10536 = vunpack.c.l.b16 %v10497
        %v10537 = vunpack.c.l.b16 %v10498
        %v10538 = vunpack.c.l.b16 %v10499
        %v10539 = vunpack.c.l.b16 %v10500
        %v10540 = vunpack.c.l.b16 %v10501
        %v10541 = vunpack.c.l.b16 %v10502
        %v10542 = vunpack.c.l.b16 %v10503
        %v10543 = vunpack.c.l.b16 %v10504
        %v10544 = vpack.c.b16 %v10529, %v10528
        %v10545 = vpack.c.b16 %v10531, %v10530
        %v10546 = vpack.c.b16 %v10533, %v10532
        %v10547 = vpack.c.b16 %v10535, %v10534
        %v10548 = vpack.c.b16 %v10537, %v10536
        %v10549 = vpack.c.b16 %v10539, %v10538
        %v10550 = vpack.c.b16 %v10541, %v10540
        %v10551 = vpack.c.b16 %v10543, %v10542
        %10560 = vmatprep.subr.bf16.mxu0 0
        %10561 = vmatpush1.bf16.msra.mxu0 %v10544
        %10562 = vmatprep.subr.bf16.mxu0 0
        %10563 = vmatpush1.bf16.msra.mxu0 %v10545
        %10564 = vmatprep.subr.bf16.mxu0 0
        %10565 = vmatpush1.bf16.msra.mxu0 %v10546
        %10566 = vmatprep.subr.bf16.mxu0 0
        %10567 = vmatpush1.bf16.msra.mxu0 %v10547
        %10568 = vmatprep.subr.bf16.mxu0 0
        %10569 = vmatpush1.bf16.msra.mxu0 %v10548
        %10570 = vmatprep.subr.bf16.mxu0 0
        %10571 = vmatpush1.bf16.msra.mxu0 %v10549
        %10572 = vmatprep.subr.bf16.mxu0 0
        %10573 = vmatpush1.bf16.msra.mxu0 %v10550
        %10574 = vmatprep.subr.bf16.mxu0 0
        %10575 = vmatpush1.bf16.msra.mxu0 %v10551
        %10576 = vmatprep.subr.bf16.mxu0 0
        %10577 = vmatpush1.bf16.msra.mxu0 0
        %10578 = vmatprep.subr.bf16.mxu0 0
        %10579 = vmatpush1.bf16.msra.mxu0 0
        %10580 = vmatprep.subr.bf16.mxu0 0
        %10581 = vmatpush1.bf16.msra.mxu0 0
        %10582 = vmatprep.subr.bf16.mxu0 0
        %10583 = vmatpush1.bf16.msra.mxu0 0
        %10584 = vmatprep.subr.bf16.mxu0 0
        %10585 = vmatpush1.bf16.msra.mxu0 0
        %10586 = vmatprep.subr.bf16.mxu0 0
        %10587 = vmatpush1.bf16.msra.mxu0 0
        %10588 = vmatprep.subr.bf16.mxu0 0
        %10589 = vmatpush1.bf16.msra.mxu0 0
        %10590 = vmatprep.subr.bf16.mxu0 0
        %10591 = vmatpush1.bf16.msra.mxu0 0
        %10592 = vmatprep.mubr.bf16.mxu0 0
        %10593 = vmatmul.mubr.bf16.gmra.mrb[0].mxu0 %v10488
        %v10594 = vpop.f32.mrb[0].mxu0
        %v10595 = vadd.f32 %v10510, %v10594
        %v10596 = vpop.f32.mrb[0].mxu0
        %v10597 = vpop.f32.mrb[0].mxu0
        %v10598 = vpop.f32.mrb[0].mxu0
        %10599 = vdwg.mxu0
        %v10602 = vunpack.c.l.s4 1983009808
        %v10603 = vunpack.c.0.s8 %v10602
        %v10604 = vlaneseq
        %v10605 = vshrl.u32 %v10604, 7
        %v10606 = vsub.s32 %v10603, %v10605
        %v10607 = vrot.slane %v10595, %v10606
        %v10608 = vcombine.high %v10607, %v10607
        %10611 = vst [vmem:[#allocation6] sm:$0xf] 0.0
        %10612 = vst [vmem:[#allocation6 + $0x4] sm:$0xf] 0.0
        %10613 = vst [vmem:[#allocation6 + $0x8] sm:$0xf] 0.0
        %10614 = vst [vmem:[#allocation6 + $0xc] sm:$0xf] 0.0
        %s10615 = scalar_lea.vmem [#allocation6], 4
        %10616 = vst [vmem:[%s10615 + $0x1] sm:$0x3] %v10607
        %10617 = vst [vmem:[%s10615 + $0x5] sm:$0x3] %v10608
        %v10618 = vld [vmem:[%s39] sm:$0xff]
        %v10619 = vld [vmem:[%s39 + $0x8] sm:$0x1]
        %v10620 = vld [vmem:[#allocation6] sm:$0x3]
        %v10621 = vld [vmem:[#allocation6 + $0x4] sm:$0x3]
        %v10622 = vlaneseq
        %v10623 = vshrl.u32 %v10622, 7
        %v10624 = vsub.s32 0, %v10623
        %v10625 = vrot.slane %v10618, %v10624
        %v10626 = vmul.f32 %v10620, %v10625
        %v10627 = vmul.f32 %v10621, %v10625
        %v10628 = vadd.f32 %v10626, 0.0
        %v10629 = vadd.f32 %v10627, 0.0
        %v10630 = vld [vmem:[#allocation6 + $0x1] sm:$0x3]
        %v10631 = vld [vmem:[#allocation6 + $0x5] sm:$0x3]
        %v10632 = vlaneseq
        %v10633 = vshrl.u32 %v10632, 7
        %v10634 = vsub.s32 1, %v10633
        %v10635 = vrot.slane %v10618, %v10634
        %v10636 = vmul.f32 %v10630, %v10635
        %v10637 = vmul.f32 %v10631, %v10635
        %v10638 = vadd.f32 %v10628, %v10636
        %v10639 = vadd.f32 %v10629, %v10637
        %v10640 = vld [vmem:[#allocation6 + $0x2] sm:$0x3]
        %v10641 = vld [vmem:[#allocation6 + $0x6] sm:$0x3]
        %v10642 = vlaneseq
        %v10643 = vshrl.u32 %v10642, 7
        %v10644 = vsub.s32 2, %v10643
        %v10645 = vrot.slane %v10618, %v10644
        %v10646 = vmul.f32 %v10640, %v10645
        %v10647 = vmul.f32 %v10641, %v10645
        %v10648 = vadd.f32 %v10638, %v10646
        %v10649 = vadd.f32 %v10639, %v10647
        %v10650 = vld [vmem:[%s10615] sm:$0x3]
        %v10651 = vld [vmem:[%s10615 + $0x4] sm:$0x3]
        %v10652 = vlaneseq
        %v10653 = vshrl.u32 %v10652, 7
        %v10654 = vsub.s32 3, %v10653
        %v10655 = vrot.slane %v10618, %v10654
        %v10656 = vmul.f32 %v10650, %v10655
        %v10657 = vmul.f32 %v10651, %v10655
        %v10658 = vadd.f32 %v10648, %v10656
        %v10659 = vadd.f32 %v10649, %v10657
        %v10660 = vld [vmem:[%s10615 + $0x1] sm:$0x3]
        %v10661 = vld [vmem:[%s10615 + $0x5] sm:$0x3]
        %v10662 = vlaneseq
        %v10663 = vshrl.u32 %v10662, 7
        %v10664 = vsub.s32 4, %v10663
        %v10665 = vrot.slane %v10618, %v10664
        %v10666 = vmul.f32 %v10660, %v10665
        %v10667 = vmul.f32 %v10661, %v10665
        %v10668 = vadd.f32 %v10658, %v10666
        %v10669 = vadd.f32 %v10659, %v10667
        %v10670 = vld [vmem:[%s10615 + $0x2] sm:$0x3]
        %v10671 = vld [vmem:[%s10615 + $0x6] sm:$0x3]
        %v10672 = vlaneseq
        %v10673 = vshrl.u32 %v10672, 7
        %v10674 = vsub.s32 5, %v10673
        %v10675 = vrot.slane %v10618, %v10674
        %v10676 = vmul.f32 %v10670, %v10675
        %v10677 = vmul.f32 %v10671, %v10675
        %v10678 = vadd.f32 %v10668, %v10676
        %v10679 = vadd.f32 %v10669, %v10677
        %s10680 = scalar_lea.vmem [#allocation6], 8
        %v10681 = vld [vmem:[%s10680] sm:$0x3]
        %v10682 = vld [vmem:[%s10680 + $0x4] sm:$0x3]
        %v10683 = vlaneseq
        %v10684 = vshrl.u32 %v10683, 7
        %v10685 = vsub.s32 6, %v10684
        %v10686 = vrot.slane %v10618, %v10685
        %v10687 = vmul.f32 %v10681, %v10686
        %v10688 = vmul.f32 %v10682, %v10686
        %v10689 = vadd.f32 %v10678, %v10687
        %v10690 = vadd.f32 %v10679, %v10688
        %v10691 = vld [vmem:[%s10680 + $0x1] sm:$0x3]
        %v10692 = vld [vmem:[%s10680 + $0x5] sm:$0x3]
        %v10693 = vlaneseq
        %v10694 = vshrl.u32 %v10693, 7
        %v10695 = vsub.s32 7, %v10694
        %v10696 = vrot.slane %v10618, %v10695
        %v10697 = vmul.f32 %v10691, %v10696
        %v10698 = vmul.f32 %v10692, %v10696
        %v10699 = vadd.f32 %v10689, %v10697
        %v10700 = vadd.f32 %v10690, %v10698
        %v10701 = vld [vmem:[%s10680 + $0x2] sm:$0x3]
        %v10702 = vld [vmem:[%s10680 + $0x6] sm:$0x3]
        %v10703 = vlaneseq
        %v10704 = vshrl.u32 %v10703, 7
        %v10705 = vsub.s32 0, %v10704
        %v10706 = vrot.slane %v10619, %v10705
        %v10707 = vmul.f32 %v10701, %v10706
        %v10708 = vmul.f32 %v10702, %v10706
        %v10709 = vadd.f32 %v10699, %v10707
        %v10710 = vadd.f32 %v10700, %v10708
        %v10711 = vld [vmem:[%s41] sm:$0x1]
        %v10713 = vlaneseq
        %v10714 = vshrl.u32 %v10713, 7
        %v10715 = vsub.s32 0, %v10714
        %v10716 = vrot.slane %v10711, %v10715
        %v10718 = vadd.f32 %v10709, %v10716
        %v10719 = vadd.f32 %v10710, %v10716
        %v10720 = vmax.f32 %v10718, 0.0
        %v10721 = vmax.f32 %v10719, 0.0
        %v10722 = vmin.f32 %v10720, 6.0
        %v10723 = vmin.f32 %v10721, 6.0
        %v10726 = vcombine.low %v10722, %v10723
        %v10728 = vunpack.c.l.s4 1983009808
        %v10729 = vunpack.c.0.s8 %v10728
        %v10730 = vlaneseq
        %v10731 = vshrl.u32 %v10730, 7
        %v10732 = vsub.s32 %v10729, %v10731
        %v10733 = vrot.slane %v10726, %v10732
        %v10735 = vpack.c.bf16 %v10733, %v10733
        %v10736 = vld [vmem:[%s43] sm:$0xf]
        %v10737 = vld [vmem:[%s43 + $0x4] sm:$0xf]
        %v10738 = vld [vmem:[%s43 + $0x8] sm:$0xf]
        %v10739 = vld [vmem:[%s43 + $0xc] sm:$0xf]
        %v10740 = vld [vmem:[%s43 + $0x10] sm:$0xf]
        %v10741 = vld [vmem:[%s43 + $0x14] sm:$0xf]
        %v10742 = vld [vmem:[%s43 + $0x18] sm:$0xf]
        %v10743 = vld [vmem:[%s43 + $0x1c] sm:$0xf]
        %v10744 = vld [vmem:[%s43 + $0x20] sm:$0xf]
        %v10745 = vld [vmem:[%s43 + $0x24] sm:$0xf]
        %v10746 = vld [vmem:[%s43 + $0x28] sm:$0xf]
        %v10747 = vld [vmem:[%s43 + $0x2c] sm:$0xf]
        %v10748 = vld [vmem:[%s43 + $0x30] sm:$0xf]
        %v10749 = vld [vmem:[%s43 + $0x34] sm:$0xf]
        %v10750 = vld [vmem:[%s43 + $0x38] sm:$0xf]
        %v10751 = vld [vmem:[%s43 + $0x3c] sm:$0xf]
        %v10752 = vld [vmem:[%s45] sm:$0x1]
        %v10754 = vlaneseq
        %v10755 = vshrl.u32 %v10754, 7
        %v10756 = vsub.s32 0, %v10755
        %v10757 = vrot.slane %v10752, %v10756
        %v10775 = vunpack.c.l.b16 %v10736
        %v10776 = vunpack.c.l.b16 %v10737
        %v10777 = vunpack.c.l.b16 %v10738
        %v10778 = vunpack.c.l.b16 %v10739
        %v10779 = vunpack.c.l.b16 %v10740
        %v10780 = vunpack.c.l.b16 %v10741
        %v10781 = vunpack.c.l.b16 %v10742
        %v10782 = vunpack.c.l.b16 %v10743
        %v10783 = vunpack.c.l.b16 %v10744
        %v10784 = vunpack.c.l.b16 %v10745
        %v10785 = vunpack.c.l.b16 %v10746
        %v10786 = vunpack.c.l.b16 %v10747
        %v10787 = vunpack.c.l.b16 %v10748
        %v10788 = vunpack.c.l.b16 %v10749
        %v10789 = vunpack.c.l.b16 %v10750
        %v10790 = vunpack.c.l.b16 %v10751
        %v10791 = vpack.c.b16 %v10776, %v10775
        %v10792 = vpack.c.b16 %v10778, %v10777
        %v10793 = vpack.c.b16 %v10780, %v10779
        %v10794 = vpack.c.b16 %v10782, %v10781
        %v10795 = vpack.c.b16 %v10784, %v10783
        %v10796 = vpack.c.b16 %v10786, %v10785
        %v10797 = vpack.c.b16 %v10788, %v10787
        %v10798 = vpack.c.b16 %v10790, %v10789
        %10807 = vmatprep.subr.bf16.mxu0 0
        %10808 = vmatpush1.bf16.msra.mxu0 %v10791
        %10809 = vmatprep.subr.bf16.mxu0 0
        %10810 = vmatpush1.bf16.msra.mxu0 %v10792
        %10811 = vmatprep.subr.bf16.mxu0 0
        %10812 = vmatpush1.bf16.msra.mxu0 %v10793
        %10813 = vmatprep.subr.bf16.mxu0 0
        %10814 = vmatpush1.bf16.msra.mxu0 %v10794
        %10815 = vmatprep.subr.bf16.mxu0 0
        %10816 = vmatpush1.bf16.msra.mxu0 %v10795
        %10817 = vmatprep.subr.bf16.mxu0 0
        %10818 = vmatpush1.bf16.msra.mxu0 %v10796
        %10819 = vmatprep.subr.bf16.mxu0 0
        %10820 = vmatpush1.bf16.msra.mxu0 %v10797
        %10821 = vmatprep.subr.bf16.mxu0 0
        %10822 = vmatpush1.bf16.msra.mxu0 %v10798
        %10823 = vmatprep.subr.bf16.mxu0 0
        %10824 = vmatpush1.bf16.msra.mxu0 0
        %10825 = vmatprep.subr.bf16.mxu0 0
        %10826 = vmatpush1.bf16.msra.mxu0 0
        %10827 = vmatprep.subr.bf16.mxu0 0
        %10828 = vmatpush1.bf16.msra.mxu0 0
        %10829 = vmatprep.subr.bf16.mxu0 0
        %10830 = vmatpush1.bf16.msra.mxu0 0
        %10831 = vmatprep.subr.bf16.mxu0 0
        %10832 = vmatpush1.bf16.msra.mxu0 0
        %10833 = vmatprep.subr.bf16.mxu0 0
        %10834 = vmatpush1.bf16.msra.mxu0 0
        %10835 = vmatprep.subr.bf16.mxu0 0
        %10836 = vmatpush1.bf16.msra.mxu0 0
        %10837 = vmatprep.subr.bf16.mxu0 0
        %10838 = vmatpush1.bf16.msra.mxu0 0
        %10839 = vmatprep.mubr.bf16.mxu0 0
        %10840 = vmatmul.mubr.bf16.gmra.mrb[0].mxu0 %v10735
        %v10841 = vpop.f32.mrb[0].mxu0
        %v10842 = vadd.f32 %v10757, %v10841
        %v10843 = vpop.f32.mrb[0].mxu0
        %v10844 = vpop.f32.mrb[0].mxu0
        %v10845 = vpop.f32.mrb[0].mxu0
        %10846 = vdwg.mxu0
        %v10849 = vunpack.c.l.s4 1983009808
        %v10850 = vunpack.c.0.s8 %v10849
        %v10851 = vlaneseq
        %v10852 = vshrl.u32 %v10851, 7
        %v10853 = vsub.s32 %v10850, %v10852
        %v10854 = vrot.slane %v10842, %v10853
        %v10855 = vcombine.high %v10854, %v10854
        %10858 = vst [vmem:[#allocation7] sm:$0xf] 0.0
        %10859 = vst [vmem:[#allocation7 + $0x4] sm:$0xf] 0.0
        %10860 = vst [vmem:[#allocation7 + $0x8] sm:$0xf] 0.0
        %10861 = vst [vmem:[#allocation7 + $0xc] sm:$0xf] 0.0
        %s10862 = scalar_lea.vmem [#allocation7], 4
        %10863 = vst [vmem:[%s10862 + $0x1] sm:$0x3] %v10854
        %10864 = vst [vmem:[%s10862 + $0x5] sm:$0x3] %v10855
        %v10865 = vld [vmem:[%s47] sm:$0xff]
        %v10866 = vld [vmem:[%s47 + $0x8] sm:$0x1]
        %v10867 = vld [vmem:[#allocation7] sm:$0x3]
        %v10868 = vld [vmem:[#allocation7 + $0x4] sm:$0x3]
        %v10869 = vlaneseq
        %v10870 = vshrl.u32 %v10869, 7
        %v10871 = vsub.s32 0, %v10870
        %v10872 = vrot.slane %v10865, %v10871
        %v10873 = vmul.f32 %v10867, %v10872
        %v10874 = vmul.f32 %v10868, %v10872
        %v10875 = vadd.f32 %v10873, 0.0
        %v10876 = vadd.f32 %v10874, 0.0
        %v10877 = vld [vmem:[#allocation7 + $0x1] sm:$0x3]
        %v10878 = vld [vmem:[#allocation7 + $0x5] sm:$0x3]
        %v10879 = vlaneseq
        %v10880 = vshrl.u32 %v10879, 7
        %v10881 = vsub.s32 1, %v10880
        %v10882 = vrot.slane %v10865, %v10881
        %v10883 = vmul.f32 %v10877, %v10882
        %v10884 = vmul.f32 %v10878, %v10882
        %v10885 = vadd.f32 %v10875, %v10883
        %v10886 = vadd.f32 %v10876, %v10884
        %v10887 = vld [vmem:[#allocation7 + $0x2] sm:$0x3]
        %v10888 = vld [vmem:[#allocation7 + $0x6] sm:$0x3]
        %v10889 = vlaneseq
        %v10890 = vshrl.u32 %v10889, 7
        %v10891 = vsub.s32 2, %v10890
        %v10892 = vrot.slane %v10865, %v10891
        %v10893 = vmul.f32 %v10887, %v10892
        %v10894 = vmul.f32 %v10888, %v10892
        %v10895 = vadd.f32 %v10885, %v10893
        %v10896 = vadd.f32 %v10886, %v10894
        %v10897 = vld [vmem:[%s10862] sm:$0x3]
        %v10898 = vld [vmem:[%s10862 + $0x4] sm:$0x3]
        %v10899 = vlaneseq
        %v10900 = vshrl.u32 %v10899, 7
        %v10901 = vsub.s32 3, %v10900
        %v10902 = vrot.slane %v10865, %v10901
        %v10903 = vmul.f32 %v10897, %v10902
        %v10904 = vmul.f32 %v10898, %v10902
        %v10905 = vadd.f32 %v10895, %v10903
        %v10906 = vadd.f32 %v10896, %v10904
        %v10907 = vld [vmem:[%s10862 + $0x1] sm:$0x3]
        %v10908 = vld [vmem:[%s10862 + $0x5] sm:$0x3]
        %v10909 = vlaneseq
        %v10910 = vshrl.u32 %v10909, 7
        %v10911 = vsub.s32 4, %v10910
        %v10912 = vrot.slane %v10865, %v10911
        %v10913 = vmul.f32 %v10907, %v10912
        %v10914 = vmul.f32 %v10908, %v10912
        %v10915 = vadd.f32 %v10905, %v10913
        %v10916 = vadd.f32 %v10906, %v10914
        %v10917 = vld [vmem:[%s10862 + $0x2] sm:$0x3]
        %v10918 = vld [vmem:[%s10862 + $0x6] sm:$0x3]
        %v10919 = vlaneseq
        %v10920 = vshrl.u32 %v10919, 7
        %v10921 = vsub.s32 5, %v10920
        %v10922 = vrot.slane %v10865, %v10921
        %v10923 = vmul.f32 %v10917, %v10922
        %v10924 = vmul.f32 %v10918, %v10922
        %v10925 = vadd.f32 %v10915, %v10923
        %v10926 = vadd.f32 %v10916, %v10924
        %s10927 = scalar_lea.vmem [#allocation7], 8
        %v10928 = vld [vmem:[%s10927] sm:$0x3]
        %v10929 = vld [vmem:[%s10927 + $0x4] sm:$0x3]
        %v10930 = vlaneseq
        %v10931 = vshrl.u32 %v10930, 7
        %v10932 = vsub.s32 6, %v10931
        %v10933 = vrot.slane %v10865, %v10932
        %v10934 = vmul.f32 %v10928, %v10933
        %v10935 = vmul.f32 %v10929, %v10933
        %v10936 = vadd.f32 %v10925, %v10934
        %v10937 = vadd.f32 %v10926, %v10935
        %v10938 = vld [vmem:[%s10927 + $0x1] sm:$0x3]
        %v10939 = vld [vmem:[%s10927 + $0x5] sm:$0x3]
        %v10940 = vlaneseq
        %v10941 = vshrl.u32 %v10940, 7
        %v10942 = vsub.s32 7, %v10941
        %v10943 = vrot.slane %v10865, %v10942
        %v10944 = vmul.f32 %v10938, %v10943
        %v10945 = vmul.f32 %v10939, %v10943
        %v10946 = vadd.f32 %v10936, %v10944
        %v10947 = vadd.f32 %v10937, %v10945
        %v10948 = vld [vmem:[%s10927 + $0x2] sm:$0x3]
        %v10949 = vld [vmem:[%s10927 + $0x6] sm:$0x3]
        %v10950 = vlaneseq
        %v10951 = vshrl.u32 %v10950, 7
        %v10952 = vsub.s32 0, %v10951
        %v10953 = vrot.slane %v10866, %v10952
        %v10954 = vmul.f32 %v10948, %v10953
        %v10955 = vmul.f32 %v10949, %v10953
        %v10956 = vadd.f32 %v10946, %v10954
        %v10957 = vadd.f32 %v10947, %v10955
        %v10958 = vld [vmem:[%s49] sm:$0x1]
        %v10960 = vlaneseq
        %v10961 = vshrl.u32 %v10960, 7
        %v10962 = vsub.s32 0, %v10961
        %v10963 = vrot.slane %v10958, %v10962
        %v10965 = vadd.f32 %v10956, %v10963
        %v10966 = vadd.f32 %v10957, %v10963
        %v10967 = vmax.f32 %v10965, 0.0
        %v10968 = vmax.f32 %v10966, 0.0
        %v10969 = vmin.f32 %v10967, 6.0
        %v10970 = vmin.f32 %v10968, 6.0
        %v10973 = vcombine.low %v10969, %v10970
        %v10975 = vunpack.c.l.s4 1983009808
        %v10976 = vunpack.c.0.s8 %v10975
        %v10977 = vlaneseq
        %v10978 = vshrl.u32 %v10977, 7
        %v10979 = vsub.s32 %v10976, %v10978
        %v10980 = vrot.slane %v10973, %v10979
        %v10982 = vpack.c.bf16 %v10980, %v10980
        %v10983 = vld [vmem:[%s51] sm:$0xf]
        %v10984 = vld [vmem:[%s51 + $0x4] sm:$0xf]
        %v10985 = vld [vmem:[%s51 + $0x8] sm:$0xf]
        %v10986 = vld [vmem:[%s51 + $0xc] sm:$0xf]
        %v10987 = vld [vmem:[%s51 + $0x10] sm:$0xf]
        %v10988 = vld [vmem:[%s51 + $0x14] sm:$0xf]
        %v10989 = vld [vmem:[%s51 + $0x18] sm:$0xf]
        %v10990 = vld [vmem:[%s51 + $0x1c] sm:$0xf]
        %v10991 = vld [vmem:[%s51 + $0x20] sm:$0xf]
        %v10992 = vld [vmem:[%s51 + $0x24] sm:$0xf]
        %v10993 = vld [vmem:[%s51 + $0x28] sm:$0xf]
        %v10994 = vld [vmem:[%s51 + $0x2c] sm:$0xf]
        %v10995 = vld [vmem:[%s51 + $0x30] sm:$0xf]
        %v10996 = vld [vmem:[%s51 + $0x34] sm:$0xf]
        %v10997 = vld [vmem:[%s51 + $0x38] sm:$0xf]
        %v10998 = vld [vmem:[%s51 + $0x3c] sm:$0xf]
        %v10999 = vld [vmem:[%s53] sm:$0x1]
        %v11001 = vlaneseq
        %v11002 = vshrl.u32 %v11001, 7
        %v11003 = vsub.s32 0, %v11002
        %v11004 = vrot.slane %v10999, %v11003
        %v11022 = vunpack.c.l.b16 %v10983
        %v11023 = vunpack.c.l.b16 %v10984
        %v11024 = vunpack.c.l.b16 %v10985
        %v11025 = vunpack.c.l.b16 %v10986
        %v11026 = vunpack.c.l.b16 %v10987
        %v11027 = vunpack.c.l.b16 %v10988
        %v11028 = vunpack.c.l.b16 %v10989
        %v11029 = vunpack.c.l.b16 %v10990
        %v11030 = vunpack.c.l.b16 %v10991
        %v11031 = vunpack.c.l.b16 %v10992
        %v11032 = vunpack.c.l.b16 %v10993
        %v11033 = vunpack.c.l.b16 %v10994
        %v11034 = vunpack.c.l.b16 %v10995
        %v11035 = vunpack.c.l.b16 %v10996
        %v11036 = vunpack.c.l.b16 %v10997
        %v11037 = vunpack.c.l.b16 %v10998
        %v11038 = vpack.c.b16 %v11023, %v11022
        %v11039 = vpack.c.b16 %v11025, %v11024
        %v11040 = vpack.c.b16 %v11027, %v11026
        %v11041 = vpack.c.b16 %v11029, %v11028
        %v11042 = vpack.c.b16 %v11031, %v11030
        %v11043 = vpack.c.b16 %v11033, %v11032
        %v11044 = vpack.c.b16 %v11035, %v11034
        %v11045 = vpack.c.b16 %v11037, %v11036
        %11054 = vmatprep.subr.bf16.mxu0 0
        %11055 = vmatpush1.bf16.msra.mxu0 %v11038
        %11056 = vmatprep.subr.bf16.mxu0 0
        %11057 = vmatpush1.bf16.msra.mxu0 %v11039
        %11058 = vmatprep.subr.bf16.mxu0 0
        %11059 = vmatpush1.bf16.msra.mxu0 %v11040
        %11060 = vmatprep.subr.bf16.mxu0 0
        %11061 = vmatpush1.bf16.msra.mxu0 %v11041
        %11062 = vmatprep.subr.bf16.mxu0 0
        %11063 = vmatpush1.bf16.msra.mxu0 %v11042
        %11064 = vmatprep.subr.bf16.mxu0 0
        %11065 = vmatpush1.bf16.msra.mxu0 %v11043
        %11066 = vmatprep.subr.bf16.mxu0 0
        %11067 = vmatpush1.bf16.msra.mxu0 %v11044
        %11068 = vmatprep.subr.bf16.mxu0 0
        %11069 = vmatpush1.bf16.msra.mxu0 %v11045
        %11070 = vmatprep.subr.bf16.mxu0 0
        %11071 = vmatpush1.bf16.msra.mxu0 0
        %11072 = vmatprep.subr.bf16.mxu0 0
        %11073 = vmatpush1.bf16.msra.mxu0 0
        %11074 = vmatprep.subr.bf16.mxu0 0
        %11075 = vmatpush1.bf16.msra.mxu0 0
        %11076 = vmatprep.subr.bf16.mxu0 0
        %11077 = vmatpush1.bf16.msra.mxu0 0
        %11078 = vmatprep.subr.bf16.mxu0 0
        %11079 = vmatpush1.bf16.msra.mxu0 0
        %11080 = vmatprep.subr.bf16.mxu0 0
        %11081 = vmatpush1.bf16.msra.mxu0 0
        %11082 = vmatprep.subr.bf16.mxu0 0
        %11083 = vmatpush1.bf16.msra.mxu0 0
        %11084 = vmatprep.subr.bf16.mxu0 0
        %11085 = vmatpush1.bf16.msra.mxu0 0
        %11086 = vmatprep.mubr.bf16.mxu0 0
        %11087 = vmatmul.mubr.bf16.gmra.mrb[0].mxu0 %v10982
        %v11088 = vpop.f32.mrb[0].mxu0
        %v11089 = vadd.f32 %v11004, %v11088
        %v11090 = vpop.f32.mrb[0].mxu0
        %v11091 = vpop.f32.mrb[0].mxu0
        %v11092 = vpop.f32.mrb[0].mxu0
        %11093 = vdwg.mxu0
        %v11096 = vunpack.c.l.s4 1983009808
        %v11097 = vunpack.c.0.s8 %v11096
        %v11098 = vlaneseq
        %v11099 = vshrl.u32 %v11098, 7
        %v11100 = vsub.s32 %v11097, %v11099
        %v11101 = vrot.slane %v11089, %v11100
        %v11102 = vcombine.high %v11101, %v11101
        %11105 = vst [vmem:[#allocation8] sm:$0xf] 0.0
        %11106 = vst [vmem:[#allocation8 + $0x4] sm:$0xf] 0.0
        %11107 = vst [vmem:[#allocation8 + $0x8] sm:$0xf] 0.0
        %11108 = vst [vmem:[#allocation8 + $0xc] sm:$0xf] 0.0
        %s11109 = scalar_lea.vmem [#allocation8], 4
        %11110 = vst [vmem:[%s11109 + $0x1] sm:$0x3] %v11101
        %11111 = vst [vmem:[%s11109 + $0x5] sm:$0x3] %v11102
        %v11112 = vld [vmem:[%s55] sm:$0xff]
        %v11113 = vld [vmem:[%s55 + $0x8] sm:$0x1]
        %v11114 = vld [vmem:[#allocation8] sm:$0x3]
        %v11115 = vld [vmem:[#allocation8 + $0x4] sm:$0x3]
        %v11116 = vlaneseq
        %v11117 = vshrl.u32 %v11116, 7
        %v11118 = vsub.s32 0, %v11117
        %v11119 = vrot.slane %v11112, %v11118
        %v11120 = vmul.f32 %v11114, %v11119
        %v11121 = vmul.f32 %v11115, %v11119
        %v11122 = vadd.f32 %v11120, 0.0
        %v11123 = vadd.f32 %v11121, 0.0
        %v11124 = vld [vmem:[#allocation8 + $0x1] sm:$0x3]
        %v11125 = vld [vmem:[#allocation8 + $0x5] sm:$0x3]
        %v11126 = vlaneseq
        %v11127 = vshrl.u32 %v11126, 7
        %v11128 = vsub.s32 1, %v11127
        %v11129 = vrot.slane %v11112, %v11128
        %v11130 = vmul.f32 %v11124, %v11129
        %v11131 = vmul.f32 %v11125, %v11129
        %v11132 = vadd.f32 %v11122, %v11130
        %v11133 = vadd.f32 %v11123, %v11131
        %v11134 = vld [vmem:[#allocation8 + $0x2] sm:$0x3]
        %v11135 = vld [vmem:[#allocation8 + $0x6] sm:$0x3]
        %v11136 = vlaneseq
        %v11137 = vshrl.u32 %v11136, 7
        %v11138 = vsub.s32 2, %v11137
        %v11139 = vrot.slane %v11112, %v11138
        %v11140 = vmul.f32 %v11134, %v11139
        %v11141 = vmul.f32 %v11135, %v11139
        %v11142 = vadd.f32 %v11132, %v11140
        %v11143 = vadd.f32 %v11133, %v11141
        %v11144 = vld [vmem:[%s11109] sm:$0x3]
        %v11145 = vld [vmem:[%s11109 + $0x4] sm:$0x3]
        %v11146 = vlaneseq
        %v11147 = vshrl.u32 %v11146, 7
        %v11148 = vsub.s32 3, %v11147
        %v11149 = vrot.slane %v11112, %v11148
        %v11150 = vmul.f32 %v11144, %v11149
        %v11151 = vmul.f32 %v11145, %v11149
        %v11152 = vadd.f32 %v11142, %v11150
        %v11153 = vadd.f32 %v11143, %v11151
        %v11154 = vld [vmem:[%s11109 + $0x1] sm:$0x3]
        %v11155 = vld [vmem:[%s11109 + $0x5] sm:$0x3]
        %v11156 = vlaneseq
        %v11157 = vshrl.u32 %v11156, 7
        %v11158 = vsub.s32 4, %v11157
        %v11159 = vrot.slane %v11112, %v11158
        %v11160 = vmul.f32 %v11154, %v11159
        %v11161 = vmul.f32 %v11155, %v11159
        %v11162 = vadd.f32 %v11152, %v11160
        %v11163 = vadd.f32 %v11153, %v11161
        %v11164 = vld [vmem:[%s11109 + $0x2] sm:$0x3]
        %v11165 = vld [vmem:[%s11109 + $0x6] sm:$0x3]
        %v11166 = vlaneseq
        %v11167 = vshrl.u32 %v11166, 7
        %v11168 = vsub.s32 5, %v11167
        %v11169 = vrot.slane %v11112, %v11168
        %v11170 = vmul.f32 %v11164, %v11169
        %v11171 = vmul.f32 %v11165, %v11169
        %v11172 = vadd.f32 %v11162, %v11170
        %v11173 = vadd.f32 %v11163, %v11171
        %s11174 = scalar_lea.vmem [#allocation8], 8
        %v11175 = vld [vmem:[%s11174] sm:$0x3]
        %v11176 = vld [vmem:[%s11174 + $0x4] sm:$0x3]
        %v11177 = vlaneseq
        %v11178 = vshrl.u32 %v11177, 7
        %v11179 = vsub.s32 6, %v11178
        %v11180 = vrot.slane %v11112, %v11179
        %v11181 = vmul.f32 %v11175, %v11180
        %v11182 = vmul.f32 %v11176, %v11180
        %v11183 = vadd.f32 %v11172, %v11181
        %v11184 = vadd.f32 %v11173, %v11182
        %v11185 = vld [vmem:[%s11174 + $0x1] sm:$0x3]
        %v11186 = vld [vmem:[%s11174 + $0x5] sm:$0x3]
        %v11187 = vlaneseq
        %v11188 = vshrl.u32 %v11187, 7
        %v11189 = vsub.s32 7, %v11188
        %v11190 = vrot.slane %v11112, %v11189
        %v11191 = vmul.f32 %v11185, %v11190
        %v11192 = vmul.f32 %v11186, %v11190
        %v11193 = vadd.f32 %v11183, %v11191
        %v11194 = vadd.f32 %v11184, %v11192
        %v11195 = vld [vmem:[%s11174 + $0x2] sm:$0x3]
        %v11196 = vld [vmem:[%s11174 + $0x6] sm:$0x3]
        %v11197 = vlaneseq
        %v11198 = vshrl.u32 %v11197, 7
        %v11199 = vsub.s32 0, %v11198
        %v11200 = vrot.slane %v11113, %v11199
        %v11201 = vmul.f32 %v11195, %v11200
        %v11202 = vmul.f32 %v11196, %v11200
        %v11203 = vadd.f32 %v11193, %v11201
        %v11204 = vadd.f32 %v11194, %v11202
        %v11205 = vld [vmem:[%s57] sm:$0x1]
        %v11207 = vlaneseq
        %v11208 = vshrl.u32 %v11207, 7
        %v11209 = vsub.s32 0, %v11208
        %v11210 = vrot.slane %v11205, %v11209
        %v11212 = vadd.f32 %v11203, %v11210
        %v11213 = vadd.f32 %v11204, %v11210
        %v11214 = vmax.f32 %v11212, 0.0
        %v11215 = vmax.f32 %v11213, 0.0
        %v11216 = vmin.f32 %v11214, 6.0
        %v11217 = vmin.f32 %v11215, 6.0
        %v11220 = vcombine.low %v11216, %v11217
        %v11222 = vunpack.c.l.s4 1983009808
        %v11223 = vunpack.c.0.s8 %v11222
        %v11224 = vlaneseq
        %v11225 = vshrl.u32 %v11224, 7
        %v11226 = vsub.s32 %v11223, %v11225
        %v11227 = vrot.slane %v11220, %v11226
        %v11229 = vpack.c.bf16 %v11227, %v11227
        %v11230 = vld [vmem:[%s59] sm:$0xf]
        %v11231 = vld [vmem:[%s59 + $0x4] sm:$0xf]
        %v11232 = vld [vmem:[%s59 + $0x8] sm:$0xf]
        %v11233 = vld [vmem:[%s59 + $0xc] sm:$0xf]
        %v11234 = vld [vmem:[%s59 + $0x10] sm:$0xf]
        %v11235 = vld [vmem:[%s59 + $0x14] sm:$0xf]
        %v11236 = vld [vmem:[%s59 + $0x18] sm:$0xf]
        %v11237 = vld [vmem:[%s59 + $0x1c] sm:$0xf]
        %v11238 = vld [vmem:[%s59 + $0x20] sm:$0xf]
        %v11239 = vld [vmem:[%s59 + $0x24] sm:$0xf]
        %v11240 = vld [vmem:[%s59 + $0x28] sm:$0xf]
        %v11241 = vld [vmem:[%s59 + $0x2c] sm:$0xf]
        %v11242 = vld [vmem:[%s59 + $0x30] sm:$0xf]
        %v11243 = vld [vmem:[%s59 + $0x34] sm:$0xf]
        %v11244 = vld [vmem:[%s59 + $0x38] sm:$0xf]
        %v11245 = vld [vmem:[%s59 + $0x3c] sm:$0xf]
        %v11246 = vld [vmem:[%s61] sm:$0x1]
        %v11248 = vlaneseq
        %v11249 = vshrl.u32 %v11248, 7
        %v11250 = vsub.s32 0, %v11249
        %v11251 = vrot.slane %v11246, %v11250
        %v11269 = vunpack.c.l.b16 %v11230
        %v11270 = vunpack.c.l.b16 %v11231
        %v11271 = vunpack.c.l.b16 %v11232
        %v11272 = vunpack.c.l.b16 %v11233
        %v11273 = vunpack.c.l.b16 %v11234
        %v11274 = vunpack.c.l.b16 %v11235
        %v11275 = vunpack.c.l.b16 %v11236
        %v11276 = vunpack.c.l.b16 %v11237
        %v11277 = vunpack.c.l.b16 %v11238
        %v11278 = vunpack.c.l.b16 %v11239
        %v11279 = vunpack.c.l.b16 %v11240
        %v11280 = vunpack.c.l.b16 %v11241
        %v11281 = vunpack.c.l.b16 %v11242
        %v11282 = vunpack.c.l.b16 %v11243
        %v11283 = vunpack.c.l.b16 %v11244
        %v11284 = vunpack.c.l.b16 %v11245
        %v11285 = vpack.c.b16 %v11270, %v11269
        %v11286 = vpack.c.b16 %v11272, %v11271
        %v11287 = vpack.c.b16 %v11274, %v11273
        %v11288 = vpack.c.b16 %v11276, %v11275
        %v11289 = vpack.c.b16 %v11278, %v11277
        %v11290 = vpack.c.b16 %v11280, %v11279
        %v11291 = vpack.c.b16 %v11282, %v11281
        %v11292 = vpack.c.b16 %v11284, %v11283
        %11301 = vmatprep.subr.bf16.mxu0 0
        %11302 = vmatpush1.bf16.msra.mxu0 %v11285
        %11303 = vmatprep.subr.bf16.mxu0 0
        %11304 = vmatpush1.bf16.msra.mxu0 %v11286
        %11305 = vmatprep.subr.bf16.mxu0 0
        %11306 = vmatpush1.bf16.msra.mxu0 %v11287
        %11307 = vmatprep.subr.bf16.mxu0 0
        %11308 = vmatpush1.bf16.msra.mxu0 %v11288
        %11309 = vmatprep.subr.bf16.mxu0 0
        %11310 = vmatpush1.bf16.msra.mxu0 %v11289
        %11311 = vmatprep.subr.bf16.mxu0 0
        %11312 = vmatpush1.bf16.msra.mxu0 %v11290
        %11313 = vmatprep.subr.bf16.mxu0 0
        %11314 = vmatpush1.bf16.msra.mxu0 %v11291
        %11315 = vmatprep.subr.bf16.mxu0 0
        %11316 = vmatpush1.bf16.msra.mxu0 %v11292
        %11317 = vmatprep.subr.bf16.mxu0 0
        %11318 = vmatpush1.bf16.msra.mxu0 0
        %11319 = vmatprep.subr.bf16.mxu0 0
        %11320 = vmatpush1.bf16.msra.mxu0 0
        %11321 = vmatprep.subr.bf16.mxu0 0
        %11322 = vmatpush1.bf16.msra.mxu0 0
        %11323 = vmatprep.subr.bf16.mxu0 0
        %11324 = vmatpush1.bf16.msra.mxu0 0
        %11325 = vmatprep.subr.bf16.mxu0 0
        %11326 = vmatpush1.bf16.msra.mxu0 0
        %11327 = vmatprep.subr.bf16.mxu0 0
        %11328 = vmatpush1.bf16.msra.mxu0 0
        %11329 = vmatprep.subr.bf16.mxu0 0
        %11330 = vmatpush1.bf16.msra.mxu0 0
        %11331 = vmatprep.subr.bf16.mxu0 0
        %11332 = vmatpush1.bf16.msra.mxu0 0
        %11333 = vmatprep.mubr.bf16.mxu0 0
        %11334 = vmatmul.mubr.bf16.gmra.mrb[0].mxu0 %v11229
        %v11335 = vpop.f32.mrb[0].mxu0
        %v11336 = vadd.f32 %v11251, %v11335
        %v11337 = vpop.f32.mrb[0].mxu0
        %v11338 = vpop.f32.mrb[0].mxu0
        %v11339 = vpop.f32.mrb[0].mxu0
        %11340 = vdwg.mxu0
        %vm11341 = vcmask 1043456
        %v11342 = vsel %vm11341, %v11336, 0.0
        %v11343 = vrot.slane %v11342, 4
        %v11344 = vadd.f32 %v11342, %v11343
        %v11345 = vrot.slane %v11344, 2
        %v11346 = vadd.f32 %v11344, %v11345
        %v11347 = vrot.slane %v11346, 1
        %v11348 = vadd.f32 %v11346, %v11347
        %v11349 = vrcp.pop 4.0
        %v11350 = vmul.f32 %v11348, %v11349
        %v11351 = vld [vmem:[%s63] sm:$0xff]
        %v11352 = vld [vmem:[%s63 + $0x8] sm:$0xff]
        %v11353 = vld [vmem:[%s63 + $0x10] sm:$0xff]
        %v11354 = vld [vmem:[%s63 + $0x18] sm:$0xff]
        %v11355 = vld [vmem:[%s63 + $0x20] sm:$0xff]
        %v11356 = vld [vmem:[%s63 + $0x28] sm:$0xff]
        %v11357 = vld [vmem:[%s63 + $0x30] sm:$0xff]
        %v11358 = vld [vmem:[%s63 + $0x38] sm:$0xff]
        %v11359 = vld [vmem:[%s63 + $0x40] sm:$0xff]
        %v11360 = vld [vmem:[%s63 + $0x48] sm:$0xff]
        %v11361 = vld [vmem:[%s63 + $0x50] sm:$0xff]
        %v11362 = vld [vmem:[%s63 + $0x58] sm:$0xff]
        %v11363 = vld [vmem:[%s63 + $0x60] sm:$0xff]
        %v11364 = vld [vmem:[%s63 + $0x68] sm:$0xff]
        %v11365 = vld [vmem:[%s63 + $0x70] sm:$0xff]
        %v11366 = vld [vmem:[%s63 + $0x78] sm:$0xff]
        %v11367 = vld [vmem:[%s65] sm:$0x1]
        %11368 = vmatprep.subr.mxu0 0.0
        %11369 = vmatpush1.msra.mxu0 %v11351
        %11370 = vmatprep.subr.mxu0 0.0
        %11371 = vmatpush1.msra.mxu0 %v11352
        %11372 = vmatprep.subr.mxu0 0.0
        %11373 = vmatpush1.msra.mxu0 %v11353
        %11374 = vmatprep.subr.mxu0 0.0
        %11375 = vmatpush1.msra.mxu0 %v11354
        %11376 = vmatprep.subr.mxu0 0.0
        %11377 = vmatpush1.msra.mxu0 %v11355
        %11378 = vmatprep.subr.mxu0 0.0
        %11379 = vmatpush1.msra.mxu0 %v11356
        %11380 = vmatprep.subr.mxu0 0.0
        %11381 = vmatpush1.msra.mxu0 %v11357
        %11382 = vmatprep.subr.mxu0 0.0
        %11383 = vmatpush1.msra.mxu0 %v11358
        %11384 = vmatprep.subr.mxu0 0.0
        %11385 = vmatpush1.msra.mxu0 %v11359
        %11386 = vmatprep.subr.mxu0 0.0
        %11387 = vmatpush1.msra.mxu0 %v11360
        %11388 = vmatprep.subr.mxu0 0.0
        %11389 = vmatpush1.msra.mxu0 %v11361
        %11390 = vmatprep.subr.mxu0 0.0
        %11391 = vmatpush1.msra.mxu0 %v11362
        %11392 = vmatprep.subr.mxu0 0.0
        %11393 = vmatpush1.msra.mxu0 %v11363
        %11394 = vmatprep.subr.mxu0 0.0
        %11395 = vmatpush1.msra.mxu0 %v11364
        %11396 = vmatprep.subr.mxu0 0.0
        %11397 = vmatpush1.msra.mxu0 %v11365
        %11398 = vmatprep.subr.mxu0 0.0
        %11399 = vmatpush1.msra.mxu0 %v11366
        %11400 = vmatprep.subr.mxu0 0.0
        %11401 = vmatpush1.msra.mxu0 0.0
        %11402 = vmatprep.subr.mxu0 0.0
        %11403 = vmatpush1.msra.mxu0 0.0
        %11404 = vmatprep.subr.mxu0 0.0
        %11405 = vmatpush1.msra.mxu0 0.0
        %11406 = vmatprep.subr.mxu0 0.0
        %11407 = vmatpush1.msra.mxu0 0.0
        %11408 = vmatprep.subr.mxu0 0.0
        %11409 = vmatpush1.msra.mxu0 0.0
        %11410 = vmatprep.subr.mxu0 0.0
        %11411 = vmatpush1.msra.mxu0 0.0
        %11412 = vmatprep.subr.mxu0 0.0
        %11413 = vmatpush1.msra.mxu0 0.0
        %11414 = vmatprep.subr.mxu0 0.0
        %11415 = vmatpush1.msra.mxu0 0.0
        %11416 = vmatprep.subr.mxu0 0.0
        %11417 = vmatpush1.msra.mxu0 0.0
        %11418 = vmatprep.subr.mxu0 0.0
        %11419 = vmatpush1.msra.mxu0 0.0
        %11420 = vmatprep.subr.mxu0 0.0
        %11421 = vmatpush1.msra.mxu0 0.0
        %11422 = vmatprep.subr.mxu0 0.0
        %11423 = vmatpush1.msra.mxu0 0.0
        %11424 = vmatprep.subr.mxu0 0.0
        %11425 = vmatpush1.msra.mxu0 0.0
        %11426 = vmatprep.subr.mxu0 0.0
        %11427 = vmatpush1.msra.mxu0 0.0
        %11428 = vmatprep.subr.mxu0 0.0
        %11429 = vmatpush1.msra.mxu0 0.0
        %11430 = vmatprep.subr.mxu0 0.0
        %11431 = vmatpush1.msra.mxu0 0.0
        %11432 = vmatprep.mubr.f32.mxu0 0.0
        %11433 = vmatmul.mubr.f32.gmra.mrb[0].mxu0 %v11350
        %v11434 = vpop.f32.mrb[0].mxu0
        %v11435 = vadd.f32 %v11367, %v11434
        %v11436 = vpop.f32.mrb[0].mxu0
        %11437 = vdwg.mxu0
        %11438 = vst [vmem:[%s1006] sm:$0x1] %v11435
        %s11439 = sand.u32 %s787, 1
        %s11440 = scalar_lea.sflag [#allocation10], %s11439
        %s11441 = sand.u32 %s787, 1
        %s11442 = scalar_lea.vmem [#allocation9], %s11441
        // Predicated region
        $region153: #{tpu_custom_call.1} parent=151 // pred_check
          %p11443 = pneg %p797
        $region154: #{tpu_custom_call.1} parent=151 // pred_check_branch
          %11445 = sbr.rel (%p11443) target = $region156
        $region155: #{tpu_custom_call.1} parent=151 // pred_region
          %s11447 = ssub.s32 16, 16
          %11448 = vsyncadd %s11440, %s11447
          %s11449 = smul.addr %s81, 16
          %s11450 = scalar_lea.hbm %s67, %s11449
          %s11452 = sshll.u32 %s11442, 4
          %s11453 = int_to_ptr.vmem [resolvable:$true] %s11452
          %11455 = dma.vmem_to_hbm [thread:$0]  %s11453, 16, %s11450, %s11440
        $region156: #{tpu_custom_call.1} parent=151 // pred_fallthru
          _
      $region152: #{tpu_custom_call.1} parent=5 // pred_fallthru
        _
      %p11456 = scmp.le.s32.totalorder 2, %s76
      // Predicated region
      $region157: #{tpu_custom_call.1} parent=5 // pred_check
        %p11457 = pneg %p11456
      $region158: #{tpu_custom_call.1} parent=5 // pred_check_branch
        %11459 = sbr.rel (%p11457) target = $region160
      $region159: #{tpu_custom_call.1} parent=5 // pred_region
        %s11460 = ssub.s32 %s76, 2
        // Predicated region
        $region161: #{tpu_custom_call.1} parent=159 // pred_check
          %p11461 = pneg %p803
        $region162: #{tpu_custom_call.1} parent=159 // pred_check_branch
          %11463 = sbr.rel (%p11461) target = $region164
        $region163: #{tpu_custom_call.1} parent=159 // pred_region
          %s11464 = sand.u32 %s788, 1
          %s11465 = scalar_lea.sflag [#allocation10], %s11464
          %s11466 = sand.u32 %s788, 1
          %s11467 = scalar_lea.vmem [#allocation9], %s11466
          %11468 = dma.done %s11465, 16
        $region164: #{tpu_custom_call.1} parent=159 // pred_fallthru
          _
      $region160: #{tpu_custom_call.1} parent=5 // pred_fallthru
        _
    $region6: #{tpu_custom_call.1} parent=1 // loop_footer
      %s80 = sadd.s32 1, %s76
    $region7: #{tpu_custom_call.1} parent=1 // loop_footer_branch
      %75 = sbr.rel target = $region3
    $region8: #{tpu_custom_call.1} parent=1 // loop_exit
      _
    %11469 = vsyncpa [#allocation10], 1
    %s11470 = scalar_lea.sflag [#allocation10], 1
    %11471 = vsyncpa %s11470, 1

</llo_original>
